<compile_context>
chip_gen: v7x
topology: tpu7x:2x2x1
jax: 0.10.0
libtpu: 0.0.40
codegen_flags: <defaults>
</compile_context>

<pallas_src>
import functools

import jax
import jax.numpy as jnp
from jax import lax
from jax.experimental import pallas as pl
from jax.experimental.pallas import tpu as pltpu


# ------------------------------- helpers -------------------------------------

def _round_up(x, m):
    return (x + m - 1) // m * m


def _cpad(c):
    # lane-dense channel width
    return max(128, _round_up(c, 128))


def _vmem_budget():
    """(tile-selection VMEM budget, vmem_limit_bytes or None) per generation."""
    try:
        kind = jax.devices()[0].device_kind.lower()
    except Exception:
        kind = ""
    if "v5 lite" in kind or "v5e" in kind or "v5lite" in kind:
        return 14 * 2 ** 20, 64 * 2 ** 20      # 128 MiB physical VMEM
    if "v6" in kind or "trillium" in kind:
        return 48 * 2 ** 20, 96 * 2 ** 20      # 128 MiB physical VMEM
    if "v7" in kind or "7x" in kind:
        return 26 * 2 ** 20, 48 * 2 ** 20      # 64 MiB physical VMEM per core
    return 14 * 2 ** 20, None                  # unknown: stay near defaults


_BUFFERED1_OK = None


def _buffered1_ok():
    """Probe once whether pipeline_mode=pl.Buffered(1) works on this JAX/TPU."""
    global _BUFFERED1_OK
    if _BUFFERED1_OK is not None:
        return _BUFFERED1_OK
    try:
        def _probe(x_ref, w_ref, o_ref):
            o_ref[...] = x_ref[...] + w_ref[...]

        f = pl.pallas_call(
            _probe,
            out_shape=jax.ShapeDtypeStruct((16, 128), jnp.float32),
            grid=(2,),
            in_specs=[pl.BlockSpec((8, 128), lambda i: (i, 0)),
                      pl.BlockSpec((8, 128), lambda i: (0, 0),
                                   pipeline_mode=pl.Buffered(1))],
            out_specs=pl.BlockSpec((8, 128), lambda i: (i, 0)),
        )
        jax.block_until_ready(
            f(jnp.zeros((16, 128), jnp.float32), jnp.ones((8, 128), jnp.float32)))
        _BUFFERED1_OK = True
    except Exception:
        _BUFFERED1_OK = False
    return _BUFFERED1_OK


def _wspec(shape, index_map):
    """BlockSpec for grid-invariant operands (weights / scale / bias):
    single-buffered when supported so the saved VMEM can go to row tiles."""
    if _buffered1_ok():
        return pl.BlockSpec(shape, index_map, pipeline_mode=pl.Buffered(1))
    return pl.BlockSpec(shape, index_map)


def _pick_tm(M, per_row_bytes, fixed_bytes, budget):
    """Row-tile: as large as VMEM allows (<=1024, multiple of 16) while still
    giving >=4 grid steps (double-buffering overlap + v7x megacore)."""
    tm = min(1024, _round_up(max(M, 16), 16))
    while tm > 16 and fixed_bytes + tm * per_row_bytes > budget:
        tm = max(16, _round_up(tm // 2, 16))
    while tm > 16 and -(-M // tm) < 4:
        tm = max(16, _round_up(tm // 2, 16))
    return tm


def _pick_th(B, Ho, Wo, CP, budget):
    """Output-row tile for the fused residual-block kernel."""
    Wp2 = Wo + 2
    wf = 1 if _buffered1_ok() else 2

    def est(th):
        n_ht = -(-Ho // th)
        hpp = n_ht * th + 2
        fixed = (2 * hpp * Wp2 * CP * 2           # resident padded image (2 bufs)
                 + wf * 10 * CP * CP * 2)         # 1x1 + nine 3x3-tap weights
        per = ((th + 2) * Wp2 * CP * (4 + 2)      # 1x1 output f32 + bf16 copy
               + th * Wo * CP * 8                 # 3x3 accumulator / epilogue f32
               + 2 * th * Wo * CP * 2)            # double-buffered bf16 out tile
        return fixed + per

    th = max(1, min(Ho, 32))
    while th > 1 and est(th) > budget:
        th = max(1, th // 2)
    while th > 1 and B * (-(-Ho // th)) < 4:
        th = max(1, th // 2)
    return th


# ------------------------------ Pallas kernels --------------------------------

def _mish(y):
    # Mish(y) = y * tanh(softplus(y)); tanh(log u) = (u^2-1)/(u^2+1), u = 1+e^y.
    t = jnp.exp(jnp.minimum(y, 20.0))
    u = 1.0 + t
    u2 = u * u
    d = u2 + 1.0
    inv = pl.reciprocal(d, approx=True)
    inv = inv * (2.0 - d * inv)                   # one Newton step -> ~f32 exact
    return y * (u2 - 1.0) * inv


def _head_kernel(p_ref, w1_ref, s1_ref, b1_ref, wd_ref, sd_ref, bd_ref,
                 s0_ref, c0_ref):
    # conv1 (im2col'd 3x3, stride 2) -> BN -> Mish, kept in VMEM ...
    x1 = jnp.dot(p_ref[...], w1_ref[...], preferred_element_type=jnp.float32)
    x1 = _mish(x1 * s1_ref[...] + b1_ref[...])
    # ... then conv2 and csp.conv as one wide (lane-dense) matmul.
    y = jnp.dot(x1.astype(jnp.bfloat16), wd_ref[...],
                preferred_element_type=jnp.float32)
    y = _mish(y * sd_ref[...] + bd_ref[...])
    n = s0_ref.shape[1]
    s0_ref[...] = y[:, :n].astype(s0_ref.dtype)
    c0_ref[...] = y[:, n:].astype(c0_ref.dtype)


def _resblock_kernel(xp_ref, w1_ref, s1_ref, b1_ref, w2_ref, s2_ref, b2_ref,
                     o_ref, *, Ho):
    # One full ResidualBlock: 1x1 conv -> 3x3 conv (in-kernel im2col) -> +res.
    TH, Wo, CP = o_ref.shape
    Wp2 = Wo + 2
    h0 = pl.program_id(1) * TH                    # window start (padded rows)

    xw = xp_ref[pl.ds(h0, TH + 2), :, :]          # (TH+2, Wo+2, CP) bf16
    rows2d = (TH + 2) * Wp2

    # 1x1 conv + BN + Mish on the tile rows (incl. the 1-row/col halo).
    h = jnp.dot(xw.reshape(rows2d, CP), w1_ref[...],
                preferred_element_type=jnp.float32)
    h = _mish(h * s1_ref[...] + b1_ref[...]).reshape(TH + 2, Wp2, CP)

    # Zero the 3x3's zero-padding border (and rows past the true image height);
    # the 1x1 of a zero-padded pixel is mish(bias) != 0, so mask explicitly.
    rr = h0 + lax.broadcasted_iota(jnp.int32, (TH + 2, Wp2, 1), 0)
    cc = lax.broadcasted_iota(jnp.int32, (TH + 2, Wp2, 1), 1)
    interior = (rr >= 1) & (rr <= Ho) & (cc >= 1) & (cc <= Wo)
    hp = jnp.where(interior, h, 0.0).astype(jnp.bfloat16)

    # 3x3 conv as 9 shifted VMEM windows, accumulated in f32 (in-kernel im2col).
    acc = jnp.zeros((TH * Wo, CP), jnp.float32)
    for ki in range(3):
        for kj in range(3):
            win = hp[ki:ki + TH, kj:kj + Wo, :].reshape(TH * Wo, CP)
            acc = acc + jnp.dot(win, w2_ref[ki * 3 + kj],
                                preferred_element_type=jnp.float32)
    y = _mish(acc * s2_ref[...] + b2_ref[...])

    res = xw[1:1 + TH, 1:1 + Wo, :].reshape(TH * Wo, CP).astype(jnp.float32)
    o_ref[...] = (res + y).astype(o_ref.dtype).reshape(TH, Wo, CP)


def _tail_kernel(c_ref, s0_ref, w3_ref, s3_ref, b3_ref,
                 w4a_ref, w4b_ref, s4_ref, b4_ref, o_ref):
    # split1 = Mish(BN(conv3(csp_out)))  -- stays in VMEM
    y3 = jnp.dot(c_ref[...], w3_ref[...], preferred_element_type=jnp.float32)
    y3 = _mish(y3 * s3_ref[...] + b3_ref[...])
    # conv4(concat([split0, split1])) == split0 @ W4a + split1 @ W4b
    z = jnp.dot(s0_ref[...], w4a_ref[...], preferred_element_type=jnp.float32)
    z = z + jnp.dot(y3.astype(jnp.bfloat16), w4b_ref[...],
                    preferred_element_type=jnp.float32)
    o_ref[...] = _mish(z * s4_ref[...] + b4_ref[...]).astype(o_ref.dtype)


# --------------------------- pallas_call wrappers -----------------------------

def _head_call(patches, w1, s1, b1, wd, sd, bd, budget, vmem_limit):
    M, K1 = patches.shape
    CP2 = w1.shape[1]
    Nd = wd.shape[1]
    CP = Nd // 2
    wf = 1 if _buffered1_ok() else 2
    fixed = wf * (K1 * CP2 + CP2 * Nd) * 2 + 4 * Nd * 4
    per_row = 2 * K1 * 2 + 2 * Nd * 2 + 2 * (CP2 + Nd) * 4
    TM = _pick_tm(M, per_row, fixed, budget)
    Mpad = _round_up(M, TM)
    if Mpad != M:
        patches = jnp.pad(patches, ((0, Mpad - M), (0, 0)))

    s0, c0 = pl.pallas_call(
        _head_kernel,
        out_shape=(jax.ShapeDtypeStruct((Mpad, CP), jnp.bfloat16),
                   jax.ShapeDtypeStruct((Mpad, CP), jnp.bfloat16)),
        grid=(Mpad // TM,),
        in_specs=[pl.BlockSpec((TM, K1), lambda i: (i, 0)),
                  _wspec((K1, CP2), lambda i: (0, 0)),
                  _wspec((1, CP2), lambda i: (0, 0)),
                  _wspec((1, CP2), lambda i: (0, 0)),
                  _wspec((CP2, Nd), lambda i: (0, 0)),
                  _wspec((1, Nd), lambda i: (0, 0)),
                  _wspec((1, Nd), lambda i: (0, 0))],
        out_specs=(pl.BlockSpec((TM, CP), lambda i: (i, 0)),
                   pl.BlockSpec((TM, CP), lambda i: (i, 0))),
        compiler_params=pltpu.CompilerParams(
            dimension_semantics=("parallel",),
            vmem_limit_bytes=vmem_limit),
    )(patches, w1, s1, b1, wd, sd, bd)
    return s0[:M], c0[:M]


def _resblock_call(xp, wb1, sb1, bb1, wb2, sb2, bb2, *, TH, Ho, Wo, vmem_limit):
    B, Hpp, Wp2, CP = xp.shape
    n_ht = (Hpp - 2) // TH
    kernel = functools.partial(_resblock_kernel, Ho=Ho)
    return pl.pallas_call(
        kernel,
        out_shape=jax.ShapeDtypeStruct((B, n_ht * TH, Wo, CP), jnp.bfloat16),
        grid=(B, n_ht),
        in_specs=[pl.BlockSpec((None, Hpp, Wp2, CP), lambda b, t: (b, 0, 0, 0)),
                  _wspec((CP, CP), lambda b, t: (0, 0)),
                  _wspec((1, CP), lambda b, t: (0, 0)),
                  _wspec((1, CP), lambda b, t: (0, 0)),
                  _wspec((9, CP, CP), lambda b, t: (0, 0, 0)),
                  _wspec((1, CP), lambda b, t: (0, 0)),
                  _wspec((1, CP), lambda b, t: (0, 0))],
        out_specs=pl.BlockSpec((None, TH, Wo, CP), lambda b, t: (b, t, 0, 0)),
        compiler_params=pltpu.CompilerParams(
            dimension_semantics=("parallel", "parallel"),
            vmem_limit_bytes=vmem_limit),
    )(xp, wb1, sb1, bb1, wb2, sb2, bb2)


def _tail_call(csp_out, split0, w3, s3, b3, w4a, w4b, s4, b4, budget, vmem_limit):
    M, CP = csp_out.shape
    CP2 = w4a.shape[1]
    wf = 1 if _buffered1_ok() else 2
    fixed = wf * (CP * CP + 2 * CP * CP2) * 2 + 4 * CP2 * 4
    per_row = 2 * 2 * CP * 2 + 2 * CP2 * 2 + 2 * (CP + 2 * CP2) * 4
    TM = _pick_tm(M, per_row, fixed, budget)
    Mpad = _round_up(M, TM)
    if Mpad != M:
        pad = ((0, Mpad - M), (0, 0))
        csp_out = jnp.pad(csp_out, pad)
        split0 = jnp.pad(split0, pad)

    out = pl.pallas_call(
        _tail_kernel,
        out_shape=jax.ShapeDtypeStruct((Mpad, CP2), jnp.bfloat16),
        grid=(Mpad // TM,),
        in_specs=[pl.BlockSpec((TM, CP), lambda i: (i, 0)),
                  pl.BlockSpec((TM, CP), lambda i: (i, 0)),
                  _wspec((CP, CP), lambda i: (0, 0)),
                  _wspec((1, CP), lambda i: (0, 0)),
                  _wspec((1, CP), lambda i: (0, 0)),
                  _wspec((CP, CP2), lambda i: (0, 0)),
                  _wspec((CP, CP2), lambda i: (0, 0)),
                  _wspec((1, CP2), lambda i: (0, 0)),
                  _wspec((1, CP2), lambda i: (0, 0))],
        out_specs=pl.BlockSpec((TM, CP2), lambda i: (i, 0)),
        compiler_params=pltpu.CompilerParams(
            dimension_semantics=("parallel",),
            vmem_limit_bytes=vmem_limit),
    )(csp_out, split0, w3, s3, b3, w4a, w4b, s4, b4)
    return out[:M]


# ------------------------------- JAX glue -------------------------------------

def _im2col(x_sp, k, stride, padding):
    """x_sp: (B, H, W, CP) bf16 -> (B*Ho*Wo, k*k*CP) bf16 patches (tap-major).
    Only used for conv1 (stride 2, pad 0); block 3x3s are im2col'd in-kernel."""
    if padding > 0:
        x_sp = jnp.pad(x_sp, ((0, 0), (padding, padding),
                              (padding, padding), (0, 0)))
    B, Hp, Wp, CPc = x_sp.shape
    Ho = (Hp - k) // stride + 1
    Wo = (Wp - k) // stride + 1
    pieces = [x_sp[:, i:i + stride * Ho:stride, j:j + stride * Wo:stride, :]
              for i in range(k) for j in range(k)]
    patches = jnp.concatenate(pieces, axis=-1).reshape(B * Ho * Wo, k * k * CPc)
    return patches, Ho, Wo


def _fold_conv(conv_params, cin, cout, k, eps=1e-5):
    """Fold eval-mode BatchNorm into the conv; pad channels to lane width."""
    w, gamma, beta, mean, var = conv_params
    scale = gamma / jnp.sqrt(var + eps)
    bias = beta - mean * scale
    cpi, cpo = _cpad(cin), _cpad(cout)
    # (Cout, Cin, k, k) -> (k*k, Cin, Cout), pad channels, flatten tap-major.
    wm = jnp.transpose(w, (2, 3, 1, 0)).reshape(k * k, cin, cout)
    wm = jnp.pad(wm, ((0, 0), (0, cpi - cin), (0, cpo - cout)))
    wm = wm.reshape(k * k * cpi, cpo).astype(jnp.bfloat16)
    scale = jnp.pad(scale, (0, cpo - cout)).reshape(1, cpo).astype(jnp.float32)
    bias = jnp.pad(bias, (0, cpo - cout)).reshape(1, cpo).astype(jnp.float32)
    return wm, scale, bias


def prepare_params(params, in_channel, eps=1e-5):
    C = in_channel
    CP, CP2 = _cpad(C), _cpad(2 * C)
    prep = {"conv1": _fold_conv(params["conv1"], C, 2 * C, 3)}

    # conv2 and csp.conv both consume conv1's output -> one wide matmul.
    w2, s2, b2 = _fold_conv(params["conv2"], 2 * C, C, 1)
    wc, sc, bc = _fold_conv(params["csp_conv"], 2 * C, C, 1)
    prep["dual"] = (jnp.concatenate([w2, wc], axis=1),
                    jnp.concatenate([s2, sc], axis=1),
                    jnp.concatenate([b2, bc], axis=1))

    blocks = []
    for (p1, p2) in params["blocks"]:
        wb1, sb1, bb1 = _fold_conv(p1, C, C, 1)
        wb2, sb2, bb2 = _fold_conv(p2, C, C, 3)
        blocks.append(((wb1, sb1, bb1),
                       (wb2.reshape(9, CP, CP), sb2, bb2)))   # 9 taps, tap-major
    prep["blocks"] = blocks

    # conv3 + channel-concat + conv4 fused: split conv4's weight by which half
    # of the concatenated input (split0 | split1) each row consumes.
    w3, s3, b3 = _fold_conv(params["conv3"], C, C, 1)
    w4, g4, be4, m4, v4 = params["conv4"]
    scale4 = g4 / jnp.sqrt(v4 + eps)
    bias4 = be4 - m4 * scale4
    w4m = jnp.transpose(w4, (2, 3, 1, 0)).reshape(2 * C, 2 * C)    # (in, out)
    w4a = jnp.zeros((CP, CP2), jnp.float32).at[:C, :2 * C].set(w4m[:C])
    w4b = jnp.zeros((CP, CP2), jnp.float32).at[:C, :2 * C].set(w4m[C:])
    s4 = jnp.pad(scale4, (0, CP2 - 2 * C)).reshape(1, CP2).astype(jnp.float32)
    b4 = jnp.pad(bias4, (0, CP2 - 2 * C)).reshape(1, CP2).astype(jnp.float32)
    prep["tail"] = (w3, s3, b3, w4a.astype(jnp.bfloat16),
                    w4b.astype(jnp.bfloat16), s4, b4)
    return prep


# -------------------------- parameter initialization --------------------------

def init_conv_params(key, cin, cout, k):
    k1, k2, k3, k4, k5 = jax.random.split(key, 5)
    w = 0.1 * jax.random.normal(k1, (cout, cin, k, k), jnp.float32)
    gamma = 1.0 + 0.1 * jax.random.normal(k2, (cout,), jnp.float32)
    beta = 0.1 * jax.random.normal(k3, (cout,), jnp.float32)
    mean = 0.1 * jax.random.normal(k4, (cout,), jnp.float32)
    var = jnp.abs(jax.random.normal(k5, (cout,), jnp.float32)) + 0.5
    return (w, gamma, beta, mean, var)


def init_cspstage_params(key, in_channel, num_blocks):
    keys = jax.random.split(key, 5 + 2 * num_blocks)
    params = {
        "conv1": init_conv_params(keys[0], in_channel, 2 * in_channel, 3),
        "conv2": init_conv_params(keys[1], 2 * in_channel, in_channel, 1),
        "conv3": init_conv_params(keys[2], in_channel, in_channel, 1),
        "conv4": init_conv_params(keys[3], 2 * in_channel, 2 * in_channel, 1),
        "csp_conv": init_conv_params(keys[4], 2 * in_channel, in_channel, 1),
        "blocks": [],
    }
    for i in range(num_blocks):
        p1 = init_conv_params(keys[5 + 2 * i], in_channel, in_channel, 1)
        p2 = init_conv_params(keys[6 + 2 * i], in_channel, in_channel, 3)
        params["blocks"].append((p1, p2))
    return params


# ------------------------------ CSPStage forward ------------------------------

def cspstage_forward(prep, x_nchw):
    B, C, H, W = x_nchw.shape
    CP = _cpad(C)
    budget, vmem_limit = _vmem_budget()

    # Single NCHW -> NHWC transpose + channel pad + bf16 cast at the boundary.
    x = jnp.transpose(x_nchw, (0, 2, 3, 1))
    x = jnp.pad(x, ((0, 0), (0, 0), (0, 0), (0, CP - C))).astype(jnp.bfloat16)

    # conv1 patches (3x3, stride 2, pad 0) -- XLA im2col (see TODO at top).
    patches, Ho, Wo = _im2col(x, 3, 2, 0)
    M = B * Ho * Wo

    # Head kernel: conv1 -> {conv2 (split0), csp.conv} fused.
    w1, s1, b1 = prep["conv1"]
    wd, sd, bd = prep["dual"]
    split0, out = _head_call(patches, w1, s1, b1, wd, sd, bd,
                             budget, vmem_limit)

    # Residual blocks: each block is one kernel (1x1 -> in-kernel 3x3 -> +res).
    if prep["blocks"]:
        TH = _pick_th(B, Ho, Wo, CP, budget)
        n_ht = -(-Ho // TH)
        Ho_pad = n_ht * TH
        out_sp = out.reshape(B, Ho, Wo, CP)
        xp = jnp.pad(out_sp, ((0, 0), (1, 1 + Ho_pad - Ho), (1, 1), (0, 0)))
        o = None
        nb = len(prep["blocks"])
        for i, ((wb1, sb1, bb1), (wb2, sb2, bb2)) in enumerate(prep["blocks"]):
            o = _resblock_call(xp, wb1, sb1, bb1, wb2, sb2, bb2,
                               TH=TH, Ho=Ho, Wo=Wo, vmem_limit=vmem_limit)
            if i + 1 < nb:
                xp = jnp.pad(o, ((0, 0), (1, 1), (1, 1), (0, 0)))
        out = o[:, :Ho].reshape(M, CP)

    # Tail kernel: conv3 + concat([split0, split1]) + conv4 fused, bf16 out.
    w3, s3, b3, w4a, w4b, s4, b4 = prep["tail"]
    y = _tail_call(out, split0, w3, s3, b3, w4a, w4b, s4, b4,
                   budget, vmem_limit)

    y = y[:, :2 * C].astype(jnp.float32).reshape(B, Ho, Wo, 2 * C)
    return jnp.transpose(y, (0, 3, 1, 2))            # back to NCHW, f32


# ----------------------------------- main --------------------------------------

if __name__ == "__main__":
    key = jax.random.PRNGKey(0)
    k_x, k_p = jax.random.split(key)

    B, C, H, W = 2, 4, 16, 16
    num_blocks = 2
    # Note: C=4 pads to 128 lanes, so this demo shape mostly exercises padding;
    # tune/benchmark at production channel counts (C a multiple of 64-128).
    x = jax.random.normal(k_x, (B, C, H, W), jnp.float32)
    raw_params = init_cspstage_params(k_p, C, num_blocks)
    prep = prepare_params(raw_params, C)

    _buffered1_ok()   # warm the single-buffer capability probe outside jit

    fwd = jax.jit(functools.partial(cspstage_forward, prep))
    out = fwd(x)
    jax.block_until_ready(out)

    # conv1 is 3x3 stride=2 pad=0: Ho = (16-3)//2 + 1 = 7 -> output (2, 8, 7, 7)
    assert out.shape == (B, 2 * C, 7, 7), out.shape
    assert out.dtype == jnp.float32
    print("KERNEL_OK")
</pallas_src>

<mosaic_0001>
module attributes {stable_mosaic.version = 11 : i64} {
  func.func @_probe(%arg0: i32, %arg1: memref<8x128xf32, #tpu.memory_space<vmem>>, %arg2: memref<8x128xf32, #tpu.memory_space<vmem>>, %arg3: memref<8x128xf32, #tpu.memory_space<vmem>>) attributes {dimension_semantics = [#tpu.dimension_semantics<arbitrary>], iteration_bounds = array<i64: 2>, scalar_prefetch = 0 : i64, scratch_operands = 0 : i64, tpu.core_type = #tpu.core_type<tc>, window_params = [{transform_indices = @transform_0, window_bounds = array<i64: 8, 128>}, {pipeline_mode = #tpu.pipeline_mode<synchronous>, transform_indices = @transform_1, window_bounds = array<i64: 8, 128>}, {transform_indices = @transform_2, window_bounds = array<i64: 8, 128>}]} {
    %c0 = arith.constant 0 : index
    %c0_0 = arith.constant 0 : index
    %0 = vector.load %arg1[%c0, %c0_0] : memref<8x128xf32, #tpu.memory_space<vmem>>, vector<8x128xf32>
    %c0_1 = arith.constant 0 : index
    %c0_2 = arith.constant 0 : index
    %1 = vector.load %arg2[%c0_1, %c0_2] : memref<8x128xf32, #tpu.memory_space<vmem>>, vector<8x128xf32>
    %2 = arith.addf %0, %1 : vector<8x128xf32>
    %c0_3 = arith.constant 0 : index
    %c0_4 = arith.constant 0 : index
    %3 = vector.load %arg3[%c0_3, %c0_4] : memref<8x128xf32, #tpu.memory_space<vmem>>, vector<8x128xf32>
    tpu.vector_store %arg3[%c0_3, %c0_4], %2 {strides = array<i32>} : memref<8x128xf32, #tpu.memory_space<vmem>>, vector<8x128xf32>,
    return
  }
  func.func @transform_0(%arg0: i32) -> (i32, i32) {
    %c0_i32 = arith.constant 0 : i32
    %c0_i32_0 = arith.constant 0 : i32
    return %arg0, %c0_i32 : i32, i32
  }
  func.func @transform_1(%arg0: i32) -> (i32, i32) {
    %c0_i32 = arith.constant 0 : i32
    %c0_i32_0 = arith.constant 0 : i32
    %c0_i32_1 = arith.constant 0 : i32
    return %c0_i32, %c0_i32_0 : i32, i32
  }
  func.func @transform_2(%arg0: i32) -> (i32, i32) {
    %c0_i32 = arith.constant 0 : i32
    %c0_i32_0 = arith.constant 0 : i32
    return %arg0, %c0_i32 : i32, i32
  }
}

module attributes {stable_mosaic.version = 11 : i64} {
  func.func @_head_kernel(%arg0: i32, %arg1: memref<32x1152xbf16, #tpu.memory_space<vmem>>, %arg2: memref<1152x128xbf16, #tpu.memory_space<vmem>>, %arg3: memref<1x128xf32, #tpu.memory_space<vmem>>, %arg4: memref<1x128xf32, #tpu.memory_space<vmem>>, %arg5: memref<128x256xbf16, #tpu.memory_space<vmem>>, %arg6: memref<1x256xf32, #tpu.memory_space<vmem>>, %arg7: memref<1x256xf32, #tpu.memory_space<vmem>>, %arg8: memref<32x128xbf16, #tpu.memory_space<vmem>>, %arg9: memref<32x128xbf16, #tpu.memory_space<vmem>>) attributes {dimension_semantics = [#tpu.dimension_semantics<parallel>], iteration_bounds = array<i64: 4>, scalar_prefetch = 0 : i64, scratch_operands = 0 : i64, tpu.core_type = #tpu.core_type<tc>, window_params = [{transform_indices = @transform_0, window_bounds = array<i64: 32, 1152>}, {pipeline_mode = #tpu.pipeline_mode<synchronous>, transform_indices = @transform_1, window_bounds = array<i64: 1152, 128>}, {pipeline_mode = #tpu.pipeline_mode<synchronous>, transform_indices = @transform_2, window_bounds = array<i64: 1, 128>}, {pipeline_mode = #tpu.pipeline_mode<synchronous>, transform_indices = @transform_3, window_bounds = array<i64: 1, 128>}, {pipeline_mode = #tpu.pipeline_mode<synchronous>, transform_indices = @transform_4, window_bounds = array<i64: 128, 256>}, {pipeline_mode = #tpu.pipeline_mode<synchronous>, transform_indices = @transform_5, window_bounds = array<i64: 1, 256>}, {pipeline_mode = #tpu.pipeline_mode<synchronous>, transform_indices = @transform_6, window_bounds = array<i64: 1, 256>}, {transform_indices = @transform_7, window_bounds = array<i64: 32, 128>}, {transform_indices = @transform_8, window_bounds = array<i64: 32, 128>}]} {
    %c0 = arith.constant 0 : index
    %c0_0 = arith.constant 0 : index
    %0 = vector.load %arg1[%c0, %c0_0] : memref<32x1152xbf16, #tpu.memory_space<vmem>>, vector<32x1152xbf16>
    %c0_1 = arith.constant 0 : index
    %c0_2 = arith.constant 0 : index
    %1 = vector.load %arg2[%c0_1, %c0_2] : memref<1152x128xbf16, #tpu.memory_space<vmem>>, vector<1152x128xbf16>
    %cst = arith.constant dense<0.000000e+00> : vector<32x128xf32>
    %2 = tpu.matmul %0, %1, %cst {dimension_numbers = #tpu.dot_dimension_numbers<[1], [0], [0], [1], [0, 0, 1, 1], [], []>} : vector<32x1152xbf16>, vector<1152x128xbf16>, vector<32x128xf32> -> vector<32x128xf32>
    %c0_3 = arith.constant 0 : index
    %c0_4 = arith.constant 0 : index
    %3 = vector.load %arg3[%c0_3, %c0_4] : memref<1x128xf32, #tpu.memory_space<vmem>>, vector<1x128xf32>
    %4 = vector.broadcast %3 : vector<1x128xf32> to vector<32x128xf32>
    %5 = arith.mulf %2, %4 : vector<32x128xf32>
    %c0_5 = arith.constant 0 : index
    %c0_6 = arith.constant 0 : index
    %6 = vector.load %arg4[%c0_5, %c0_6] : memref<1x128xf32, #tpu.memory_space<vmem>>, vector<1x128xf32>
    %7 = vector.broadcast %6 : vector<1x128xf32> to vector<32x128xf32>
    %8 = arith.addf %5, %7 : vector<32x128xf32>
    %cst_7 = arith.constant 2.000000e+01 : f32
    %9 = vector.broadcast %cst_7 : f32 to vector<32x128xf32>
    %10 = arith.minimumf %8, %9 : vector<32x128xf32>
    %11 = math.exp %10 : vector<32x128xf32>
    %cst_8 = arith.constant 1.000000e+00 : f32
    %12 = vector.broadcast %cst_8 : f32 to vector<32x128xf32>
    %13 = arith.addf %12, %11 : vector<32x128xf32>
    %14 = arith.mulf %13, %13 : vector<32x128xf32>
    %cst_9 = arith.constant 1.000000e+00 : f32
    %15 = vector.broadcast %cst_9 : f32 to vector<32x128xf32>
    %16 = arith.addf %14, %15 : vector<32x128xf32>
    %17 = tpu.reciprocal %16 {approx = true} : vector<32x128xf32> -> vector<32x128xf32>
    %18 = arith.mulf %16, %17 : vector<32x128xf32>
    %cst_10 = arith.constant 2.000000e+00 : f32
    %19 = vector.broadcast %cst_10 : f32 to vector<32x128xf32>
    %20 = arith.subf %19, %18 : vector<32x128xf32>
    %21 = arith.mulf %17, %20 : vector<32x128xf32>
    %cst_11 = arith.constant 1.000000e+00 : f32
    %22 = vector.broadcast %cst_11 : f32 to vector<32x128xf32>
    %23 = arith.subf %14, %22 : vector<32x128xf32>
    %24 = arith.mulf %8, %23 : vector<32x128xf32>
    %25 = arith.mulf %24, %21 : vector<32x128xf32>
    %26 = arith.truncf %25 : vector<32x128xf32> to vector<32x128xbf16>
    %c0_12 = arith.constant 0 : index
    %c0_13 = arith.constant 0 : index
    %27 = vector.load %arg5[%c0_12, %c0_13] : memref<128x256xbf16, #tpu.memory_space<vmem>>, vector<128x256xbf16>
    %cst_14 = arith.constant dense<0.000000e+00> : vector<32x256xf32>
    %28 = tpu.matmul %26, %27, %cst_14 {dimension_numbers = #tpu.dot_dimension_numbers<[1], [0], [0], [1], [0, 0, 1, 1], [], []>} : vector<32x128xbf16>, vector<128x256xbf16>, vector<32x256xf32> -> vector<32x256xf32>
    %c0_15 = arith.constant 0 : index
    %c0_16 = arith.constant 0 : index
    %29 = vector.load %arg6[%c0_15, %c0_16] : memref<1x256xf32, #tpu.memory_space<vmem>>, vector<1x256xf32>
    %30 = vector.broadcast %29 : vector<1x256xf32> to vector<32x256xf32>
    %31 = arith.mulf %28, %30 : vector<32x256xf32>
    %c0_17 = arith.constant 0 : index
    %c0_18 = arith.constant 0 : index
    %32 = vector.load %arg7[%c0_17, %c0_18] : memref<1x256xf32, #tpu.memory_space<vmem>>, vector<1x256xf32>
    %33 = vector.broadcast %32 : vector<1x256xf32> to vector<32x256xf32>
    %34 = arith.addf %31, %33 : vector<32x256xf32>
    %cst_19 = arith.constant 2.000000e+01 : f32
    %35 = vector.broadcast %cst_19 : f32 to vector<32x256xf32>
    %36 = arith.minimumf %34, %35 : vector<32x256xf32>
    %37 = math.exp %36 : vector<32x256xf32>
    %cst_20 = arith.constant 1.000000e+00 : f32
    %38 = vector.broadcast %cst_20 : f32 to vector<32x256xf32>
    %39 = arith.addf %38, %37 : vector<32x256xf32>
    %40 = arith.mulf %39, %39 : vector<32x256xf32>
    %cst_21 = arith.constant 1.000000e+00 : f32
    %41 = vector.broadcast %cst_21 : f32 to vector<32x256xf32>
    %42 = arith.addf %40, %41 : vector<32x256xf32>
    %43 = tpu.reciprocal %42 {approx = true} : vector<32x256xf32> -> vector<32x256xf32>
    %44 = arith.mulf %42, %43 : vector<32x256xf32>
    %cst_22 = arith.constant 2.000000e+00 : f32
    %45 = vector.broadcast %cst_22 : f32 to vector<32x256xf32>
    %46 = arith.subf %45, %44 : vector<32x256xf32>
    %47 = arith.mulf %43, %46 : vector<32x256xf32>
    %cst_23 = arith.constant 1.000000e+00 : f32
    %48 = vector.broadcast %cst_23 : f32 to vector<32x256xf32>
    %49 = arith.subf %40, %48 : vector<32x256xf32>
    %50 = arith.mulf %34, %49 : vector<32x256xf32>
    %51 = arith.mulf %50, %47 : vector<32x256xf32>
    %52 = vector.extract_strided_slice %51 {offsets = [0, 0], sizes = [32, 128], strides = [1, 1]} : vector<32x256xf32> to vector<32x128xf32>
    %53 = arith.truncf %52 : vector<32x128xf32> to vector<32x128xbf16>
    %c0_24 = arith.constant 0 : index
    %c0_25 = arith.constant 0 : index
    %54 = vector.load %arg8[%c0_24, %c0_25] : memref<32x128xbf16, #tpu.memory_space<vmem>>, vector<32x128xbf16>
    tpu.vector_store %arg8[%c0_24, %c0_25], %53 {strides = array<i32>} : memref<32x128xbf16, #tpu.memory_space<vmem>>, vector<32x128xbf16>,
    %55 = vector.extract_strided_slice %51 {offsets = [0, 128], sizes = [32, 128], strides = [1, 1]} : vector<32x256xf32> to vector<32x128xf32>
    %56 = arith.truncf %55 : vector<32x128xf32> to vector<32x128xbf16>
    %c0_26 = arith.constant 0 : index
    %c0_27 = arith.constant 0 : index
    %57 = vector.load %arg9[%c0_26, %c0_27] : memref<32x128xbf16, #tpu.memory_space<vmem>>, vector<32x128xbf16>
    tpu.vector_store %arg9[%c0_26, %c0_27], %56 {strides = array<i32>} : memref<32x128xbf16, #tpu.memory_space<vmem>>, vector<32x128xbf16>,
    return
  }
  func.func @transform_0(%arg0: i32) -> (i32, i32) {
    %c0_i32 = arith.constant 0 : i32
    %c0_i32_0 = arith.constant 0 : i32
    return %arg0, %c0_i32 : i32, i32
  }
  func.func @transform_1(%arg0: i32) -> (i32, i32) {
    %c0_i32 = arith.constant 0 : i32
    %c0_i32_0 = arith.constant 0 : i32
    %c0_i32_1 = arith.constant 0 : i32
    return %c0_i32, %c0_i32_0 : i32, i32
  }
  func.func @transform_2(%arg0: i32) -> (i32, i32) {
    %c0_i32 = arith.constant 0 : i32
    %c0_i32_0 = arith.constant 0 : i32
    %c0_i32_1 = arith.constant 0 : i32
    return %c0_i32, %c0_i32_0 : i32, i32
  }
  func.func @transform_3(%arg0: i32) -> (i32, i32) {
    %c0_i32 = arith.constant 0 : i32
    %c0_i32_0 = arith.constant 0 : i32
    %c0_i32_1 = arith.constant 0 : i32
    return %c0_i32, %c0_i32_0 : i32, i32
  }
  func.func @transform_4(%arg0: i32) -> (i32, i32) {
    %c0_i32 = arith.constant 0 : i32
    %c0_i32_0 = arith.constant 0 : i32
    %c0_i32_1 = arith.constant 0 : i32
    return %c0_i32, %c0_i32_0 : i32, i32
  }
  func.func @transform_5(%arg0: i32) -> (i32, i32) {
    %c0_i32 = arith.constant 0 : i32
    %c0_i32_0 = arith.constant 0 : i32
    %c0_i32_1 = arith.constant 0 : i32
    return %c0_i32, %c0_i32_0 : i32, i32
  }
  func.func @transform_6(%arg0: i32) -> (i32, i32) {
    %c0_i32 = arith.constant 0 : i32
    %c0_i32_0 = arith.constant 0 : i32
    %c0_i32_1 = arith.constant 0 : i32
    return %c0_i32, %c0_i32_0 : i32, i32
  }
  func.func @transform_7(%arg0: i32) -> (i32, i32) {
    %c0_i32 = arith.constant 0 : i32
    %c0_i32_0 = arith.constant 0 : i32
    return %arg0, %c0_i32 : i32, i32
  }
  func.func @transform_8(%arg0: i32) -> (i32, i32) {
    %c0_i32 = arith.constant 0 : i32
    %c0_i32_0 = arith.constant 0 : i32
    return %arg0, %c0_i32 : i32, i32
  }
}

module attributes {stable_mosaic.version = 11 : i64} {
  func.func @_resblock_kernel(%arg0: i32, %arg1: i32, %arg2: memref<1x11x9x128xbf16, #tpu.memory_space<vmem>>, %arg3: memref<128x128xbf16, #tpu.memory_space<vmem>>, %arg4: memref<1x128xf32, #tpu.memory_space<vmem>>, %arg5: memref<1x128xf32, #tpu.memory_space<vmem>>, %arg6: memref<9x128x128xbf16, #tpu.memory_space<vmem>>, %arg7: memref<1x128xf32, #tpu.memory_space<vmem>>, %arg8: memref<1x128xf32, #tpu.memory_space<vmem>>, %arg9: memref<1x3x7x128xbf16, #tpu.memory_space<vmem>>) attributes {dimension_semantics = [#tpu.dimension_semantics<parallel>, #tpu.dimension_semantics<parallel>], iteration_bounds = array<i64: 2, 3>, scalar_prefetch = 0 : i64, scratch_operands = 0 : i64, tpu.core_type = #tpu.core_type<tc>, window_params = [{transform_indices = @transform_0, window_bounds = array<i64: 1, 11, 9, 128>}, {pipeline_mode = #tpu.pipeline_mode<synchronous>, transform_indices = @transform_1, window_bounds = array<i64: 128, 128>}, {pipeline_mode = #tpu.pipeline_mode<synchronous>, transform_indices = @transform_2, window_bounds = array<i64: 1, 128>}, {pipeline_mode = #tpu.pipeline_mode<synchronous>, transform_indices = @transform_3, window_bounds = array<i64: 1, 128>}, {pipeline_mode = #tpu.pipeline_mode<synchronous>, transform_indices = @transform_4, window_bounds = array<i64: 9, 128, 128>}, {pipeline_mode = #tpu.pipeline_mode<synchronous>, transform_indices = @transform_5, window_bounds = array<i64: 1, 128>}, {pipeline_mode = #tpu.pipeline_mode<synchronous>, transform_indices = @transform_6, window_bounds = array<i64: 1, 128>}, {transform_indices = @transform_7, window_bounds = array<i64: 1, 3, 7, 128>}]} {
    %c3_i32 = arith.constant 3 : i32
    %0 = arith.muli %arg1, %c3_i32 : i32
    %c0 = arith.constant 0 : index
    %1 = arith.index_cast %0 : i32 to index
    %c0_0 = arith.constant 0 : index
    %c0_1 = arith.constant 0 : index
    %2 = vector.load %arg2[%c0, %1, %c0_0, %c0_1] : memref<1x11x9x128xbf16, #tpu.memory_space<vmem>>, vector<1x5x9x128xbf16>
    %3 = vector.shape_cast %2 : vector<1x5x9x128xbf16> to vector<5x9x128xbf16>
    %4 = vector.shape_cast %3 : vector<5x9x128xbf16> to vector<45x128xbf16>
    %c0_2 = arith.constant 0 : index
    %c0_3 = arith.constant 0 : index
    %5 = vector.load %arg3[%c0_2, %c0_3] : memref<128x128xbf16, #tpu.memory_space<vmem>>, vector<128x128xbf16>
    %cst = arith.constant dense<0.000000e+00> : vector<45x128xf32>
    %6 = tpu.matmul %4, %5, %cst {dimension_numbers = #tpu.dot_dimension_numbers<[1], [0], [0], [1], [0, 0, 1, 1], [], []>} : vector<45x128xbf16>, vector<128x128xbf16>, vector<45x128xf32> -> vector<45x128xf32>
    %c0_4 = arith.constant 0 : index
    %c0_5 = arith.constant 0 : index
    %7 = vector.load %arg4[%c0_4, %c0_5] : memref<1x128xf32, #tpu.memory_space<vmem>>, vector<1x128xf32>
    %8 = vector.broadcast %7 : vector<1x128xf32> to vector<45x128xf32>
    %9 = arith.mulf %6, %8 : vector<45x128xf32>
    %c0_6 = arith.constant 0 : index
    %c0_7 = arith.constant 0 : index
    %10 = vector.load %arg5[%c0_6, %c0_7] : memref<1x128xf32, #tpu.memory_space<vmem>>, vector<1x128xf32>
    %11 = vector.broadcast %10 : vector<1x128xf32> to vector<45x128xf32>
    %12 = arith.addf %9, %11 : vector<45x128xf32>
    %cst_8 = arith.constant 2.000000e+01 : f32
    %13 = vector.broadcast %cst_8 : f32 to vector<45x128xf32>
    %14 = arith.minimumf %12, %13 : vector<45x128xf32>
    %15 = math.exp %14 : vector<45x128xf32>
    %cst_9 = arith.constant 1.000000e+00 : f32
    %16 = vector.broadcast %cst_9 : f32 to vector<45x128xf32>
    %17 = arith.addf %16, %15 : vector<45x128xf32>
    %18 = arith.mulf %17, %17 : vector<45x128xf32>
    %cst_10 = arith.constant 1.000000e+00 : f32
    %19 = vector.broadcast %cst_10 : f32 to vector<45x128xf32>
    %20 = arith.addf %18, %19 : vector<45x128xf32>
    %21 = tpu.reciprocal %20 {approx = true} : vector<45x128xf32> -> vector<45x128xf32>
    %22 = arith.mulf %20, %21 : vector<45x128xf32>
    %cst_11 = arith.constant 2.000000e+00 : f32
    %23 = vector.broadcast %cst_11 : f32 to vector<45x128xf32>
    %24 = arith.subf %23, %22 : vector<45x128xf32>
    %25 = arith.mulf %21, %24 : vector<45x128xf32>
    %cst_12 = arith.constant 1.000000e+00 : f32
    %26 = vector.broadcast %cst_12 : f32 to vector<45x128xf32>
    %27 = arith.subf %18, %26 : vector<45x128xf32>
    %28 = arith.mulf %12, %27 : vector<45x128xf32>
    %29 = arith.mulf %28, %25 : vector<45x128xf32>
    %30 = vector.shape_cast %29 : vector<45x128xf32> to vector<5x9x128xf32>
    %31 = tpu.iota {dimensions = array<i32: 0>} : vector<5x9x1xi32>
    %32 = vector.broadcast %0 : i32 to vector<5x9x1xi32>
    %33 = arith.addi %32, %31 : vector<5x9x1xi32>
    %34 = tpu.iota {dimensions = array<i32: 1>} : vector<5x9x1xi32>
    %c1_i32 = arith.constant 1 : i32
    %35 = vector.broadcast %c1_i32 : i32 to vector<5x9x1xi32>
    %36 = arith.cmpi sge, %33, %35 : vector<5x9x1xi32>
    %c7_i32 = arith.constant 7 : i32
    %37 = vector.broadcast %c7_i32 : i32 to vector<5x9x1xi32>
    %38 = arith.cmpi sle, %33, %37 : vector<5x9x1xi32>
    %39 = arith.andi %36, %38 : vector<5x9x1xi1>
    %c1_i32_13 = arith.constant 1 : i32
    %40 = vector.broadcast %c1_i32_13 : i32 to vector<5x9x1xi32>
    %41 = arith.cmpi sge, %34, %40 : vector<5x9x1xi32>
    %42 = arith.andi %39, %41 : vector<5x9x1xi1>
    %c7_i32_14 = arith.constant 7 : i32
    %43 = vector.broadcast %c7_i32_14 : i32 to vector<5x9x1xi32>
    %44 = arith.cmpi sle, %34, %43 : vector<5x9x1xi32>
    %45 = arith.andi %42, %44 : vector<5x9x1xi1>
    %cst_15 = arith.constant 0.000000e+00 : f32
    %46 = vector.shape_cast %45 : vector<5x9x1xi1> to vector<5x9x1xi1>
    %47 = vector.broadcast %46 : vector<5x9x1xi1> to vector<5x9x128xi1>
    %48 = vector.broadcast %cst_15 : f32 to vector<5x9x128xf32>
    %49 = arith.select %47, %30, %48 : vector<5x9x128xi1>, vector<5x9x128xf32>
    %50 = arith.truncf %49 : vector<5x9x128xf32> to vector<5x9x128xbf16>
    %cst_16 = arith.constant 0.000000e+00 : f32
    %51 = vector.broadcast %cst_16 : f32 to vector<21x128xf32>
    %52 = vector.extract_strided_slice %50 {offsets = [0, 0, 0], sizes = [3, 7, 128], strides = [1, 1, 1]} : vector<5x9x128xbf16> to vector<3x7x128xbf16>
    %53 = vector.shape_cast %52 : vector<3x7x128xbf16> to vector<21x128xbf16>
    %c0_17 = arith.constant 0 : index
    %c0_18 = arith.constant 0 : index
    %c0_19 = arith.constant 0 : index
    %54 = vector.load %arg6[%c0_17, %c0_18, %c0_19] : memref<9x128x128xbf16, #tpu.memory_space<vmem>>, vector<1x128x128xbf16>
    %55 = vector.shape_cast %54 : vector<1x128x128xbf16> to vector<128x128xbf16>
    %cst_20 = arith.constant dense<0.000000e+00> : vector<21x128xf32>
    %56 = tpu.matmul %53, %55, %cst_20 {dimension_numbers = #tpu.dot_dimension_numbers<[1], [0], [0], [1], [0, 0, 1, 1], [], []>} : vector<21x128xbf16>, vector<128x128xbf16>, vector<21x128xf32> -> vector<21x128xf32>
    %57 = arith.addf %51, %56 : vector<21x128xf32>
    %58 = vector.extract_strided_slice %50 {offsets = [0, 1, 0], sizes = [3, 7, 128], strides = [1, 1, 1]} : vector<5x9x128xbf16> to vector<3x7x128xbf16>
    %59 = vector.shape_cast %58 : vector<3x7x128xbf16> to vector<21x128xbf16>
    %c1 = arith.constant 1 : index
    %c0_21 = arith.constant 0 : index
    %c0_22 = arith.constant 0 : index
    %60 = vector.load %arg6[%c1, %c0_21, %c0_22] : memref<9x128x128xbf16, #tpu.memory_space<vmem>>, vector<1x128x128xbf16>
    %61 = vector.shape_cast %60 : vector<1x128x128xbf16> to vector<128x128xbf16>
    %cst_23 = arith.constant dense<0.000000e+00> : vector<21x128xf32>
    %62 = tpu.matmul %59, %61, %cst_23 {dimension_numbers = #tpu.dot_dimension_numbers<[1], [0], [0], [1], [0, 0, 1, 1], [], []>} : vector<21x128xbf16>, vector<128x128xbf16>, vector<21x128xf32> -> vector<21x128xf32>
    %63 = arith.addf %57, %62 : vector<21x128xf32>
    %64 = vector.extract_strided_slice %50 {offsets = [0, 2, 0], sizes = [3, 7, 128], strides = [1, 1, 1]} : vector<5x9x128xbf16> to vector<3x7x128xbf16>
    %65 = vector.shape_cast %64 : vector<3x7x128xbf16> to vector<21x128xbf16>
    %c2 = arith.constant 2 : index
    %c0_24 = arith.constant 0 : index
    %c0_25 = arith.constant 0 : index
    %66 = vector.load %arg6[%c2, %c0_24, %c0_25] : memref<9x128x128xbf16, #tpu.memory_space<vmem>>, vector<1x128x128xbf16>
    %67 = vector.shape_cast %66 : vector<1x128x128xbf16> to vector<128x128xbf16>
    %cst_26 = arith.constant dense<0.000000e+00> : vector<21x128xf32>
    %68 = tpu.matmul %65, %67, %cst_26 {dimension_numbers = #tpu.dot_dimension_numbers<[1], [0], [0], [1], [0, 0, 1, 1], [], []>} : vector<21x128xbf16>, vector<128x128xbf16>, vector<21x128xf32> -> vector<21x128xf32>
    %69 = arith.addf %63, %68 : vector<21x128xf32>
    %70 = vector.extract_strided_slice %50 {offsets = [1, 0, 0], sizes = [3, 7, 128], strides = [1, 1, 1]} : vector<5x9x128xbf16> to vector<3x7x128xbf16>
    %71 = vector.shape_cast %70 : vector<3x7x128xbf16> to vector<21x128xbf16>
    %c3 = arith.constant 3 : index
    %c0_27 = arith.constant 0 : index
    %c0_28 = arith.constant 0 : index
    %72 = vector.load %arg6[%c3, %c0_27, %c0_28] : memref<9x128x128xbf16, #tpu.memory_space<vmem>>, vector<1x128x128xbf16>
    %73 = vector.shape_cast %72 : vector<1x128x128xbf16> to vector<128x128xbf16>
    %cst_29 = arith.constant dense<0.000000e+00> : vector<21x128xf32>
    %74 = tpu.matmul %71, %73, %cst_29 {dimension_numbers = #tpu.dot_dimension_numbers<[1], [0], [0], [1], [0, 0, 1, 1], [], []>} : vector<21x128xbf16>, vector<128x128xbf16>, vector<21x128xf32> -> vector<21x128xf32>
    %75 = arith.addf %69, %74 : vector<21x128xf32>
    %76 = vector.extract_strided_slice %50 {offsets = [1, 1, 0], sizes = [3, 7, 128], strides = [1, 1, 1]} : vector<5x9x128xbf16> to vector<3x7x128xbf16>
    %77 = vector.shape_cast %76 : vector<3x7x128xbf16> to vector<21x128xbf16>
    %c4 = arith.constant 4 : index
    %c0_30 = arith.constant 0 : index
    %c0_31 = arith.constant 0 : index
    %78 = vector.load %arg6[%c4, %c0_30, %c0_31] : memref<9x128x128xbf16, #tpu.memory_space<vmem>>, vector<1x128x128xbf16>
    %79 = vector.shape_cast %78 : vector<1x128x128xbf16> to vector<128x128xbf16>
    %cst_32 = arith.constant dense<0.000000e+00> : vector<21x128xf32>
    %80 = tpu.matmul %77, %79, %cst_32 {dimension_numbers = #tpu.dot_dimension_numbers<[1], [0], [0], [1], [0, 0, 1, 1], [], []>} : vector<21x128xbf16>, vector<128x128xbf16>, vector<21x128xf32> -> vector<21x128xf32>
    %81 = arith.addf %75, %80 : vector<21x128xf32>
    %82 = vector.extract_strided_slice %50 {offsets = [1, 2, 0], sizes = [3, 7, 128], strides = [1, 1, 1]} : vector<5x9x128xbf16> to vector<3x7x128xbf16>
    %83 = vector.shape_cast %82 : vector<3x7x128xbf16> to vector<21x128xbf16>
    %c5 = arith.constant 5 : index
    %c0_33 = arith.constant 0 : index
    %c0_34 = arith.constant 0 : index
    %84 = vector.load %arg6[%c5, %c0_33, %c0_34] : memref<9x128x128xbf16, #tpu.memory_space<vmem>>, vector<1x128x128xbf16>
    %85 = vector.shape_cast %84 : vector<1x128x128xbf16> to vector<128x128xbf16>
    %cst_35 = arith.constant dense<0.000000e+00> : vector<21x128xf32>
    %86 = tpu.matmul %83, %85, %cst_35 {dimension_numbers = #tpu.dot_dimension_numbers<[1], [0], [0], [1], [0, 0, 1, 1], [], []>} : vector<21x128xbf16>, vector<128x128xbf16>, vector<21x128xf32> -> vector<21x128xf32>
    %87 = arith.addf %81, %86 : vector<21x128xf32>
    %88 = vector.extract_strided_slice %50 {offsets = [2, 0, 0], sizes = [3, 7, 128], strides = [1, 1, 1]} : vector<5x9x128xbf16> to vector<3x7x128xbf16>
    %89 = vector.shape_cast %88 : vector<3x7x128xbf16> to vector<21x128xbf16>
    %c6 = arith.constant 6 : index
    %c0_36 = arith.constant 0 : index
    %c0_37 = arith.constant 0 : index
    %90 = vector.load %arg6[%c6, %c0_36, %c0_37] : memref<9x128x128xbf16, #tpu.memory_space<vmem>>, vector<1x128x128xbf16>
    %91 = vector.shape_cast %90 : vector<1x128x128xbf16> to vector<128x128xbf16>
    %cst_38 = arith.constant dense<0.000000e+00> : vector<21x128xf32>
    %92 = tpu.matmul %89, %91, %cst_38 {dimension_numbers = #tpu.dot_dimension_numbers<[1], [0], [0], [1], [0, 0, 1, 1], [], []>} : vector<21x128xbf16>, vector<128x128xbf16>, vector<21x128xf32> -> vector<21x128xf32>
    %93 = arith.addf %87, %92 : vector<21x128xf32>
    %94 = vector.extract_strided_slice %50 {offsets = [2, 1, 0], sizes = [3, 7, 128], strides = [1, 1, 1]} : vector<5x9x128xbf16> to vector<3x7x128xbf16>
    %95 = vector.shape_cast %94 : vector<3x7x128xbf16> to vector<21x128xbf16>
    %c7 = arith.constant 7 : index
    %c0_39 = arith.constant 0 : index
    %c0_40 = arith.constant 0 : index
    %96 = vector.load %arg6[%c7, %c0_39, %c0_40] : memref<9x128x128xbf16, #tpu.memory_space<vmem>>, vector<1x128x128xbf16>
    %97 = vector.shape_cast %96 : vector<1x128x128xbf16> to vector<128x128xbf16>
    %cst_41 = arith.constant dense<0.000000e+00> : vector<21x128xf32>
    %98 = tpu.matmul %95, %97, %cst_41 {dimension_numbers = #tpu.dot_dimension_numbers<[1], [0], [0], [1], [0, 0, 1, 1], [], []>} : vector<21x128xbf16>, vector<128x128xbf16>, vector<21x128xf32> -> vector<21x128xf32>
    %99 = arith.addf %93, %98 : vector<21x128xf32>
    %100 = vector.extract_strided_slice %50 {offsets = [2, 2, 0], sizes = [3, 7, 128], strides = [1, 1, 1]} : vector<5x9x128xbf16> to vector<3x7x128xbf16>
    %101 = vector.shape_cast %100 : vector<3x7x128xbf16> to vector<21x128xbf16>
    %c8 = arith.constant 8 : index
    %c0_42 = arith.constant 0 : index
    %c0_43 = arith.constant 0 : index
    %102 = vector.load %arg6[%c8, %c0_42, %c0_43] : memref<9x128x128xbf16, #tpu.memory_space<vmem>>, vector<1x128x128xbf16>
    %103 = vector.shape_cast %102 : vector<1x128x128xbf16> to vector<128x128xbf16>
    %cst_44 = arith.constant dense<0.000000e+00> : vector<21x128xf32>
    %104 = tpu.matmul %101, %103, %cst_44 {dimension_numbers = #tpu.dot_dimension_numbers<[1], [0], [0], [1], [0, 0, 1, 1], [], []>} : vector<21x128xbf16>, vector<128x128xbf16>, vector<21x128xf32> -> vector<21x128xf32>
    %105 = arith.addf %99, %104 : vector<21x128xf32>
    %c0_45 = arith.constant 0 : index
    %c0_46 = arith.constant 0 : index
    %106 = vector.load %arg7[%c0_45, %c0_46] : memref<1x128xf32, #tpu.memory_space<vmem>>, vector<1x128xf32>
    %107 = vector.broadcast %106 : vector<1x128xf32> to vector<21x128xf32>
    %108 = arith.mulf %105, %107 : vector<21x128xf32>
    %c0_47 = arith.constant 0 : index
    %c0_48 = arith.constant 0 : index
    %109 = vector.load %arg8[%c0_47, %c0_48] : memref<1x128xf32, #tpu.memory_space<vmem>>, vector<1x128xf32>
    %110 = vector.broadcast %109 : vector<1x128xf32> to vector<21x128xf32>
    %111 = arith.addf %108, %110 : vector<21x128xf32>
    %cst_49 = arith.constant 2.000000e+01 : f32
    %112 = vector.broadcast %cst_49 : f32 to vector<21x128xf32>
    %113 = arith.minimumf %111, %112 : vector<21x128xf32>
    %114 = math.exp %113 : vector<21x128xf32>
    %cst_50 = arith.constant 1.000000e+00 : f32
    %115 = vector.broadcast %cst_50 : f32 to vector<21x128xf32>
    %116 = arith.addf %115, %114 : vector<21x128xf32>
    %117 = arith.mulf %116, %116 : vector<21x128xf32>
    %cst_51 = arith.constant 1.000000e+00 : f32
    %118 = vector.broadcast %cst_51 : f32 to vector<21x128xf32>
    %119 = arith.addf %117, %118 : vector<21x128xf32>
    %120 = tpu.reciprocal %119 {approx = true} : vector<21x128xf32> -> vector<21x128xf32>
    %121 = arith.mulf %119, %120 : vector<21x128xf32>
    %cst_52 = arith.constant 2.000000e+00 : f32
    %122 = vector.broadcast %cst_52 : f32 to vector<21x128xf32>
    %123 = arith.subf %122, %121 : vector<21x128xf32>
    %124 = arith.mulf %120, %123 : vector<21x128xf32>
    %cst_53 = arith.constant 1.000000e+00 : f32
    %125 = vector.broadcast %cst_53 : f32 to vector<21x128xf32>
    %126 = arith.subf %117, %125 : vector<21x128xf32>
    %127 = arith.mulf %111, %126 : vector<21x128xf32>
    %128 = arith.mulf %127, %124 : vector<21x128xf32>
    %129 = vector.extract_strided_slice %3 {offsets = [1, 1, 0], sizes = [3, 7, 128], strides = [1, 1, 1]} : vector<5x9x128xbf16> to vector<3x7x128xbf16>
    %130 = vector.shape_cast %129 : vector<3x7x128xbf16> to vector<21x128xbf16>
    %131 = arith.extf %130 : vector<21x128xbf16> to vector<21x128xf32>
    %132 = arith.addf %131, %128 : vector<21x128xf32>
    %133 = arith.truncf %132 : vector<21x128xf32> to vector<21x128xbf16>
    %134 = vector.shape_cast %133 : vector<21x128xbf16> to vector<3x7x128xbf16>
    %c0_54 = arith.constant 0 : index
    %c0_55 = arith.constant 0 : index
    %c0_56 = arith.constant 0 : index
    %c0_57 = arith.constant 0 : index
    %135 = vector.load %arg9[%c0_54, %c0_55, %c0_56, %c0_57] : memref<1x3x7x128xbf16, #tpu.memory_space<vmem>>, vector<1x3x7x128xbf16>
    %136 = vector.shape_cast %135 : vector<1x3x7x128xbf16> to vector<3x7x128xbf16>
    %137 = vector.shape_cast %134 : vector<3x7x128xbf16> to vector<1x3x7x128xbf16>
    tpu.vector_store %arg9[%c0_54, %c0_55, %c0_56, %c0_57], %137 {strides = array<i32>} : memref<1x3x7x128xbf16, #tpu.memory_space<vmem>>, vector<1x3x7x128xbf16>,
    return
  }
  func.func @transform_0(%arg0: i32, %arg1: i32) -> (i32, i32, i32, i32) {
    %c0_i32 = arith.constant 0 : i32
    %c0_i32_0 = arith.constant 0 : i32
    %c0_i32_1 = arith.constant 0 : i32
    %c0_i32_2 = arith.constant 0 : i32
    return %arg0, %c0_i32, %c0_i32_0, %c0_i32_1 : i32, i32, i32, i32
  }
  func.func @transform_1(%arg0: i32, %arg1: i32) -> (i32, i32) {
    %c0_i32 = arith.constant 0 : i32
    %c0_i32_0 = arith.constant 0 : i32
    %c0_i32_1 = arith.constant 0 : i32
    return %c0_i32, %c0_i32_0 : i32, i32
  }
  func.func @transform_2(%arg0: i32, %arg1: i32) -> (i32, i32) {
    %c0_i32 = arith.constant 0 : i32
    %c0_i32_0 = arith.constant 0 : i32
    %c0_i32_1 = arith.constant 0 : i32
    return %c0_i32, %c0_i32_0 : i32, i32
  }
  func.func @transform_3(%arg0: i32, %arg1: i32) -> (i32, i32) {
    %c0_i32 = arith.constant 0 : i32
    %c0_i32_0 = arith.constant 0 : i32
    %c0_i32_1 = arith.constant 0 : i32
    return %c0_i32, %c0_i32_0 : i32, i32
  }
  func.func @transform_4(%arg0: i32, %arg1: i32) -> (i32, i32, i32) {
    %c0_i32 = arith.constant 0 : i32
    %c0_i32_0 = arith.constant 0 : i32
    %c0_i32_1 = arith.constant 0 : i32
    %c0_i32_2 = arith.constant 0 : i32
    return %c0_i32, %c0_i32_0, %c0_i32_1 : i32, i32, i32
  }
  func.func @transform_5(%arg0: i32, %arg1: i32) -> (i32, i32) {
    %c0_i32 = arith.constant 0 : i32
    %c0_i32_0 = arith.constant 0 : i32
    %c0_i32_1 = arith.constant 0 : i32
    return %c0_i32, %c0_i32_0 : i32, i32
  }
  func.func @transform_6(%arg0: i32, %arg1: i32) -> (i32, i32) {
    %c0_i32 = arith.constant 0 : i32
    %c0_i32_0 = arith.constant 0 : i32
    %c0_i32_1 = arith.constant 0 : i32
    return %c0_i32, %c0_i32_0 : i32, i32
  }
  func.func @transform_7(%arg0: i32, %arg1: i32) -> (i32, i32, i32, i32) {
    %c0_i32 = arith.constant 0 : i32
    %c0_i32_0 = arith.constant 0 : i32
    %c0_i32_1 = arith.constant 0 : i32
    return %arg0, %arg1, %c0_i32, %c0_i32_0 : i32, i32, i32, i32
  }
}

module attributes {stable_mosaic.version = 11 : i64} {
  func.func @_tail_kernel(%arg0: i32, %arg1: memref<32x128xbf16, #tpu.memory_space<vmem>>, %arg2: memref<32x128xbf16, #tpu.memory_space<vmem>>, %arg3: memref<128x128xbf16, #tpu.memory_space<vmem>>, %arg4: memref<1x128xf32, #tpu.memory_space<vmem>>, %arg5: memref<1x128xf32, #tpu.memory_space<vmem>>, %arg6: memref<128x128xbf16, #tpu.memory_space<vmem>>, %arg7: memref<128x128xbf16, #tpu.memory_space<vmem>>, %arg8: memref<1x128xf32, #tpu.memory_space<vmem>>, %arg9: memref<1x128xf32, #tpu.memory_space<vmem>>, %arg10: memref<32x128xbf16, #tpu.memory_space<vmem>>) attributes {dimension_semantics = [#tpu.dimension_semantics<parallel>], iteration_bounds = array<i64: 4>, scalar_prefetch = 0 : i64, scratch_operands = 0 : i64, tpu.core_type = #tpu.core_type<tc>, window_params = [{transform_indices = @transform_0, window_bounds = array<i64: 32, 128>}, {transform_indices = @transform_1, window_bounds = array<i64: 32, 128>}, {pipeline_mode = #tpu.pipeline_mode<synchronous>, transform_indices = @transform_2, window_bounds = array<i64: 128, 128>}, {pipeline_mode = #tpu.pipeline_mode<synchronous>, transform_indices = @transform_3, window_bounds = array<i64: 1, 128>}, {pipeline_mode = #tpu.pipeline_mode<synchronous>, transform_indices = @transform_4, window_bounds = array<i64: 1, 128>}, {pipeline_mode = #tpu.pipeline_mode<synchronous>, transform_indices = @transform_5, window_bounds = array<i64: 128, 128>}, {pipeline_mode = #tpu.pipeline_mode<synchronous>, transform_indices = @transform_6, window_bounds = array<i64: 128, 128>}, {pipeline_mode = #tpu.pipeline_mode<synchronous>, transform_indices = @transform_7, window_bounds = array<i64: 1, 128>}, {pipeline_mode = #tpu.pipeline_mode<synchronous>, transform_indices = @transform_8, window_bounds = array<i64: 1, 128>}, {transform_indices = @transform_9, window_bounds = array<i64: 32, 128>}]} {
    %c0 = arith.constant 0 : index
    %c0_0 = arith.constant 0 : index
    %0 = vector.load %arg1[%c0, %c0_0] : memref<32x128xbf16, #tpu.memory_space<vmem>>, vector<32x128xbf16>
    %c0_1 = arith.constant 0 : index
    %c0_2 = arith.constant 0 : index
    %1 = vector.load %arg3[%c0_1, %c0_2] : memref<128x128xbf16, #tpu.memory_space<vmem>>, vector<128x128xbf16>
    %cst = arith.constant dense<0.000000e+00> : vector<32x128xf32>
    %2 = tpu.matmul %0, %1, %cst {dimension_numbers = #tpu.dot_dimension_numbers<[1], [0], [0], [1], [0, 0, 1, 1], [], []>} : vector<32x128xbf16>, vector<128x128xbf16>, vector<32x128xf32> -> vector<32x128xf32>
    %c0_3 = arith.constant 0 : index
    %c0_4 = arith.constant 0 : index
    %3 = vector.load %arg4[%c0_3, %c0_4] : memref<1x128xf32, #tpu.memory_space<vmem>>, vector<1x128xf32>
    %4 = vector.broadcast %3 : vector<1x128xf32> to vector<32x128xf32>
    %5 = arith.mulf %2, %4 : vector<32x128xf32>
    %c0_5 = arith.constant 0 : index
    %c0_6 = arith.constant 0 : index
    %6 = vector.load %arg5[%c0_5, %c0_6] : memref<1x128xf32, #tpu.memory_space<vmem>>, vector<1x128xf32>
    %7 = vector.broadcast %6 : vector<1x128xf32> to vector<32x128xf32>
    %8 = arith.addf %5, %7 : vector<32x128xf32>
    %cst_7 = arith.constant 2.000000e+01 : f32
    %9 = vector.broadcast %cst_7 : f32 to vector<32x128xf32>
    %10 = arith.minimumf %8, %9 : vector<32x128xf32>
    %11 = math.exp %10 : vector<32x128xf32>
    %cst_8 = arith.constant 1.000000e+00 : f32
    %12 = vector.broadcast %cst_8 : f32 to vector<32x128xf32>
    %13 = arith.addf %12, %11 : vector<32x128xf32>
    %14 = arith.mulf %13, %13 : vector<32x128xf32>
    %cst_9 = arith.constant 1.000000e+00 : f32
    %15 = vector.broadcast %cst_9 : f32 to vector<32x128xf32>
    %16 = arith.addf %14, %15 : vector<32x128xf32>
    %17 = tpu.reciprocal %16 {approx = true} : vector<32x128xf32> -> vector<32x128xf32>
    %18 = arith.mulf %16, %17 : vector<32x128xf32>
    %cst_10 = arith.constant 2.000000e+00 : f32
    %19 = vector.broadcast %cst_10 : f32 to vector<32x128xf32>
    %20 = arith.subf %19, %18 : vector<32x128xf32>
    %21 = arith.mulf %17, %20 : vector<32x128xf32>
    %cst_11 = arith.constant 1.000000e+00 : f32
    %22 = vector.broadcast %cst_11 : f32 to vector<32x128xf32>
    %23 = arith.subf %14, %22 : vector<32x128xf32>
    %24 = arith.mulf %8, %23 : vector<32x128xf32>
    %25 = arith.mulf %24, %21 : vector<32x128xf32>
    %c0_12 = arith.constant 0 : index
    %c0_13 = arith.constant 0 : index
    %26 = vector.load %arg2[%c0_12, %c0_13] : memref<32x128xbf16, #tpu.memory_space<vmem>>, vector<32x128xbf16>
    %c0_14 = arith.constant 0 : index
    %c0_15 = arith.constant 0 : index
    %27 = vector.load %arg6[%c0_14, %c0_15] : memref<128x128xbf16, #tpu.memory_space<vmem>>, vector<128x128xbf16>
    %cst_16 = arith.constant dense<0.000000e+00> : vector<32x128xf32>
    %28 = tpu.matmul %26, %27, %cst_16 {dimension_numbers = #tpu.dot_dimension_numbers<[1], [0], [0], [1], [0, 0, 1, 1], [], []>} : vector<32x128xbf16>, vector<128x128xbf16>, vector<32x128xf32> -> vector<32x128xf32>
    %29 = arith.truncf %25 : vector<32x128xf32> to vector<32x128xbf16>
    %c0_17 = arith.constant 0 : index
    %c0_18 = arith.constant 0 : index
    %30 = vector.load %arg7[%c0_17, %c0_18] : memref<128x128xbf16, #tpu.memory_space<vmem>>, vector<128x128xbf16>
    %cst_19 = arith.constant dense<0.000000e+00> : vector<32x128xf32>
    %31 = tpu.matmul %29, %30, %cst_19 {dimension_numbers = #tpu.dot_dimension_numbers<[1], [0], [0], [1], [0, 0, 1, 1], [], []>} : vector<32x128xbf16>, vector<128x128xbf16>, vector<32x128xf32> -> vector<32x128xf32>
    %32 = arith.addf %28, %31 : vector<32x128xf32>
    %c0_20 = arith.constant 0 : index
    %c0_21 = arith.constant 0 : index
    %33 = vector.load %arg8[%c0_20, %c0_21] : memref<1x128xf32, #tpu.memory_space<vmem>>, vector<1x128xf32>
    %34 = vector.broadcast %33 : vector<1x128xf32> to vector<32x128xf32>
    %35 = arith.mulf %32, %34 : vector<32x128xf32>
    %c0_22 = arith.constant 0 : index
    %c0_23 = arith.constant 0 : index
    %36 = vector.load %arg9[%c0_22, %c0_23] : memref<1x128xf32, #tpu.memory_space<vmem>>, vector<1x128xf32>
    %37 = vector.broadcast %36 : vector<1x128xf32> to vector<32x128xf32>
    %38 = arith.addf %35, %37 : vector<32x128xf32>
    %cst_24 = arith.constant 2.000000e+01 : f32
    %39 = vector.broadcast %cst_24 : f32 to vector<32x128xf32>
    %40 = arith.minimumf %38, %39 : vector<32x128xf32>
    %41 = math.exp %40 : vector<32x128xf32>
    %cst_25 = arith.constant 1.000000e+00 : f32
    %42 = vector.broadcast %cst_25 : f32 to vector<32x128xf32>
    %43 = arith.addf %42, %41 : vector<32x128xf32>
    %44 = arith.mulf %43, %43 : vector<32x128xf32>
    %cst_26 = arith.constant 1.000000e+00 : f32
    %45 = vector.broadcast %cst_26 : f32 to vector<32x128xf32>
    %46 = arith.addf %44, %45 : vector<32x128xf32>
    %47 = tpu.reciprocal %46 {approx = true} : vector<32x128xf32> -> vector<32x128xf32>
    %48 = arith.mulf %46, %47 : vector<32x128xf32>
    %cst_27 = arith.constant 2.000000e+00 : f32
    %49 = vector.broadcast %cst_27 : f32 to vector<32x128xf32>
    %50 = arith.subf %49, %48 : vector<32x128xf32>
    %51 = arith.mulf %47, %50 : vector<32x128xf32>
    %cst_28 = arith.constant 1.000000e+00 : f32
    %52 = vector.broadcast %cst_28 : f32 to vector<32x128xf32>
    %53 = arith.subf %44, %52 : vector<32x128xf32>
    %54 = arith.mulf %38, %53 : vector<32x128xf32>
    %55 = arith.mulf %54, %51 : vector<32x128xf32>
    %56 = arith.truncf %55 : vector<32x128xf32> to vector<32x128xbf16>
    %c0_29 = arith.constant 0 : index
    %c0_30 = arith.constant 0 : index
    %57 = vector.load %arg10[%c0_29, %c0_30] : memref<32x128xbf16, #tpu.memory_space<vmem>>, vector<32x128xbf16>
    tpu.vector_store %arg10[%c0_29, %c0_30], %56 {strides = array<i32>} : memref<32x128xbf16, #tpu.memory_space<vmem>>, vector<32x128xbf16>,
    return
  }
  func.func @transform_0(%arg0: i32) -> (i32, i32) {
    %c0_i32 = arith.constant 0 : i32
    %c0_i32_0 = arith.constant 0 : i32
    return %arg0, %c0_i32 : i32, i32
  }
  func.func @transform_1(%arg0: i32) -> (i32, i32) {
    %c0_i32 = arith.constant 0 : i32
    %c0_i32_0 = arith.constant 0 : i32
    return %arg0, %c0_i32 : i32, i32
  }
  func.func @transform_2(%arg0: i32) -> (i32, i32) {
    %c0_i32 = arith.constant 0 : i32
    %c0_i32_0 = arith.constant 0 : i32
    %c0_i32_1 = arith.constant 0 : i32
    return %c0_i32, %c0_i32_0 : i32, i32
  }
  func.func @transform_3(%arg0: i32) -> (i32, i32) {
    %c0_i32 = arith.constant 0 : i32
    %c0_i32_0 = arith.constant 0 : i32
    %c0_i32_1 = arith.constant 0 : i32
    return %c0_i32, %c0_i32_0 : i32, i32
  }
  func.func @transform_4(%arg0: i32) -> (i32, i32) {
    %c0_i32 = arith.constant 0 : i32
    %c0_i32_0 = arith.constant 0 : i32
    %c0_i32_1 = arith.constant 0 : i32
    return %c0_i32, %c0_i32_0 : i32, i32
  }
  func.func @transform_5(%arg0: i32) -> (i32, i32) {
    %c0_i32 = arith.constant 0 : i32
    %c0_i32_0 = arith.constant 0 : i32
    %c0_i32_1 = arith.constant 0 : i32
    return %c0_i32, %c0_i32_0 : i32, i32
  }
  func.func @transform_6(%arg0: i32) -> (i32, i32) {
    %c0_i32 = arith.constant 0 : i32
    %c0_i32_0 = arith.constant 0 : i32
    %c0_i32_1 = arith.constant 0 : i32
    return %c0_i32, %c0_i32_0 : i32, i32
  }
  func.func @transform_7(%arg0: i32) -> (i32, i32) {
    %c0_i32 = arith.constant 0 : i32
    %c0_i32_0 = arith.constant 0 : i32
    %c0_i32_1 = arith.constant 0 : i32
    return %c0_i32, %c0_i32_0 : i32, i32
  }
  func.func @transform_8(%arg0: i32) -> (i32, i32) {
    %c0_i32 = arith.constant 0 : i32
    %c0_i32_0 = arith.constant 0 : i32
    %c0_i32_1 = arith.constant 0 : i32
    return %c0_i32, %c0_i32_0 : i32, i32
  }
  func.func @transform_9(%arg0: i32) -> (i32, i32) {
    %c0_i32 = arith.constant 0 : i32
    %c0_i32_0 = arith.constant 0 : i32
    return %arg0, %c0_i32 : i32, i32
  }
}

</mosaic_0001>

<llo_original>
// kernel: tpu_custom_call.1
$region0: #{tpu_custom_call.1}
  #allocation0 [shape = 'u32[]', space=smem, size = 0x4, offset = 0x4, fixed_abs, tag = 'smem constant byte address 0x4 - core index']
  #allocation1 [shape = 'u32[144,128]{1,0:T(1,128)}', space=vmem, size = 0x12000, scoped, tag = 'internal scratch']
  %s0 = inlined_call_operand.hbm [shape: f32[16,128], index: 0, kind: input, shape index: {}]
  %s1 = inlined_call_operand.hbm [shape: f32[8,128], index: 1, kind: input, shape index: {}]
  %s2 = inlined_call_operand.hbm [shape: f32[16,128], index: 2, kind: output, shape index: {}]
  %s3 = sld [smem:[#allocation0]]
  $region49: #{tpu_custom_call.1} parent=0
    _
  %s5 = ssub.s32 1, %s3
  %s6 = scalar_select 0, %s5, %s3
  $region1: #{tpu_custom_call.1} parent=0
    #allocation2 [shape = 'u8[8192]{0}', space=vmem, size = 0x2000, scoped, tag = 'input window, operand 0']
    #allocation3 [shape = 's32[2]{0}', space=sflag, size = 0x8, scoped, tag = 'scoped memory for tpu_custom_call.1']
    #allocation4 [shape = 's32[2]{0}', space=sflag, size = 0x8, scoped, tag = 'scoped memory for tpu_custom_call.1']
    #allocation5 [shape = 'u8[4096]{0}', space=vmem, size = 0x1000, scoped, tag = 'input window, operand 1, single buffered']
    #allocation6 [shape = 's32[1]{0}', space=sflag, size = 0x4, scoped, tag = 'scoped memory for tpu_custom_call.1']
    #allocation7 [shape = 'u8[8192]{0}', space=vmem, size = 0x2000, scoped, tag = 'output window, operand 0']
    %7 = vsyncpa [#allocation3], 0
    %s8 = scalar_lea.sflag [#allocation3], 1
    %9 = vsyncpa %s8, 0
    %10 = vsyncpa [#allocation6], 0
    %11 = vsyncpa [#allocation4], 0
    %s12 = scalar_lea.sflag [#allocation4], 1
    %13 = vsyncpa %s12, 0
    loop: start=0, step=1, limit=4
    $region2: #{tpu_custom_call.1} parent=1 // loop_pre_header
      _
    $region3: #{tpu_custom_call.1} parent=1 // loop_header
      %s15 = sphi 0, %s19
      %p16 = scmp.ge.s32.totalorder %s15, 4
      %s25 = sphi 0, %s27
      %s28 = sphi 0, %s25
      %s29 = sphi 0, %s28
      %s45 = sphi 0, %s29
      %s49 = sphi 0, %s49
      %s51 = sphi 0, %s49
      %s52 = sphi 0, %s51
      %s66 = sphi 0, %s52
      %s72 = sphi 0, %s74
      %s75 = sphi 0, %s72
      %s76 = sphi 0, %s75
      %s92 = sphi 0, %s76
    $region4: #{tpu_custom_call.1} parent=1 // loop_header_branch
      %18 = sbr.rel (%p16) target = $region8
    $region5: #{tpu_custom_call.1} parent=1 // loop_body
      %s20 = ssub.s32 %s15, 1
      %s21 = ssub.s32 %s15, 2
      %s22 = sadd.s32 %s15, 1
      %s23 = ssub.s32 %s15, %s22
      %p24 = scmp.eq.s32.totalorder %s23, 0
      %s26 = sadd.s32 %s25, 1
      %s27 = scalar_select %p24, %s25, %s26
      %p30 = pneg %p24
      %p31 = scmp.eq.s32.totalorder %s15, 1
      %p32 = por %p30, %p31
      %p33 = scmp.ne.s32.totalorder %s25, %s28
      %p34 = scmp.eq.s32.totalorder %s15, 0
      %p35 = por %p33, %p34
      %p36 = scmp.ne.s32.totalorder %s25, %s28
      %p37 = scmp.eq.s32.totalorder %s20, 1
      %p38 = por %p36, %p37
      %p39 = scmp.ne.s32.totalorder %s28, %s29
      %p40 = scmp.eq.s32.totalorder %s20, 0
      %p41 = por %p39, %p40
      %p42 = scmp.ne.s32.totalorder %s28, %s29
      %p43 = scmp.eq.s32.totalorder %s21, 1
      %p44 = por %p42, %p43
      %p46 = scmp.ne.s32.totalorder %s29, %s45
      %p47 = scmp.eq.s32.totalorder %s21, 0
      %p48 = por %p46, %p47
      %s50 = sadd.s32 %s49, 1
      %p53 = scmp.eq.s32.totalorder %s15, 1
      %p54 = scmp.ne.s32.totalorder %s49, %s51
      %p55 = scmp.eq.s32.totalorder %s15, 0
      %p56 = por %p54, %p55
      %p57 = scmp.ne.s32.totalorder %s49, %s51
      %p58 = scmp.eq.s32.totalorder %s20, 1
      %p59 = por %p57, %p58
      %p60 = scmp.ne.s32.totalorder %s51, %s52
      %p61 = scmp.eq.s32.totalorder %s20, 0
      %p62 = por %p60, %p61
      %p63 = scmp.ne.s32.totalorder %s51, %s52
      %p64 = scmp.eq.s32.totalorder %s21, 1
      %p65 = por %p63, %p64
      %p67 = scmp.ne.s32.totalorder %s52, %s66
      %p68 = scmp.eq.s32.totalorder %s21, 0
      %p69 = por %p67, %p68
      %s70 = ssub.s32 %s15, %s22
      %p71 = scmp.eq.s32.totalorder %s70, 0
      %s73 = sadd.s32 %s72, 1
      %s74 = scalar_select %p71, %s72, %s73
      %p77 = pneg %p71
      %p78 = scmp.eq.s32.totalorder %s15, 1
      %p79 = por %p77, %p78
      %p80 = scmp.ne.s32.totalorder %s72, %s75
      %p81 = scmp.eq.s32.totalorder %s15, 0
      %p82 = por %p80, %p81
      %p83 = scmp.ne.s32.totalorder %s72, %s75
      %p84 = scmp.eq.s32.totalorder %s20, 1
      %p85 = por %p83, %p84
      %p86 = scmp.ne.s32.totalorder %s75, %s76
      %p87 = scmp.eq.s32.totalorder %s20, 0
      %p88 = por %p86, %p87
      %p89 = scmp.ne.s32.totalorder %s75, %s76
      %p90 = scmp.eq.s32.totalorder %s21, 1
      %p91 = por %p89, %p90
      %p93 = scmp.ne.s32.totalorder %s76, %s92
      %p94 = scmp.eq.s32.totalorder %s21, 0
      %p95 = por %p93, %p94
      %p96 = scmp.le.s32.totalorder 1, %s15
      %p97 = scmp.lt.s32.totalorder %s15, 3
      %p98 = pnand %p96, %p97
      %p99 = pneg %p98
      // Predicated region
      $region9: #{tpu_custom_call.1} parent=5 // pred_check
        _
      $region10: #{tpu_custom_call.1} parent=5 // pred_check_branch
        %101 = sbr.rel (%p98) target = $region12
      $region11: #{tpu_custom_call.1} parent=5 // pred_region
        %s102 = ssub.s32 %s15, 1
        // Predicated region
        $region13: #{tpu_custom_call.1} parent=11 // pred_check
          %p103 = pneg %p62
        $region14: #{tpu_custom_call.1} parent=11 // pred_check_branch
          %105 = sbr.rel (%p103) target = $region16
        $region15: #{tpu_custom_call.1} parent=11 // pred_region
          %s107 = ssub.s32 128, 128
          %108 = vsyncadd [#allocation6], %s107
          %s110 = sshll.u32 [#allocation5], 4
          %s111 = int_to_ptr.vmem [resolvable:$true] %s110
          %113 = dma.hbm_to_vmem [thread:$0]  %s1, 128, %s111, [#allocation6]
        $region16: #{tpu_custom_call.1} parent=11 // pred_fallthru
          _
      $region12: #{tpu_custom_call.1} parent=5 // pred_fallthru
        _
      %p114 = scmp.lt.s32.totalorder %s15, 2
      // Predicated region
      $region17: #{tpu_custom_call.1} parent=5 // pred_check
        %p115 = pneg %p114
      $region18: #{tpu_custom_call.1} parent=5 // pred_check_branch
        %117 = sbr.rel (%p115) target = $region20
      $region19: #{tpu_custom_call.1} parent=5 // pred_region
        // Predicated region
        $region21: #{tpu_custom_call.1} parent=19 // pred_check
          %p118 = pneg %p35
        $region22: #{tpu_custom_call.1} parent=19 // pred_check_branch
          %120 = sbr.rel (%p118) target = $region24
        $region23: #{tpu_custom_call.1} parent=19 // pred_region
          %s121 = sand.u32 %s25, 1
          %s122 = scalar_lea.sflag [#allocation3], %s121
          %s123 = sand.u32 %s25, 1
          %s124 = smul.addr %s123, 8
          %s125 = scalar_lea.vmem [#allocation2], %s124
          %s127 = ssub.s32 128, 128
          %128 = vsyncadd %s122, %s127
          %s129 = smul.addr %s15, 128
          %s130 = scalar_lea.hbm %s0, %s129
          %s132 = sshll.u32 %s125, 4
          %s133 = int_to_ptr.vmem [resolvable:$true] %s132
          %135 = dma.hbm_to_vmem [thread:$0]  %s130, 128, %s133, %s122
        $region24: #{tpu_custom_call.1} parent=19 // pred_fallthru
          _
      $region20: #{tpu_custom_call.1} parent=5 // pred_fallthru
        _
      %p136 = scmp.le.s32.totalorder 1, %s15
      %p137 = scmp.lt.s32.totalorder %s15, 3
      %p138 = pnand %p136, %p137
      %p139 = pneg %p138
      // Predicated region
      $region25: #{tpu_custom_call.1} parent=5 // pred_check
        _
      $region26: #{tpu_custom_call.1} parent=5 // pred_check_branch
        %141 = sbr.rel (%p138) target = $region28
      $region27: #{tpu_custom_call.1} parent=5 // pred_region
        %s142 = ssub.s32 %s15, 1
        %s143 = sand.u32 %s28, 1
        %s144 = scalar_lea.sflag [#allocation3], %s143
        %s145 = sand.u32 %s28, 1
        %s146 = smul.addr %s145, 8
        %s147 = scalar_lea.vmem [#allocation2], %s146
        // Predicated region
        $region29: #{tpu_custom_call.1} parent=27 // pred_check
          %p148 = pneg %p41
        $region30: #{tpu_custom_call.1} parent=27 // pred_check_branch
          %150 = sbr.rel (%p148) target = $region32
        $region31: #{tpu_custom_call.1} parent=27 // pred_region
          %151 = dma.done %s144, 128
        $region32: #{tpu_custom_call.1} parent=27 // pred_fallthru
          _
        // Predicated region
        $region33: #{tpu_custom_call.1} parent=27 // pred_check
          %p152 = pneg %p62
        $region34: #{tpu_custom_call.1} parent=27 // pred_check_branch
          %154 = sbr.rel (%p152) target = $region36
        $region35: #{tpu_custom_call.1} parent=27 // pred_region
          %155 = dma.done [#allocation6], 128
        $region36: #{tpu_custom_call.1} parent=27 // pred_fallthru
          _
        %s156 = sand.u32 %s28, 1
        %s157 = scalar_lea.sflag [#allocation3], %s156
        %s158 = sand.u32 %s28, 1
        %s159 = smul.addr %s158, 8
        %s160 = scalar_lea.vmem [#allocation2], %s159
        %p161 = pneg %p41
        %p162 = pneg %p38
        %p163 = pneg %p62
        %p164 = pneg %p59
        %p165 = pneg %p88
        %p166 = pneg %p85
        %s167 = sand.u32 %s75, 1
        %s168 = scalar_lea.sflag [#allocation4], %s167
        %s169 = sand.u32 %s75, 1
        %s170 = smul.addr %s169, 8
        %s171 = scalar_lea.vmem [#allocation7], %s170
        %v172 = vld [vmem:[%s147] sm:$0xff]
        %v173 = vld [vmem:[#allocation5] sm:$0xff]
        %v174 = vadd.f32 %v172, %v173
        %175 = vst [vmem:[%s171] sm:$0xff] %v174
        %s176 = sand.u32 %s75, 1
        %s177 = scalar_lea.sflag [#allocation4], %s176
        %s178 = sand.u32 %s75, 1
        %s179 = smul.addr %s178, 8
        %s180 = scalar_lea.vmem [#allocation7], %s179
        // Predicated region
        $region37: #{tpu_custom_call.1} parent=27 // pred_check
          %p181 = pneg %p85
        $region38: #{tpu_custom_call.1} parent=27 // pred_check_branch
          %183 = sbr.rel (%p181) target = $region40
        $region39: #{tpu_custom_call.1} parent=27 // pred_region
          %s185 = ssub.s32 128, 128
          %186 = vsyncadd %s177, %s185
          %s187 = smul.addr %s20, 128
          %s188 = scalar_lea.hbm %s2, %s187
          %s190 = sshll.u32 %s180, 4
          %s191 = int_to_ptr.vmem [resolvable:$true] %s190
          %193 = dma.vmem_to_hbm [thread:$0]  %s191, 128, %s188, %s177
        $region40: #{tpu_custom_call.1} parent=27 // pred_fallthru
          _
      $region28: #{tpu_custom_call.1} parent=5 // pred_fallthru
        _
      %p194 = scmp.le.s32.totalorder 2, %s15
      // Predicated region
      $region41: #{tpu_custom_call.1} parent=5 // pred_check
        %p195 = pneg %p194
      $region42: #{tpu_custom_call.1} parent=5 // pred_check_branch
        %197 = sbr.rel (%p195) target = $region44
      $region43: #{tpu_custom_call.1} parent=5 // pred_region
        %s198 = ssub.s32 %s15, 2
        // Predicated region
        $region45: #{tpu_custom_call.1} parent=43 // pred_check
          %p199 = pneg %p91
        $region46: #{tpu_custom_call.1} parent=43 // pred_check_branch
          %201 = sbr.rel (%p199) target = $region48
        $region47: #{tpu_custom_call.1} parent=43 // pred_region
          %s202 = sand.u32 %s76, 1
          %s203 = scalar_lea.sflag [#allocation4], %s202
          %s204 = sand.u32 %s76, 1
          %s205 = smul.addr %s204, 8
          %s206 = scalar_lea.vmem [#allocation7], %s205
          %207 = dma.done %s203, 128
        $region48: #{tpu_custom_call.1} parent=43 // pred_fallthru
          _
      $region44: #{tpu_custom_call.1} parent=5 // pred_fallthru
        _
    $region6: #{tpu_custom_call.1} parent=1 // loop_footer
      %s19 = sadd.s32 1, %s15
    $region7: #{tpu_custom_call.1} parent=1 // loop_footer_branch
      %14 = sbr.rel target = $region3
    $region8: #{tpu_custom_call.1} parent=1 // loop_exit
      _
    %208 = vsyncpa [#allocation3], 1
    %s209 = scalar_lea.sflag [#allocation3], 1
    %210 = vsyncpa %s209, 1
    %211 = vsyncpa [#allocation6], 1
    %212 = vsyncpa [#allocation4], 1
    %s213 = scalar_lea.sflag [#allocation4], 1
    %214 = vsyncpa %s213, 1

// kernel: cspstage_forward.4
$region0: #{cspstage_forward.4}
  #allocation0 [shape = 'u32[]', space=smem, size = 0x4, offset = 0x4, fixed_abs, tag = 'smem constant byte address 0x4 - core index']
  #allocation1 [shape = 'u32[144,128]{1,0:T(1,128)}', space=vmem, size = 0x12000, scoped, tag = 'internal scratch']
  %s0 = inlined_call_operand.vmem [shape: bf16[128,1152], index: 0, kind: input, shape index: {}]
  %s1 = inlined_call_operand.vmem [shape: bf16[1152,128], index: 1, kind: input, shape index: {}]
  %s2 = inlined_call_operand.vmem [shape: f32[1,128], index: 2, kind: input, shape index: {}]
  %s3 = inlined_call_operand.vmem [shape: f32[1,128], index: 3, kind: input, shape index: {}]
  %s4 = inlined_call_operand.vmem [shape: bf16[128,256], index: 4, kind: input, shape index: {}]
  %s5 = inlined_call_operand.vmem [shape: f32[1,256], index: 5, kind: input, shape index: {}]
  %s6 = inlined_call_operand.vmem [shape: f32[1,256], index: 6, kind: input, shape index: {}]
  %s7 = inlined_call_operand.vmem [shape: bf16[128,128], index: 7, kind: output, shape index: {0}]
  %s8 = inlined_call_operand.vmem [shape: bf16[128,128], index: 8, kind: output, shape index: {1}]
  %9 = xla_tuple %s7, %s8
  %s10 = sld [smem:[#allocation0]]
  $region69: #{cspstage_forward.4} parent=0
    _
  %s12 = ssub.s32 1, %s10
  %s13 = scalar_select 0, %s12, %s10
  loop: start=0, step=1, limit=6
  $region2: #{cspstage_forward.4} parent=0 // loop_pre_header
    _
  $region3: #{cspstage_forward.4} parent=0 // loop_header
    %s15 = sphi 0, %s19
    %p16 = scmp.ge.s32.totalorder %s15, 6
    %s25 = sphi 0, %s27
    %s28 = sphi 0, %s25
    %s29 = sphi 0, %s28
    %s45 = sphi 0, %s29
    %s49 = sphi 0, %s49
    %s51 = sphi 0, %s49
    %s52 = sphi 0, %s51
    %s66 = sphi 0, %s52
    %s70 = sphi 0, %s70
    %s72 = sphi 0, %s70
    %s73 = sphi 0, %s72
    %s87 = sphi 0, %s73
    %s91 = sphi 0, %s91
    %s93 = sphi 0, %s91
    %s94 = sphi 0, %s93
    %s108 = sphi 0, %s94
    %s112 = sphi 0, %s112
    %s114 = sphi 0, %s112
    %s115 = sphi 0, %s114
    %s129 = sphi 0, %s115
    %s133 = sphi 0, %s133
    %s135 = sphi 0, %s133
    %s136 = sphi 0, %s135
    %s150 = sphi 0, %s136
    %s154 = sphi 0, %s154
    %s156 = sphi 0, %s154
    %s157 = sphi 0, %s156
    %s171 = sphi 0, %s157
    %s177 = sphi 0, %s179
    %s180 = sphi 0, %s177
    %s181 = sphi 0, %s180
    %s197 = sphi 0, %s181
    %s203 = sphi 0, %s205
    %s206 = sphi 0, %s203
    %s207 = sphi 0, %s206
    %s223 = sphi 0, %s207
  $region4: #{cspstage_forward.4} parent=0 // loop_header_branch
    %18 = sbr.rel (%p16) target = $region8
  $region5: #{cspstage_forward.4} parent=0 // loop_body
    %s20 = ssub.s32 %s15, 1
    %s21 = ssub.s32 %s15, 2
    %s22 = sadd.s32 %s15, 1
    %s23 = ssub.s32 %s15, %s22
    %p24 = scmp.eq.s32.totalorder %s23, 0
    %s26 = sadd.s32 %s25, 1
    %s27 = scalar_select %p24, %s25, %s26
    %p30 = pneg %p24
    %p31 = scmp.eq.s32.totalorder %s15, 3
    %p32 = por %p30, %p31
    %p33 = scmp.ne.s32.totalorder %s25, %s28
    %p34 = scmp.eq.s32.totalorder %s15, 0
    %p35 = por %p33, %p34
    %p36 = scmp.ne.s32.totalorder %s25, %s28
    %p37 = scmp.eq.s32.totalorder %s20, 3
    %p38 = por %p36, %p37
    %p39 = scmp.ne.s32.totalorder %s28, %s29
    %p40 = scmp.eq.s32.totalorder %s20, 0
    %p41 = por %p39, %p40
    %p42 = scmp.ne.s32.totalorder %s28, %s29
    %p43 = scmp.eq.s32.totalorder %s21, 3
    %p44 = por %p42, %p43
    %p46 = scmp.ne.s32.totalorder %s29, %s45
    %p47 = scmp.eq.s32.totalorder %s21, 0
    %p48 = por %p46, %p47
    %s50 = sadd.s32 %s49, 1
    %p53 = scmp.eq.s32.totalorder %s15, 3
    %p54 = scmp.ne.s32.totalorder %s49, %s51
    %p55 = scmp.eq.s32.totalorder %s15, 0
    %p56 = por %p54, %p55
    %p57 = scmp.ne.s32.totalorder %s49, %s51
    %p58 = scmp.eq.s32.totalorder %s20, 3
    %p59 = por %p57, %p58
    %p60 = scmp.ne.s32.totalorder %s51, %s52
    %p61 = scmp.eq.s32.totalorder %s20, 0
    %p62 = por %p60, %p61
    %p63 = scmp.ne.s32.totalorder %s51, %s52
    %p64 = scmp.eq.s32.totalorder %s21, 3
    %p65 = por %p63, %p64
    %p67 = scmp.ne.s32.totalorder %s52, %s66
    %p68 = scmp.eq.s32.totalorder %s21, 0
    %p69 = por %p67, %p68
    %s71 = sadd.s32 %s70, 1
    %p74 = scmp.eq.s32.totalorder %s15, 3
    %p75 = scmp.ne.s32.totalorder %s70, %s72
    %p76 = scmp.eq.s32.totalorder %s15, 0
    %p77 = por %p75, %p76
    %p78 = scmp.ne.s32.totalorder %s70, %s72
    %p79 = scmp.eq.s32.totalorder %s20, 3
    %p80 = por %p78, %p79
    %p81 = scmp.ne.s32.totalorder %s72, %s73
    %p82 = scmp.eq.s32.totalorder %s20, 0
    %p83 = por %p81, %p82
    %p84 = scmp.ne.s32.totalorder %s72, %s73
    %p85 = scmp.eq.s32.totalorder %s21, 3
    %p86 = por %p84, %p85
    %p88 = scmp.ne.s32.totalorder %s73, %s87
    %p89 = scmp.eq.s32.totalorder %s21, 0
    %p90 = por %p88, %p89
    %s92 = sadd.s32 %s91, 1
    %p95 = scmp.eq.s32.totalorder %s15, 3
    %p96 = scmp.ne.s32.totalorder %s91, %s93
    %p97 = scmp.eq.s32.totalorder %s15, 0
    %p98 = por %p96, %p97
    %p99 = scmp.ne.s32.totalorder %s91, %s93
    %p100 = scmp.eq.s32.totalorder %s20, 3
    %p101 = por %p99, %p100
    %p102 = scmp.ne.s32.totalorder %s93, %s94
    %p103 = scmp.eq.s32.totalorder %s20, 0
    %p104 = por %p102, %p103
    %p105 = scmp.ne.s32.totalorder %s93, %s94
    %p106 = scmp.eq.s32.totalorder %s21, 3
    %p107 = por %p105, %p106
    %p109 = scmp.ne.s32.totalorder %s94, %s108
    %p110 = scmp.eq.s32.totalorder %s21, 0
    %p111 = por %p109, %p110
    %s113 = sadd.s32 %s112, 1
    %p116 = scmp.eq.s32.totalorder %s15, 3
    %p117 = scmp.ne.s32.totalorder %s112, %s114
    %p118 = scmp.eq.s32.totalorder %s15, 0
    %p119 = por %p117, %p118
    %p120 = scmp.ne.s32.totalorder %s112, %s114
    %p121 = scmp.eq.s32.totalorder %s20, 3
    %p122 = por %p120, %p121
    %p123 = scmp.ne.s32.totalorder %s114, %s115
    %p124 = scmp.eq.s32.totalorder %s20, 0
    %p125 = por %p123, %p124
    %p126 = scmp.ne.s32.totalorder %s114, %s115
    %p127 = scmp.eq.s32.totalorder %s21, 3
    %p128 = por %p126, %p127
    %p130 = scmp.ne.s32.totalorder %s115, %s129
    %p131 = scmp.eq.s32.totalorder %s21, 0
    %p132 = por %p130, %p131
    %s134 = sadd.s32 %s133, 1
    %p137 = scmp.eq.s32.totalorder %s15, 3
    %p138 = scmp.ne.s32.totalorder %s133, %s135
    %p139 = scmp.eq.s32.totalorder %s15, 0
    %p140 = por %p138, %p139
    %p141 = scmp.ne.s32.totalorder %s133, %s135
    %p142 = scmp.eq.s32.totalorder %s20, 3
    %p143 = por %p141, %p142
    %p144 = scmp.ne.s32.totalorder %s135, %s136
    %p145 = scmp.eq.s32.totalorder %s20, 0
    %p146 = por %p144, %p145
    %p147 = scmp.ne.s32.totalorder %s135, %s136
    %p148 = scmp.eq.s32.totalorder %s21, 3
    %p149 = por %p147, %p148
    %p151 = scmp.ne.s32.totalorder %s136, %s150
    %p152 = scmp.eq.s32.totalorder %s21, 0
    %p153 = por %p151, %p152
    %s155 = sadd.s32 %s154, 1
    %p158 = scmp.eq.s32.totalorder %s15, 3
    %p159 = scmp.ne.s32.totalorder %s154, %s156
    %p160 = scmp.eq.s32.totalorder %s15, 0
    %p161 = por %p159, %p160
    %p162 = scmp.ne.s32.totalorder %s154, %s156
    %p163 = scmp.eq.s32.totalorder %s20, 3
    %p164 = por %p162, %p163
    %p165 = scmp.ne.s32.totalorder %s156, %s157
    %p166 = scmp.eq.s32.totalorder %s20, 0
    %p167 = por %p165, %p166
    %p168 = scmp.ne.s32.totalorder %s156, %s157
    %p169 = scmp.eq.s32.totalorder %s21, 3
    %p170 = por %p168, %p169
    %p172 = scmp.ne.s32.totalorder %s157, %s171
    %p173 = scmp.eq.s32.totalorder %s21, 0
    %p174 = por %p172, %p173
    %s175 = ssub.s32 %s15, %s22
    %p176 = scmp.eq.s32.totalorder %s175, 0
    %s178 = sadd.s32 %s177, 1
    %s179 = scalar_select %p176, %s177, %s178
    %p182 = pneg %p176
    %p183 = scmp.eq.s32.totalorder %s15, 3
    %p184 = por %p182, %p183
    %p185 = scmp.ne.s32.totalorder %s177, %s180
    %p186 = scmp.eq.s32.totalorder %s15, 0
    %p187 = por %p185, %p186
    %p188 = scmp.ne.s32.totalorder %s177, %s180
    %p189 = scmp.eq.s32.totalorder %s20, 3
    %p190 = por %p188, %p189
    %p191 = scmp.ne.s32.totalorder %s180, %s181
    %p192 = scmp.eq.s32.totalorder %s20, 0
    %p193 = por %p191, %p192
    %p194 = scmp.ne.s32.totalorder %s180, %s181
    %p195 = scmp.eq.s32.totalorder %s21, 3
    %p196 = por %p194, %p195
    %p198 = scmp.ne.s32.totalorder %s181, %s197
    %p199 = scmp.eq.s32.totalorder %s21, 0
    %p200 = por %p198, %p199
    %s201 = ssub.s32 %s15, %s22
    %p202 = scmp.eq.s32.totalorder %s201, 0
    %s204 = sadd.s32 %s203, 1
    %s205 = scalar_select %p202, %s203, %s204
    %p208 = pneg %p202
    %p209 = scmp.eq.s32.totalorder %s15, 3
    %p210 = por %p208, %p209
    %p211 = scmp.ne.s32.totalorder %s203, %s206
    %p212 = scmp.eq.s32.totalorder %s15, 0
    %p213 = por %p211, %p212
    %p214 = scmp.ne.s32.totalorder %s203, %s206
    %p215 = scmp.eq.s32.totalorder %s20, 3
    %p216 = por %p214, %p215
    %p217 = scmp.ne.s32.totalorder %s206, %s207
    %p218 = scmp.eq.s32.totalorder %s20, 0
    %p219 = por %p217, %p218
    %p220 = scmp.ne.s32.totalorder %s206, %s207
    %p221 = scmp.eq.s32.totalorder %s21, 3
    %p222 = por %p220, %p221
    %p224 = scmp.ne.s32.totalorder %s207, %s223
    %p225 = scmp.eq.s32.totalorder %s21, 0
    %p226 = por %p224, %p225
    %p227 = scmp.le.s32.totalorder 1, %s15
    %p228 = scmp.lt.s32.totalorder %s15, 5
    %p229 = pnand %p227, %p228
    %p230 = pneg %p229
    // Predicated region
    $region9: #{cspstage_forward.4} parent=5 // pred_check
      _
    $region10: #{cspstage_forward.4} parent=5 // pred_check_branch
      %232 = sbr.rel (%p229) target = $region12
    $region11: #{cspstage_forward.4} parent=5 // pred_region
      %s233 = ssub.s32 %s15, 1
      // Predicated region
      $region13: #{cspstage_forward.4} parent=11 // pred_check
        %p234 = pneg %p62
      $region14: #{cspstage_forward.4} parent=11 // pred_check_branch
        %236 = sbr.rel (%p234) target = $region16
      $region15: #{cspstage_forward.4} parent=11 // pred_region
        _
      $region16: #{cspstage_forward.4} parent=11 // pred_fallthru
        _
      // Predicated region
      $region17: #{cspstage_forward.4} parent=11 // pred_check
        %p237 = pneg %p83
      $region18: #{cspstage_forward.4} parent=11 // pred_check_branch
        %239 = sbr.rel (%p237) target = $region20
      $region19: #{cspstage_forward.4} parent=11 // pred_region
        _
      $region20: #{cspstage_forward.4} parent=11 // pred_fallthru
        _
      // Predicated region
      $region21: #{cspstage_forward.4} parent=11 // pred_check
        %p240 = pneg %p104
      $region22: #{cspstage_forward.4} parent=11 // pred_check_branch
        %242 = sbr.rel (%p240) target = $region24
      $region23: #{cspstage_forward.4} parent=11 // pred_region
        _
      $region24: #{cspstage_forward.4} parent=11 // pred_fallthru
        _
      // Predicated region
      $region25: #{cspstage_forward.4} parent=11 // pred_check
        %p243 = pneg %p125
      $region26: #{cspstage_forward.4} parent=11 // pred_check_branch
        %245 = sbr.rel (%p243) target = $region28
      $region27: #{cspstage_forward.4} parent=11 // pred_region
        _
      $region28: #{cspstage_forward.4} parent=11 // pred_fallthru
        _
      // Predicated region
      $region29: #{cspstage_forward.4} parent=11 // pred_check
        %p246 = pneg %p146
      $region30: #{cspstage_forward.4} parent=11 // pred_check_branch
        %248 = sbr.rel (%p246) target = $region32
      $region31: #{cspstage_forward.4} parent=11 // pred_region
        _
      $region32: #{cspstage_forward.4} parent=11 // pred_fallthru
        _
      // Predicated region
      $region33: #{cspstage_forward.4} parent=11 // pred_check
        %p249 = pneg %p167
      $region34: #{cspstage_forward.4} parent=11 // pred_check_branch
        %251 = sbr.rel (%p249) target = $region36
      $region35: #{cspstage_forward.4} parent=11 // pred_region
        _
      $region36: #{cspstage_forward.4} parent=11 // pred_fallthru
        _
    $region12: #{cspstage_forward.4} parent=5 // pred_fallthru
      _
    %p252 = scmp.lt.s32.totalorder %s15, 4
    // Predicated region
    $region37: #{cspstage_forward.4} parent=5 // pred_check
      %p253 = pneg %p252
    $region38: #{cspstage_forward.4} parent=5 // pred_check_branch
      %255 = sbr.rel (%p253) target = $region40
    $region39: #{cspstage_forward.4} parent=5 // pred_region
      // Predicated region
      $region41: #{cspstage_forward.4} parent=39 // pred_check
        %p256 = pneg %p35
      $region42: #{cspstage_forward.4} parent=39 // pred_check_branch
        %258 = sbr.rel (%p256) target = $region44
      $region43: #{cspstage_forward.4} parent=39 // pred_region
        %s259 = smul.u32 4, %s15
        %p260 = scmp.lt.s32.totalorder %s259, 15
        %s261 = scalar_select %p260, %s259, 15
        %s262 = smul.addr %s261, 9
        %s263 = smul.addr %s262, 4
        %s264 = scalar_lea.vmem %s0, %s263
        %s265 = smul.u32 4, %s15
      $region44: #{cspstage_forward.4} parent=39 // pred_fallthru
        _
    $region40: #{cspstage_forward.4} parent=5 // pred_fallthru
      _
    %p266 = scmp.le.s32.totalorder 1, %s15
    %p267 = scmp.lt.s32.totalorder %s15, 5
    %p268 = pnand %p266, %p267
    %p269 = pneg %p268
    // Predicated region
    $region45: #{cspstage_forward.4} parent=5 // pred_check
      _
    $region46: #{cspstage_forward.4} parent=5 // pred_check_branch
      %271 = sbr.rel (%p268) target = $region48
    $region47: #{cspstage_forward.4} parent=5 // pred_region
      %s272 = ssub.s32 %s15, 1
      %s273 = smul.u32 4, %s20
      %p274 = scmp.lt.s32.totalorder %s273, 15
      %s275 = scalar_select %p274, %s273, 15
      %s276 = smul.addr %s275, 9
      %s277 = smul.addr %s276, 4
      %s278 = scalar_lea.vmem %s0, %s277
      %p279 = pneg %p41
      %p280 = pneg %p38
      %p281 = pneg %p62
      %p282 = pneg %p59
      %p283 = pneg %p83
      %p284 = pneg %p80
      %p285 = pneg %p104
      %p286 = pneg %p101
      %p287 = pneg %p125
      %p288 = pneg %p122
      %p289 = pneg %p146
      %p290 = pneg %p143
      %p291 = pneg %p167
      %p292 = pneg %p164
      %p293 = pneg %p193
      %p294 = pneg %p190
      %s295 = smul.u32 4, %s20
      %p296 = scmp.lt.s32.totalorder %s295, 15
      %s297 = scalar_select %p296, %s295, 15
      %s298 = smul.addr %s297, 4
      %s299 = scalar_lea.vmem %s7, %s298
      %p300 = pneg %p219
      %p301 = pneg %p216
      %s302 = smul.u32 4, %s20
      %p303 = scmp.lt.s32.totalorder %s302, 15
      %s304 = scalar_select %p303, %s302, 15
      %s305 = smul.addr %s304, 4
      %s306 = scalar_lea.vmem %s8, %s305
      %s307 = smul.u32 4, %s20
      %p308 = scmp.lt.s32.totalorder %s307, 15
      %s309 = scalar_select %p308, %s307, 15
      %s310 = smul.addr %s309, 9
      %s311 = smul.addr %s310, 4
      %s312 = scalar_lea.vmem %s0, %s311
      %s313 = smul.u32 4, %s20
      %s314 = smul.u32 4, %s20
      %p315 = scmp.lt.s32.totalorder %s314, 15
      %s316 = scalar_select %p315, %s314, 15
      %s317 = smul.addr %s316, 4
      %s318 = scalar_lea.vmem %s7, %s317
      %s319 = smul.u32 4, %s20
      %s320 = smul.u32 4, %s20
      %p321 = scmp.lt.s32.totalorder %s320, 15
      %s322 = scalar_select %p321, %s320, 15
      %s323 = smul.addr %s322, 4
      %s324 = scalar_lea.vmem %s8, %s323
      %s325 = smul.u32 4, %s20
      %v327 = vld [vmem:[%s312] sm:$0xff]
      %v328 = vld [vmem:[%s312 + $0x8] sm:$0xff]
      %v329 = vld [vmem:[%s312 + $0x10] sm:$0xff]
      %v330 = vld [vmem:[%s312 + $0x18] sm:$0xff]
      %v331 = vld [vmem:[%s312 + $0x20] sm:$0xf]
      %v332 = vld [vmem:[%s312 + $0x24] sm:$0xff]
      %v333 = vld [vmem:[%s312 + $0x2c] sm:$0xff]
      %v334 = vld [vmem:[%s312 + $0x34] sm:$0xff]
      %v335 = vld [vmem:[%s312 + $0x3c] sm:$0xff]
      %v336 = vld [vmem:[%s312 + $0x44] sm:$0xf]
      %v337 = vld [vmem:[%s312 + $0x48] sm:$0xff]
      %v338 = vld [vmem:[%s312 + $0x50] sm:$0xff]
      %v339 = vld [vmem:[%s312 + $0x58] sm:$0xff]
      %v340 = vld [vmem:[%s312 + $0x60] sm:$0xff]
      %v341 = vld [vmem:[%s312 + $0x68] sm:$0xf]
      %v342 = vld [vmem:[%s312 + $0x6c] sm:$0xff]
      %v343 = vld [vmem:[%s312 + $0x74] sm:$0xff]
      %v344 = vld [vmem:[%s312 + $0x7c] sm:$0xff]
      %v345 = vld [vmem:[%s312 + $0x84] sm:$0xff]
      %v346 = vld [vmem:[%s312 + $0x8c] sm:$0xf]
      %v347 = vld [vmem:[%s1] sm:$0xf]
      %v348 = vld [vmem:[%s1 + $0x4] sm:$0xf]
      %v349 = vld [vmem:[%s1 + $0x8] sm:$0xf]
      %v350 = vld [vmem:[%s1 + $0xc] sm:$0xf]
      %v351 = vld [vmem:[%s1 + $0x10] sm:$0xf]
      %v352 = vld [vmem:[%s1 + $0x14] sm:$0xf]
      %v353 = vld [vmem:[%s1 + $0x18] sm:$0xf]
      %v354 = vld [vmem:[%s1 + $0x1c] sm:$0xf]
      %v355 = vld [vmem:[%s1 + $0x20] sm:$0xf]
      %v356 = vld [vmem:[%s1 + $0x24] sm:$0xf]
      %v357 = vld [vmem:[%s1 + $0x28] sm:$0xf]
      %v358 = vld [vmem:[%s1 + $0x2c] sm:$0xf]
      %v359 = vld [vmem:[%s1 + $0x30] sm:$0xf]
      %v360 = vld [vmem:[%s1 + $0x34] sm:$0xf]
      %v361 = vld [vmem:[%s1 + $0x38] sm:$0xf]
      %v362 = vld [vmem:[%s1 + $0x3c] sm:$0xf]
      %v363 = vld [vmem:[%s1 + $0x40] sm:$0xf]
      %v364 = vld [vmem:[%s1 + $0x44] sm:$0xf]
      %v365 = vld [vmem:[%s1 + $0x48] sm:$0xf]
      %v366 = vld [vmem:[%s1 + $0x4c] sm:$0xf]
      %v367 = vld [vmem:[%s1 + $0x50] sm:$0xf]
      %v368 = vld [vmem:[%s1 + $0x54] sm:$0xf]
      %v369 = vld [vmem:[%s1 + $0x58] sm:$0xf]
      %v370 = vld [vmem:[%s1 + $0x5c] sm:$0xf]
      %v371 = vld [vmem:[%s1 + $0x60] sm:$0xf]
      %v372 = vld [vmem:[%s1 + $0x64] sm:$0xf]
      %v373 = vld [vmem:[%s1 + $0x68] sm:$0xf]
      %v374 = vld [vmem:[%s1 + $0x6c] sm:$0xf]
      %v375 = vld [vmem:[%s1 + $0x70] sm:$0xf]
      %v376 = vld [vmem:[%s1 + $0x74] sm:$0xf]
      %v377 = vld [vmem:[%s1 + $0x78] sm:$0xf]
      %v378 = vld [vmem:[%s1 + $0x7c] sm:$0xf]
      %v379 = vld [vmem:[%s1 + $0x80] sm:$0xf]
      %v380 = vld [vmem:[%s1 + $0x84] sm:$0xf]
      %v381 = vld [vmem:[%s1 + $0x88] sm:$0xf]
      %v382 = vld [vmem:[%s1 + $0x8c] sm:$0xf]
      %v383 = vld [vmem:[%s1 + $0x90] sm:$0xf]
      %v384 = vld [vmem:[%s1 + $0x94] sm:$0xf]
      %v385 = vld [vmem:[%s1 + $0x98] sm:$0xf]
      %v386 = vld [vmem:[%s1 + $0x9c] sm:$0xf]
      %v387 = vld [vmem:[%s1 + $0xa0] sm:$0xf]
      %v388 = vld [vmem:[%s1 + $0xa4] sm:$0xf]
      %v389 = vld [vmem:[%s1 + $0xa8] sm:$0xf]
      %v390 = vld [vmem:[%s1 + $0xac] sm:$0xf]
      %v391 = vld [vmem:[%s1 + $0xb0] sm:$0xf]
      %v392 = vld [vmem:[%s1 + $0xb4] sm:$0xf]
      %v393 = vld [vmem:[%s1 + $0xb8] sm:$0xf]
      %v394 = vld [vmem:[%s1 + $0xbc] sm:$0xf]
      %v395 = vld [vmem:[%s1 + $0xc0] sm:$0xf]
      %v396 = vld [vmem:[%s1 + $0xc4] sm:$0xf]
      %v397 = vld [vmem:[%s1 + $0xc8] sm:$0xf]
      %v398 = vld [vmem:[%s1 + $0xcc] sm:$0xf]
      %v399 = vld [vmem:[%s1 + $0xd0] sm:$0xf]
      %v400 = vld [vmem:[%s1 + $0xd4] sm:$0xf]
      %v401 = vld [vmem:[%s1 + $0xd8] sm:$0xf]
      %v402 = vld [vmem:[%s1 + $0xdc] sm:$0xf]
      %v403 = vld [vmem:[%s1 + $0xe0] sm:$0xf]
      %v404 = vld [vmem:[%s1 + $0xe4] sm:$0xf]
      %v405 = vld [vmem:[%s1 + $0xe8] sm:$0xf]
      %v406 = vld [vmem:[%s1 + $0xec] sm:$0xf]
      %v407 = vld [vmem:[%s1 + $0xf0] sm:$0xf]
      %v408 = vld [vmem:[%s1 + $0xf4] sm:$0xf]
      %v409 = vld [vmem:[%s1 + $0xf8] sm:$0xf]
      %v410 = vld [vmem:[%s1 + $0xfc] sm:$0xf]
      %v411 = vld [vmem:[%s1 + $0x100] sm:$0xf]
      %v412 = vld [vmem:[%s1 + $0x104] sm:$0xf]
      %v413 = vld [vmem:[%s1 + $0x108] sm:$0xf]
      %v414 = vld [vmem:[%s1 + $0x10c] sm:$0xf]
      %v415 = vld [vmem:[%s1 + $0x110] sm:$0xf]
      %v416 = vld [vmem:[%s1 + $0x114] sm:$0xf]
      %v417 = vld [vmem:[%s1 + $0x118] sm:$0xf]
      %v418 = vld [vmem:[%s1 + $0x11c] sm:$0xf]
      %v419 = vld [vmem:[%s1 + $0x120] sm:$0xf]
      %v420 = vld [vmem:[%s1 + $0x124] sm:$0xf]
      %v421 = vld [vmem:[%s1 + $0x128] sm:$0xf]
      %v422 = vld [vmem:[%s1 + $0x12c] sm:$0xf]
      %v423 = vld [vmem:[%s1 + $0x130] sm:$0xf]
      %v424 = vld [vmem:[%s1 + $0x134] sm:$0xf]
      %v425 = vld [vmem:[%s1 + $0x138] sm:$0xf]
      %v426 = vld [vmem:[%s1 + $0x13c] sm:$0xf]
      %v427 = vld [vmem:[%s1 + $0x140] sm:$0xf]
      %v428 = vld [vmem:[%s1 + $0x144] sm:$0xf]
      %v429 = vld [vmem:[%s1 + $0x148] sm:$0xf]
      %v430 = vld [vmem:[%s1 + $0x14c] sm:$0xf]
      %v431 = vld [vmem:[%s1 + $0x150] sm:$0xf]
      %v432 = vld [vmem:[%s1 + $0x154] sm:$0xf]
      %v433 = vld [vmem:[%s1 + $0x158] sm:$0xf]
      %v434 = vld [vmem:[%s1 + $0x15c] sm:$0xf]
      %v435 = vld [vmem:[%s1 + $0x160] sm:$0xf]
      %v436 = vld [vmem:[%s1 + $0x164] sm:$0xf]
      %v437 = vld [vmem:[%s1 + $0x168] sm:$0xf]
      %v438 = vld [vmem:[%s1 + $0x16c] sm:$0xf]
      %v439 = vld [vmem:[%s1 + $0x170] sm:$0xf]
      %v440 = vld [vmem:[%s1 + $0x174] sm:$0xf]
      %v441 = vld [vmem:[%s1 + $0x178] sm:$0xf]
      %v442 = vld [vmem:[%s1 + $0x17c] sm:$0xf]
      %v443 = vld [vmem:[%s1 + $0x180] sm:$0xf]
      %v444 = vld [vmem:[%s1 + $0x184] sm:$0xf]
      %v445 = vld [vmem:[%s1 + $0x188] sm:$0xf]
      %v446 = vld [vmem:[%s1 + $0x18c] sm:$0xf]
      %v447 = vld [vmem:[%s1 + $0x190] sm:$0xf]
      %v448 = vld [vmem:[%s1 + $0x194] sm:$0xf]
      %v449 = vld [vmem:[%s1 + $0x198] sm:$0xf]
      %v450 = vld [vmem:[%s1 + $0x19c] sm:$0xf]
      %v451 = vld [vmem:[%s1 + $0x1a0] sm:$0xf]
      %v452 = vld [vmem:[%s1 + $0x1a4] sm:$0xf]
      %v453 = vld [vmem:[%s1 + $0x1a8] sm:$0xf]
      %v454 = vld [vmem:[%s1 + $0x1ac] sm:$0xf]
      %v455 = vld [vmem:[%s1 + $0x1b0] sm:$0xf]
      %v456 = vld [vmem:[%s1 + $0x1b4] sm:$0xf]
      %v457 = vld [vmem:[%s1 + $0x1b8] sm:$0xf]
      %v458 = vld [vmem:[%s1 + $0x1bc] sm:$0xf]
      %v459 = vld [vmem:[%s1 + $0x1c0] sm:$0xf]
      %v460 = vld [vmem:[%s1 + $0x1c4] sm:$0xf]
      %v461 = vld [vmem:[%s1 + $0x1c8] sm:$0xf]
      %v462 = vld [vmem:[%s1 + $0x1cc] sm:$0xf]
      %v463 = vld [vmem:[%s1 + $0x1d0] sm:$0xf]
      %v464 = vld [vmem:[%s1 + $0x1d4] sm:$0xf]
      %v465 = vld [vmem:[%s1 + $0x1d8] sm:$0xf]
      %v466 = vld [vmem:[%s1 + $0x1dc] sm:$0xf]
      %v467 = vld [vmem:[%s1 + $0x1e0] sm:$0xf]
      %v468 = vld [vmem:[%s1 + $0x1e4] sm:$0xf]
      %v469 = vld [vmem:[%s1 + $0x1e8] sm:$0xf]
      %v470 = vld [vmem:[%s1 + $0x1ec] sm:$0xf]
      %v471 = vld [vmem:[%s1 + $0x1f0] sm:$0xf]
      %v472 = vld [vmem:[%s1 + $0x1f4] sm:$0xf]
      %v473 = vld [vmem:[%s1 + $0x1f8] sm:$0xf]
      %v474 = vld [vmem:[%s1 + $0x1fc] sm:$0xf]
      %v475 = vld [vmem:[%s1 + $0x200] sm:$0xf]
      %v476 = vld [vmem:[%s1 + $0x204] sm:$0xf]
      %v477 = vld [vmem:[%s1 + $0x208] sm:$0xf]
      %v478 = vld [vmem:[%s1 + $0x20c] sm:$0xf]
      %v479 = vld [vmem:[%s1 + $0x210] sm:$0xf]
      %v480 = vld [vmem:[%s1 + $0x214] sm:$0xf]
      %v481 = vld [vmem:[%s1 + $0x218] sm:$0xf]
      %v482 = vld [vmem:[%s1 + $0x21c] sm:$0xf]
      %v483 = vld [vmem:[%s1 + $0x220] sm:$0xf]
      %v484 = vld [vmem:[%s1 + $0x224] sm:$0xf]
      %v485 = vld [vmem:[%s1 + $0x228] sm:$0xf]
      %v486 = vld [vmem:[%s1 + $0x22c] sm:$0xf]
      %v487 = vld [vmem:[%s1 + $0x230] sm:$0xf]
      %v488 = vld [vmem:[%s1 + $0x234] sm:$0xf]
      %v489 = vld [vmem:[%s1 + $0x238] sm:$0xf]
      %v490 = vld [vmem:[%s1 + $0x23c] sm:$0xf]
      %v511 = vunpack.c.l.b16 %v327
      %v512 = vunpack.c.h.b16 %v327
      %v513 = vunpack.c.l.b16 %v328
      %v514 = vunpack.c.h.b16 %v328
      %v515 = vunpack.c.l.b16 %v329
      %v516 = vunpack.c.h.b16 %v329
      %v517 = vunpack.c.l.b16 %v330
      %v518 = vunpack.c.h.b16 %v330
      %v519 = vunpack.c.l.b16 %v331
      %v520 = vunpack.c.l.b16 %v332
      %v521 = vunpack.c.h.b16 %v332
      %v522 = vunpack.c.l.b16 %v333
      %v523 = vunpack.c.h.b16 %v333
      %v524 = vunpack.c.l.b16 %v334
      %v525 = vunpack.c.h.b16 %v334
      %v526 = vunpack.c.l.b16 %v335
      %v527 = vunpack.c.h.b16 %v335
      %v528 = vunpack.c.l.b16 %v336
      %v529 = vunpack.c.l.b16 %v337
      %v530 = vunpack.c.h.b16 %v337
      %v531 = vunpack.c.l.b16 %v338
      %v532 = vunpack.c.h.b16 %v338
      %v533 = vunpack.c.l.b16 %v339
      %v534 = vunpack.c.h.b16 %v339
      %v535 = vunpack.c.l.b16 %v340
      %v536 = vunpack.c.h.b16 %v340
      %v537 = vunpack.c.l.b16 %v341
      %v538 = vunpack.c.l.b16 %v342
      %v539 = vunpack.c.h.b16 %v342
      %v540 = vunpack.c.l.b16 %v343
      %v541 = vunpack.c.h.b16 %v343
      %v542 = vunpack.c.l.b16 %v344
      %v543 = vunpack.c.h.b16 %v344
      %v544 = vunpack.c.l.b16 %v345
      %v545 = vunpack.c.h.b16 %v345
      %v546 = vunpack.c.l.b16 %v346
      %v547 = vpack.c.b16 %v520, %v511
      %v548 = vpack.c.b16 %v521, %v512
      %v549 = vpack.c.b16 %v522, %v513
      %v550 = vpack.c.b16 %v523, %v514
      %v551 = vpack.c.b16 %v524, %v515
      %v552 = vpack.c.b16 %v525, %v516
      %v553 = vpack.c.b16 %v526, %v517
      %v554 = vpack.c.b16 %v527, %v518
      %v555 = vpack.c.b16 %v528, %v519
      %v556 = vpack.c.b16 %v538, %v529
      %v557 = vpack.c.b16 %v539, %v530
      %v558 = vpack.c.b16 %v540, %v531
      %v559 = vpack.c.b16 %v541, %v532
      %v560 = vpack.c.b16 %v542, %v533
      %v561 = vpack.c.b16 %v543, %v534
      %v562 = vpack.c.b16 %v544, %v535
      %v563 = vpack.c.b16 %v545, %v536
      %v564 = vpack.c.b16 %v546, %v537
      %v727 = vunpack.c.l.b16 %v347
      %v728 = vunpack.c.l.b16 %v348
      %v729 = vunpack.c.l.b16 %v349
      %v730 = vunpack.c.l.b16 %v350
      %v731 = vunpack.c.l.b16 %v351
      %v732 = vunpack.c.l.b16 %v352
      %v733 = vunpack.c.l.b16 %v353
      %v734 = vunpack.c.l.b16 %v354
      %v735 = vunpack.c.l.b16 %v355
      %v736 = vunpack.c.l.b16 %v356
      %v737 = vunpack.c.l.b16 %v357
      %v738 = vunpack.c.l.b16 %v358
      %v739 = vunpack.c.l.b16 %v359
      %v740 = vunpack.c.l.b16 %v360
      %v741 = vunpack.c.l.b16 %v361
      %v742 = vunpack.c.l.b16 %v362
      %v743 = vunpack.c.l.b16 %v363
      %v744 = vunpack.c.l.b16 %v364
      %v745 = vunpack.c.l.b16 %v365
      %v746 = vunpack.c.l.b16 %v366
      %v747 = vunpack.c.l.b16 %v367
      %v748 = vunpack.c.l.b16 %v368
      %v749 = vunpack.c.l.b16 %v369
      %v750 = vunpack.c.l.b16 %v370
      %v751 = vunpack.c.l.b16 %v371
      %v752 = vunpack.c.l.b16 %v372
      %v753 = vunpack.c.l.b16 %v373
      %v754 = vunpack.c.l.b16 %v374
      %v755 = vunpack.c.l.b16 %v375
      %v756 = vunpack.c.l.b16 %v376
      %v757 = vunpack.c.l.b16 %v377
      %v758 = vunpack.c.l.b16 %v378
      %v759 = vunpack.c.l.b16 %v379
      %v760 = vunpack.c.l.b16 %v380
      %v761 = vunpack.c.l.b16 %v381
      %v762 = vunpack.c.l.b16 %v382
      %v763 = vunpack.c.l.b16 %v383
      %v764 = vunpack.c.l.b16 %v384
      %v765 = vunpack.c.l.b16 %v385
      %v766 = vunpack.c.l.b16 %v386
      %v767 = vunpack.c.l.b16 %v387
      %v768 = vunpack.c.l.b16 %v388
      %v769 = vunpack.c.l.b16 %v389
      %v770 = vunpack.c.l.b16 %v390
      %v771 = vunpack.c.l.b16 %v391
      %v772 = vunpack.c.l.b16 %v392
      %v773 = vunpack.c.l.b16 %v393
      %v774 = vunpack.c.l.b16 %v394
      %v775 = vunpack.c.l.b16 %v395
      %v776 = vunpack.c.l.b16 %v396
      %v777 = vunpack.c.l.b16 %v397
      %v778 = vunpack.c.l.b16 %v398
      %v779 = vunpack.c.l.b16 %v399
      %v780 = vunpack.c.l.b16 %v400
      %v781 = vunpack.c.l.b16 %v401
      %v782 = vunpack.c.l.b16 %v402
      %v783 = vunpack.c.l.b16 %v403
      %v784 = vunpack.c.l.b16 %v404
      %v785 = vunpack.c.l.b16 %v405
      %v786 = vunpack.c.l.b16 %v406
      %v787 = vunpack.c.l.b16 %v407
      %v788 = vunpack.c.l.b16 %v408
      %v789 = vunpack.c.l.b16 %v409
      %v790 = vunpack.c.l.b16 %v410
      %v791 = vunpack.c.l.b16 %v411
      %v792 = vunpack.c.l.b16 %v412
      %v793 = vunpack.c.l.b16 %v413
      %v794 = vunpack.c.l.b16 %v414
      %v795 = vunpack.c.l.b16 %v415
      %v796 = vunpack.c.l.b16 %v416
      %v797 = vunpack.c.l.b16 %v417
      %v798 = vunpack.c.l.b16 %v418
      %v799 = vunpack.c.l.b16 %v419
      %v800 = vunpack.c.l.b16 %v420
      %v801 = vunpack.c.l.b16 %v421
      %v802 = vunpack.c.l.b16 %v422
      %v803 = vunpack.c.l.b16 %v423
      %v804 = vunpack.c.l.b16 %v424
      %v805 = vunpack.c.l.b16 %v425
      %v806 = vunpack.c.l.b16 %v426
      %v807 = vunpack.c.l.b16 %v427
      %v808 = vunpack.c.l.b16 %v428
      %v809 = vunpack.c.l.b16 %v429
      %v810 = vunpack.c.l.b16 %v430
      %v811 = vunpack.c.l.b16 %v431
      %v812 = vunpack.c.l.b16 %v432
      %v813 = vunpack.c.l.b16 %v433
      %v814 = vunpack.c.l.b16 %v434
      %v815 = vunpack.c.l.b16 %v435
      %v816 = vunpack.c.l.b16 %v436
      %v817 = vunpack.c.l.b16 %v437
      %v818 = vunpack.c.l.b16 %v438
      %v819 = vunpack.c.l.b16 %v439
      %v820 = vunpack.c.l.b16 %v440
      %v821 = vunpack.c.l.b16 %v441
      %v822 = vunpack.c.l.b16 %v442
      %v823 = vunpack.c.l.b16 %v443
      %v824 = vunpack.c.l.b16 %v444
      %v825 = vunpack.c.l.b16 %v445
      %v826 = vunpack.c.l.b16 %v446
      %v827 = vunpack.c.l.b16 %v447
      %v828 = vunpack.c.l.b16 %v448
      %v829 = vunpack.c.l.b16 %v449
      %v830 = vunpack.c.l.b16 %v450
      %v831 = vunpack.c.l.b16 %v451
      %v832 = vunpack.c.l.b16 %v452
      %v833 = vunpack.c.l.b16 %v453
      %v834 = vunpack.c.l.b16 %v454
      %v835 = vunpack.c.l.b16 %v455
      %v836 = vunpack.c.l.b16 %v456
      %v837 = vunpack.c.l.b16 %v457
      %v838 = vunpack.c.l.b16 %v458
      %v839 = vunpack.c.l.b16 %v459
      %v840 = vunpack.c.l.b16 %v460
      %v841 = vunpack.c.l.b16 %v461
      %v842 = vunpack.c.l.b16 %v462
      %v843 = vunpack.c.l.b16 %v463
      %v844 = vunpack.c.l.b16 %v464
      %v845 = vunpack.c.l.b16 %v465
      %v846 = vunpack.c.l.b16 %v466
      %v847 = vunpack.c.l.b16 %v467
      %v848 = vunpack.c.l.b16 %v468
      %v849 = vunpack.c.l.b16 %v469
      %v850 = vunpack.c.l.b16 %v470
      %v851 = vunpack.c.l.b16 %v471
      %v852 = vunpack.c.l.b16 %v472
      %v853 = vunpack.c.l.b16 %v473
      %v854 = vunpack.c.l.b16 %v474
      %v855 = vunpack.c.l.b16 %v475
      %v856 = vunpack.c.l.b16 %v476
      %v857 = vunpack.c.l.b16 %v477
      %v858 = vunpack.c.l.b16 %v478
      %v859 = vunpack.c.l.b16 %v479
      %v860 = vunpack.c.l.b16 %v480
      %v861 = vunpack.c.l.b16 %v481
      %v862 = vunpack.c.l.b16 %v482
      %v863 = vunpack.c.l.b16 %v483
      %v864 = vunpack.c.l.b16 %v484
      %v865 = vunpack.c.l.b16 %v485
      %v866 = vunpack.c.l.b16 %v486
      %v867 = vunpack.c.l.b16 %v487
      %v868 = vunpack.c.l.b16 %v488
      %v869 = vunpack.c.l.b16 %v489
      %v870 = vunpack.c.l.b16 %v490
      %v871 = vpack.c.b16 %v728, %v727
      %v872 = vpack.c.b16 %v730, %v729
      %v873 = vpack.c.b16 %v732, %v731
      %v874 = vpack.c.b16 %v734, %v733
      %v875 = vpack.c.b16 %v736, %v735
      %v876 = vpack.c.b16 %v738, %v737
      %v877 = vpack.c.b16 %v740, %v739
      %v878 = vpack.c.b16 %v742, %v741
      %v879 = vpack.c.b16 %v744, %v743
      %v880 = vpack.c.b16 %v746, %v745
      %v881 = vpack.c.b16 %v748, %v747
      %v882 = vpack.c.b16 %v750, %v749
      %v883 = vpack.c.b16 %v752, %v751
      %v884 = vpack.c.b16 %v754, %v753
      %v885 = vpack.c.b16 %v756, %v755
      %v886 = vpack.c.b16 %v758, %v757
      %v887 = vpack.c.b16 %v760, %v759
      %v888 = vpack.c.b16 %v762, %v761
      %v889 = vpack.c.b16 %v764, %v763
      %v890 = vpack.c.b16 %v766, %v765
      %v891 = vpack.c.b16 %v768, %v767
      %v892 = vpack.c.b16 %v770, %v769
      %v893 = vpack.c.b16 %v772, %v771
      %v894 = vpack.c.b16 %v774, %v773
      %v895 = vpack.c.b16 %v776, %v775
      %v896 = vpack.c.b16 %v778, %v777
      %v897 = vpack.c.b16 %v780, %v779
      %v898 = vpack.c.b16 %v782, %v781
      %v899 = vpack.c.b16 %v784, %v783
      %v900 = vpack.c.b16 %v786, %v785
      %v901 = vpack.c.b16 %v788, %v787
      %v902 = vpack.c.b16 %v790, %v789
      %v903 = vpack.c.b16 %v792, %v791
      %v904 = vpack.c.b16 %v794, %v793
      %v905 = vpack.c.b16 %v796, %v795
      %v906 = vpack.c.b16 %v798, %v797
      %v907 = vpack.c.b16 %v800, %v799
      %v908 = vpack.c.b16 %v802, %v801
      %v909 = vpack.c.b16 %v804, %v803
      %v910 = vpack.c.b16 %v806, %v805
      %v911 = vpack.c.b16 %v808, %v807
      %v912 = vpack.c.b16 %v810, %v809
      %v913 = vpack.c.b16 %v812, %v811
      %v914 = vpack.c.b16 %v814, %v813
      %v915 = vpack.c.b16 %v816, %v815
      %v916 = vpack.c.b16 %v818, %v817
      %v917 = vpack.c.b16 %v820, %v819
      %v918 = vpack.c.b16 %v822, %v821
      %v919 = vpack.c.b16 %v824, %v823
      %v920 = vpack.c.b16 %v826, %v825
      %v921 = vpack.c.b16 %v828, %v827
      %v922 = vpack.c.b16 %v830, %v829
      %v923 = vpack.c.b16 %v832, %v831
      %v924 = vpack.c.b16 %v834, %v833
      %v925 = vpack.c.b16 %v836, %v835
      %v926 = vpack.c.b16 %v838, %v837
      %v927 = vpack.c.b16 %v840, %v839
      %v928 = vpack.c.b16 %v842, %v841
      %v929 = vpack.c.b16 %v844, %v843
      %v930 = vpack.c.b16 %v846, %v845
      %v931 = vpack.c.b16 %v848, %v847
      %v932 = vpack.c.b16 %v850, %v849
      %v933 = vpack.c.b16 %v852, %v851
      %v934 = vpack.c.b16 %v854, %v853
      %v935 = vpack.c.b16 %v856, %v855
      %v936 = vpack.c.b16 %v858, %v857
      %v937 = vpack.c.b16 %v860, %v859
      %v938 = vpack.c.b16 %v862, %v861
      %v939 = vpack.c.b16 %v864, %v863
      %v940 = vpack.c.b16 %v866, %v865
      %v941 = vpack.c.b16 %v868, %v867
      %v942 = vpack.c.b16 %v870, %v869
      %1015 = vmatprep.subr.bf16.mxu0 0
      %1016 = vmatpush1.bf16.msra.mxu0 %v871
      %1017 = vmatprep.subr.bf16.mxu0 0
      %1018 = vmatpush1.bf16.msra.mxu0 %v872
      %1019 = vmatprep.subr.bf16.mxu0 0
      %1020 = vmatpush1.bf16.msra.mxu0 %v873
      %1021 = vmatprep.subr.bf16.mxu0 0
      %1022 = vmatpush1.bf16.msra.mxu0 %v874
      %1023 = vmatprep.subr.bf16.mxu0 0
      %1024 = vmatpush1.bf16.msra.mxu0 %v875
      %1025 = vmatprep.subr.bf16.mxu0 0
      %1026 = vmatpush1.bf16.msra.mxu0 %v876
      %1027 = vmatprep.subr.bf16.mxu0 0
      %1028 = vmatpush1.bf16.msra.mxu0 %v877
      %1029 = vmatprep.subr.bf16.mxu0 0
      %1030 = vmatpush1.bf16.msra.mxu0 %v878
      %1031 = vmatprep.subr.bf16.mxu0 0
      %1032 = vmatpush1.bf16.msra.mxu0 %v879
      %1033 = vmatprep.subr.bf16.mxu0 0
      %1034 = vmatpush1.bf16.msra.mxu0 %v880
      %1035 = vmatprep.subr.bf16.mxu0 0
      %1036 = vmatpush1.bf16.msra.mxu0 %v881
      %1037 = vmatprep.subr.bf16.mxu0 0
      %1038 = vmatpush1.bf16.msra.mxu0 %v882
      %1039 = vmatprep.subr.bf16.mxu0 0
      %1040 = vmatpush1.bf16.msra.mxu0 %v883
      %1041 = vmatprep.subr.bf16.mxu0 0
      %1042 = vmatpush1.bf16.msra.mxu0 %v884
      %1043 = vmatprep.subr.bf16.mxu0 0
      %1044 = vmatpush1.bf16.msra.mxu0 %v885
      %1045 = vmatprep.subr.bf16.mxu0 0
      %1046 = vmatpush1.bf16.msra.mxu0 %v886
      %1047 = vmatprep.mubr.bf16.mxu0 %v548
      %1048 = vmatmul.mubr.bf16.gmra.mrb[0].mxu0 %v547
      %v1049 = vpop.f32.mrb[0].mxu0
      %v1050 = vadd.f32 0.0, %v1049
      %v1051 = vpop.f32.mrb[0].mxu0
      %v1052 = vpop.f32.mrb[0].mxu0
      %v1053 = vadd.f32 0.0, %v1052
      %v1054 = vpop.f32.mrb[0].mxu0
      %1055 = vmatprep.mubr.bf16.mxu0 %v557
      %1056 = vmatmul.mubr.bf16.gmra.mrb[0].mxu0 %v556
      %v1057 = vpop.f32.mrb[0].mxu0
      %v1058 = vadd.f32 0.0, %v1057
      %v1059 = vpop.f32.mrb[0].mxu0
      %v1060 = vpop.f32.mrb[0].mxu0
      %v1061 = vadd.f32 0.0, %v1060
      %v1062 = vpop.f32.mrb[0].mxu0
      %1063 = vdwg.mxu0
      %1064 = vmatprep.subr.bf16.mxu0 0
      %1065 = vmatpush1.bf16.msra.mxu0 %v887
      %1066 = vmatprep.subr.bf16.mxu0 0
      %1067 = vmatpush1.bf16.msra.mxu0 %v888
      %1068 = vmatprep.subr.bf16.mxu0 0
      %1069 = vmatpush1.bf16.msra.mxu0 %v889
      %1070 = vmatprep.subr.bf16.mxu0 0
      %1071 = vmatpush1.bf16.msra.mxu0 %v890
      %1072 = vmatprep.subr.bf16.mxu0 0
      %1073 = vmatpush1.bf16.msra.mxu0 %v891
      %1074 = vmatprep.subr.bf16.mxu0 0
      %1075 = vmatpush1.bf16.msra.mxu0 %v892
      %1076 = vmatprep.subr.bf16.mxu0 0
      %1077 = vmatpush1.bf16.msra.mxu0 %v893
      %1078 = vmatprep.subr.bf16.mxu0 0
      %1079 = vmatpush1.bf16.msra.mxu0 %v894
      %1080 = vmatprep.subr.bf16.mxu0 0
      %1081 = vmatpush1.bf16.msra.mxu0 %v895
      %1082 = vmatprep.subr.bf16.mxu0 0
      %1083 = vmatpush1.bf16.msra.mxu0 %v896
      %1084 = vmatprep.subr.bf16.mxu0 0
      %1085 = vmatpush1.bf16.msra.mxu0 %v897
      %1086 = vmatprep.subr.bf16.mxu0 0
      %1087 = vmatpush1.bf16.msra.mxu0 %v898
      %1088 = vmatprep.subr.bf16.mxu0 0
      %1089 = vmatpush1.bf16.msra.mxu0 %v899
      %1090 = vmatprep.subr.bf16.mxu0 0
      %1091 = vmatpush1.bf16.msra.mxu0 %v900
      %1092 = vmatprep.subr.bf16.mxu0 0
      %1093 = vmatpush1.bf16.msra.mxu0 %v901
      %1094 = vmatprep.subr.bf16.mxu0 0
      %1095 = vmatpush1.bf16.msra.mxu0 %v902
      %1096 = vmatprep.mubr.bf16.mxu0 %v550
      %1097 = vmatmul.mubr.bf16.gmra.mrb[0].mxu0 %v549
      %v1098 = vpop.f32.mrb[0].mxu0
      %v1099 = vadd.f32 %v1050, %v1098
      %v1100 = vpop.f32.mrb[0].mxu0
      %v1101 = vpop.f32.mrb[0].mxu0
      %v1102 = vadd.f32 %v1053, %v1101
      %v1103 = vpop.f32.mrb[0].mxu0
      %1104 = vmatprep.mubr.bf16.mxu0 %v559
      %1105 = vmatmul.mubr.bf16.gmra.mrb[0].mxu0 %v558
      %v1106 = vpop.f32.mrb[0].mxu0
      %v1107 = vadd.f32 %v1058, %v1106
      %v1108 = vpop.f32.mrb[0].mxu0
      %v1109 = vpop.f32.mrb[0].mxu0
      %v1110 = vadd.f32 %v1061, %v1109
      %v1111 = vpop.f32.mrb[0].mxu0
      %1112 = vdwg.mxu0
      %1113 = vmatprep.subr.bf16.mxu0 0
      %1114 = vmatpush1.bf16.msra.mxu0 %v903
      %1115 = vmatprep.subr.bf16.mxu0 0
      %1116 = vmatpush1.bf16.msra.mxu0 %v904
      %1117 = vmatprep.subr.bf16.mxu0 0
      %1118 = vmatpush1.bf16.msra.mxu0 %v905
      %1119 = vmatprep.subr.bf16.mxu0 0
      %1120 = vmatpush1.bf16.msra.mxu0 %v906
      %1121 = vmatprep.subr.bf16.mxu0 0
      %1122 = vmatpush1.bf16.msra.mxu0 %v907
      %1123 = vmatprep.subr.bf16.mxu0 0
      %1124 = vmatpush1.bf16.msra.mxu0 %v908
      %1125 = vmatprep.subr.bf16.mxu0 0
      %1126 = vmatpush1.bf16.msra.mxu0 %v909
      %1127 = vmatprep.subr.bf16.mxu0 0
      %1128 = vmatpush1.bf16.msra.mxu0 %v910
      %1129 = vmatprep.subr.bf16.mxu0 0
      %1130 = vmatpush1.bf16.msra.mxu0 %v911
      %1131 = vmatprep.subr.bf16.mxu0 0
      %1132 = vmatpush1.bf16.msra.mxu0 %v912
      %1133 = vmatprep.subr.bf16.mxu0 0
      %1134 = vmatpush1.bf16.msra.mxu0 %v913
      %1135 = vmatprep.subr.bf16.mxu0 0
      %1136 = vmatpush1.bf16.msra.mxu0 %v914
      %1137 = vmatprep.subr.bf16.mxu0 0
      %1138 = vmatpush1.bf16.msra.mxu0 %v915
      %1139 = vmatprep.subr.bf16.mxu0 0
      %1140 = vmatpush1.bf16.msra.mxu0 %v916
      %1141 = vmatprep.subr.bf16.mxu0 0
      %1142 = vmatpush1.bf16.msra.mxu0 %v917
      %1143 = vmatprep.subr.bf16.mxu0 0
      %1144 = vmatpush1.bf16.msra.mxu0 %v918
      %1145 = vmatprep.mubr.bf16.mxu0 %v552
      %1146 = vmatmul.mubr.bf16.gmra.mrb[0].mxu0 %v551
      %v1147 = vpop.f32.mrb[0].mxu0
      %v1148 = vadd.f32 %v1099, %v1147
      %v1149 = vpop.f32.mrb[0].mxu0
      %v1150 = vpop.f32.mrb[0].mxu0
      %v1151 = vadd.f32 %v1102, %v1150
      %v1152 = vpop.f32.mrb[0].mxu0
      %1153 = vmatprep.mubr.bf16.mxu0 %v561
      %1154 = vmatmul.mubr.bf16.gmra.mrb[0].mxu0 %v560
      %v1155 = vpop.f32.mrb[0].mxu0
      %v1156 = vadd.f32 %v1107, %v1155
      %v1157 = vpop.f32.mrb[0].mxu0
      %v1158 = vpop.f32.mrb[0].mxu0
      %v1159 = vadd.f32 %v1110, %v1158
      %v1160 = vpop.f32.mrb[0].mxu0
      %1161 = vdwg.mxu0
      %1162 = vmatprep.subr.bf16.mxu0 0
      %1163 = vmatpush1.bf16.msra.mxu0 %v919
      %1164 = vmatprep.subr.bf16.mxu0 0
      %1165 = vmatpush1.bf16.msra.mxu0 %v920
      %1166 = vmatprep.subr.bf16.mxu0 0
      %1167 = vmatpush1.bf16.msra.mxu0 %v921
      %1168 = vmatprep.subr.bf16.mxu0 0
      %1169 = vmatpush1.bf16.msra.mxu0 %v922
      %1170 = vmatprep.subr.bf16.mxu0 0
      %1171 = vmatpush1.bf16.msra.mxu0 %v923
      %1172 = vmatprep.subr.bf16.mxu0 0
      %1173 = vmatpush1.bf16.msra.mxu0 %v924
      %1174 = vmatprep.subr.bf16.mxu0 0
      %1175 = vmatpush1.bf16.msra.mxu0 %v925
      %1176 = vmatprep.subr.bf16.mxu0 0
      %1177 = vmatpush1.bf16.msra.mxu0 %v926
      %1178 = vmatprep.subr.bf16.mxu0 0
      %1179 = vmatpush1.bf16.msra.mxu0 %v927
      %1180 = vmatprep.subr.bf16.mxu0 0
      %1181 = vmatpush1.bf16.msra.mxu0 %v928
      %1182 = vmatprep.subr.bf16.mxu0 0
      %1183 = vmatpush1.bf16.msra.mxu0 %v929
      %1184 = vmatprep.subr.bf16.mxu0 0
      %1185 = vmatpush1.bf16.msra.mxu0 %v930
      %1186 = vmatprep.subr.bf16.mxu0 0
      %1187 = vmatpush1.bf16.msra.mxu0 %v931
      %1188 = vmatprep.subr.bf16.mxu0 0
      %1189 = vmatpush1.bf16.msra.mxu0 %v932
      %1190 = vmatprep.subr.bf16.mxu0 0
      %1191 = vmatpush1.bf16.msra.mxu0 %v933
      %1192 = vmatprep.subr.bf16.mxu0 0
      %1193 = vmatpush1.bf16.msra.mxu0 %v934
      %1194 = vmatprep.mubr.bf16.mxu0 %v554
      %1195 = vmatmul.mubr.bf16.gmra.mrb[0].mxu0 %v553
      %v1196 = vpop.f32.mrb[0].mxu0
      %v1197 = vadd.f32 %v1148, %v1196
      %v1198 = vpop.f32.mrb[0].mxu0
      %v1199 = vpop.f32.mrb[0].mxu0
      %v1200 = vadd.f32 %v1151, %v1199
      %v1201 = vpop.f32.mrb[0].mxu0
      %1202 = vmatprep.mubr.bf16.mxu0 %v563
      %1203 = vmatmul.mubr.bf16.gmra.mrb[0].mxu0 %v562
      %v1204 = vpop.f32.mrb[0].mxu0
      %v1205 = vadd.f32 %v1156, %v1204
      %v1206 = vpop.f32.mrb[0].mxu0
      %v1207 = vpop.f32.mrb[0].mxu0
      %v1208 = vadd.f32 %v1159, %v1207
      %v1209 = vpop.f32.mrb[0].mxu0
      %1210 = vdwg.mxu0
      %1211 = vmatprep.subr.bf16.mxu0 0
      %1212 = vmatpush1.bf16.msra.mxu0 %v935
      %1213 = vmatprep.subr.bf16.mxu0 0
      %1214 = vmatpush1.bf16.msra.mxu0 %v936
      %1215 = vmatprep.subr.bf16.mxu0 0
      %1216 = vmatpush1.bf16.msra.mxu0 %v937
      %1217 = vmatprep.subr.bf16.mxu0 0
      %1218 = vmatpush1.bf16.msra.mxu0 %v938
      %1219 = vmatprep.subr.bf16.mxu0 0
      %1220 = vmatpush1.bf16.msra.mxu0 %v939
      %1221 = vmatprep.subr.bf16.mxu0 0
      %1222 = vmatpush1.bf16.msra.mxu0 %v940
      %1223 = vmatprep.subr.bf16.mxu0 0
      %1224 = vmatpush1.bf16.msra.mxu0 %v941
      %1225 = vmatprep.subr.bf16.mxu0 0
      %1226 = vmatpush1.bf16.msra.mxu0 %v942
      %1227 = vmatprep.subr.bf16.mxu0 0
      %1228 = vmatpush1.bf16.msra.mxu0 0
      %1229 = vmatprep.subr.bf16.mxu0 0
      %1230 = vmatpush1.bf16.msra.mxu0 0
      %1231 = vmatprep.subr.bf16.mxu0 0
      %1232 = vmatpush1.bf16.msra.mxu0 0
      %1233 = vmatprep.subr.bf16.mxu0 0
      %1234 = vmatpush1.bf16.msra.mxu0 0
      %1235 = vmatprep.subr.bf16.mxu0 0
      %1236 = vmatpush1.bf16.msra.mxu0 0
      %1237 = vmatprep.subr.bf16.mxu0 0
      %1238 = vmatpush1.bf16.msra.mxu0 0
      %1239 = vmatprep.subr.bf16.mxu0 0
      %1240 = vmatpush1.bf16.msra.mxu0 0
      %1241 = vmatprep.subr.bf16.mxu0 0
      %1242 = vmatpush1.bf16.msra.mxu0 0
      %1243 = vmatprep.mubr.bf16.mxu0 0
      %1244 = vmatmul.mubr.bf16.gmra.mrb[0].mxu0 %v555
      %v1245 = vpop.f32.mrb[0].mxu0
      %v1246 = vadd.f32 %v1197, %v1245
      %v1247 = vpop.f32.mrb[0].mxu0
      %v1248 = vpop.f32.mrb[0].mxu0
      %v1249 = vadd.f32 %v1200, %v1248
      %v1250 = vpop.f32.mrb[0].mxu0
      %1251 = vmatprep.mubr.bf16.mxu0 0
      %1252 = vmatmul.mubr.bf16.gmra.mrb[0].mxu0 %v564
      %v1253 = vpop.f32.mrb[0].mxu0
      %v1254 = vadd.f32 %v1205, %v1253
      %v1255 = vpop.f32.mrb[0].mxu0
      %v1256 = vpop.f32.mrb[0].mxu0
      %v1257 = vadd.f32 %v1208, %v1256
      %v1258 = vpop.f32.mrb[0].mxu0
      %1259 = vdwg.mxu0
      %v1260 = vld [vmem:[%s2] sm:$0x1]
      %v1262 = vlaneseq
      %v1263 = vshrl.u32 %v1262, 7
      %v1264 = vsub.s32 0, %v1263
      %v1265 = vrot.slane %v1260, %v1264
      %v1267 = vmul.f32 %v1246, %v1265
      %v1268 = vmul.f32 %v1249, %v1265
      %v1269 = vmul.f32 %v1254, %v1265
      %v1270 = vmul.f32 %v1257, %v1265
      %v1271 = vld [vmem:[%s3] sm:$0x1]
      %v1273 = vlaneseq
      %v1274 = vshrl.u32 %v1273, 7
      %v1275 = vsub.s32 0, %v1274
      %v1276 = vrot.slane %v1271, %v1275
      %v1278 = vadd.f32 %v1267, %v1276
      %v1279 = vadd.f32 %v1268, %v1276
      %v1280 = vadd.f32 %v1269, %v1276
      %v1281 = vadd.f32 %v1270, %v1276
      %v1282 = vmin.f32 %v1278, 20.0
      %v1283 = vmin.f32 %v1279, 20.0
      %v1284 = vmin.f32 %v1280, 20.0
      %v1285 = vmin.f32 %v1281, 20.0
      %v1286 = vmul.f32 %v1282, 1.442695
      %v1287 = vpow.pop %v1286
      %v1288 = vmul.f32 %v1283, 1.442695
      %v1289 = vpow.pop %v1288
      %v1290 = vmul.f32 %v1284, 1.442695
      %v1291 = vpow.pop %v1290
      %v1292 = vmul.f32 %v1285, 1.442695
      %v1293 = vpow.pop %v1292
      %v1294 = vadd.f32 %v1287, 1.0
      %v1295 = vadd.f32 %v1289, 1.0
      %v1296 = vadd.f32 %v1291, 1.0
      %v1297 = vadd.f32 %v1293, 1.0
      %v1298 = vmul.f32 %v1294, %v1294
      %v1299 = vmul.f32 %v1295, %v1295
      %v1300 = vmul.f32 %v1296, %v1296
      %v1301 = vmul.f32 %v1297, %v1297
      %v1302 = vadd.f32 %v1298, 1.0
      %v1303 = vadd.f32 %v1299, 1.0
      %v1304 = vadd.f32 %v1300, 1.0
      %v1305 = vadd.f32 %v1301, 1.0
      %v1306 = vrcp.pop %v1302
      %v1307 = vrcp.pop %v1303
      %v1308 = vrcp.pop %v1304
      %v1309 = vrcp.pop %v1305
      %v1310 = vmul.f32 %v1302, %v1306
      %v1311 = vmul.f32 %v1303, %v1307
      %v1312 = vmul.f32 %v1304, %v1308
      %v1313 = vmul.f32 %v1305, %v1309
      %v1314 = vsub.f32 2.0, %v1310
      %v1315 = vsub.f32 2.0, %v1311
      %v1316 = vsub.f32 2.0, %v1312
      %v1317 = vsub.f32 2.0, %v1313
      %v1318 = vmul.f32 %v1306, %v1314
      %v1319 = vmul.f32 %v1307, %v1315
      %v1320 = vmul.f32 %v1308, %v1316
      %v1321 = vmul.f32 %v1309, %v1317
      %v1322 = vsub.f32 %v1298, 1.0
      %v1323 = vsub.f32 %v1299, 1.0
      %v1324 = vsub.f32 %v1300, 1.0
      %v1325 = vsub.f32 %v1301, 1.0
      %v1326 = vmul.f32 %v1278, %v1322
      %v1327 = vmul.f32 %v1279, %v1323
      %v1328 = vmul.f32 %v1280, %v1324
      %v1329 = vmul.f32 %v1281, %v1325
      %v1330 = vmul.f32 %v1326, %v1318
      %v1331 = vmul.f32 %v1327, %v1319
      %v1332 = vmul.f32 %v1328, %v1320
      %v1333 = vmul.f32 %v1329, %v1321
      %v1334 = vpack.c.bf16 %v1331, %v1330
      %v1335 = vpack.c.bf16 %v1333, %v1332
      %v1336 = vld [vmem:[%s4] sm:$0xff]
      %v1337 = vld [vmem:[%s4 + $0x8] sm:$0xff]
      %v1338 = vld [vmem:[%s4 + $0x10] sm:$0xff]
      %v1339 = vld [vmem:[%s4 + $0x18] sm:$0xff]
      %v1340 = vld [vmem:[%s4 + $0x20] sm:$0xff]
      %v1341 = vld [vmem:[%s4 + $0x28] sm:$0xff]
      %v1342 = vld [vmem:[%s4 + $0x30] sm:$0xff]
      %v1343 = vld [vmem:[%s4 + $0x38] sm:$0xff]
      %v1344 = vld [vmem:[%s4 + $0x40] sm:$0xff]
      %v1345 = vld [vmem:[%s4 + $0x48] sm:$0xff]
      %v1346 = vld [vmem:[%s4 + $0x50] sm:$0xff]
      %v1347 = vld [vmem:[%s4 + $0x58] sm:$0xff]
      %v1348 = vld [vmem:[%s4 + $0x60] sm:$0xff]
      %v1349 = vld [vmem:[%s4 + $0x68] sm:$0xff]
      %v1350 = vld [vmem:[%s4 + $0x70] sm:$0xff]
      %v1351 = vld [vmem:[%s4 + $0x78] sm:$0xff]
      %v1368 = vunpack.c.l.b16 %v1336
      %v1369 = vunpack.c.h.b16 %v1336
      %v1370 = vunpack.c.l.b16 %v1337
      %v1371 = vunpack.c.h.b16 %v1337
      %v1372 = vunpack.c.l.b16 %v1338
      %v1373 = vunpack.c.h.b16 %v1338
      %v1374 = vunpack.c.l.b16 %v1339
      %v1375 = vunpack.c.h.b16 %v1339
      %v1376 = vunpack.c.l.b16 %v1340
      %v1377 = vunpack.c.h.b16 %v1340
      %v1378 = vunpack.c.l.b16 %v1341
      %v1379 = vunpack.c.h.b16 %v1341
      %v1380 = vunpack.c.l.b16 %v1342
      %v1381 = vunpack.c.h.b16 %v1342
      %v1382 = vunpack.c.l.b16 %v1343
      %v1383 = vunpack.c.h.b16 %v1343
      %v1384 = vunpack.c.l.b16 %v1344
      %v1385 = vunpack.c.h.b16 %v1344
      %v1386 = vunpack.c.l.b16 %v1345
      %v1387 = vunpack.c.h.b16 %v1345
      %v1388 = vunpack.c.l.b16 %v1346
      %v1389 = vunpack.c.h.b16 %v1346
      %v1390 = vunpack.c.l.b16 %v1347
      %v1391 = vunpack.c.h.b16 %v1347
      %v1392 = vunpack.c.l.b16 %v1348
      %v1393 = vunpack.c.h.b16 %v1348
      %v1394 = vunpack.c.l.b16 %v1349
      %v1395 = vunpack.c.h.b16 %v1349
      %v1396 = vunpack.c.l.b16 %v1350
      %v1397 = vunpack.c.h.b16 %v1350
      %v1398 = vunpack.c.l.b16 %v1351
      %v1399 = vunpack.c.h.b16 %v1351
      %v1400 = vpack.c.b16 %v1370, %v1368
      %v1401 = vpack.c.b16 %v1371, %v1369
      %v1402 = vpack.c.b16 %v1374, %v1372
      %v1403 = vpack.c.b16 %v1375, %v1373
      %v1404 = vpack.c.b16 %v1378, %v1376
      %v1405 = vpack.c.b16 %v1379, %v1377
      %v1406 = vpack.c.b16 %v1382, %v1380
      %v1407 = vpack.c.b16 %v1383, %v1381
      %v1408 = vpack.c.b16 %v1386, %v1384
      %v1409 = vpack.c.b16 %v1387, %v1385
      %v1410 = vpack.c.b16 %v1390, %v1388
      %v1411 = vpack.c.b16 %v1391, %v1389
      %v1412 = vpack.c.b16 %v1394, %v1392
      %v1413 = vpack.c.b16 %v1395, %v1393
      %v1414 = vpack.c.b16 %v1398, %v1396
      %v1415 = vpack.c.b16 %v1399, %v1397
      %1432 = vmatprep.subr.bf16.mxu0 %v1401
      %1433 = vmatpush1.bf16.msra.mxu0 %v1400
      %1434 = vmatprep.subr.bf16.mxu0 %v1403
      %1435 = vmatpush1.bf16.msra.mxu0 %v1402
      %1436 = vmatprep.subr.bf16.mxu0 %v1405
      %1437 = vmatpush1.bf16.msra.mxu0 %v1404
      %1438 = vmatprep.subr.bf16.mxu0 %v1407
      %1439 = vmatpush1.bf16.msra.mxu0 %v1406
      %1440 = vmatprep.subr.bf16.mxu0 %v1409
      %1441 = vmatpush1.bf16.msra.mxu0 %v1408
      %1442 = vmatprep.subr.bf16.mxu0 %v1411
      %1443 = vmatpush1.bf16.msra.mxu0 %v1410
      %1444 = vmatprep.subr.bf16.mxu0 %v1413
      %1445 = vmatpush1.bf16.msra.mxu0 %v1412
      %1446 = vmatprep.subr.bf16.mxu0 %v1415
      %1447 = vmatpush1.bf16.msra.mxu0 %v1414
      %1448 = vmatprep.subr.bf16.mxu0 0
      %1449 = vmatpush1.bf16.msra.mxu0 0
      %1450 = vmatprep.subr.bf16.mxu0 0
      %1451 = vmatpush1.bf16.msra.mxu0 0
      %1452 = vmatprep.subr.bf16.mxu0 0
      %1453 = vmatpush1.bf16.msra.mxu0 0
      %1454 = vmatprep.subr.bf16.mxu0 0
      %1455 = vmatpush1.bf16.msra.mxu0 0
      %1456 = vmatprep.subr.bf16.mxu0 0
      %1457 = vmatpush1.bf16.msra.mxu0 0
      %1458 = vmatprep.subr.bf16.mxu0 0
      %1459 = vmatpush1.bf16.msra.mxu0 0
      %1460 = vmatprep.subr.bf16.mxu0 0
      %1461 = vmatpush1.bf16.msra.mxu0 0
      %1462 = vmatprep.subr.bf16.mxu0 0
      %1463 = vmatpush1.bf16.msra.mxu0 0
      %1464 = vmatprep.mubr.bf16.mxu0 0
      %1465 = vmatmul.mubr.bf16.gmra.mrb[0].mxu0 %v1334
      %v1466 = vpop.f32.mrb[0].mxu0
      %v1467 = vadd.f32 0.0, %v1466
      %v1468 = vpop.f32.mrb[0].mxu0
      %v1469 = vadd.f32 0.0, %v1468
      %v1470 = vpop.f32.mrb[0].mxu0
      %v1471 = vadd.f32 0.0, %v1470
      %v1472 = vpop.f32.mrb[0].mxu0
      %v1473 = vadd.f32 0.0, %v1472
      %1474 = vmatprep.mubr.bf16.mxu0 0
      %1475 = vmatmul.mubr.bf16.gmra.mrb[0].mxu0 %v1335
      %v1476 = vpop.f32.mrb[0].mxu0
      %v1477 = vadd.f32 0.0, %v1476
      %v1478 = vpop.f32.mrb[0].mxu0
      %v1479 = vadd.f32 0.0, %v1478
      %v1480 = vpop.f32.mrb[0].mxu0
      %v1481 = vadd.f32 0.0, %v1480
      %v1482 = vpop.f32.mrb[0].mxu0
      %v1483 = vadd.f32 0.0, %v1482
      %1484 = vdwg.mxu0
      %v1485 = vld [vmem:[%s5] sm:$0x3]
      %v1487 = vlaneseq
      %v1488 = vshrl.u32 %v1487, 7
      %v1489 = vsub.s32 0, %v1488
      %v1490 = vrot.slane %v1485, %v1489
      %v1491 = vlaneseq
      %v1492 = vshrl.u32 %v1491, 7
      %v1493 = vsub.s32 1, %v1492
      %v1494 = vrot.slane %v1485, %v1493
      %v1497 = vmul.f32 %v1467, %v1490
      %v1498 = vmul.f32 %v1469, %v1494
      %v1499 = vmul.f32 %v1471, %v1490
      %v1500 = vmul.f32 %v1473, %v1494
      %v1501 = vmul.f32 %v1477, %v1490
      %v1502 = vmul.f32 %v1479, %v1494
      %v1503 = vmul.f32 %v1481, %v1490
      %v1504 = vmul.f32 %v1483, %v1494
      %v1505 = vld [vmem:[%s6] sm:$0x3]
      %v1507 = vlaneseq
      %v1508 = vshrl.u32 %v1507, 7
      %v1509 = vsub.s32 0, %v1508
      %v1510 = vrot.slane %v1505, %v1509
      %v1511 = vlaneseq
      %v1512 = vshrl.u32 %v1511, 7
      %v1513 = vsub.s32 1, %v1512
      %v1514 = vrot.slane %v1505, %v1513
      %v1517 = vadd.f32 %v1497, %v1510
      %v1518 = vadd.f32 %v1498, %v1514
      %v1519 = vadd.f32 %v1499, %v1510
      %v1520 = vadd.f32 %v1500, %v1514
      %v1521 = vadd.f32 %v1501, %v1510
      %v1522 = vadd.f32 %v1502, %v1514
      %v1523 = vadd.f32 %v1503, %v1510
      %v1524 = vadd.f32 %v1504, %v1514
      %v1525 = vmin.f32 %v1517, 20.0
      %v1526 = vmin.f32 %v1518, 20.0
      %v1527 = vmin.f32 %v1519, 20.0
      %v1528 = vmin.f32 %v1520, 20.0
      %v1529 = vmin.f32 %v1521, 20.0
      %v1530 = vmin.f32 %v1522, 20.0
      %v1531 = vmin.f32 %v1523, 20.0
      %v1532 = vmin.f32 %v1524, 20.0
      %v1533 = vmul.f32 %v1525, 1.442695
      %v1534 = vpow.pop %v1533
      %v1535 = vmul.f32 %v1526, 1.442695
      %v1536 = vpow.pop %v1535
      %v1537 = vmul.f32 %v1527, 1.442695
      %v1538 = vpow.pop %v1537
      %v1539 = vmul.f32 %v1528, 1.442695
      %v1540 = vpow.pop %v1539
      %v1541 = vmul.f32 %v1529, 1.442695
      %v1542 = vpow.pop %v1541
      %v1543 = vmul.f32 %v1530, 1.442695
      %v1544 = vpow.pop %v1543
      %v1545 = vmul.f32 %v1531, 1.442695
      %v1546 = vpow.pop %v1545
      %v1547 = vmul.f32 %v1532, 1.442695
      %v1548 = vpow.pop %v1547
      %v1549 = vadd.f32 %v1534, 1.0
      %v1550 = vadd.f32 %v1536, 1.0
      %v1551 = vadd.f32 %v1538, 1.0
      %v1552 = vadd.f32 %v1540, 1.0
      %v1553 = vadd.f32 %v1542, 1.0
      %v1554 = vadd.f32 %v1544, 1.0
      %v1555 = vadd.f32 %v1546, 1.0
      %v1556 = vadd.f32 %v1548, 1.0
      %v1557 = vmul.f32 %v1549, %v1549
      %v1558 = vmul.f32 %v1550, %v1550
      %v1559 = vmul.f32 %v1551, %v1551
      %v1560 = vmul.f32 %v1552, %v1552
      %v1561 = vmul.f32 %v1553, %v1553
      %v1562 = vmul.f32 %v1554, %v1554
      %v1563 = vmul.f32 %v1555, %v1555
      %v1564 = vmul.f32 %v1556, %v1556
      %v1565 = vadd.f32 %v1557, 1.0
      %v1566 = vadd.f32 %v1558, 1.0
      %v1567 = vadd.f32 %v1559, 1.0
      %v1568 = vadd.f32 %v1560, 1.0
      %v1569 = vadd.f32 %v1561, 1.0
      %v1570 = vadd.f32 %v1562, 1.0
      %v1571 = vadd.f32 %v1563, 1.0
      %v1572 = vadd.f32 %v1564, 1.0
      %v1573 = vrcp.pop %v1565
      %v1574 = vrcp.pop %v1566
      %v1575 = vrcp.pop %v1567
      %v1576 = vrcp.pop %v1568
      %v1577 = vrcp.pop %v1569
      %v1578 = vrcp.pop %v1570
      %v1579 = vrcp.pop %v1571
      %v1580 = vrcp.pop %v1572
      %v1581 = vmul.f32 %v1565, %v1573
      %v1582 = vmul.f32 %v1566, %v1574
      %v1583 = vmul.f32 %v1567, %v1575
      %v1584 = vmul.f32 %v1568, %v1576
      %v1585 = vmul.f32 %v1569, %v1577
      %v1586 = vmul.f32 %v1570, %v1578
      %v1587 = vmul.f32 %v1571, %v1579
      %v1588 = vmul.f32 %v1572, %v1580
      %v1589 = vsub.f32 2.0, %v1581
      %v1590 = vsub.f32 2.0, %v1582
      %v1591 = vsub.f32 2.0, %v1583
      %v1592 = vsub.f32 2.0, %v1584
      %v1593 = vsub.f32 2.0, %v1585
      %v1594 = vsub.f32 2.0, %v1586
      %v1595 = vsub.f32 2.0, %v1587
      %v1596 = vsub.f32 2.0, %v1588
      %v1597 = vmul.f32 %v1573, %v1589
      %v1598 = vmul.f32 %v1574, %v1590
      %v1599 = vmul.f32 %v1575, %v1591
      %v1600 = vmul.f32 %v1576, %v1592
      %v1601 = vmul.f32 %v1577, %v1593
      %v1602 = vmul.f32 %v1578, %v1594
      %v1603 = vmul.f32 %v1579, %v1595
      %v1604 = vmul.f32 %v1580, %v1596
      %v1605 = vsub.f32 %v1557, 1.0
      %v1606 = vsub.f32 %v1558, 1.0
      %v1607 = vsub.f32 %v1559, 1.0
      %v1608 = vsub.f32 %v1560, 1.0
      %v1609 = vsub.f32 %v1561, 1.0
      %v1610 = vsub.f32 %v1562, 1.0
      %v1611 = vsub.f32 %v1563, 1.0
      %v1612 = vsub.f32 %v1564, 1.0
      %v1613 = vmul.f32 %v1517, %v1605
      %v1614 = vmul.f32 %v1518, %v1606
      %v1615 = vmul.f32 %v1519, %v1607
      %v1616 = vmul.f32 %v1520, %v1608
      %v1617 = vmul.f32 %v1521, %v1609
      %v1618 = vmul.f32 %v1522, %v1610
      %v1619 = vmul.f32 %v1523, %v1611
      %v1620 = vmul.f32 %v1524, %v1612
      %v1621 = vmul.f32 %v1613, %v1597
      %v1622 = vmul.f32 %v1614, %v1598
      %v1623 = vmul.f32 %v1615, %v1599
      %v1624 = vmul.f32 %v1616, %v1600
      %v1625 = vmul.f32 %v1617, %v1601
      %v1626 = vmul.f32 %v1618, %v1602
      %v1627 = vmul.f32 %v1619, %v1603
      %v1628 = vmul.f32 %v1620, %v1604
      %v1629 = vpack.c.bf16 %v1623, %v1621
      %v1630 = vpack.c.bf16 %v1627, %v1625
      %v1633 = vunpack.c.l.b16 %v1629
      %v1634 = vunpack.c.h.b16 %v1629
      %v1635 = vunpack.c.l.b16 %v1630
      %v1636 = vunpack.c.h.b16 %v1630
      %v1637 = vpack.c.b16 %v1633, %v1633
      %v1638 = vpack.c.b16 %v1634, %v1634
      %v1639 = vpack.c.b16 %v1635, %v1635
      %v1640 = vpack.c.b16 %v1636, %v1636
      %1645 = vst [vmem:[%s318] sm:$0xf] %v1637
      %1646 = vst [vmem:[%s318 + $0x4] sm:$0xf] %v1638
      %1647 = vst [vmem:[%s318 + $0x8] sm:$0xf] %v1639
      %1648 = vst [vmem:[%s318 + $0xc] sm:$0xf] %v1640
      %v1649 = vpack.c.bf16 %v1624, %v1622
      %v1650 = vpack.c.bf16 %v1628, %v1626
      %v1653 = vunpack.c.l.b16 %v1649
      %v1654 = vunpack.c.h.b16 %v1649
      %v1655 = vunpack.c.l.b16 %v1650
      %v1656 = vunpack.c.h.b16 %v1650
      %v1657 = vpack.c.b16 %v1653, %v1653
      %v1658 = vpack.c.b16 %v1654, %v1654
      %v1659 = vpack.c.b16 %v1655, %v1655
      %v1660 = vpack.c.b16 %v1656, %v1656
      %1665 = vst [vmem:[%s324] sm:$0xf] %v1657
      %1666 = vst [vmem:[%s324 + $0x4] sm:$0xf] %v1658
      %1667 = vst [vmem:[%s324 + $0x8] sm:$0xf] %v1659
      %1668 = vst [vmem:[%s324 + $0xc] sm:$0xf] %v1660
      %s1669 = smul.u32 4, %s20
      %p1670 = scmp.lt.s32.totalorder %s1669, 15
      %s1671 = scalar_select %p1670, %s1669, 15
      %s1672 = smul.addr %s1671, 4
      %s1673 = scalar_lea.vmem %s7, %s1672
      %s1674 = smul.u32 4, %s20
      %p1675 = scmp.lt.s32.totalorder %s1674, 15
      %s1676 = scalar_select %p1675, %s1674, 15
      %s1677 = smul.addr %s1676, 4
      %s1678 = scalar_lea.vmem %s8, %s1677
      // Predicated region
      $region49: #{cspstage_forward.4} parent=47 // pred_check
        %p1679 = pneg %p190
      $region50: #{cspstage_forward.4} parent=47 // pred_check_branch
        %1681 = sbr.rel (%p1679) target = $region52
      $region51: #{cspstage_forward.4} parent=47 // pred_region
        %s1682 = smul.u32 4, %s20
      $region52: #{cspstage_forward.4} parent=47 // pred_fallthru
        _
      // Predicated region
      $region53: #{cspstage_forward.4} parent=47 // pred_check
        %p1683 = pneg %p216
      $region54: #{cspstage_forward.4} parent=47 // pred_check_branch
        %1685 = sbr.rel (%p1683) target = $region56
      $region55: #{cspstage_forward.4} parent=47 // pred_region
        %s1686 = smul.u32 4, %s20
      $region56: #{cspstage_forward.4} parent=47 // pred_fallthru
        _
    $region48: #{cspstage_forward.4} parent=5 // pred_fallthru
      _
    %p1687 = scmp.le.s32.totalorder 2, %s15
    // Predicated region
    $region57: #{cspstage_forward.4} parent=5 // pred_check
      %p1688 = pneg %p1687
    $region58: #{cspstage_forward.4} parent=5 // pred_check_branch
      %1690 = sbr.rel (%p1688) target = $region60
    $region59: #{cspstage_forward.4} parent=5 // pred_region
      %s1691 = ssub.s32 %s15, 2
      // Predicated region
      $region61: #{cspstage_forward.4} parent=59 // pred_check
        %p1692 = pneg %p196
      $region62: #{cspstage_forward.4} parent=59 // pred_check_branch
        %1694 = sbr.rel (%p1692) target = $region64
      $region63: #{cspstage_forward.4} parent=59 // pred_region
        %s1695 = smul.u32 4, %s21
        %p1696 = scmp.lt.s32.totalorder %s1695, 15
        %s1697 = scalar_select %p1696, %s1695, 15
        %s1698 = smul.addr %s1697, 4
        %s1699 = scalar_lea.vmem %s7, %s1698
      $region64: #{cspstage_forward.4} parent=59 // pred_fallthru
        _
      // Predicated region
      $region65: #{cspstage_forward.4} parent=59 // pred_check
        %p1700 = pneg %p222
      $region66: #{cspstage_forward.4} parent=59 // pred_check_branch
        %1702 = sbr.rel (%p1700) target = $region68
      $region67: #{cspstage_forward.4} parent=59 // pred_region
        %s1703 = smul.u32 4, %s21
        %p1704 = scmp.lt.s32.totalorder %s1703, 15
        %s1705 = scalar_select %p1704, %s1703, 15
        %s1706 = smul.addr %s1705, 4
        %s1707 = scalar_lea.vmem %s8, %s1706
      $region68: #{cspstage_forward.4} parent=59 // pred_fallthru
        _
    $region60: #{cspstage_forward.4} parent=5 // pred_fallthru
      _
  $region6: #{cspstage_forward.4} parent=0 // loop_footer
    %s19 = sadd.s32 1, %s15
  $region7: #{cspstage_forward.4} parent=0 // loop_footer_branch
    %14 = sbr.rel target = $region3
  $region8: #{cspstage_forward.4} parent=0 // loop_exit
    _

// kernel: cspstage_forward.7
$region0: #{cspstage_forward.7}
  #allocation0 [shape = 'u32[]', space=smem, size = 0x4, offset = 0x4, fixed_abs, tag = 'smem constant byte address 0x4 - core index']
  #allocation1 [shape = 'u32[144,128]{1,0:T(1,128)}', space=vmem, size = 0x12000, scoped, tag = 'internal scratch']
  %s0 = inlined_call_operand.vmem [shape: bf16[128,128], index: 0, kind: input, shape index: {}]
  %s1 = inlined_call_operand.vmem [shape: bf16[128,128], index: 1, kind: input, shape index: {}]
  %s2 = inlined_call_operand.vmem [shape: bf16[128,128], index: 2, kind: input, shape index: {}]
  %s3 = inlined_call_operand.vmem [shape: f32[1,128], index: 3, kind: input, shape index: {}]
  %s4 = inlined_call_operand.vmem [shape: f32[1,128], index: 4, kind: input, shape index: {}]
  %s5 = inlined_call_operand.vmem [shape: bf16[128,128], index: 5, kind: input, shape index: {}]
  %s6 = inlined_call_operand.vmem [shape: bf16[128,128], index: 6, kind: input, shape index: {}]
  %s7 = inlined_call_operand.vmem [shape: f32[1,128], index: 7, kind: input, shape index: {}]
  %s8 = inlined_call_operand.vmem [shape: f32[1,128], index: 8, kind: input, shape index: {}]
  %s9 = inlined_call_operand.vmem [shape: bf16[128,128], index: 9, kind: output, shape index: {}]
  %s10 = sld [smem:[#allocation0]]
  $region69: #{cspstage_forward.7} parent=0
    _
  %s12 = ssub.s32 1, %s10
  %s13 = scalar_select 0, %s12, %s10
  loop: start=0, step=1, limit=6
  $region2: #{cspstage_forward.7} parent=0 // loop_pre_header
    _
  $region3: #{cspstage_forward.7} parent=0 // loop_header
    %s15 = sphi 0, %s19
    %p16 = scmp.ge.s32.totalorder %s15, 6
    %s25 = sphi 0, %s27
    %s28 = sphi 0, %s25
    %s29 = sphi 0, %s28
    %s45 = sphi 0, %s29
    %s51 = sphi 0, %s53
    %s54 = sphi 0, %s51
    %s55 = sphi 0, %s54
    %s71 = sphi 0, %s55
    %s75 = sphi 0, %s75
    %s77 = sphi 0, %s75
    %s78 = sphi 0, %s77
    %s92 = sphi 0, %s78
    %s96 = sphi 0, %s96
    %s98 = sphi 0, %s96
    %s99 = sphi 0, %s98
    %s113 = sphi 0, %s99
    %s117 = sphi 0, %s117
    %s119 = sphi 0, %s117
    %s120 = sphi 0, %s119
    %s134 = sphi 0, %s120
    %s138 = sphi 0, %s138
    %s140 = sphi 0, %s138
    %s141 = sphi 0, %s140
    %s155 = sphi 0, %s141
    %s159 = sphi 0, %s159
    %s161 = sphi 0, %s159
    %s162 = sphi 0, %s161
    %s176 = sphi 0, %s162
    %s180 = sphi 0, %s180
    %s182 = sphi 0, %s180
    %s183 = sphi 0, %s182
    %s197 = sphi 0, %s183
    %s201 = sphi 0, %s201
    %s203 = sphi 0, %s201
    %s204 = sphi 0, %s203
    %s218 = sphi 0, %s204
    %s224 = sphi 0, %s226
    %s227 = sphi 0, %s224
    %s228 = sphi 0, %s227
    %s244 = sphi 0, %s228
  $region4: #{cspstage_forward.7} parent=0 // loop_header_branch
    %18 = sbr.rel (%p16) target = $region8
  $region5: #{cspstage_forward.7} parent=0 // loop_body
    %s20 = ssub.s32 %s15, 1
    %s21 = ssub.s32 %s15, 2
    %s22 = sadd.s32 %s15, 1
    %s23 = ssub.s32 %s15, %s22
    %p24 = scmp.eq.s32.totalorder %s23, 0
    %s26 = sadd.s32 %s25, 1
    %s27 = scalar_select %p24, %s25, %s26
    %p30 = pneg %p24
    %p31 = scmp.eq.s32.totalorder %s15, 3
    %p32 = por %p30, %p31
    %p33 = scmp.ne.s32.totalorder %s25, %s28
    %p34 = scmp.eq.s32.totalorder %s15, 0
    %p35 = por %p33, %p34
    %p36 = scmp.ne.s32.totalorder %s25, %s28
    %p37 = scmp.eq.s32.totalorder %s20, 3
    %p38 = por %p36, %p37
    %p39 = scmp.ne.s32.totalorder %s28, %s29
    %p40 = scmp.eq.s32.totalorder %s20, 0
    %p41 = por %p39, %p40
    %p42 = scmp.ne.s32.totalorder %s28, %s29
    %p43 = scmp.eq.s32.totalorder %s21, 3
    %p44 = por %p42, %p43
    %p46 = scmp.ne.s32.totalorder %s29, %s45
    %p47 = scmp.eq.s32.totalorder %s21, 0
    %p48 = por %p46, %p47
    %s49 = ssub.s32 %s15, %s22
    %p50 = scmp.eq.s32.totalorder %s49, 0
    %s52 = sadd.s32 %s51, 1
    %s53 = scalar_select %p50, %s51, %s52
    %p56 = pneg %p50
    %p57 = scmp.eq.s32.totalorder %s15, 3
    %p58 = por %p56, %p57
    %p59 = scmp.ne.s32.totalorder %s51, %s54
    %p60 = scmp.eq.s32.totalorder %s15, 0
    %p61 = por %p59, %p60
    %p62 = scmp.ne.s32.totalorder %s51, %s54
    %p63 = scmp.eq.s32.totalorder %s20, 3
    %p64 = por %p62, %p63
    %p65 = scmp.ne.s32.totalorder %s54, %s55
    %p66 = scmp.eq.s32.totalorder %s20, 0
    %p67 = por %p65, %p66
    %p68 = scmp.ne.s32.totalorder %s54, %s55
    %p69 = scmp.eq.s32.totalorder %s21, 3
    %p70 = por %p68, %p69
    %p72 = scmp.ne.s32.totalorder %s55, %s71
    %p73 = scmp.eq.s32.totalorder %s21, 0
    %p74 = por %p72, %p73
    %s76 = sadd.s32 %s75, 1
    %p79 = scmp.eq.s32.totalorder %s15, 3
    %p80 = scmp.ne.s32.totalorder %s75, %s77
    %p81 = scmp.eq.s32.totalorder %s15, 0
    %p82 = por %p80, %p81
    %p83 = scmp.ne.s32.totalorder %s75, %s77
    %p84 = scmp.eq.s32.totalorder %s20, 3
    %p85 = por %p83, %p84
    %p86 = scmp.ne.s32.totalorder %s77, %s78
    %p87 = scmp.eq.s32.totalorder %s20, 0
    %p88 = por %p86, %p87
    %p89 = scmp.ne.s32.totalorder %s77, %s78
    %p90 = scmp.eq.s32.totalorder %s21, 3
    %p91 = por %p89, %p90
    %p93 = scmp.ne.s32.totalorder %s78, %s92
    %p94 = scmp.eq.s32.totalorder %s21, 0
    %p95 = por %p93, %p94
    %s97 = sadd.s32 %s96, 1
    %p100 = scmp.eq.s32.totalorder %s15, 3
    %p101 = scmp.ne.s32.totalorder %s96, %s98
    %p102 = scmp.eq.s32.totalorder %s15, 0
    %p103 = por %p101, %p102
    %p104 = scmp.ne.s32.totalorder %s96, %s98
    %p105 = scmp.eq.s32.totalorder %s20, 3
    %p106 = por %p104, %p105
    %p107 = scmp.ne.s32.totalorder %s98, %s99
    %p108 = scmp.eq.s32.totalorder %s20, 0
    %p109 = por %p107, %p108
    %p110 = scmp.ne.s32.totalorder %s98, %s99
    %p111 = scmp.eq.s32.totalorder %s21, 3
    %p112 = por %p110, %p111
    %p114 = scmp.ne.s32.totalorder %s99, %s113
    %p115 = scmp.eq.s32.totalorder %s21, 0
    %p116 = por %p114, %p115
    %s118 = sadd.s32 %s117, 1
    %p121 = scmp.eq.s32.totalorder %s15, 3
    %p122 = scmp.ne.s32.totalorder %s117, %s119
    %p123 = scmp.eq.s32.totalorder %s15, 0
    %p124 = por %p122, %p123
    %p125 = scmp.ne.s32.totalorder %s117, %s119
    %p126 = scmp.eq.s32.totalorder %s20, 3
    %p127 = por %p125, %p126
    %p128 = scmp.ne.s32.totalorder %s119, %s120
    %p129 = scmp.eq.s32.totalorder %s20, 0
    %p130 = por %p128, %p129
    %p131 = scmp.ne.s32.totalorder %s119, %s120
    %p132 = scmp.eq.s32.totalorder %s21, 3
    %p133 = por %p131, %p132
    %p135 = scmp.ne.s32.totalorder %s120, %s134
    %p136 = scmp.eq.s32.totalorder %s21, 0
    %p137 = por %p135, %p136
    %s139 = sadd.s32 %s138, 1
    %p142 = scmp.eq.s32.totalorder %s15, 3
    %p143 = scmp.ne.s32.totalorder %s138, %s140
    %p144 = scmp.eq.s32.totalorder %s15, 0
    %p145 = por %p143, %p144
    %p146 = scmp.ne.s32.totalorder %s138, %s140
    %p147 = scmp.eq.s32.totalorder %s20, 3
    %p148 = por %p146, %p147
    %p149 = scmp.ne.s32.totalorder %s140, %s141
    %p150 = scmp.eq.s32.totalorder %s20, 0
    %p151 = por %p149, %p150
    %p152 = scmp.ne.s32.totalorder %s140, %s141
    %p153 = scmp.eq.s32.totalorder %s21, 3
    %p154 = por %p152, %p153
    %p156 = scmp.ne.s32.totalorder %s141, %s155
    %p157 = scmp.eq.s32.totalorder %s21, 0
    %p158 = por %p156, %p157
    %s160 = sadd.s32 %s159, 1
    %p163 = scmp.eq.s32.totalorder %s15, 3
    %p164 = scmp.ne.s32.totalorder %s159, %s161
    %p165 = scmp.eq.s32.totalorder %s15, 0
    %p166 = por %p164, %p165
    %p167 = scmp.ne.s32.totalorder %s159, %s161
    %p168 = scmp.eq.s32.totalorder %s20, 3
    %p169 = por %p167, %p168
    %p170 = scmp.ne.s32.totalorder %s161, %s162
    %p171 = scmp.eq.s32.totalorder %s20, 0
    %p172 = por %p170, %p171
    %p173 = scmp.ne.s32.totalorder %s161, %s162
    %p174 = scmp.eq.s32.totalorder %s21, 3
    %p175 = por %p173, %p174
    %p177 = scmp.ne.s32.totalorder %s162, %s176
    %p178 = scmp.eq.s32.totalorder %s21, 0
    %p179 = por %p177, %p178
    %s181 = sadd.s32 %s180, 1
    %p184 = scmp.eq.s32.totalorder %s15, 3
    %p185 = scmp.ne.s32.totalorder %s180, %s182
    %p186 = scmp.eq.s32.totalorder %s15, 0
    %p187 = por %p185, %p186
    %p188 = scmp.ne.s32.totalorder %s180, %s182
    %p189 = scmp.eq.s32.totalorder %s20, 3
    %p190 = por %p188, %p189
    %p191 = scmp.ne.s32.totalorder %s182, %s183
    %p192 = scmp.eq.s32.totalorder %s20, 0
    %p193 = por %p191, %p192
    %p194 = scmp.ne.s32.totalorder %s182, %s183
    %p195 = scmp.eq.s32.totalorder %s21, 3
    %p196 = por %p194, %p195
    %p198 = scmp.ne.s32.totalorder %s183, %s197
    %p199 = scmp.eq.s32.totalorder %s21, 0
    %p200 = por %p198, %p199
    %s202 = sadd.s32 %s201, 1
    %p205 = scmp.eq.s32.totalorder %s15, 3
    %p206 = scmp.ne.s32.totalorder %s201, %s203
    %p207 = scmp.eq.s32.totalorder %s15, 0
    %p208 = por %p206, %p207
    %p209 = scmp.ne.s32.totalorder %s201, %s203
    %p210 = scmp.eq.s32.totalorder %s20, 3
    %p211 = por %p209, %p210
    %p212 = scmp.ne.s32.totalorder %s203, %s204
    %p213 = scmp.eq.s32.totalorder %s20, 0
    %p214 = por %p212, %p213
    %p215 = scmp.ne.s32.totalorder %s203, %s204
    %p216 = scmp.eq.s32.totalorder %s21, 3
    %p217 = por %p215, %p216
    %p219 = scmp.ne.s32.totalorder %s204, %s218
    %p220 = scmp.eq.s32.totalorder %s21, 0
    %p221 = por %p219, %p220
    %s222 = ssub.s32 %s15, %s22
    %p223 = scmp.eq.s32.totalorder %s222, 0
    %s225 = sadd.s32 %s224, 1
    %s226 = scalar_select %p223, %s224, %s225
    %p229 = pneg %p223
    %p230 = scmp.eq.s32.totalorder %s15, 3
    %p231 = por %p229, %p230
    %p232 = scmp.ne.s32.totalorder %s224, %s227
    %p233 = scmp.eq.s32.totalorder %s15, 0
    %p234 = por %p232, %p233
    %p235 = scmp.ne.s32.totalorder %s224, %s227
    %p236 = scmp.eq.s32.totalorder %s20, 3
    %p237 = por %p235, %p236
    %p238 = scmp.ne.s32.totalorder %s227, %s228
    %p239 = scmp.eq.s32.totalorder %s20, 0
    %p240 = por %p238, %p239
    %p241 = scmp.ne.s32.totalorder %s227, %s228
    %p242 = scmp.eq.s32.totalorder %s21, 3
    %p243 = por %p241, %p242
    %p245 = scmp.ne.s32.totalorder %s228, %s244
    %p246 = scmp.eq.s32.totalorder %s21, 0
    %p247 = por %p245, %p246
    %p248 = scmp.le.s32.totalorder 1, %s15
    %p249 = scmp.lt.s32.totalorder %s15, 5
    %p250 = pnand %p248, %p249
    %p251 = pneg %p250
    // Predicated region
    $region9: #{cspstage_forward.7} parent=5 // pred_check
      _
    $region10: #{cspstage_forward.7} parent=5 // pred_check_branch
      %253 = sbr.rel (%p250) target = $region12
    $region11: #{cspstage_forward.7} parent=5 // pred_region
      %s254 = ssub.s32 %s15, 1
      // Predicated region
      $region13: #{cspstage_forward.7} parent=11 // pred_check
        %p255 = pneg %p88
      $region14: #{cspstage_forward.7} parent=11 // pred_check_branch
        %257 = sbr.rel (%p255) target = $region16
      $region15: #{cspstage_forward.7} parent=11 // pred_region
        _
      $region16: #{cspstage_forward.7} parent=11 // pred_fallthru
        _
      // Predicated region
      $region17: #{cspstage_forward.7} parent=11 // pred_check
        %p258 = pneg %p109
      $region18: #{cspstage_forward.7} parent=11 // pred_check_branch
        %260 = sbr.rel (%p258) target = $region20
      $region19: #{cspstage_forward.7} parent=11 // pred_region
        _
      $region20: #{cspstage_forward.7} parent=11 // pred_fallthru
        _
      // Predicated region
      $region21: #{cspstage_forward.7} parent=11 // pred_check
        %p261 = pneg %p130
      $region22: #{cspstage_forward.7} parent=11 // pred_check_branch
        %263 = sbr.rel (%p261) target = $region24
      $region23: #{cspstage_forward.7} parent=11 // pred_region
        _
      $region24: #{cspstage_forward.7} parent=11 // pred_fallthru
        _
      // Predicated region
      $region25: #{cspstage_forward.7} parent=11 // pred_check
        %p264 = pneg %p151
      $region26: #{cspstage_forward.7} parent=11 // pred_check_branch
        %266 = sbr.rel (%p264) target = $region28
      $region27: #{cspstage_forward.7} parent=11 // pred_region
        _
      $region28: #{cspstage_forward.7} parent=11 // pred_fallthru
        _
      // Predicated region
      $region29: #{cspstage_forward.7} parent=11 // pred_check
        %p267 = pneg %p172
      $region30: #{cspstage_forward.7} parent=11 // pred_check_branch
        %269 = sbr.rel (%p267) target = $region32
      $region31: #{cspstage_forward.7} parent=11 // pred_region
        _
      $region32: #{cspstage_forward.7} parent=11 // pred_fallthru
        _
      // Predicated region
      $region33: #{cspstage_forward.7} parent=11 // pred_check
        %p270 = pneg %p193
      $region34: #{cspstage_forward.7} parent=11 // pred_check_branch
        %272 = sbr.rel (%p270) target = $region36
      $region35: #{cspstage_forward.7} parent=11 // pred_region
        _
      $region36: #{cspstage_forward.7} parent=11 // pred_fallthru
        _
      // Predicated region
      $region37: #{cspstage_forward.7} parent=11 // pred_check
        %p273 = pneg %p214
      $region38: #{cspstage_forward.7} parent=11 // pred_check_branch
        %275 = sbr.rel (%p273) target = $region40
      $region39: #{cspstage_forward.7} parent=11 // pred_region
        _
      $region40: #{cspstage_forward.7} parent=11 // pred_fallthru
        _
    $region12: #{cspstage_forward.7} parent=5 // pred_fallthru
      _
    %p276 = scmp.lt.s32.totalorder %s15, 4
    // Predicated region
    $region41: #{cspstage_forward.7} parent=5 // pred_check
      %p277 = pneg %p276
    $region42: #{cspstage_forward.7} parent=5 // pred_check_branch
      %279 = sbr.rel (%p277) target = $region44
    $region43: #{cspstage_forward.7} parent=5 // pred_region
      // Predicated region
      $region45: #{cspstage_forward.7} parent=43 // pred_check
        %p280 = pneg %p35
      $region46: #{cspstage_forward.7} parent=43 // pred_check_branch
        %282 = sbr.rel (%p280) target = $region48
      $region47: #{cspstage_forward.7} parent=43 // pred_region
        %s283 = smul.u32 4, %s15
        %p284 = scmp.lt.s32.totalorder %s283, 15
        %s285 = scalar_select %p284, %s283, 15
        %s286 = smul.addr %s285, 4
        %s287 = scalar_lea.vmem %s0, %s286
        %s288 = smul.u32 4, %s15
      $region48: #{cspstage_forward.7} parent=43 // pred_fallthru
        _
      // Predicated region
      $region49: #{cspstage_forward.7} parent=43 // pred_check
        %p289 = pneg %p61
      $region50: #{cspstage_forward.7} parent=43 // pred_check_branch
        %291 = sbr.rel (%p289) target = $region52
      $region51: #{cspstage_forward.7} parent=43 // pred_region
        %s292 = smul.u32 4, %s15
        %p293 = scmp.lt.s32.totalorder %s292, 15
        %s294 = scalar_select %p293, %s292, 15
        %s295 = smul.addr %s294, 4
        %s296 = scalar_lea.vmem %s1, %s295
        %s297 = smul.u32 4, %s15
      $region52: #{cspstage_forward.7} parent=43 // pred_fallthru
        _
    $region44: #{cspstage_forward.7} parent=5 // pred_fallthru
      _
    %p298 = scmp.le.s32.totalorder 1, %s15
    %p299 = scmp.lt.s32.totalorder %s15, 5
    %p300 = pnand %p298, %p299
    %p301 = pneg %p300
    // Predicated region
    $region53: #{cspstage_forward.7} parent=5 // pred_check
      _
    $region54: #{cspstage_forward.7} parent=5 // pred_check_branch
      %303 = sbr.rel (%p300) target = $region56
    $region55: #{cspstage_forward.7} parent=5 // pred_region
      %s304 = ssub.s32 %s15, 1
      %s305 = smul.u32 4, %s20
      %p306 = scmp.lt.s32.totalorder %s305, 15
      %s307 = scalar_select %p306, %s305, 15
      %s308 = smul.addr %s307, 4
      %s309 = scalar_lea.vmem %s0, %s308
      %p310 = pneg %p41
      %p311 = pneg %p38
      %s312 = smul.u32 4, %s20
      %p313 = scmp.lt.s32.totalorder %s312, 15
      %s314 = scalar_select %p313, %s312, 15
      %s315 = smul.addr %s314, 4
      %s316 = scalar_lea.vmem %s1, %s315
      %p317 = pneg %p67
      %p318 = pneg %p64
      %p319 = pneg %p88
      %p320 = pneg %p85
      %p321 = pneg %p109
      %p322 = pneg %p106
      %p323 = pneg %p130
      %p324 = pneg %p127
      %p325 = pneg %p151
      %p326 = pneg %p148
      %p327 = pneg %p172
      %p328 = pneg %p169
      %p329 = pneg %p193
      %p330 = pneg %p190
      %p331 = pneg %p214
      %p332 = pneg %p211
      %p333 = pneg %p240
      %p334 = pneg %p237
      %s335 = smul.u32 4, %s20
      %p336 = scmp.lt.s32.totalorder %s335, 15
      %s337 = scalar_select %p336, %s335, 15
      %s338 = smul.addr %s337, 4
      %s339 = scalar_lea.vmem %s9, %s338
      %s340 = smul.u32 4, %s20
      %p341 = scmp.lt.s32.totalorder %s340, 15
      %s342 = scalar_select %p341, %s340, 15
      %s343 = smul.addr %s342, 4
      %s344 = scalar_lea.vmem %s0, %s343
      %s345 = smul.u32 4, %s20
      %s346 = smul.u32 4, %s20
      %p347 = scmp.lt.s32.totalorder %s346, 15
      %s348 = scalar_select %p347, %s346, 15
      %s349 = smul.addr %s348, 4
      %s350 = scalar_lea.vmem %s1, %s349
      %s351 = smul.u32 4, %s20
      %s352 = smul.u32 4, %s20
      %p353 = scmp.lt.s32.totalorder %s352, 15
      %s354 = scalar_select %p353, %s352, 15
      %s355 = smul.addr %s354, 4
      %s356 = scalar_lea.vmem %s9, %s355
      %s357 = smul.u32 4, %s20
      %v359 = vld [vmem:[%s344] sm:$0xf]
      %v360 = vld [vmem:[%s344 + $0x4] sm:$0xf]
      %v361 = vld [vmem:[%s344 + $0x8] sm:$0xf]
      %v362 = vld [vmem:[%s344 + $0xc] sm:$0xf]
      %v363 = vld [vmem:[%s2] sm:$0xf]
      %v364 = vld [vmem:[%s2 + $0x4] sm:$0xf]
      %v365 = vld [vmem:[%s2 + $0x8] sm:$0xf]
      %v366 = vld [vmem:[%s2 + $0xc] sm:$0xf]
      %v367 = vld [vmem:[%s2 + $0x10] sm:$0xf]
      %v368 = vld [vmem:[%s2 + $0x14] sm:$0xf]
      %v369 = vld [vmem:[%s2 + $0x18] sm:$0xf]
      %v370 = vld [vmem:[%s2 + $0x1c] sm:$0xf]
      %v371 = vld [vmem:[%s2 + $0x20] sm:$0xf]
      %v372 = vld [vmem:[%s2 + $0x24] sm:$0xf]
      %v373 = vld [vmem:[%s2 + $0x28] sm:$0xf]
      %v374 = vld [vmem:[%s2 + $0x2c] sm:$0xf]
      %v375 = vld [vmem:[%s2 + $0x30] sm:$0xf]
      %v376 = vld [vmem:[%s2 + $0x34] sm:$0xf]
      %v377 = vld [vmem:[%s2 + $0x38] sm:$0xf]
      %v378 = vld [vmem:[%s2 + $0x3c] sm:$0xf]
      %v383 = vunpack.c.l.b16 %v359
      %v384 = vunpack.c.l.b16 %v360
      %v385 = vunpack.c.l.b16 %v361
      %v386 = vunpack.c.l.b16 %v362
      %v387 = vpack.c.b16 %v384, %v383
      %v388 = vpack.c.b16 %v386, %v385
      %v407 = vunpack.c.l.b16 %v363
      %v408 = vunpack.c.l.b16 %v364
      %v409 = vunpack.c.l.b16 %v365
      %v410 = vunpack.c.l.b16 %v366
      %v411 = vunpack.c.l.b16 %v367
      %v412 = vunpack.c.l.b16 %v368
      %v413 = vunpack.c.l.b16 %v369
      %v414 = vunpack.c.l.b16 %v370
      %v415 = vunpack.c.l.b16 %v371
      %v416 = vunpack.c.l.b16 %v372
      %v417 = vunpack.c.l.b16 %v373
      %v418 = vunpack.c.l.b16 %v374
      %v419 = vunpack.c.l.b16 %v375
      %v420 = vunpack.c.l.b16 %v376
      %v421 = vunpack.c.l.b16 %v377
      %v422 = vunpack.c.l.b16 %v378
      %v423 = vpack.c.b16 %v408, %v407
      %v424 = vpack.c.b16 %v410, %v409
      %v425 = vpack.c.b16 %v412, %v411
      %v426 = vpack.c.b16 %v414, %v413
      %v427 = vpack.c.b16 %v416, %v415
      %v428 = vpack.c.b16 %v418, %v417
      %v429 = vpack.c.b16 %v420, %v419
      %v430 = vpack.c.b16 %v422, %v421
      %439 = vmatprep.subr.bf16.mxu0 0
      %440 = vmatpush1.bf16.msra.mxu0 %v423
      %441 = vmatprep.subr.bf16.mxu0 0
      %442 = vmatpush1.bf16.msra.mxu0 %v424
      %443 = vmatprep.subr.bf16.mxu0 0
      %444 = vmatpush1.bf16.msra.mxu0 %v425
      %445 = vmatprep.subr.bf16.mxu0 0
      %446 = vmatpush1.bf16.msra.mxu0 %v426
      %447 = vmatprep.subr.bf16.mxu0 0
      %448 = vmatpush1.bf16.msra.mxu0 %v427
      %449 = vmatprep.subr.bf16.mxu0 0
      %450 = vmatpush1.bf16.msra.mxu0 %v428
      %451 = vmatprep.subr.bf16.mxu0 0
      %452 = vmatpush1.bf16.msra.mxu0 %v429
      %453 = vmatprep.subr.bf16.mxu0 0
      %454 = vmatpush1.bf16.msra.mxu0 %v430
      %455 = vmatprep.subr.bf16.mxu0 0
      %456 = vmatpush1.bf16.msra.mxu0 0
      %457 = vmatprep.subr.bf16.mxu0 0
      %458 = vmatpush1.bf16.msra.mxu0 0
      %459 = vmatprep.subr.bf16.mxu0 0
      %460 = vmatpush1.bf16.msra.mxu0 0
      %461 = vmatprep.subr.bf16.mxu0 0
      %462 = vmatpush1.bf16.msra.mxu0 0
      %463 = vmatprep.subr.bf16.mxu0 0
      %464 = vmatpush1.bf16.msra.mxu0 0
      %465 = vmatprep.subr.bf16.mxu0 0
      %466 = vmatpush1.bf16.msra.mxu0 0
      %467 = vmatprep.subr.bf16.mxu0 0
      %468 = vmatpush1.bf16.msra.mxu0 0
      %469 = vmatprep.subr.bf16.mxu0 0
      %470 = vmatpush1.bf16.msra.mxu0 0
      %471 = vmatprep.mubr.bf16.mxu0 0
      %472 = vmatmul.mubr.bf16.gmra.mrb[0].mxu0 %v387
      %v473 = vpop.f32.mrb[0].mxu0
      %v474 = vadd.f32 0.0, %v473
      %v475 = vpop.f32.mrb[0].mxu0
      %v476 = vpop.f32.mrb[0].mxu0
      %v477 = vadd.f32 0.0, %v476
      %v478 = vpop.f32.mrb[0].mxu0
      %479 = vmatprep.mubr.bf16.mxu0 0
      %480 = vmatmul.mubr.bf16.gmra.mrb[0].mxu0 %v388
      %v481 = vpop.f32.mrb[0].mxu0
      %v482 = vadd.f32 0.0, %v481
      %v483 = vpop.f32.mrb[0].mxu0
      %v484 = vpop.f32.mrb[0].mxu0
      %v485 = vadd.f32 0.0, %v484
      %v486 = vpop.f32.mrb[0].mxu0
      %487 = vdwg.mxu0
      %v488 = vld [vmem:[%s3] sm:$0x1]
      %v490 = vlaneseq
      %v491 = vshrl.u32 %v490, 7
      %v492 = vsub.s32 0, %v491
      %v493 = vrot.slane %v488, %v492
      %v495 = vmul.f32 %v474, %v493
      %v496 = vmul.f32 %v477, %v493
      %v497 = vmul.f32 %v482, %v493
      %v498 = vmul.f32 %v485, %v493
      %v499 = vld [vmem:[%s4] sm:$0x1]
      %v501 = vlaneseq
      %v502 = vshrl.u32 %v501, 7
      %v503 = vsub.s32 0, %v502
      %v504 = vrot.slane %v499, %v503
      %v506 = vadd.f32 %v495, %v504
      %v507 = vadd.f32 %v496, %v504
      %v508 = vadd.f32 %v497, %v504
      %v509 = vadd.f32 %v498, %v504
      %v510 = vmin.f32 %v506, 20.0
      %v511 = vmin.f32 %v507, 20.0
      %v512 = vmin.f32 %v508, 20.0
      %v513 = vmin.f32 %v509, 20.0
      %v514 = vmul.f32 %v510, 1.442695
      %v515 = vpow.pop %v514
      %v516 = vmul.f32 %v511, 1.442695
      %v517 = vpow.pop %v516
      %v518 = vmul.f32 %v512, 1.442695
      %v519 = vpow.pop %v518
      %v520 = vmul.f32 %v513, 1.442695
      %v521 = vpow.pop %v520
      %v522 = vadd.f32 %v515, 1.0
      %v523 = vadd.f32 %v517, 1.0
      %v524 = vadd.f32 %v519, 1.0
      %v525 = vadd.f32 %v521, 1.0
      %v526 = vmul.f32 %v522, %v522
      %v527 = vmul.f32 %v523, %v523
      %v528 = vmul.f32 %v524, %v524
      %v529 = vmul.f32 %v525, %v525
      %v530 = vadd.f32 %v526, 1.0
      %v531 = vadd.f32 %v527, 1.0
      %v532 = vadd.f32 %v528, 1.0
      %v533 = vadd.f32 %v529, 1.0
      %v534 = vrcp.pop %v530
      %v535 = vrcp.pop %v531
      %v536 = vrcp.pop %v532
      %v537 = vrcp.pop %v533
      %v538 = vmul.f32 %v530, %v534
      %v539 = vmul.f32 %v531, %v535
      %v540 = vmul.f32 %v532, %v536
      %v541 = vmul.f32 %v533, %v537
      %v542 = vsub.f32 2.0, %v538
      %v543 = vsub.f32 2.0, %v539
      %v544 = vsub.f32 2.0, %v540
      %v545 = vsub.f32 2.0, %v541
      %v546 = vmul.f32 %v534, %v542
      %v547 = vmul.f32 %v535, %v543
      %v548 = vmul.f32 %v536, %v544
      %v549 = vmul.f32 %v537, %v545
      %v550 = vsub.f32 %v526, 1.0
      %v551 = vsub.f32 %v527, 1.0
      %v552 = vsub.f32 %v528, 1.0
      %v553 = vsub.f32 %v529, 1.0
      %v554 = vmul.f32 %v506, %v550
      %v555 = vmul.f32 %v507, %v551
      %v556 = vmul.f32 %v508, %v552
      %v557 = vmul.f32 %v509, %v553
      %v558 = vmul.f32 %v554, %v546
      %v559 = vmul.f32 %v555, %v547
      %v560 = vmul.f32 %v556, %v548
      %v561 = vmul.f32 %v557, %v549
      %v562 = vld [vmem:[%s350] sm:$0xf]
      %v563 = vld [vmem:[%s350 + $0x4] sm:$0xf]
      %v564 = vld [vmem:[%s350 + $0x8] sm:$0xf]
      %v565 = vld [vmem:[%s350 + $0xc] sm:$0xf]
      %v566 = vld [vmem:[%s5] sm:$0xf]
      %v567 = vld [vmem:[%s5 + $0x4] sm:$0xf]
      %v568 = vld [vmem:[%s5 + $0x8] sm:$0xf]
      %v569 = vld [vmem:[%s5 + $0xc] sm:$0xf]
      %v570 = vld [vmem:[%s5 + $0x10] sm:$0xf]
      %v571 = vld [vmem:[%s5 + $0x14] sm:$0xf]
      %v572 = vld [vmem:[%s5 + $0x18] sm:$0xf]
      %v573 = vld [vmem:[%s5 + $0x1c] sm:$0xf]
      %v574 = vld [vmem:[%s5 + $0x20] sm:$0xf]
      %v575 = vld [vmem:[%s5 + $0x24] sm:$0xf]
      %v576 = vld [vmem:[%s5 + $0x28] sm:$0xf]
      %v577 = vld [vmem:[%s5 + $0x2c] sm:$0xf]
      %v578 = vld [vmem:[%s5 + $0x30] sm:$0xf]
      %v579 = vld [vmem:[%s5 + $0x34] sm:$0xf]
      %v580 = vld [vmem:[%s5 + $0x38] sm:$0xf]
      %v581 = vld [vmem:[%s5 + $0x3c] sm:$0xf]
      %v582 = vpack.c.bf16 %v559, %v558
      %v583 = vpack.c.bf16 %v561, %v560
      %v584 = vld [vmem:[%s6] sm:$0xf]
      %v585 = vld [vmem:[%s6 + $0x4] sm:$0xf]
      %v586 = vld [vmem:[%s6 + $0x8] sm:$0xf]
      %v587 = vld [vmem:[%s6 + $0xc] sm:$0xf]
      %v588 = vld [vmem:[%s6 + $0x10] sm:$0xf]
      %v589 = vld [vmem:[%s6 + $0x14] sm:$0xf]
      %v590 = vld [vmem:[%s6 + $0x18] sm:$0xf]
      %v591 = vld [vmem:[%s6 + $0x1c] sm:$0xf]
      %v592 = vld [vmem:[%s6 + $0x20] sm:$0xf]
      %v593 = vld [vmem:[%s6 + $0x24] sm:$0xf]
      %v594 = vld [vmem:[%s6 + $0x28] sm:$0xf]
      %v595 = vld [vmem:[%s6 + $0x2c] sm:$0xf]
      %v596 = vld [vmem:[%s6 + $0x30] sm:$0xf]
      %v597 = vld [vmem:[%s6 + $0x34] sm:$0xf]
      %v598 = vld [vmem:[%s6 + $0x38] sm:$0xf]
      %v599 = vld [vmem:[%s6 + $0x3c] sm:$0xf]
      %v616 = vunpack.c.l.b16 %v584
      %v617 = vunpack.c.l.b16 %v585
      %v618 = vunpack.c.l.b16 %v586
      %v619 = vunpack.c.l.b16 %v587
      %v620 = vunpack.c.l.b16 %v588
      %v621 = vunpack.c.l.b16 %v589
      %v622 = vunpack.c.l.b16 %v590
      %v623 = vunpack.c.l.b16 %v591
      %v624 = vunpack.c.l.b16 %v592
      %v625 = vunpack.c.l.b16 %v593
      %v626 = vunpack.c.l.b16 %v594
      %v627 = vunpack.c.l.b16 %v595
      %v628 = vunpack.c.l.b16 %v596
      %v629 = vunpack.c.l.b16 %v597
      %v630 = vunpack.c.l.b16 %v598
      %v631 = vunpack.c.l.b16 %v599
      %v632 = vpack.c.b16 %v617, %v616
      %v633 = vpack.c.b16 %v619, %v618
      %v634 = vpack.c.b16 %v621, %v620
      %v635 = vpack.c.b16 %v623, %v622
      %v636 = vpack.c.b16 %v625, %v624
      %v637 = vpack.c.b16 %v627, %v626
      %v638 = vpack.c.b16 %v629, %v628
      %v639 = vpack.c.b16 %v631, %v630
      %648 = vmatprep.subr.bf16.mxu0 0
      %649 = vmatpush1.bf16.msra.mxu0 %v632
      %650 = vmatprep.subr.bf16.mxu0 0
      %651 = vmatpush1.bf16.msra.mxu0 %v633
      %652 = vmatprep.subr.bf16.mxu0 0
      %653 = vmatpush1.bf16.msra.mxu0 %v634
      %654 = vmatprep.subr.bf16.mxu0 0
      %655 = vmatpush1.bf16.msra.mxu0 %v635
      %656 = vmatprep.subr.bf16.mxu0 0
      %657 = vmatpush1.bf16.msra.mxu0 %v636
      %658 = vmatprep.subr.bf16.mxu0 0
      %659 = vmatpush1.bf16.msra.mxu0 %v637
      %660 = vmatprep.subr.bf16.mxu0 0
      %661 = vmatpush1.bf16.msra.mxu0 %v638
      %662 = vmatprep.subr.bf16.mxu0 0
      %663 = vmatpush1.bf16.msra.mxu0 %v639
      %664 = vmatprep.subr.bf16.mxu0 0
      %665 = vmatpush1.bf16.msra.mxu0 0
      %666 = vmatprep.subr.bf16.mxu0 0
      %667 = vmatpush1.bf16.msra.mxu0 0
      %668 = vmatprep.subr.bf16.mxu0 0
      %669 = vmatpush1.bf16.msra.mxu0 0
      %670 = vmatprep.subr.bf16.mxu0 0
      %671 = vmatpush1.bf16.msra.mxu0 0
      %672 = vmatprep.subr.bf16.mxu0 0
      %673 = vmatpush1.bf16.msra.mxu0 0
      %674 = vmatprep.subr.bf16.mxu0 0
      %675 = vmatpush1.bf16.msra.mxu0 0
      %676 = vmatprep.subr.bf16.mxu0 0
      %677 = vmatpush1.bf16.msra.mxu0 0
      %678 = vmatprep.subr.bf16.mxu0 0
      %679 = vmatpush1.bf16.msra.mxu0 0
      %680 = vmatprep.mubr.bf16.mxu0 0
      %681 = vmatmul.mubr.bf16.gmra.mrb[0].mxu0 %v582
      %v682 = vpop.f32.mrb[0].mxu0
      %v683 = vadd.f32 0.0, %v682
      %v684 = vpop.f32.mrb[0].mxu0
      %v685 = vpop.f32.mrb[0].mxu0
      %v686 = vadd.f32 0.0, %v685
      %v687 = vpop.f32.mrb[0].mxu0
      %688 = vmatprep.mubr.bf16.mxu0 0
      %689 = vmatmul.mubr.bf16.gmra.mrb[0].mxu0 %v583
      %v690 = vpop.f32.mrb[0].mxu0
      %v691 = vadd.f32 0.0, %v690
      %v692 = vpop.f32.mrb[0].mxu0
      %v693 = vpop.f32.mrb[0].mxu0
      %v694 = vadd.f32 0.0, %v693
      %v695 = vpop.f32.mrb[0].mxu0
      %696 = vdwg.mxu0
      %v701 = vunpack.c.l.b16 %v562
      %v702 = vunpack.c.l.b16 %v563
      %v703 = vunpack.c.l.b16 %v564
      %v704 = vunpack.c.l.b16 %v565
      %v705 = vpack.c.b16 %v702, %v701
      %v706 = vpack.c.b16 %v704, %v703
      %v725 = vunpack.c.l.b16 %v566
      %v726 = vunpack.c.l.b16 %v567
      %v727 = vunpack.c.l.b16 %v568
      %v728 = vunpack.c.l.b16 %v569
      %v729 = vunpack.c.l.b16 %v570
      %v730 = vunpack.c.l.b16 %v571
      %v731 = vunpack.c.l.b16 %v572
      %v732 = vunpack.c.l.b16 %v573
      %v733 = vunpack.c.l.b16 %v574
      %v734 = vunpack.c.l.b16 %v575
      %v735 = vunpack.c.l.b16 %v576
      %v736 = vunpack.c.l.b16 %v577
      %v737 = vunpack.c.l.b16 %v578
      %v738 = vunpack.c.l.b16 %v579
      %v739 = vunpack.c.l.b16 %v580
      %v740 = vunpack.c.l.b16 %v581
      %v741 = vpack.c.b16 %v726, %v725
      %v742 = vpack.c.b16 %v728, %v727
      %v743 = vpack.c.b16 %v730, %v729
      %v744 = vpack.c.b16 %v732, %v731
      %v745 = vpack.c.b16 %v734, %v733
      %v746 = vpack.c.b16 %v736, %v735
      %v747 = vpack.c.b16 %v738, %v737
      %v748 = vpack.c.b16 %v740, %v739
      %757 = vmatprep.subr.bf16.mxu0 0
      %758 = vmatpush1.bf16.msra.mxu0 %v741
      %759 = vmatprep.subr.bf16.mxu0 0
      %760 = vmatpush1.bf16.msra.mxu0 %v742
      %761 = vmatprep.subr.bf16.mxu0 0
      %762 = vmatpush1.bf16.msra.mxu0 %v743
      %763 = vmatprep.subr.bf16.mxu0 0
      %764 = vmatpush1.bf16.msra.mxu0 %v744
      %765 = vmatprep.subr.bf16.mxu0 0
      %766 = vmatpush1.bf16.msra.mxu0 %v745
      %767 = vmatprep.subr.bf16.mxu0 0
      %768 = vmatpush1.bf16.msra.mxu0 %v746
      %769 = vmatprep.subr.bf16.mxu0 0
      %770 = vmatpush1.bf16.msra.mxu0 %v747
      %771 = vmatprep.subr.bf16.mxu0 0
      %772 = vmatpush1.bf16.msra.mxu0 %v748
      %773 = vmatprep.subr.bf16.mxu0 0
      %774 = vmatpush1.bf16.msra.mxu0 0
      %775 = vmatprep.subr.bf16.mxu0 0
      %776 = vmatpush1.bf16.msra.mxu0 0
      %777 = vmatprep.subr.bf16.mxu0 0
      %778 = vmatpush1.bf16.msra.mxu0 0
      %779 = vmatprep.subr.bf16.mxu0 0
      %780 = vmatpush1.bf16.msra.mxu0 0
      %781 = vmatprep.subr.bf16.mxu0 0
      %782 = vmatpush1.bf16.msra.mxu0 0
      %783 = vmatprep.subr.bf16.mxu0 0
      %784 = vmatpush1.bf16.msra.mxu0 0
      %785 = vmatprep.subr.bf16.mxu0 0
      %786 = vmatpush1.bf16.msra.mxu0 0
      %787 = vmatprep.subr.bf16.mxu0 0
      %788 = vmatpush1.bf16.msra.mxu0 0
      %789 = vmatprep.mubr.bf16.mxu0 0
      %790 = vmatmul.mubr.bf16.gmra.mrb[0].mxu0 %v705
      %v791 = vpop.f32.mrb[0].mxu0
      %v792 = vadd.f32 %v683, %v791
      %v793 = vpop.f32.mrb[0].mxu0
      %v794 = vpop.f32.mrb[0].mxu0
      %v795 = vadd.f32 %v686, %v794
      %v796 = vpop.f32.mrb[0].mxu0
      %797 = vmatprep.mubr.bf16.mxu0 0
      %798 = vmatmul.mubr.bf16.gmra.mrb[0].mxu0 %v706
      %v799 = vpop.f32.mrb[0].mxu0
      %v800 = vadd.f32 %v691, %v799
      %v801 = vpop.f32.mrb[0].mxu0
      %v802 = vpop.f32.mrb[0].mxu0
      %v803 = vadd.f32 %v694, %v802
      %v804 = vpop.f32.mrb[0].mxu0
      %805 = vdwg.mxu0
      %v806 = vld [vmem:[%s7] sm:$0x1]
      %v808 = vlaneseq
      %v809 = vshrl.u32 %v808, 7
      %v810 = vsub.s32 0, %v809
      %v811 = vrot.slane %v806, %v810
      %v813 = vmul.f32 %v792, %v811
      %v814 = vmul.f32 %v795, %v811
      %v815 = vmul.f32 %v800, %v811
      %v816 = vmul.f32 %v803, %v811
      %v817 = vld [vmem:[%s8] sm:$0x1]
      %v819 = vlaneseq
      %v820 = vshrl.u32 %v819, 7
      %v821 = vsub.s32 0, %v820
      %v822 = vrot.slane %v817, %v821
      %v824 = vadd.f32 %v813, %v822
      %v825 = vadd.f32 %v814, %v822
      %v826 = vadd.f32 %v815, %v822
      %v827 = vadd.f32 %v816, %v822
      %v828 = vmin.f32 %v824, 20.0
      %v829 = vmin.f32 %v825, 20.0
      %v830 = vmin.f32 %v826, 20.0
      %v831 = vmin.f32 %v827, 20.0
      %v832 = vmul.f32 %v828, 1.442695
      %v833 = vpow.pop %v832
      %v834 = vmul.f32 %v829, 1.442695
      %v835 = vpow.pop %v834
      %v836 = vmul.f32 %v830, 1.442695
      %v837 = vpow.pop %v836
      %v838 = vmul.f32 %v831, 1.442695
      %v839 = vpow.pop %v838
      %v840 = vadd.f32 %v833, 1.0
      %v841 = vadd.f32 %v835, 1.0
      %v842 = vadd.f32 %v837, 1.0
      %v843 = vadd.f32 %v839, 1.0
      %v844 = vmul.f32 %v840, %v840
      %v845 = vmul.f32 %v841, %v841
      %v846 = vmul.f32 %v842, %v842
      %v847 = vmul.f32 %v843, %v843
      %v848 = vadd.f32 %v844, 1.0
      %v849 = vadd.f32 %v845, 1.0
      %v850 = vadd.f32 %v846, 1.0
      %v851 = vadd.f32 %v847, 1.0
      %v852 = vrcp.pop %v848
      %v853 = vrcp.pop %v849
      %v854 = vrcp.pop %v850
      %v855 = vrcp.pop %v851
      %v856 = vmul.f32 %v848, %v852
      %v857 = vmul.f32 %v849, %v853
      %v858 = vmul.f32 %v850, %v854
      %v859 = vmul.f32 %v851, %v855
      %v860 = vsub.f32 2.0, %v856
      %v861 = vsub.f32 2.0, %v857
      %v862 = vsub.f32 2.0, %v858
      %v863 = vsub.f32 2.0, %v859
      %v864 = vmul.f32 %v852, %v860
      %v865 = vmul.f32 %v853, %v861
      %v866 = vmul.f32 %v854, %v862
      %v867 = vmul.f32 %v855, %v863
      %v868 = vsub.f32 %v844, 1.0
      %v869 = vsub.f32 %v845, 1.0
      %v870 = vsub.f32 %v846, 1.0
      %v871 = vsub.f32 %v847, 1.0
      %v872 = vmul.f32 %v824, %v868
      %v873 = vmul.f32 %v825, %v869
      %v874 = vmul.f32 %v826, %v870
      %v875 = vmul.f32 %v827, %v871
      %v876 = vmul.f32 %v872, %v864
      %v877 = vmul.f32 %v873, %v865
      %v878 = vmul.f32 %v874, %v866
      %v879 = vmul.f32 %v875, %v867
      %v880 = vpack.c.bf16 %v877, %v876
      %v881 = vpack.c.bf16 %v879, %v878
      %v884 = vunpack.c.l.b16 %v880
      %v885 = vunpack.c.h.b16 %v880
      %v886 = vunpack.c.l.b16 %v881
      %v887 = vunpack.c.h.b16 %v881
      %v888 = vpack.c.b16 %v884, %v884
      %v889 = vpack.c.b16 %v885, %v885
      %v890 = vpack.c.b16 %v886, %v886
      %v891 = vpack.c.b16 %v887, %v887
      %896 = vst [vmem:[%s356] sm:$0xf] %v888
      %897 = vst [vmem:[%s356 + $0x4] sm:$0xf] %v889
      %898 = vst [vmem:[%s356 + $0x8] sm:$0xf] %v890
      %899 = vst [vmem:[%s356 + $0xc] sm:$0xf] %v891
      %s900 = smul.u32 4, %s20
      %p901 = scmp.lt.s32.totalorder %s900, 15
      %s902 = scalar_select %p901, %s900, 15
      %s903 = smul.addr %s902, 4
      %s904 = scalar_lea.vmem %s9, %s903
      // Predicated region
      $region57: #{cspstage_forward.7} parent=55 // pred_check
        %p905 = pneg %p237
      $region58: #{cspstage_forward.7} parent=55 // pred_check_branch
        %907 = sbr.rel (%p905) target = $region60
      $region59: #{cspstage_forward.7} parent=55 // pred_region
        %s908 = smul.u32 4, %s20
      $region60: #{cspstage_forward.7} parent=55 // pred_fallthru
        _
    $region56: #{cspstage_forward.7} parent=5 // pred_fallthru
      _
    %p909 = scmp.le.s32.totalorder 2, %s15
    // Predicated region
    $region61: #{cspstage_forward.7} parent=5 // pred_check
      %p910 = pneg %p909
    $region62: #{cspstage_forward.7} parent=5 // pred_check_branch
      %912 = sbr.rel (%p910) target = $region64
    $region63: #{cspstage_forward.7} parent=5 // pred_region
      %s913 = ssub.s32 %s15, 2
      // Predicated region
      $region65: #{cspstage_forward.7} parent=63 // pred_check
        %p914 = pneg %p243
      $region66: #{cspstage_forward.7} parent=63 // pred_check_branch
        %916 = sbr.rel (%p914) target = $region68
      $region67: #{cspstage_forward.7} parent=63 // pred_region
        %s917 = smul.u32 4, %s21
        %p918 = scmp.lt.s32.totalorder %s917, 15
        %s919 = scalar_select %p918, %s917, 15
        %s920 = smul.addr %s919, 4
        %s921 = scalar_lea.vmem %s9, %s920
      $region68: #{cspstage_forward.7} parent=63 // pred_fallthru
        _
    $region64: #{cspstage_forward.7} parent=5 // pred_fallthru
      _
  $region6: #{cspstage_forward.7} parent=0 // loop_footer
    %s19 = sadd.s32 1, %s15
  $region7: #{cspstage_forward.7} parent=0 // loop_footer_branch
    %14 = sbr.rel target = $region3
  $region8: #{cspstage_forward.7} parent=0 // loop_exit
    _

// kernel: cspstage_forward.5
$region0: #{cspstage_forward.5}
  #allocation0 [shape = 'u32[]', space=smem, size = 0x4, offset = 0x4, fixed_abs, tag = 'smem constant byte address 0x4 - core index']
  #allocation1 [shape = 'u32[144,128]{1,0:T(1,128)}', space=vmem, size = 0x12000, scoped, tag = 'internal scratch']
  %s0 = inlined_call_operand.vmem [shape: bf16[2,11,9,128], index: 0, kind: input, shape index: {}]
  %s1 = inlined_call_operand.vmem [shape: bf16[128,128], index: 1, kind: input, shape index: {}]
  %s2 = inlined_call_operand.vmem [shape: f32[1,128], index: 2, kind: input, shape index: {}]
  %s3 = inlined_call_operand.vmem [shape: f32[1,128], index: 3, kind: input, shape index: {}]
  %s4 = inlined_call_operand.vmem [shape: bf16[9,128,128], index: 4, kind: input, shape index: {}]
  %s5 = inlined_call_operand.vmem [shape: f32[1,128], index: 5, kind: input, shape index: {}]
  %s6 = inlined_call_operand.vmem [shape: f32[1,128], index: 6, kind: input, shape index: {}]
  %s7 = inlined_call_operand.vmem [shape: bf16[2,9,7,128], index: 7, kind: output, shape index: {}]
  %s8 = sld [smem:[#allocation0]]
  $region61: #{cspstage_forward.5} parent=0
    _
  %s10 = ssub.s32 1, %s8
  %s11 = scalar_select 0, %s10, %s8
  loop: start=0, step=1, limit=8
  $region2: #{cspstage_forward.5} parent=0 // loop_pre_header
    _
  $region3: #{cspstage_forward.5} parent=0 // loop_header
    %s13 = sphi 0, %s17
    %p14 = scmp.ge.s32.totalorder %s13, 8
    %s20 = sphi 0, %s32
    %s21 = sphi 0, %s28
    %s22 = sphi 0, %s20
    %s23 = sphi 0, %s21
    %s24 = sphi 0, %s22
    %s25 = sphi 0, %s23
    %s35 = sphi 0, %s37
    %s38 = sphi 0, %s35
    %s39 = sphi 0, %s38
    %s55 = sphi 0, %s39
    %s59 = sphi 0, %s59
    %s61 = sphi 0, %s59
    %s62 = sphi 0, %s61
    %s76 = sphi 0, %s62
    %s80 = sphi 0, %s80
    %s82 = sphi 0, %s80
    %s83 = sphi 0, %s82
    %s97 = sphi 0, %s83
    %s101 = sphi 0, %s101
    %s103 = sphi 0, %s101
    %s104 = sphi 0, %s103
    %s118 = sphi 0, %s104
    %s122 = sphi 0, %s122
    %s124 = sphi 0, %s122
    %s125 = sphi 0, %s124
    %s139 = sphi 0, %s125
    %s143 = sphi 0, %s143
    %s145 = sphi 0, %s143
    %s146 = sphi 0, %s145
    %s160 = sphi 0, %s146
    %s164 = sphi 0, %s164
    %s166 = sphi 0, %s164
    %s167 = sphi 0, %s166
    %s181 = sphi 0, %s167
    %s189 = sphi 0, %s191
    %s192 = sphi 0, %s189
    %s193 = sphi 0, %s192
    %s209 = sphi 0, %s193
  $region4: #{cspstage_forward.5} parent=0 // loop_header_branch
    %16 = sbr.rel (%p14) target = $region8
  $region5: #{cspstage_forward.5} parent=0 // loop_body
    %s18 = ssub.s32 %s13, 1
    %s19 = ssub.s32 %s13, 2
    %s26 = sadd.s32 1, %s21
    %p27 = scmp.ge.s32.totalorder %s26, 3
    %s28 = scalar_select %p27, 0, %s26
    %s29 = sadd.s32 1, %s20
    %s30 = scalar_select %p27, %s29, %s20
    %p31 = scmp.ge.s32.totalorder %s30, 2
    %s32 = scalar_select %p31, 0, %s30
    %s33 = ssub.s32 %s20, %s32
    %p34 = scmp.eq.s32.totalorder %s33, 0
    %s36 = sadd.s32 %s35, 1
    %s37 = scalar_select %p34, %s35, %s36
    %p40 = pneg %p34
    %p41 = scmp.eq.s32.totalorder %s13, 5
    %p42 = por %p40, %p41
    %p43 = scmp.ne.s32.totalorder %s35, %s38
    %p44 = scmp.eq.s32.totalorder %s13, 0
    %p45 = por %p43, %p44
    %p46 = scmp.ne.s32.totalorder %s35, %s38
    %p47 = scmp.eq.s32.totalorder %s18, 5
    %p48 = por %p46, %p47
    %p49 = scmp.ne.s32.totalorder %s38, %s39
    %p50 = scmp.eq.s32.totalorder %s18, 0
    %p51 = por %p49, %p50
    %p52 = scmp.ne.s32.totalorder %s38, %s39
    %p53 = scmp.eq.s32.totalorder %s19, 5
    %p54 = por %p52, %p53
    %p56 = scmp.ne.s32.totalorder %s39, %s55
    %p57 = scmp.eq.s32.totalorder %s19, 0
    %p58 = por %p56, %p57
    %s60 = sadd.s32 %s59, 1
    %p63 = scmp.eq.s32.totalorder %s13, 5
    %p64 = scmp.ne.s32.totalorder %s59, %s61
    %p65 = scmp.eq.s32.totalorder %s13, 0
    %p66 = por %p64, %p65
    %p67 = scmp.ne.s32.totalorder %s59, %s61
    %p68 = scmp.eq.s32.totalorder %s18, 5
    %p69 = por %p67, %p68
    %p70 = scmp.ne.s32.totalorder %s61, %s62
    %p71 = scmp.eq.s32.totalorder %s18, 0
    %p72 = por %p70, %p71
    %p73 = scmp.ne.s32.totalorder %s61, %s62
    %p74 = scmp.eq.s32.totalorder %s19, 5
    %p75 = por %p73, %p74
    %p77 = scmp.ne.s32.totalorder %s62, %s76
    %p78 = scmp.eq.s32.totalorder %s19, 0
    %p79 = por %p77, %p78
    %s81 = sadd.s32 %s80, 1
    %p84 = scmp.eq.s32.totalorder %s13, 5
    %p85 = scmp.ne.s32.totalorder %s80, %s82
    %p86 = scmp.eq.s32.totalorder %s13, 0
    %p87 = por %p85, %p86
    %p88 = scmp.ne.s32.totalorder %s80, %s82
    %p89 = scmp.eq.s32.totalorder %s18, 5
    %p90 = por %p88, %p89
    %p91 = scmp.ne.s32.totalorder %s82, %s83
    %p92 = scmp.eq.s32.totalorder %s18, 0
    %p93 = por %p91, %p92
    %p94 = scmp.ne.s32.totalorder %s82, %s83
    %p95 = scmp.eq.s32.totalorder %s19, 5
    %p96 = por %p94, %p95
    %p98 = scmp.ne.s32.totalorder %s83, %s97
    %p99 = scmp.eq.s32.totalorder %s19, 0
    %p100 = por %p98, %p99
    %s102 = sadd.s32 %s101, 1
    %p105 = scmp.eq.s32.totalorder %s13, 5
    %p106 = scmp.ne.s32.totalorder %s101, %s103
    %p107 = scmp.eq.s32.totalorder %s13, 0
    %p108 = por %p106, %p107
    %p109 = scmp.ne.s32.totalorder %s101, %s103
    %p110 = scmp.eq.s32.totalorder %s18, 5
    %p111 = por %p109, %p110
    %p112 = scmp.ne.s32.totalorder %s103, %s104
    %p113 = scmp.eq.s32.totalorder %s18, 0
    %p114 = por %p112, %p113
    %p115 = scmp.ne.s32.totalorder %s103, %s104
    %p116 = scmp.eq.s32.totalorder %s19, 5
    %p117 = por %p115, %p116
    %p119 = scmp.ne.s32.totalorder %s104, %s118
    %p120 = scmp.eq.s32.totalorder %s19, 0
    %p121 = por %p119, %p120
    %s123 = sadd.s32 %s122, 1
    %p126 = scmp.eq.s32.totalorder %s13, 5
    %p127 = scmp.ne.s32.totalorder %s122, %s124
    %p128 = scmp.eq.s32.totalorder %s13, 0
    %p129 = por %p127, %p128
    %p130 = scmp.ne.s32.totalorder %s122, %s124
    %p131 = scmp.eq.s32.totalorder %s18, 5
    %p132 = por %p130, %p131
    %p133 = scmp.ne.s32.totalorder %s124, %s125
    %p134 = scmp.eq.s32.totalorder %s18, 0
    %p135 = por %p133, %p134
    %p136 = scmp.ne.s32.totalorder %s124, %s125
    %p137 = scmp.eq.s32.totalorder %s19, 5
    %p138 = por %p136, %p137
    %p140 = scmp.ne.s32.totalorder %s125, %s139
    %p141 = scmp.eq.s32.totalorder %s19, 0
    %p142 = por %p140, %p141
    %s144 = sadd.s32 %s143, 1
    %p147 = scmp.eq.s32.totalorder %s13, 5
    %p148 = scmp.ne.s32.totalorder %s143, %s145
    %p149 = scmp.eq.s32.totalorder %s13, 0
    %p150 = por %p148, %p149
    %p151 = scmp.ne.s32.totalorder %s143, %s145
    %p152 = scmp.eq.s32.totalorder %s18, 5
    %p153 = por %p151, %p152
    %p154 = scmp.ne.s32.totalorder %s145, %s146
    %p155 = scmp.eq.s32.totalorder %s18, 0
    %p156 = por %p154, %p155
    %p157 = scmp.ne.s32.totalorder %s145, %s146
    %p158 = scmp.eq.s32.totalorder %s19, 5
    %p159 = por %p157, %p158
    %p161 = scmp.ne.s32.totalorder %s146, %s160
    %p162 = scmp.eq.s32.totalorder %s19, 0
    %p163 = por %p161, %p162
    %s165 = sadd.s32 %s164, 1
    %p168 = scmp.eq.s32.totalorder %s13, 5
    %p169 = scmp.ne.s32.totalorder %s164, %s166
    %p170 = scmp.eq.s32.totalorder %s13, 0
    %p171 = por %p169, %p170
    %p172 = scmp.ne.s32.totalorder %s164, %s166
    %p173 = scmp.eq.s32.totalorder %s18, 5
    %p174 = por %p172, %p173
    %p175 = scmp.ne.s32.totalorder %s166, %s167
    %p176 = scmp.eq.s32.totalorder %s18, 0
    %p177 = por %p175, %p176
    %p178 = scmp.ne.s32.totalorder %s166, %s167
    %p179 = scmp.eq.s32.totalorder %s19, 5
    %p180 = por %p178, %p179
    %p182 = scmp.ne.s32.totalorder %s167, %s181
    %p183 = scmp.eq.s32.totalorder %s19, 0
    %p184 = por %p182, %p183
    %s185 = ssub.s32 %s20, %s32
    %s186 = ssub.s32 %s21, %s28
    %s187 = sor.u32 %s185, %s186
    %p188 = scmp.eq.s32.totalorder %s187, 0
    %s190 = sadd.s32 %s189, 1
    %s191 = scalar_select %p188, %s189, %s190
    %p194 = pneg %p188
    %p195 = scmp.eq.s32.totalorder %s13, 5
    %p196 = por %p194, %p195
    %p197 = scmp.ne.s32.totalorder %s189, %s192
    %p198 = scmp.eq.s32.totalorder %s13, 0
    %p199 = por %p197, %p198
    %p200 = scmp.ne.s32.totalorder %s189, %s192
    %p201 = scmp.eq.s32.totalorder %s18, 5
    %p202 = por %p200, %p201
    %p203 = scmp.ne.s32.totalorder %s192, %s193
    %p204 = scmp.eq.s32.totalorder %s18, 0
    %p205 = por %p203, %p204
    %p206 = scmp.ne.s32.totalorder %s192, %s193
    %p207 = scmp.eq.s32.totalorder %s19, 5
    %p208 = por %p206, %p207
    %p210 = scmp.ne.s32.totalorder %s193, %s209
    %p211 = scmp.eq.s32.totalorder %s19, 0
    %p212 = por %p210, %p211
    %p213 = scmp.le.s32.totalorder 1, %s13
    %p214 = scmp.lt.s32.totalorder %s13, 7
    %p215 = pnand %p213, %p214
    %p216 = pneg %p215
    // Predicated region
    $region9: #{cspstage_forward.5} parent=5 // pred_check
      _
    $region10: #{cspstage_forward.5} parent=5 // pred_check_branch
      %218 = sbr.rel (%p215) target = $region12
    $region11: #{cspstage_forward.5} parent=5 // pred_region
      %s219 = ssub.s32 %s13, 1
      // Predicated region
      $region13: #{cspstage_forward.5} parent=11 // pred_check
        %p220 = pneg %p72
      $region14: #{cspstage_forward.5} parent=11 // pred_check_branch
        %222 = sbr.rel (%p220) target = $region16
      $region15: #{cspstage_forward.5} parent=11 // pred_region
        _
      $region16: #{cspstage_forward.5} parent=11 // pred_fallthru
        _
      // Predicated region
      $region17: #{cspstage_forward.5} parent=11 // pred_check
        %p223 = pneg %p93
      $region18: #{cspstage_forward.5} parent=11 // pred_check_branch
        %225 = sbr.rel (%p223) target = $region20
      $region19: #{cspstage_forward.5} parent=11 // pred_region
        _
      $region20: #{cspstage_forward.5} parent=11 // pred_fallthru
        _
      // Predicated region
      $region21: #{cspstage_forward.5} parent=11 // pred_check
        %p226 = pneg %p114
      $region22: #{cspstage_forward.5} parent=11 // pred_check_branch
        %228 = sbr.rel (%p226) target = $region24
      $region23: #{cspstage_forward.5} parent=11 // pred_region
        _
      $region24: #{cspstage_forward.5} parent=11 // pred_fallthru
        _
      // Predicated region
      $region25: #{cspstage_forward.5} parent=11 // pred_check
        %p229 = pneg %p135
      $region26: #{cspstage_forward.5} parent=11 // pred_check_branch
        %231 = sbr.rel (%p229) target = $region28
      $region27: #{cspstage_forward.5} parent=11 // pred_region
        _
      $region28: #{cspstage_forward.5} parent=11 // pred_fallthru
        _
      // Predicated region
      $region29: #{cspstage_forward.5} parent=11 // pred_check
        %p232 = pneg %p156
      $region30: #{cspstage_forward.5} parent=11 // pred_check_branch
        %234 = sbr.rel (%p232) target = $region32
      $region31: #{cspstage_forward.5} parent=11 // pred_region
        _
      $region32: #{cspstage_forward.5} parent=11 // pred_fallthru
        _
      // Predicated region
      $region33: #{cspstage_forward.5} parent=11 // pred_check
        %p235 = pneg %p177
      $region34: #{cspstage_forward.5} parent=11 // pred_check_branch
        %237 = sbr.rel (%p235) target = $region36
      $region35: #{cspstage_forward.5} parent=11 // pred_region
        _
      $region36: #{cspstage_forward.5} parent=11 // pred_fallthru
        _
    $region12: #{cspstage_forward.5} parent=5 // pred_fallthru
      _
    %p238 = scmp.lt.s32.totalorder %s13, 6
    // Predicated region
    $region37: #{cspstage_forward.5} parent=5 // pred_check
      %p239 = pneg %p238
    $region38: #{cspstage_forward.5} parent=5 // pred_check_branch
      %241 = sbr.rel (%p239) target = $region40
    $region39: #{cspstage_forward.5} parent=5 // pred_region
      // Predicated region
      $region41: #{cspstage_forward.5} parent=39 // pred_check
        %p242 = pneg %p45
      $region42: #{cspstage_forward.5} parent=39 // pred_check_branch
        %244 = sbr.rel (%p242) target = $region44
      $region43: #{cspstage_forward.5} parent=39 // pred_region
        %p245 = scmp.lt.s32.totalorder %s20, 1
        %s246 = scalar_select %p245, %s20, 1
        %s247 = smul.addr %s246, 22
        %s248 = smul.addr %s247, 4
        %s249 = scalar_lea.vmem %s0, %s248
      $region44: #{cspstage_forward.5} parent=39 // pred_fallthru
        _
    $region40: #{cspstage_forward.5} parent=5 // pred_fallthru
      _
    %p250 = scmp.le.s32.totalorder 1, %s13
    %p251 = scmp.lt.s32.totalorder %s13, 7
    %p252 = pnand %p250, %p251
    %p253 = pneg %p252
    // Predicated region
    $region45: #{cspstage_forward.5} parent=5 // pred_check
      _
    $region46: #{cspstage_forward.5} parent=5 // pred_check_branch
      %255 = sbr.rel (%p252) target = $region48
    $region47: #{cspstage_forward.5} parent=5 // pred_region
      %s256 = ssub.s32 %s13, 1
      %p257 = scmp.lt.s32.totalorder %s22, 1
      %s258 = scalar_select %p257, %s22, 1
      %s259 = smul.addr %s258, 22
      %s260 = smul.addr %s259, 4
      %s261 = scalar_lea.vmem %s0, %s260
      %p262 = pneg %p51
      %p263 = pneg %p48
      %p264 = pneg %p72
      %p265 = pneg %p69
      %p266 = pneg %p93
      %p267 = pneg %p90
      %p268 = pneg %p114
      %p269 = pneg %p111
      %p270 = pneg %p135
      %p271 = pneg %p132
      %p272 = pneg %p156
      %p273 = pneg %p153
      %p274 = pneg %p177
      %p275 = pneg %p174
      %p276 = pneg %p205
      %p277 = pneg %p202
      %s278 = smul.u32 3, %s23
      %p279 = scmp.lt.s32.totalorder %s22, 1
      %s280 = scalar_select %p279, %s22, 1
      %p281 = scmp.lt.s32.totalorder %s278, 8
      %s282 = scalar_select %p281, %s278, 8
      %s283 = smul.addr %s280, 9
      %s284 = sadd.s32 %s282, %s283
      %s285 = smul.addr %s284, 4
      %s286 = scalar_lea.vmem %s7, %s285
      %p287 = scmp.lt.s32.totalorder %s22, 1
      %s288 = scalar_select %p287, %s22, 1
      %s289 = smul.addr %s288, 22
      %s290 = smul.addr %s289, 4
      %s291 = scalar_lea.vmem %s0, %s290
      %s292 = smul.u32 3, %s23
      %p293 = scmp.lt.s32.totalorder %s22, 1
      %s294 = scalar_select %p293, %s22, 1
      %p295 = scmp.lt.s32.totalorder %s292, 8
      %s296 = scalar_select %p295, %s292, 8
      %s297 = smul.addr %s294, 9
      %s298 = sadd.s32 %s296, %s297
      %s299 = smul.addr %s298, 4
      %s300 = scalar_lea.vmem %s7, %s299
      %s301 = smul.u32 3, %s23
      %s303 = smul.u32 %s23, 3
      %s304 = smul.u32 %s303, 2
      %s305 = smul.addr %s304, 4
      %s306 = scalar_lea.vmem %s291, %s305
      %v307 = vld [vmem:[%s306] sm:$0xf]
      %v308 = vld [vmem:[%s306 + $0x4] sm:$0x1]
      %v309 = vld [vmem:[%s306 + $0x8] sm:$0xf]
      %v310 = vld [vmem:[%s306 + $0xc] sm:$0x1]
      %v311 = vld [vmem:[%s306 + $0x10] sm:$0xf]
      %v312 = vld [vmem:[%s306 + $0x14] sm:$0x1]
      %v313 = vld [vmem:[%s306 + $0x18] sm:$0xf]
      %v314 = vld [vmem:[%s306 + $0x1c] sm:$0x1]
      %v315 = vld [vmem:[%s306 + $0x20] sm:$0xf]
      %v316 = vld [vmem:[%s306 + $0x24] sm:$0x1]
      %v328 = vunpack.c.l.s4 1966171168
      %v329 = vunpack.c.0.s8 %v328
      %v330 = vlaneseq
      %v331 = vshrl.u32 %v330, 7
      %v332 = vsub.s32 %v329, %v331
      %v333 = vrot.slane %v307, %v332
      %v334 = vcombine.high %v333, %v333
      %v336 = vunpack.c.l.s4 1966171168
      %v337 = vunpack.c.0.s8 %v336
      %v338 = vlaneseq
      %v339 = vshrl.u32 %v338, 7
      %v340 = vsub.s32 %v337, %v339
      %v341 = vrot.slane %v333, %v340
      %v343 = vunpack.c.l.s4 1966171168
      %v344 = vunpack.c.0.s8 %v343
      %v345 = vlaneseq
      %v346 = vshrl.u32 %v345, 7
      %v347 = vsub.s32 %v344, %v346
      %v348 = vrot.slane %v334, %v347
      %v349 = vcombine.high %v341, %v341
      %v350 = vcombine.high %v348, %v348
      %v352 = vunpack.c.l.s4 1966171168
      %v353 = vunpack.c.0.s8 %v352
      %v354 = vlaneseq
      %v355 = vshrl.u32 %v354, 7
      %v356 = vsub.s32 %v353, %v355
      %v357 = vrot.slane %v308, %v356
      %v359 = vunpack.c.l.s4 1966171168
      %v360 = vunpack.c.0.s8 %v359
      %v361 = vlaneseq
      %v362 = vshrl.u32 %v361, 7
      %v363 = vsub.s32 %v360, %v362
      %v364 = vrot.slane %v357, %v363
      %v366 = vunpack.c.l.s4 1966171168
      %v367 = vunpack.c.0.s8 %v366
      %v368 = vlaneseq
      %v369 = vshrl.u32 %v368, 7
      %v370 = vsub.s32 %v367, %v369
      %v371 = vrot.slane %v309, %v370
      %v372 = vcombine.high %v371, %v371
      %v374 = vunpack.c.l.s4 1966171168
      %v375 = vunpack.c.0.s8 %v374
      %v376 = vlaneseq
      %v377 = vshrl.u32 %v376, 7
      %v378 = vsub.s32 %v375, %v377
      %v379 = vrot.slane %v371, %v378
      %v381 = vunpack.c.l.s4 1966171168
      %v382 = vunpack.c.0.s8 %v381
      %v383 = vlaneseq
      %v384 = vshrl.u32 %v383, 7
      %v385 = vsub.s32 %v382, %v384
      %v386 = vrot.slane %v372, %v385
      %v387 = vcombine.high %v379, %v379
      %v388 = vcombine.high %v386, %v386
      %v390 = vunpack.c.l.s4 1966171168
      %v391 = vunpack.c.0.s8 %v390
      %v392 = vlaneseq
      %v393 = vshrl.u32 %v392, 7
      %v394 = vsub.s32 %v391, %v393
      %v395 = vrot.slane %v310, %v394
      %v397 = vunpack.c.l.s4 1966171168
      %v398 = vunpack.c.0.s8 %v397
      %v399 = vlaneseq
      %v400 = vshrl.u32 %v399, 7
      %v401 = vsub.s32 %v398, %v400
      %v402 = vrot.slane %v395, %v401
      %v404 = vunpack.c.l.s4 1966171168
      %v405 = vunpack.c.0.s8 %v404
      %v406 = vlaneseq
      %v407 = vshrl.u32 %v406, 7
      %v408 = vsub.s32 %v405, %v407
      %v409 = vrot.slane %v311, %v408
      %v410 = vcombine.high %v409, %v409
      %v412 = vunpack.c.l.s4 1966171168
      %v413 = vunpack.c.0.s8 %v412
      %v414 = vlaneseq
      %v415 = vshrl.u32 %v414, 7
      %v416 = vsub.s32 %v413, %v415
      %v417 = vrot.slane %v409, %v416
      %v419 = vunpack.c.l.s4 1966171168
      %v420 = vunpack.c.0.s8 %v419
      %v421 = vlaneseq
      %v422 = vshrl.u32 %v421, 7
      %v423 = vsub.s32 %v420, %v422
      %v424 = vrot.slane %v410, %v423
      %v425 = vcombine.high %v417, %v417
      %v426 = vcombine.high %v424, %v424
      %v428 = vunpack.c.l.s4 1966171168
      %v429 = vunpack.c.0.s8 %v428
      %v430 = vlaneseq
      %v431 = vshrl.u32 %v430, 7
      %v432 = vsub.s32 %v429, %v431
      %v433 = vrot.slane %v312, %v432
      %v435 = vunpack.c.l.s4 1966171168
      %v436 = vunpack.c.0.s8 %v435
      %v437 = vlaneseq
      %v438 = vshrl.u32 %v437, 7
      %v439 = vsub.s32 %v436, %v438
      %v440 = vrot.slane %v433, %v439
      %v442 = vunpack.c.l.s4 1966171168
      %v443 = vunpack.c.0.s8 %v442
      %v444 = vlaneseq
      %v445 = vshrl.u32 %v444, 7
      %v446 = vsub.s32 %v443, %v445
      %v447 = vrot.slane %v313, %v446
      %v448 = vcombine.high %v447, %v447
      %v450 = vunpack.c.l.s4 1966171168
      %v451 = vunpack.c.0.s8 %v450
      %v452 = vlaneseq
      %v453 = vshrl.u32 %v452, 7
      %v454 = vsub.s32 %v451, %v453
      %v455 = vrot.slane %v447, %v454
      %v457 = vunpack.c.l.s4 1966171168
      %v458 = vunpack.c.0.s8 %v457
      %v459 = vlaneseq
      %v460 = vshrl.u32 %v459, 7
      %v461 = vsub.s32 %v458, %v460
      %v462 = vrot.slane %v448, %v461
      %v463 = vcombine.high %v455, %v455
      %v464 = vcombine.high %v462, %v462
      %v466 = vunpack.c.l.s4 1966171168
      %v467 = vunpack.c.0.s8 %v466
      %v468 = vlaneseq
      %v469 = vshrl.u32 %v468, 7
      %v470 = vsub.s32 %v467, %v469
      %v471 = vrot.slane %v314, %v470
      %v473 = vunpack.c.l.s4 1966171168
      %v474 = vunpack.c.0.s8 %v473
      %v475 = vlaneseq
      %v476 = vshrl.u32 %v475, 7
      %v477 = vsub.s32 %v474, %v476
      %v478 = vrot.slane %v471, %v477
      %v480 = vunpack.c.l.s4 1966171168
      %v481 = vunpack.c.0.s8 %v480
      %v482 = vlaneseq
      %v483 = vshrl.u32 %v482, 7
      %v484 = vsub.s32 %v481, %v483
      %v485 = vrot.slane %v315, %v484
      %v486 = vcombine.high %v485, %v485
      %v488 = vunpack.c.l.s4 1966171168
      %v489 = vunpack.c.0.s8 %v488
      %v490 = vlaneseq
      %v491 = vshrl.u32 %v490, 7
      %v492 = vsub.s32 %v489, %v491
      %v493 = vrot.slane %v485, %v492
      %v495 = vunpack.c.l.s4 1966171168
      %v496 = vunpack.c.0.s8 %v495
      %v497 = vlaneseq
      %v498 = vshrl.u32 %v497, 7
      %v499 = vsub.s32 %v496, %v498
      %v500 = vrot.slane %v486, %v499
      %v501 = vcombine.high %v493, %v493
      %v502 = vcombine.high %v500, %v500
      %v504 = vunpack.c.l.s4 1966171168
      %v505 = vunpack.c.0.s8 %v504
      %v506 = vlaneseq
      %v507 = vshrl.u32 %v506, 7
      %v508 = vsub.s32 %v505, %v507
      %v509 = vrot.slane %v316, %v508
      %v511 = vunpack.c.l.s4 1966171168
      %v512 = vunpack.c.0.s8 %v511
      %v513 = vlaneseq
      %v514 = vshrl.u32 %v513, 7
      %v515 = vsub.s32 %v512, %v514
      %v516 = vrot.slane %v509, %v515
      %v517 = vunpack.i.l.s16 %v341
      %v518 = vunpack.i.h.s16 %v341
      %v519 = vunpack.i.l.s16 %v348
      %v520 = vunpack.i.h.s16 %v348
      %v521 = vunpack.i.l.s16 %v349
      %v522 = vunpack.i.h.s16 %v349
      %v523 = vunpack.i.l.s16 %v350
      %v524 = vunpack.i.h.s16 %v350
      %v525 = vunpack.i.l.s16 %v364
      %v526 = vunpack.i.l.s16 %v379
      %v527 = vunpack.i.h.s16 %v379
      %v528 = vunpack.i.l.s16 %v386
      %v529 = vunpack.i.h.s16 %v386
      %v530 = vunpack.i.l.s16 %v387
      %v531 = vunpack.i.h.s16 %v387
      %v532 = vunpack.i.l.s16 %v388
      %v533 = vunpack.i.h.s16 %v388
      %v534 = vunpack.i.l.s16 %v402
      %v535 = vunpack.i.l.s16 %v417
      %v536 = vunpack.i.h.s16 %v417
      %v537 = vunpack.i.l.s16 %v424
      %v538 = vunpack.i.h.s16 %v424
      %v539 = vunpack.i.l.s16 %v425
      %v540 = vunpack.i.h.s16 %v425
      %v541 = vunpack.i.l.s16 %v426
      %v542 = vunpack.i.h.s16 %v426
      %v543 = vunpack.i.l.s16 %v440
      %v544 = vunpack.i.l.s16 %v455
      %v545 = vunpack.i.h.s16 %v455
      %v546 = vunpack.i.l.s16 %v462
      %v547 = vunpack.i.h.s16 %v462
      %v548 = vunpack.i.l.s16 %v463
      %v549 = vunpack.i.h.s16 %v463
      %v550 = vunpack.i.l.s16 %v464
      %v551 = vunpack.i.h.s16 %v464
      %v552 = vunpack.i.l.s16 %v478
      %v553 = vunpack.i.l.s16 %v493
      %v554 = vunpack.i.h.s16 %v493
      %v555 = vunpack.i.l.s16 %v500
      %v556 = vunpack.i.h.s16 %v500
      %v557 = vunpack.i.l.s16 %v501
      %v558 = vunpack.i.h.s16 %v501
      %v559 = vunpack.i.l.s16 %v502
      %v560 = vunpack.i.h.s16 %v502
      %v561 = vunpack.i.l.s16 %v516
      %v562 = vld [vmem:[%s1] sm:$0xf]
      %v563 = vld [vmem:[%s1 + $0x4] sm:$0xf]
      %v564 = vld [vmem:[%s1 + $0x8] sm:$0xf]
      %v565 = vld [vmem:[%s1 + $0xc] sm:$0xf]
      %v566 = vld [vmem:[%s1 + $0x10] sm:$0xf]
      %v567 = vld [vmem:[%s1 + $0x14] sm:$0xf]
      %v568 = vld [vmem:[%s1 + $0x18] sm:$0xf]
      %v569 = vld [vmem:[%s1 + $0x1c] sm:$0xf]
      %v570 = vld [vmem:[%s1 + $0x20] sm:$0xf]
      %v571 = vld [vmem:[%s1 + $0x24] sm:$0xf]
      %v572 = vld [vmem:[%s1 + $0x28] sm:$0xf]
      %v573 = vld [vmem:[%s1 + $0x2c] sm:$0xf]
      %v574 = vld [vmem:[%s1 + $0x30] sm:$0xf]
      %v575 = vld [vmem:[%s1 + $0x34] sm:$0xf]
      %v576 = vld [vmem:[%s1 + $0x38] sm:$0xf]
      %v577 = vld [vmem:[%s1 + $0x3c] sm:$0xf]
      %v578 = vpack.i.b16 %v518, %v517
      %v579 = vpack.i.b16 %v520, %v519
      %v580 = vpack.i.b16 %v522, %v521
      %v581 = vpack.i.b16 %v524, %v523
      %v582 = vpack.i.b16 %v526, %v525
      %v583 = vpack.i.b16 %v528, %v527
      %v584 = vpack.i.b16 %v530, %v529
      %v585 = vpack.i.b16 %v532, %v531
      %v586 = vpack.i.b16 %v534, %v533
      %v587 = vpack.i.b16 %v536, %v535
      %v588 = vpack.i.b16 %v538, %v537
      %v589 = vpack.i.b16 %v540, %v539
      %v590 = vpack.i.b16 %v542, %v541
      %v591 = vpack.i.b16 %v544, %v543
      %v592 = vpack.i.b16 %v546, %v545
      %v593 = vpack.i.b16 %v548, %v547
      %v594 = vpack.i.b16 %v550, %v549
      %v595 = vpack.i.b16 %v552, %v551
      %v596 = vpack.i.b16 %v554, %v553
      %v597 = vpack.i.b16 %v556, %v555
      %v598 = vpack.i.b16 %v558, %v557
      %v599 = vpack.i.b16 %v560, %v559
      %v601 = vcombine.low %v578, %v579
      %v602 = vcombine.low %v580, %v581
      %v603 = vcombine.low %v582, %v583
      %v604 = vcombine.low %v584, %v585
      %v606 = vunpack.c.l.s4 1966171168
      %v607 = vunpack.c.0.s8 %v606
      %v608 = vlaneseq
      %v609 = vshrl.u32 %v608, 7
      %v610 = vsub.s32 %v607, %v609
      %v611 = vrot.slane %v601, %v610
      %v613 = vunpack.c.l.s4 1966171168
      %v614 = vunpack.c.0.s8 %v613
      %v615 = vlaneseq
      %v616 = vshrl.u32 %v615, 7
      %v617 = vsub.s32 %v614, %v616
      %v618 = vrot.slane %v602, %v617
      %v620 = vunpack.c.l.s4 1966171168
      %v621 = vunpack.c.0.s8 %v620
      %v622 = vlaneseq
      %v623 = vshrl.u32 %v622, 7
      %v624 = vsub.s32 %v621, %v623
      %v625 = vrot.slane %v603, %v624
      %v627 = vunpack.c.l.s4 1966171168
      %v628 = vunpack.c.0.s8 %v627
      %v629 = vlaneseq
      %v630 = vshrl.u32 %v629, 7
      %v631 = vsub.s32 %v628, %v630
      %v632 = vrot.slane %v604, %v631
      %v633 = vcombine.low %v611, %v618
      %v634 = vcombine.low %v625, %v632
      %v636 = vunpack.c.l.s4 1966171168
      %v637 = vunpack.c.0.s8 %v636
      %v638 = vlaneseq
      %v639 = vshrl.u32 %v638, 7
      %v640 = vsub.s32 %v637, %v639
      %v641 = vrot.slane %v633, %v640
      %v643 = vunpack.c.l.s4 1966171168
      %v644 = vunpack.c.0.s8 %v643
      %v645 = vlaneseq
      %v646 = vshrl.u32 %v645, 7
      %v647 = vsub.s32 %v644, %v646
      %v648 = vrot.slane %v634, %v647
      %v649 = vcombine.low %v641, %v648
      %v650 = vcombine.low %v586, %v587
      %v651 = vcombine.low %v588, %v589
      %v652 = vcombine.low %v590, %v591
      %v653 = vcombine.low %v592, %v593
      %v655 = vunpack.c.l.s4 1966171168
      %v656 = vunpack.c.0.s8 %v655
      %v657 = vlaneseq
      %v658 = vshrl.u32 %v657, 7
      %v659 = vsub.s32 %v656, %v658
      %v660 = vrot.slane %v650, %v659
      %v662 = vunpack.c.l.s4 1966171168
      %v663 = vunpack.c.0.s8 %v662
      %v664 = vlaneseq
      %v665 = vshrl.u32 %v664, 7
      %v666 = vsub.s32 %v663, %v665
      %v667 = vrot.slane %v651, %v666
      %v669 = vunpack.c.l.s4 1966171168
      %v670 = vunpack.c.0.s8 %v669
      %v671 = vlaneseq
      %v672 = vshrl.u32 %v671, 7
      %v673 = vsub.s32 %v670, %v672
      %v674 = vrot.slane %v652, %v673
      %v676 = vunpack.c.l.s4 1966171168
      %v677 = vunpack.c.0.s8 %v676
      %v678 = vlaneseq
      %v679 = vshrl.u32 %v678, 7
      %v680 = vsub.s32 %v677, %v679
      %v681 = vrot.slane %v653, %v680
      %v682 = vcombine.low %v660, %v667
      %v683 = vcombine.low %v674, %v681
      %v685 = vunpack.c.l.s4 1966171168
      %v686 = vunpack.c.0.s8 %v685
      %v687 = vlaneseq
      %v688 = vshrl.u32 %v687, 7
      %v689 = vsub.s32 %v686, %v688
      %v690 = vrot.slane %v682, %v689
      %v692 = vunpack.c.l.s4 1966171168
      %v693 = vunpack.c.0.s8 %v692
      %v694 = vlaneseq
      %v695 = vshrl.u32 %v694, 7
      %v696 = vsub.s32 %v693, %v695
      %v697 = vrot.slane %v683, %v696
      %v698 = vcombine.low %v690, %v697
      %v699 = vcombine.low %v594, %v595
      %v700 = vcombine.low %v596, %v597
      %v701 = vcombine.low %v598, %v599
      %v703 = vunpack.c.l.s4 1966171168
      %v704 = vunpack.c.0.s8 %v703
      %v705 = vlaneseq
      %v706 = vshrl.u32 %v705, 7
      %v707 = vsub.s32 %v704, %v706
      %v708 = vrot.slane %v699, %v707
      %v710 = vunpack.c.l.s4 1966171168
      %v711 = vunpack.c.0.s8 %v710
      %v712 = vlaneseq
      %v713 = vshrl.u32 %v712, 7
      %v714 = vsub.s32 %v711, %v713
      %v715 = vrot.slane %v700, %v714
      %v717 = vunpack.c.l.s4 1966171168
      %v718 = vunpack.c.0.s8 %v717
      %v719 = vlaneseq
      %v720 = vshrl.u32 %v719, 7
      %v721 = vsub.s32 %v718, %v720
      %v722 = vrot.slane %v701, %v721
      %v724 = vunpack.c.l.s4 1966171168
      %v725 = vunpack.c.0.s8 %v724
      %v726 = vlaneseq
      %v727 = vshrl.u32 %v726, 7
      %v728 = vsub.s32 %v725, %v727
      %v729 = vrot.slane %v561, %v728
      %v730 = vcombine.low %v708, %v715
      %v731 = vcombine.low %v722, %v729
      %v733 = vunpack.c.l.s4 1966171168
      %v734 = vunpack.c.0.s8 %v733
      %v735 = vlaneseq
      %v736 = vshrl.u32 %v735, 7
      %v737 = vsub.s32 %v734, %v736
      %v738 = vrot.slane %v730, %v737
      %v740 = vunpack.c.l.s4 1966171168
      %v741 = vunpack.c.0.s8 %v740
      %v742 = vlaneseq
      %v743 = vshrl.u32 %v742, 7
      %v744 = vsub.s32 %v741, %v743
      %v745 = vrot.slane %v731, %v744
      %v746 = vcombine.low %v738, %v745
      %v766 = vunpack.c.l.b16 %v562
      %v767 = vunpack.c.l.b16 %v563
      %v768 = vunpack.c.l.b16 %v564
      %v769 = vunpack.c.l.b16 %v565
      %v770 = vunpack.c.l.b16 %v566
      %v771 = vunpack.c.l.b16 %v567
      %v772 = vunpack.c.l.b16 %v568
      %v773 = vunpack.c.l.b16 %v569
      %v774 = vunpack.c.l.b16 %v570
      %v775 = vunpack.c.l.b16 %v571
      %v776 = vunpack.c.l.b16 %v572
      %v777 = vunpack.c.l.b16 %v573
      %v778 = vunpack.c.l.b16 %v574
      %v779 = vunpack.c.l.b16 %v575
      %v780 = vunpack.c.l.b16 %v576
      %v781 = vunpack.c.l.b16 %v577
      %v782 = vpack.c.b16 %v767, %v766
      %v783 = vpack.c.b16 %v769, %v768
      %v784 = vpack.c.b16 %v771, %v770
      %v785 = vpack.c.b16 %v773, %v772
      %v786 = vpack.c.b16 %v775, %v774
      %v787 = vpack.c.b16 %v777, %v776
      %v788 = vpack.c.b16 %v779, %v778
      %v789 = vpack.c.b16 %v781, %v780
      %798 = vmatprep.subr.bf16.mxu0 0
      %799 = vmatpush1.bf16.msra.mxu0 %v782
      %800 = vmatprep.subr.bf16.mxu0 0
      %801 = vmatpush1.bf16.msra.mxu0 %v783
      %802 = vmatprep.subr.bf16.mxu0 0
      %803 = vmatpush1.bf16.msra.mxu0 %v784
      %804 = vmatprep.subr.bf16.mxu0 0
      %805 = vmatpush1.bf16.msra.mxu0 %v785
      %806 = vmatprep.subr.bf16.mxu0 0
      %807 = vmatpush1.bf16.msra.mxu0 %v786
      %808 = vmatprep.subr.bf16.mxu0 0
      %809 = vmatpush1.bf16.msra.mxu0 %v787
      %810 = vmatprep.subr.bf16.mxu0 0
      %811 = vmatpush1.bf16.msra.mxu0 %v788
      %812 = vmatprep.subr.bf16.mxu0 0
      %813 = vmatpush1.bf16.msra.mxu0 %v789
      %814 = vmatprep.subr.bf16.mxu0 0
      %815 = vmatpush1.bf16.msra.mxu0 0
      %816 = vmatprep.subr.bf16.mxu0 0
      %817 = vmatpush1.bf16.msra.mxu0 0
      %818 = vmatprep.subr.bf16.mxu0 0
      %819 = vmatpush1.bf16.msra.mxu0 0
      %820 = vmatprep.subr.bf16.mxu0 0
      %821 = vmatpush1.bf16.msra.mxu0 0
      %822 = vmatprep.subr.bf16.mxu0 0
      %823 = vmatpush1.bf16.msra.mxu0 0
      %824 = vmatprep.subr.bf16.mxu0 0
      %825 = vmatpush1.bf16.msra.mxu0 0
      %826 = vmatprep.subr.bf16.mxu0 0
      %827 = vmatpush1.bf16.msra.mxu0 0
      %828 = vmatprep.subr.bf16.mxu0 0
      %829 = vmatpush1.bf16.msra.mxu0 0
      %830 = vmatprep.mubr.bf16.mxu0 0
      %831 = vmatmul.mubr.bf16.gmra.mrb[0].mxu0 %v649
      %v832 = vpop.f32.mrb[0].mxu0
      %v833 = vadd.f32 0.0, %v832
      %v834 = vpop.f32.mrb[0].mxu0
      %v835 = vpop.f32.mrb[0].mxu0
      %v836 = vadd.f32 0.0, %v835
      %v837 = vpop.f32.mrb[0].mxu0
      %838 = vmatprep.mubr.bf16.mxu0 0
      %839 = vmatmul.mubr.bf16.gmra.mrb[0].mxu0 %v698
      %v840 = vpop.f32.mrb[0].mxu0
      %v841 = vadd.f32 0.0, %v840
      %v842 = vpop.f32.mrb[0].mxu0
      %v843 = vpop.f32.mrb[0].mxu0
      %v844 = vadd.f32 0.0, %v843
      %v845 = vpop.f32.mrb[0].mxu0
      %846 = vmatprep.mubr.bf16.mxu0 0
      %847 = vmatmul.mubr.bf16.gmra.mrb[0].mxu0 %v746
      %v848 = vpop.f32.mrb[0].mxu0
      %v849 = vadd.f32 0.0, %v848
      %v850 = vpop.f32.mrb[0].mxu0
      %v851 = vpop.f32.mrb[0].mxu0
      %v852 = vadd.f32 0.0, %v851
      %v853 = vpop.f32.mrb[0].mxu0
      %854 = vdwg.mxu0
      %v855 = vld [vmem:[%s2] sm:$0x1]
      %v857 = vlaneseq
      %v858 = vshrl.u32 %v857, 7
      %v859 = vsub.s32 0, %v858
      %v860 = vrot.slane %v855, %v859
      %v862 = vmul.f32 %v833, %v860
      %v863 = vmul.f32 %v836, %v860
      %v864 = vmul.f32 %v841, %v860
      %v865 = vmul.f32 %v844, %v860
      %v866 = vmul.f32 %v849, %v860
      %v867 = vmul.f32 %v852, %v860
      %v868 = vld [vmem:[%s3] sm:$0x1]
      %v870 = vlaneseq
      %v871 = vshrl.u32 %v870, 7
      %v872 = vsub.s32 0, %v871
      %v873 = vrot.slane %v868, %v872
      %v875 = vadd.f32 %v862, %v873
      %v876 = vadd.f32 %v863, %v873
      %v877 = vadd.f32 %v864, %v873
      %v878 = vadd.f32 %v865, %v873
      %v879 = vadd.f32 %v866, %v873
      %v880 = vadd.f32 %v867, %v873
      %v881 = vmin.f32 %v875, 20.0
      %v882 = vmin.f32 %v876, 20.0
      %v883 = vmin.f32 %v877, 20.0
      %v884 = vmin.f32 %v878, 20.0
      %v885 = vmin.f32 %v879, 20.0
      %v886 = vmin.f32 %v880, 20.0
      %v887 = vmul.f32 %v881, 1.442695
      %v888 = vpow.pop %v887
      %v889 = vmul.f32 %v882, 1.442695
      %v890 = vpow.pop %v889
      %v891 = vmul.f32 %v883, 1.442695
      %v892 = vpow.pop %v891
      %v893 = vmul.f32 %v884, 1.442695
      %v894 = vpow.pop %v893
      %v895 = vmul.f32 %v885, 1.442695
      %v896 = vpow.pop %v895
      %v897 = vmul.f32 %v886, 1.442695
      %v898 = vpow.pop %v897
      %v899 = vadd.f32 %v888, 1.0
      %v900 = vadd.f32 %v890, 1.0
      %v901 = vadd.f32 %v892, 1.0
      %v902 = vadd.f32 %v894, 1.0
      %v903 = vadd.f32 %v896, 1.0
      %v904 = vadd.f32 %v898, 1.0
      %v905 = vmul.f32 %v899, %v899
      %v906 = vmul.f32 %v900, %v900
      %v907 = vmul.f32 %v901, %v901
      %v908 = vmul.f32 %v902, %v902
      %v909 = vmul.f32 %v903, %v903
      %v910 = vmul.f32 %v904, %v904
      %v911 = vadd.f32 %v905, 1.0
      %v912 = vadd.f32 %v906, 1.0
      %v913 = vadd.f32 %v907, 1.0
      %v914 = vadd.f32 %v908, 1.0
      %v915 = vadd.f32 %v909, 1.0
      %v916 = vadd.f32 %v910, 1.0
      %v917 = vrcp.pop %v911
      %v918 = vrcp.pop %v912
      %v919 = vrcp.pop %v913
      %v920 = vrcp.pop %v914
      %v921 = vrcp.pop %v915
      %v922 = vrcp.pop %v916
      %v923 = vmul.f32 %v911, %v917
      %v924 = vmul.f32 %v912, %v918
      %v925 = vmul.f32 %v913, %v919
      %v926 = vmul.f32 %v914, %v920
      %v927 = vmul.f32 %v915, %v921
      %v928 = vmul.f32 %v916, %v922
      %v929 = vsub.f32 2.0, %v923
      %v930 = vsub.f32 2.0, %v924
      %v931 = vsub.f32 2.0, %v925
      %v932 = vsub.f32 2.0, %v926
      %v933 = vsub.f32 2.0, %v927
      %v934 = vsub.f32 2.0, %v928
      %v935 = vmul.f32 %v917, %v929
      %v936 = vmul.f32 %v918, %v930
      %v937 = vmul.f32 %v919, %v931
      %v938 = vmul.f32 %v920, %v932
      %v939 = vmul.f32 %v921, %v933
      %v940 = vmul.f32 %v922, %v934
      %v941 = vsub.f32 %v905, 1.0
      %v942 = vsub.f32 %v906, 1.0
      %v943 = vsub.f32 %v907, 1.0
      %v944 = vsub.f32 %v908, 1.0
      %v945 = vsub.f32 %v909, 1.0
      %v946 = vsub.f32 %v910, 1.0
      %v947 = vmul.f32 %v875, %v941
      %v948 = vmul.f32 %v876, %v942
      %v949 = vmul.f32 %v877, %v943
      %v950 = vmul.f32 %v878, %v944
      %v951 = vmul.f32 %v879, %v945
      %v952 = vmul.f32 %v880, %v946
      %v953 = vmul.f32 %v947, %v935
      %v954 = vmul.f32 %v948, %v936
      %v955 = vmul.f32 %v949, %v937
      %v956 = vmul.f32 %v950, %v938
      %v957 = vmul.f32 %v951, %v939
      %v958 = vmul.f32 %v952, %v940
      %v965 = vcombine.high %v953, %v953
      %v967 = vunpack.c.l.s4 1966171168
      %v968 = vunpack.c.0.s8 %v967
      %v969 = vlaneseq
      %v970 = vshrl.u32 %v969, 7
      %v971 = vsub.s32 %v968, %v970
      %v972 = vrot.slane %v953, %v971
      %v974 = vunpack.c.l.s4 1966171168
      %v975 = vunpack.c.0.s8 %v974
      %v976 = vlaneseq
      %v977 = vshrl.u32 %v976, 7
      %v978 = vsub.s32 %v975, %v977
      %v979 = vrot.slane %v965, %v978
      %v980 = vcombine.high %v972, %v972
      %v981 = vcombine.high %v979, %v979
      %v983 = vunpack.c.l.s4 1966171168
      %v984 = vunpack.c.0.s8 %v983
      %v985 = vlaneseq
      %v986 = vshrl.u32 %v985, 7
      %v987 = vsub.s32 %v984, %v986
      %v988 = vrot.slane %v972, %v987
      %v990 = vunpack.c.l.s4 1966171168
      %v991 = vunpack.c.0.s8 %v990
      %v992 = vlaneseq
      %v993 = vshrl.u32 %v992, 7
      %v994 = vsub.s32 %v991, %v993
      %v995 = vrot.slane %v979, %v994
      %v997 = vunpack.c.l.s4 1966171168
      %v998 = vunpack.c.0.s8 %v997
      %v999 = vlaneseq
      %v1000 = vshrl.u32 %v999, 7
      %v1001 = vsub.s32 %v998, %v1000
      %v1002 = vrot.slane %v980, %v1001
      %v1004 = vunpack.c.l.s4 1966171168
      %v1005 = vunpack.c.0.s8 %v1004
      %v1006 = vlaneseq
      %v1007 = vshrl.u32 %v1006, 7
      %v1008 = vsub.s32 %v1005, %v1007
      %v1009 = vrot.slane %v981, %v1008
      %v1010 = vcombine.high %v988, %v988
      %v1011 = vcombine.high %v995, %v995
      %v1012 = vcombine.high %v1002, %v1002
      %v1013 = vcombine.high %v1009, %v1009
      %v1014 = vcombine.high %v954, %v954
      %v1016 = vunpack.c.l.s4 1966171168
      %v1017 = vunpack.c.0.s8 %v1016
      %v1018 = vlaneseq
      %v1019 = vshrl.u32 %v1018, 7
      %v1020 = vsub.s32 %v1017, %v1019
      %v1021 = vrot.slane %v954, %v1020
      %v1023 = vunpack.c.l.s4 1966171168
      %v1024 = vunpack.c.0.s8 %v1023
      %v1025 = vlaneseq
      %v1026 = vshrl.u32 %v1025, 7
      %v1027 = vsub.s32 %v1024, %v1026
      %v1028 = vrot.slane %v1014, %v1027
      %v1029 = vcombine.high %v1021, %v1021
      %v1030 = vcombine.high %v1028, %v1028
      %v1032 = vunpack.c.l.s4 1966171168
      %v1033 = vunpack.c.0.s8 %v1032
      %v1034 = vlaneseq
      %v1035 = vshrl.u32 %v1034, 7
      %v1036 = vsub.s32 %v1033, %v1035
      %v1037 = vrot.slane %v1021, %v1036
      %v1039 = vunpack.c.l.s4 1966171168
      %v1040 = vunpack.c.0.s8 %v1039
      %v1041 = vlaneseq
      %v1042 = vshrl.u32 %v1041, 7
      %v1043 = vsub.s32 %v1040, %v1042
      %v1044 = vrot.slane %v1028, %v1043
      %v1046 = vunpack.c.l.s4 1966171168
      %v1047 = vunpack.c.0.s8 %v1046
      %v1048 = vlaneseq
      %v1049 = vshrl.u32 %v1048, 7
      %v1050 = vsub.s32 %v1047, %v1049
      %v1051 = vrot.slane %v1029, %v1050
      %v1053 = vunpack.c.l.s4 1966171168
      %v1054 = vunpack.c.0.s8 %v1053
      %v1055 = vlaneseq
      %v1056 = vshrl.u32 %v1055, 7
      %v1057 = vsub.s32 %v1054, %v1056
      %v1058 = vrot.slane %v1030, %v1057
      %v1059 = vcombine.high %v1037, %v1037
      %v1060 = vcombine.high %v1044, %v1044
      %v1061 = vcombine.high %v1051, %v1051
      %v1062 = vcombine.high %v1058, %v1058
      %v1063 = vcombine.high %v955, %v955
      %v1065 = vunpack.c.l.s4 1966171168
      %v1066 = vunpack.c.0.s8 %v1065
      %v1067 = vlaneseq
      %v1068 = vshrl.u32 %v1067, 7
      %v1069 = vsub.s32 %v1066, %v1068
      %v1070 = vrot.slane %v955, %v1069
      %v1072 = vunpack.c.l.s4 1966171168
      %v1073 = vunpack.c.0.s8 %v1072
      %v1074 = vlaneseq
      %v1075 = vshrl.u32 %v1074, 7
      %v1076 = vsub.s32 %v1073, %v1075
      %v1077 = vrot.slane %v1063, %v1076
      %v1078 = vcombine.high %v1070, %v1070
      %v1079 = vcombine.high %v1077, %v1077
      %v1081 = vunpack.c.l.s4 1966171168
      %v1082 = vunpack.c.0.s8 %v1081
      %v1083 = vlaneseq
      %v1084 = vshrl.u32 %v1083, 7
      %v1085 = vsub.s32 %v1082, %v1084
      %v1086 = vrot.slane %v1070, %v1085
      %v1088 = vunpack.c.l.s4 1966171168
      %v1089 = vunpack.c.0.s8 %v1088
      %v1090 = vlaneseq
      %v1091 = vshrl.u32 %v1090, 7
      %v1092 = vsub.s32 %v1089, %v1091
      %v1093 = vrot.slane %v1077, %v1092
      %v1095 = vunpack.c.l.s4 1966171168
      %v1096 = vunpack.c.0.s8 %v1095
      %v1097 = vlaneseq
      %v1098 = vshrl.u32 %v1097, 7
      %v1099 = vsub.s32 %v1096, %v1098
      %v1100 = vrot.slane %v1078, %v1099
      %v1102 = vunpack.c.l.s4 1966171168
      %v1103 = vunpack.c.0.s8 %v1102
      %v1104 = vlaneseq
      %v1105 = vshrl.u32 %v1104, 7
      %v1106 = vsub.s32 %v1103, %v1105
      %v1107 = vrot.slane %v1079, %v1106
      %v1108 = vcombine.high %v1086, %v1086
      %v1109 = vcombine.high %v1093, %v1093
      %v1110 = vcombine.high %v1100, %v1100
      %v1111 = vcombine.high %v1107, %v1107
      %v1112 = vcombine.high %v956, %v956
      %v1114 = vunpack.c.l.s4 1966171168
      %v1115 = vunpack.c.0.s8 %v1114
      %v1116 = vlaneseq
      %v1117 = vshrl.u32 %v1116, 7
      %v1118 = vsub.s32 %v1115, %v1117
      %v1119 = vrot.slane %v956, %v1118
      %v1121 = vunpack.c.l.s4 1966171168
      %v1122 = vunpack.c.0.s8 %v1121
      %v1123 = vlaneseq
      %v1124 = vshrl.u32 %v1123, 7
      %v1125 = vsub.s32 %v1122, %v1124
      %v1126 = vrot.slane %v1112, %v1125
      %v1127 = vcombine.high %v1119, %v1119
      %v1128 = vcombine.high %v1126, %v1126
      %v1130 = vunpack.c.l.s4 1966171168
      %v1131 = vunpack.c.0.s8 %v1130
      %v1132 = vlaneseq
      %v1133 = vshrl.u32 %v1132, 7
      %v1134 = vsub.s32 %v1131, %v1133
      %v1135 = vrot.slane %v1119, %v1134
      %v1137 = vunpack.c.l.s4 1966171168
      %v1138 = vunpack.c.0.s8 %v1137
      %v1139 = vlaneseq
      %v1140 = vshrl.u32 %v1139, 7
      %v1141 = vsub.s32 %v1138, %v1140
      %v1142 = vrot.slane %v1126, %v1141
      %v1144 = vunpack.c.l.s4 1966171168
      %v1145 = vunpack.c.0.s8 %v1144
      %v1146 = vlaneseq
      %v1147 = vshrl.u32 %v1146, 7
      %v1148 = vsub.s32 %v1145, %v1147
      %v1149 = vrot.slane %v1127, %v1148
      %v1151 = vunpack.c.l.s4 1966171168
      %v1152 = vunpack.c.0.s8 %v1151
      %v1153 = vlaneseq
      %v1154 = vshrl.u32 %v1153, 7
      %v1155 = vsub.s32 %v1152, %v1154
      %v1156 = vrot.slane %v1128, %v1155
      %v1157 = vcombine.high %v1135, %v1135
      %v1158 = vcombine.high %v1142, %v1142
      %v1159 = vcombine.high %v1149, %v1149
      %v1160 = vcombine.high %v1156, %v1156
      %v1161 = vcombine.high %v957, %v957
      %v1163 = vunpack.c.l.s4 1966171168
      %v1164 = vunpack.c.0.s8 %v1163
      %v1165 = vlaneseq
      %v1166 = vshrl.u32 %v1165, 7
      %v1167 = vsub.s32 %v1164, %v1166
      %v1168 = vrot.slane %v957, %v1167
      %v1170 = vunpack.c.l.s4 1966171168
      %v1171 = vunpack.c.0.s8 %v1170
      %v1172 = vlaneseq
      %v1173 = vshrl.u32 %v1172, 7
      %v1174 = vsub.s32 %v1171, %v1173
      %v1175 = vrot.slane %v1161, %v1174
      %v1176 = vcombine.high %v1168, %v1168
      %v1177 = vcombine.high %v1175, %v1175
      %v1179 = vunpack.c.l.s4 1966171168
      %v1180 = vunpack.c.0.s8 %v1179
      %v1181 = vlaneseq
      %v1182 = vshrl.u32 %v1181, 7
      %v1183 = vsub.s32 %v1180, %v1182
      %v1184 = vrot.slane %v1168, %v1183
      %v1186 = vunpack.c.l.s4 1966171168
      %v1187 = vunpack.c.0.s8 %v1186
      %v1188 = vlaneseq
      %v1189 = vshrl.u32 %v1188, 7
      %v1190 = vsub.s32 %v1187, %v1189
      %v1191 = vrot.slane %v1175, %v1190
      %v1193 = vunpack.c.l.s4 1966171168
      %v1194 = vunpack.c.0.s8 %v1193
      %v1195 = vlaneseq
      %v1196 = vshrl.u32 %v1195, 7
      %v1197 = vsub.s32 %v1194, %v1196
      %v1198 = vrot.slane %v1176, %v1197
      %v1200 = vunpack.c.l.s4 1966171168
      %v1201 = vunpack.c.0.s8 %v1200
      %v1202 = vlaneseq
      %v1203 = vshrl.u32 %v1202, 7
      %v1204 = vsub.s32 %v1201, %v1203
      %v1205 = vrot.slane %v1177, %v1204
      %v1206 = vcombine.high %v1184, %v1184
      %v1207 = vcombine.high %v1191, %v1191
      %v1208 = vcombine.high %v1198, %v1198
      %v1209 = vcombine.high %v1205, %v1205
      %v1210 = vcombine.high %v958, %v958
      %v1212 = vunpack.c.l.s4 1966171168
      %v1213 = vunpack.c.0.s8 %v1212
      %v1214 = vlaneseq
      %v1215 = vshrl.u32 %v1214, 7
      %v1216 = vsub.s32 %v1213, %v1215
      %v1217 = vrot.slane %v958, %v1216
      %v1219 = vunpack.c.l.s4 1966171168
      %v1220 = vunpack.c.0.s8 %v1219
      %v1221 = vlaneseq
      %v1222 = vshrl.u32 %v1221, 7
      %v1223 = vsub.s32 %v1220, %v1222
      %v1224 = vrot.slane %v1210, %v1223
      %v1225 = vcombine.high %v1217, %v1217
      %v1227 = vunpack.c.l.s4 1966171168
      %v1228 = vunpack.c.0.s8 %v1227
      %v1229 = vlaneseq
      %v1230 = vshrl.u32 %v1229, 7
      %v1231 = vsub.s32 %v1228, %v1230
      %v1232 = vrot.slane %v1217, %v1231
      %v1234 = vunpack.c.l.s4 1966171168
      %v1235 = vunpack.c.0.s8 %v1234
      %v1236 = vlaneseq
      %v1237 = vshrl.u32 %v1236, 7
      %v1238 = vsub.s32 %v1235, %v1237
      %v1239 = vrot.slane %v1224, %v1238
      %v1241 = vunpack.c.l.s4 1966171168
      %v1242 = vunpack.c.0.s8 %v1241
      %v1243 = vlaneseq
      %v1244 = vshrl.u32 %v1243, 7
      %v1245 = vsub.s32 %v1242, %v1244
      %v1246 = vrot.slane %v1225, %v1245
      %v1247 = vcombine.high %v1232, %v1232
      %v1248 = vcombine.high %v1246, %v1246
      %v1249 = vstv %s303
      %v1250 = vadd.s32 %v1249, 1
      %v1251 = vadd.s32 %v1249, 2
      %v1252 = vadd.s32 %v1249, 3
      %v1253 = vadd.s32 %v1249, 4
      %v1254 = vlaneseq
      %v1255 = vshrl.u32 %v1254, 7
      %v1256 = vadd.s32 %v1255, 8
      %vm1257 = vcmp.ge.s32.totalorder %v1249, 1
      %vm1258 = vcmp.ge.s32.totalorder %v1250, 1
      %vm1259 = vcmp.ge.s32.totalorder %v1251, 1
      %vm1260 = vcmp.ge.s32.totalorder %v1252, 1
      %vm1261 = vcmp.ge.s32.totalorder %v1253, 1
      %vm1262 = vcmp.le.s32.totalorder %v1249, 7
      %vm1263 = vcmp.le.s32.totalorder %v1250, 7
      %vm1264 = vcmp.le.s32.totalorder %v1251, 7
      %vm1265 = vcmp.le.s32.totalorder %v1252, 7
      %vm1266 = vcmp.le.s32.totalorder %v1253, 7
      %vm1267 = vmand %vm1257, %vm1262
      %vm1268 = vmand %vm1258, %vm1263
      %vm1269 = vmand %vm1259, %vm1264
      %vm1270 = vmand %vm1260, %vm1265
      %vm1271 = vmand %vm1261, %vm1266
      %vm1272 = vcmp.ge.s32.totalorder %v1255, 1
      %vm1273 = vcmp.ge.s32.totalorder %v1256, 1
      %vm1274 = vmand %vm1267, %vm1272
      %vm1275 = vmand %vm1267, %vm1273
      %vm1276 = vmand %vm1268, %vm1272
      %vm1277 = vmand %vm1268, %vm1273
      %vm1278 = vmand %vm1269, %vm1272
      %vm1279 = vmand %vm1269, %vm1273
      %vm1280 = vmand %vm1270, %vm1272
      %vm1281 = vmand %vm1270, %vm1273
      %vm1282 = vmand %vm1271, %vm1272
      %vm1283 = vmand %vm1271, %vm1273
      %vm1284 = vcmp.le.s32.totalorder %v1255, 7
      %vm1285 = vcmp.le.s32.totalorder %v1256, 7
      %vm1286 = vmand %vm1274, %vm1284
      %vm1287 = vmand %vm1275, %vm1285
      %vm1288 = vmand %vm1276, %vm1284
      %vm1289 = vmand %vm1277, %vm1285
      %vm1290 = vmand %vm1278, %vm1284
      %vm1291 = vmand %vm1279, %vm1285
      %vm1292 = vmand %vm1280, %vm1284
      %vm1293 = vmand %vm1281, %vm1285
      %vm1294 = vmand %vm1282, %vm1284
      %vm1295 = vmand %vm1283, %vm1285
      %v1296 = vsel %vm1286, 1, 0
      %v1297 = vsel %vm1287, 1, 0
      %v1298 = vsel %vm1288, 1, 0
      %v1299 = vsel %vm1289, 1, 0
      %v1300 = vsel %vm1290, 1, 0
      %v1301 = vsel %vm1291, 1, 0
      %v1302 = vsel %vm1292, 1, 0
      %v1303 = vsel %vm1293, 1, 0
      %v1304 = vsel %vm1294, 1, 0
      %v1305 = vsel %vm1295, 1, 0
      %vm1306 = vcmp.eq.s32.totalorder %v1296, 1
      %vm1307 = vcmp.eq.s32.totalorder %v1297, 1
      %vm1308 = vcmp.eq.s32.totalorder %v1298, 1
      %vm1309 = vcmp.eq.s32.totalorder %v1299, 1
      %vm1310 = vcmp.eq.s32.totalorder %v1300, 1
      %vm1311 = vcmp.eq.s32.totalorder %v1301, 1
      %vm1312 = vcmp.eq.s32.totalorder %v1302, 1
      %vm1313 = vcmp.eq.s32.totalorder %v1303, 1
      %vm1314 = vcmp.eq.s32.totalorder %v1304, 1
      %vm1315 = vcmp.eq.s32.totalorder %v1305, 1
      %v1316 = vcombine.low %v988, %v1002
      %v1317 = vcombine.low %v1010, %v1012
      %v1318 = vcombine.low %v995, %v1009
      %v1319 = vcombine.low %v1011, %v1013
      %v1321 = vunpack.c.l.s4 1966171168
      %v1322 = vunpack.c.0.s8 %v1321
      %v1323 = vlaneseq
      %v1324 = vshrl.u32 %v1323, 7
      %v1325 = vsub.s32 %v1322, %v1324
      %v1326 = vrot.slane %v1316, %v1325
      %v1328 = vunpack.c.l.s4 1966171168
      %v1329 = vunpack.c.0.s8 %v1328
      %v1330 = vlaneseq
      %v1331 = vshrl.u32 %v1330, 7
      %v1332 = vsub.s32 %v1329, %v1331
      %v1333 = vrot.slane %v1317, %v1332
      %v1335 = vunpack.c.l.s4 1966171168
      %v1336 = vunpack.c.0.s8 %v1335
      %v1337 = vlaneseq
      %v1338 = vshrl.u32 %v1337, 7
      %v1339 = vsub.s32 %v1336, %v1338
      %v1340 = vrot.slane %v1318, %v1339
      %v1342 = vunpack.c.l.s4 1966171168
      %v1343 = vunpack.c.0.s8 %v1342
      %v1344 = vlaneseq
      %v1345 = vshrl.u32 %v1344, 7
      %v1346 = vsub.s32 %v1343, %v1345
      %v1347 = vrot.slane %v1319, %v1346
      %v1348 = vcombine.low %v1326, %v1333
      %v1349 = vcombine.low %v1340, %v1347
      %v1351 = vunpack.c.l.s4 1966171168
      %v1352 = vunpack.c.0.s8 %v1351
      %v1353 = vlaneseq
      %v1354 = vshrl.u32 %v1353, 7
      %v1355 = vsub.s32 %v1352, %v1354
      %v1356 = vrot.slane %v1348, %v1355
      %v1358 = vunpack.c.l.s4 1966171168
      %v1359 = vunpack.c.0.s8 %v1358
      %v1360 = vlaneseq
      %v1361 = vshrl.u32 %v1360, 7
      %v1362 = vsub.s32 %v1359, %v1361
      %v1363 = vrot.slane %v1349, %v1362
      %v1364 = vcombine.low %v1356, %v1363
      %v1366 = vunpack.c.l.s4 1966171168
      %v1367 = vunpack.c.0.s8 %v1366
      %v1368 = vlaneseq
      %v1369 = vshrl.u32 %v1368, 7
      %v1370 = vsub.s32 %v1367, %v1369
      %v1371 = vrot.slane %v1037, %v1370
      %v1373 = vunpack.c.l.s4 1966171168
      %v1374 = vunpack.c.0.s8 %v1373
      %v1375 = vlaneseq
      %v1376 = vshrl.u32 %v1375, 7
      %v1377 = vsub.s32 %v1374, %v1376
      %v1378 = vrot.slane %v1371, %v1377
      %v1379 = vcombine.low %v1051, %v1059
      %v1380 = vcombine.low %v1061, %v1044
      %v1381 = vcombine.low %v1058, %v1060
      %v1382 = vcombine.low %v1062, %v1086
      %v1384 = vunpack.c.l.s4 1966171168
      %v1385 = vunpack.c.0.s8 %v1384
      %v1386 = vlaneseq
      %v1387 = vshrl.u32 %v1386, 7
      %v1388 = vsub.s32 %v1385, %v1387
      %v1389 = vrot.slane %v1379, %v1388
      %v1391 = vunpack.c.l.s4 1966171168
      %v1392 = vunpack.c.0.s8 %v1391
      %v1393 = vlaneseq
      %v1394 = vshrl.u32 %v1393, 7
      %v1395 = vsub.s32 %v1392, %v1394
      %v1396 = vrot.slane %v1380, %v1395
      %v1398 = vunpack.c.l.s4 1966171168
      %v1399 = vunpack.c.0.s8 %v1398
      %v1400 = vlaneseq
      %v1401 = vshrl.u32 %v1400, 7
      %v1402 = vsub.s32 %v1399, %v1401
      %v1403 = vrot.slane %v1381, %v1402
      %v1405 = vunpack.c.l.s4 1966171168
      %v1406 = vunpack.c.0.s8 %v1405
      %v1407 = vlaneseq
      %v1408 = vshrl.u32 %v1407, 7
      %v1409 = vsub.s32 %v1406, %v1408
      %v1410 = vrot.slane %v1382, %v1409
      %v1411 = vcombine.low %v1389, %v1396
      %v1412 = vcombine.low %v1403, %v1410
      %v1414 = vunpack.c.l.s4 1966171168
      %v1415 = vunpack.c.0.s8 %v1414
      %v1416 = vlaneseq
      %v1417 = vshrl.u32 %v1416, 7
      %v1418 = vsub.s32 %v1415, %v1417
      %v1419 = vrot.slane %v1411, %v1418
      %v1421 = vunpack.c.l.s4 1966171168
      %v1422 = vunpack.c.0.s8 %v1421
      %v1423 = vlaneseq
      %v1424 = vshrl.u32 %v1423, 7
      %v1425 = vsub.s32 %v1422, %v1424
      %v1426 = vrot.slane %v1412, %v1425
      %v1427 = vcombine.low %v1419, %v1426
      %v1429 = vunpack.c.l.s4 1966171168
      %v1430 = vunpack.c.0.s8 %v1429
      %v1431 = vlaneseq
      %v1432 = vshrl.u32 %v1431, 7
      %v1433 = vsub.s32 %v1430, %v1432
      %v1434 = vrot.slane %v1100, %v1433
      %v1436 = vunpack.c.l.s4 1966171168
      %v1437 = vunpack.c.0.s8 %v1436
      %v1438 = vlaneseq
      %v1439 = vshrl.u32 %v1438, 7
      %v1440 = vsub.s32 %v1437, %v1439
      %v1441 = vrot.slane %v1434, %v1440
      %v1442 = vcombine.low %v1108, %v1110
      %v1443 = vcombine.low %v1093, %v1107
      %v1444 = vcombine.low %v1109, %v1111
      %v1445 = vcombine.low %v1135, %v1149
      %v1447 = vunpack.c.l.s4 1966171168
      %v1448 = vunpack.c.0.s8 %v1447
      %v1449 = vlaneseq
      %v1450 = vshrl.u32 %v1449, 7
      %v1451 = vsub.s32 %v1448, %v1450
      %v1452 = vrot.slane %v1442, %v1451
      %v1454 = vunpack.c.l.s4 1966171168
      %v1455 = vunpack.c.0.s8 %v1454
      %v1456 = vlaneseq
      %v1457 = vshrl.u32 %v1456, 7
      %v1458 = vsub.s32 %v1455, %v1457
      %v1459 = vrot.slane %v1443, %v1458
      %v1461 = vunpack.c.l.s4 1966171168
      %v1462 = vunpack.c.0.s8 %v1461
      %v1463 = vlaneseq
      %v1464 = vshrl.u32 %v1463, 7
      %v1465 = vsub.s32 %v1462, %v1464
      %v1466 = vrot.slane %v1444, %v1465
      %v1468 = vunpack.c.l.s4 1966171168
      %v1469 = vunpack.c.0.s8 %v1468
      %v1470 = vlaneseq
      %v1471 = vshrl.u32 %v1470, 7
      %v1472 = vsub.s32 %v1469, %v1471
      %v1473 = vrot.slane %v1445, %v1472
      %v1474 = vcombine.low %v1452, %v1459
      %v1475 = vcombine.low %v1466, %v1473
      %v1477 = vunpack.c.l.s4 1966171168
      %v1478 = vunpack.c.0.s8 %v1477
      %v1479 = vlaneseq
      %v1480 = vshrl.u32 %v1479, 7
      %v1481 = vsub.s32 %v1478, %v1480
      %v1482 = vrot.slane %v1474, %v1481
      %v1484 = vunpack.c.l.s4 1966171168
      %v1485 = vunpack.c.0.s8 %v1484
      %v1486 = vlaneseq
      %v1487 = vshrl.u32 %v1486, 7
      %v1488 = vsub.s32 %v1485, %v1487
      %v1489 = vrot.slane %v1475, %v1488
      %v1490 = vcombine.low %v1482, %v1489
      %v1492 = vunpack.c.l.s4 1966171168
      %v1493 = vunpack.c.0.s8 %v1492
      %v1494 = vlaneseq
      %v1495 = vshrl.u32 %v1494, 7
      %v1496 = vsub.s32 %v1493, %v1495
      %v1497 = vrot.slane %v1157, %v1496
      %v1499 = vunpack.c.l.s4 1966171168
      %v1500 = vunpack.c.0.s8 %v1499
      %v1501 = vlaneseq
      %v1502 = vshrl.u32 %v1501, 7
      %v1503 = vsub.s32 %v1500, %v1502
      %v1504 = vrot.slane %v1497, %v1503
      %v1505 = vcombine.low %v1159, %v1142
      %v1506 = vcombine.low %v1156, %v1158
      %v1507 = vcombine.low %v1160, %v1184
      %v1508 = vcombine.low %v1198, %v1206
      %v1510 = vunpack.c.l.s4 1966171168
      %v1511 = vunpack.c.0.s8 %v1510
      %v1512 = vlaneseq
      %v1513 = vshrl.u32 %v1512, 7
      %v1514 = vsub.s32 %v1511, %v1513
      %v1515 = vrot.slane %v1505, %v1514
      %v1517 = vunpack.c.l.s4 1966171168
      %v1518 = vunpack.c.0.s8 %v1517
      %v1519 = vlaneseq
      %v1520 = vshrl.u32 %v1519, 7
      %v1521 = vsub.s32 %v1518, %v1520
      %v1522 = vrot.slane %v1506, %v1521
      %v1524 = vunpack.c.l.s4 1966171168
      %v1525 = vunpack.c.0.s8 %v1524
      %v1526 = vlaneseq
      %v1527 = vshrl.u32 %v1526, 7
      %v1528 = vsub.s32 %v1525, %v1527
      %v1529 = vrot.slane %v1507, %v1528
      %v1531 = vunpack.c.l.s4 1966171168
      %v1532 = vunpack.c.0.s8 %v1531
      %v1533 = vlaneseq
      %v1534 = vshrl.u32 %v1533, 7
      %v1535 = vsub.s32 %v1532, %v1534
      %v1536 = vrot.slane %v1508, %v1535
      %v1537 = vcombine.low %v1515, %v1522
      %v1538 = vcombine.low %v1529, %v1536
      %v1540 = vunpack.c.l.s4 1966171168
      %v1541 = vunpack.c.0.s8 %v1540
      %v1542 = vlaneseq
      %v1543 = vshrl.u32 %v1542, 7
      %v1544 = vsub.s32 %v1541, %v1543
      %v1545 = vrot.slane %v1537, %v1544
      %v1547 = vunpack.c.l.s4 1966171168
      %v1548 = vunpack.c.0.s8 %v1547
      %v1549 = vlaneseq
      %v1550 = vshrl.u32 %v1549, 7
      %v1551 = vsub.s32 %v1548, %v1550
      %v1552 = vrot.slane %v1538, %v1551
      %v1553 = vcombine.low %v1545, %v1552
      %v1555 = vunpack.c.l.s4 1966171168
      %v1556 = vunpack.c.0.s8 %v1555
      %v1557 = vlaneseq
      %v1558 = vshrl.u32 %v1557, 7
      %v1559 = vsub.s32 %v1556, %v1558
      %v1560 = vrot.slane %v1208, %v1559
      %v1562 = vunpack.c.l.s4 1966171168
      %v1563 = vunpack.c.0.s8 %v1562
      %v1564 = vlaneseq
      %v1565 = vshrl.u32 %v1564, 7
      %v1566 = vsub.s32 %v1563, %v1565
      %v1567 = vrot.slane %v1560, %v1566
      %v1568 = vcombine.low %v1191, %v1205
      %v1569 = vcombine.low %v1207, %v1209
      %v1570 = vcombine.low %v1232, %v1246
      %v1571 = vcombine.low %v1247, %v1248
      %v1573 = vunpack.c.l.s4 1966171168
      %v1574 = vunpack.c.0.s8 %v1573
      %v1575 = vlaneseq
      %v1576 = vshrl.u32 %v1575, 7
      %v1577 = vsub.s32 %v1574, %v1576
      %v1578 = vrot.slane %v1568, %v1577
      %v1580 = vunpack.c.l.s4 1966171168
      %v1581 = vunpack.c.0.s8 %v1580
      %v1582 = vlaneseq
      %v1583 = vshrl.u32 %v1582, 7
      %v1584 = vsub.s32 %v1581, %v1583
      %v1585 = vrot.slane %v1569, %v1584
      %v1587 = vunpack.c.l.s4 1966171168
      %v1588 = vunpack.c.0.s8 %v1587
      %v1589 = vlaneseq
      %v1590 = vshrl.u32 %v1589, 7
      %v1591 = vsub.s32 %v1588, %v1590
      %v1592 = vrot.slane %v1570, %v1591
      %v1594 = vunpack.c.l.s4 1966171168
      %v1595 = vunpack.c.0.s8 %v1594
      %v1596 = vlaneseq
      %v1597 = vshrl.u32 %v1596, 7
      %v1598 = vsub.s32 %v1595, %v1597
      %v1599 = vrot.slane %v1571, %v1598
      %v1600 = vcombine.low %v1578, %v1585
      %v1601 = vcombine.low %v1592, %v1599
      %v1603 = vunpack.c.l.s4 1966171168
      %v1604 = vunpack.c.0.s8 %v1603
      %v1605 = vlaneseq
      %v1606 = vshrl.u32 %v1605, 7
      %v1607 = vsub.s32 %v1604, %v1606
      %v1608 = vrot.slane %v1600, %v1607
      %v1610 = vunpack.c.l.s4 1966171168
      %v1611 = vunpack.c.0.s8 %v1610
      %v1612 = vlaneseq
      %v1613 = vshrl.u32 %v1612, 7
      %v1614 = vsub.s32 %v1611, %v1613
      %v1615 = vrot.slane %v1601, %v1614
      %v1616 = vcombine.low %v1608, %v1615
      %v1618 = vunpack.c.l.s4 1966171168
      %v1619 = vunpack.c.0.s8 %v1618
      %v1620 = vlaneseq
      %v1621 = vshrl.u32 %v1620, 7
      %v1622 = vsub.s32 %v1619, %v1621
      %v1623 = vrot.slane %v1239, %v1622
      %v1625 = vunpack.c.l.s4 1966171168
      %v1626 = vunpack.c.0.s8 %v1625
      %v1627 = vlaneseq
      %v1628 = vshrl.u32 %v1627, 7
      %v1629 = vsub.s32 %v1626, %v1628
      %v1630 = vrot.slane %v1623, %v1629
      %v1641 = vsel %vm1306, %v1364, 0.0
      %v1642 = vsel %vm1307, %v1378, 0.0
      %v1643 = vsel %vm1308, %v1427, 0.0
      %v1644 = vsel %vm1309, %v1441, 0.0
      %v1645 = vsel %vm1310, %v1490, 0.0
      %v1646 = vsel %vm1311, %v1504, 0.0
      %v1647 = vsel %vm1312, %v1553, 0.0
      %v1648 = vsel %vm1313, %v1567, 0.0
      %v1649 = vsel %vm1314, %v1616, 0.0
      %v1650 = vsel %vm1315, %v1630, 0.0
      %v1651 = vpack.c.bf16 %v1642, %v1641
      %v1652 = vpack.c.bf16 %v1644, %v1643
      %v1653 = vpack.c.bf16 %v1646, %v1645
      %v1654 = vpack.c.bf16 %v1648, %v1647
      %v1655 = vpack.c.bf16 %v1650, %v1649
      %v1660 = vunpack.c.l.s4 1966171168
      %v1661 = vunpack.c.0.s8 %v1660
      %v1662 = vlaneseq
      %v1663 = vshrl.u32 %v1662, 7
      %v1664 = vsub.s32 %v1661, %v1663
      %v1665 = vrot.slane %v1651, %v1664
      %v1666 = vcombine.high %v1665, %v1665
      %v1668 = vunpack.c.l.s4 1966171168
      %v1669 = vunpack.c.0.s8 %v1668
      %v1670 = vlaneseq
      %v1671 = vshrl.u32 %v1670, 7
      %v1672 = vsub.s32 %v1669, %v1671
      %v1673 = vrot.slane %v1665, %v1672
      %v1675 = vunpack.c.l.s4 1966171168
      %v1676 = vunpack.c.0.s8 %v1675
      %v1677 = vlaneseq
      %v1678 = vshrl.u32 %v1677, 7
      %v1679 = vsub.s32 %v1676, %v1678
      %v1680 = vrot.slane %v1666, %v1679
      %v1681 = vcombine.high %v1673, %v1673
      %v1682 = vcombine.high %v1680, %v1680
      %v1684 = vunpack.c.l.s4 1966171168
      %v1685 = vunpack.c.0.s8 %v1684
      %v1686 = vlaneseq
      %v1687 = vshrl.u32 %v1686, 7
      %v1688 = vsub.s32 %v1685, %v1687
      %v1689 = vrot.slane %v1652, %v1688
      %v1690 = vcombine.high %v1689, %v1689
      %v1692 = vunpack.c.l.s4 1966171168
      %v1693 = vunpack.c.0.s8 %v1692
      %v1694 = vlaneseq
      %v1695 = vshrl.u32 %v1694, 7
      %v1696 = vsub.s32 %v1693, %v1695
      %v1697 = vrot.slane %v1689, %v1696
      %v1699 = vunpack.c.l.s4 1966171168
      %v1700 = vunpack.c.0.s8 %v1699
      %v1701 = vlaneseq
      %v1702 = vshrl.u32 %v1701, 7
      %v1703 = vsub.s32 %v1700, %v1702
      %v1704 = vrot.slane %v1690, %v1703
      %v1705 = vcombine.high %v1697, %v1697
      %v1706 = vcombine.high %v1704, %v1704
      %v1708 = vunpack.c.l.s4 1966171168
      %v1709 = vunpack.c.0.s8 %v1708
      %v1710 = vlaneseq
      %v1711 = vshrl.u32 %v1710, 7
      %v1712 = vsub.s32 %v1709, %v1711
      %v1713 = vrot.slane %v1653, %v1712
      %v1714 = vcombine.high %v1713, %v1713
      %v1716 = vunpack.c.l.s4 1966171168
      %v1717 = vunpack.c.0.s8 %v1716
      %v1718 = vlaneseq
      %v1719 = vshrl.u32 %v1718, 7
      %v1720 = vsub.s32 %v1717, %v1719
      %v1721 = vrot.slane %v1713, %v1720
      %v1723 = vunpack.c.l.s4 1966171168
      %v1724 = vunpack.c.0.s8 %v1723
      %v1725 = vlaneseq
      %v1726 = vshrl.u32 %v1725, 7
      %v1727 = vsub.s32 %v1724, %v1726
      %v1728 = vrot.slane %v1714, %v1727
      %v1729 = vcombine.high %v1721, %v1721
      %v1730 = vcombine.high %v1728, %v1728
      %v1731 = vunpack.i.l.s16 %v1673
      %v1732 = vunpack.i.h.s16 %v1673
      %v1733 = vunpack.i.l.s16 %v1680
      %v1734 = vunpack.i.h.s16 %v1680
      %v1735 = vunpack.i.l.s16 %v1681
      %v1736 = vunpack.i.h.s16 %v1681
      %v1737 = vunpack.i.l.s16 %v1682
      %v1738 = vunpack.i.l.s16 %v1697
      %v1739 = vunpack.i.h.s16 %v1697
      %v1740 = vunpack.i.l.s16 %v1704
      %v1741 = vunpack.i.h.s16 %v1704
      %v1742 = vunpack.i.l.s16 %v1705
      %v1743 = vunpack.i.h.s16 %v1705
      %v1744 = vunpack.i.l.s16 %v1706
      %v1745 = vunpack.i.l.s16 %v1721
      %v1746 = vunpack.i.h.s16 %v1721
      %v1747 = vunpack.i.l.s16 %v1728
      %v1748 = vunpack.i.h.s16 %v1728
      %v1749 = vunpack.i.l.s16 %v1729
      %v1750 = vunpack.i.h.s16 %v1729
      %v1751 = vunpack.i.l.s16 %v1730
      %v1752 = vld [vmem:[%s4] sm:$0xf]
      %v1753 = vld [vmem:[%s4 + $0x4] sm:$0xf]
      %v1754 = vld [vmem:[%s4 + $0x8] sm:$0xf]
      %v1755 = vld [vmem:[%s4 + $0xc] sm:$0xf]
      %v1756 = vld [vmem:[%s4 + $0x10] sm:$0xf]
      %v1757 = vld [vmem:[%s4 + $0x14] sm:$0xf]
      %v1758 = vld [vmem:[%s4 + $0x18] sm:$0xf]
      %v1759 = vld [vmem:[%s4 + $0x1c] sm:$0xf]
      %v1760 = vld [vmem:[%s4 + $0x20] sm:$0xf]
      %v1761 = vld [vmem:[%s4 + $0x24] sm:$0xf]
      %v1762 = vld [vmem:[%s4 + $0x28] sm:$0xf]
      %v1763 = vld [vmem:[%s4 + $0x2c] sm:$0xf]
      %v1764 = vld [vmem:[%s4 + $0x30] sm:$0xf]
      %v1765 = vld [vmem:[%s4 + $0x34] sm:$0xf]
      %v1766 = vld [vmem:[%s4 + $0x38] sm:$0xf]
      %v1767 = vld [vmem:[%s4 + $0x3c] sm:$0xf]
      %v1768 = vunpack.i.h.s16 %v1682
      %v1769 = vunpack.i.h.s16 %v1706
      %v1770 = vunpack.i.h.s16 %v1730
      %s1771 = scalar_lea.vmem %s4, 64
      %v1772 = vld [vmem:[%s1771] sm:$0xf]
      %v1773 = vld [vmem:[%s1771 + $0x4] sm:$0xf]
      %v1774 = vld [vmem:[%s1771 + $0x8] sm:$0xf]
      %v1775 = vld [vmem:[%s1771 + $0xc] sm:$0xf]
      %v1776 = vld [vmem:[%s1771 + $0x10] sm:$0xf]
      %v1777 = vld [vmem:[%s1771 + $0x14] sm:$0xf]
      %v1778 = vld [vmem:[%s1771 + $0x18] sm:$0xf]
      %v1779 = vld [vmem:[%s1771 + $0x1c] sm:$0xf]
      %v1780 = vld [vmem:[%s1771 + $0x20] sm:$0xf]
      %v1781 = vld [vmem:[%s1771 + $0x24] sm:$0xf]
      %v1782 = vld [vmem:[%s1771 + $0x28] sm:$0xf]
      %v1783 = vld [vmem:[%s1771 + $0x2c] sm:$0xf]
      %v1784 = vld [vmem:[%s1771 + $0x30] sm:$0xf]
      %v1785 = vld [vmem:[%s1771 + $0x34] sm:$0xf]
      %v1786 = vld [vmem:[%s1771 + $0x38] sm:$0xf]
      %v1787 = vld [vmem:[%s1771 + $0x3c] sm:$0xf]
      %v1788 = vpack.i.b16 %v1733, %v1732
      %v1789 = vpack.i.b16 %v1735, %v1734
      %v1790 = vpack.i.b16 %v1737, %v1736
      %v1791 = vpack.i.b16 %v1739, %v1768
      %v1792 = vpack.i.b16 %v1741, %v1740
      %v1793 = vpack.i.b16 %v1743, %v1742
      %v1794 = vpack.i.b16 %v1769, %v1744
      %v1795 = vpack.i.b16 %v1747, %v1746
      %v1796 = vpack.i.b16 %v1749, %v1748
      %v1797 = vpack.i.b16 %v1751, %v1750
      %v1799 = vcombine.low %v1788, %v1789
      %v1800 = vcombine.low %v1790, %v1791
      %v1801 = vcombine.low %v1792, %v1793
      %v1802 = vcombine.low %v1794, %v1795
      %v1804 = vunpack.c.l.s4 1966171168
      %v1805 = vunpack.c.0.s8 %v1804
      %v1806 = vlaneseq
      %v1807 = vshrl.u32 %v1806, 7
      %v1808 = vsub.s32 %v1805, %v1807
      %v1809 = vrot.slane %v1799, %v1808
      %v1811 = vunpack.c.l.s4 1966171168
      %v1812 = vunpack.c.0.s8 %v1811
      %v1813 = vlaneseq
      %v1814 = vshrl.u32 %v1813, 7
      %v1815 = vsub.s32 %v1812, %v1814
      %v1816 = vrot.slane %v1800, %v1815
      %v1818 = vunpack.c.l.s4 1966171168
      %v1819 = vunpack.c.0.s8 %v1818
      %v1820 = vlaneseq
      %v1821 = vshrl.u32 %v1820, 7
      %v1822 = vsub.s32 %v1819, %v1821
      %v1823 = vrot.slane %v1801, %v1822
      %v1825 = vunpack.c.l.s4 1966171168
      %v1826 = vunpack.c.0.s8 %v1825
      %v1827 = vlaneseq
      %v1828 = vshrl.u32 %v1827, 7
      %v1829 = vsub.s32 %v1826, %v1828
      %v1830 = vrot.slane %v1802, %v1829
      %v1831 = vcombine.low %v1809, %v1816
      %v1832 = vcombine.low %v1823, %v1830
      %v1834 = vunpack.c.l.s4 1966171168
      %v1835 = vunpack.c.0.s8 %v1834
      %v1836 = vlaneseq
      %v1837 = vshrl.u32 %v1836, 7
      %v1838 = vsub.s32 %v1835, %v1837
      %v1839 = vrot.slane %v1831, %v1838
      %v1841 = vunpack.c.l.s4 1966171168
      %v1842 = vunpack.c.0.s8 %v1841
      %v1843 = vlaneseq
      %v1844 = vshrl.u32 %v1843, 7
      %v1845 = vsub.s32 %v1842, %v1844
      %v1846 = vrot.slane %v1832, %v1845
      %v1847 = vcombine.low %v1839, %v1846
      %v1848 = vcombine.low %v1796, %v1797
      %v1850 = vunpack.c.l.s4 1966171168
      %v1851 = vunpack.c.0.s8 %v1850
      %v1852 = vlaneseq
      %v1853 = vshrl.u32 %v1852, 7
      %v1854 = vsub.s32 %v1851, %v1853
      %v1855 = vrot.slane %v1848, %v1854
      %v1857 = vunpack.c.l.s4 1966171168
      %v1858 = vunpack.c.0.s8 %v1857
      %v1859 = vlaneseq
      %v1860 = vshrl.u32 %v1859, 7
      %v1861 = vsub.s32 %v1858, %v1860
      %v1862 = vrot.slane %v1770, %v1861
      %v1863 = vcombine.low %v1855, %v1862
      %v1865 = vunpack.c.l.s4 1966171168
      %v1866 = vunpack.c.0.s8 %v1865
      %v1867 = vlaneseq
      %v1868 = vshrl.u32 %v1867, 7
      %v1869 = vsub.s32 %v1866, %v1868
      %v1870 = vrot.slane %v1863, %v1869
      %v1889 = vunpack.c.l.b16 %v1772
      %v1890 = vunpack.c.l.b16 %v1773
      %v1891 = vunpack.c.l.b16 %v1774
      %v1892 = vunpack.c.l.b16 %v1775
      %v1893 = vunpack.c.l.b16 %v1776
      %v1894 = vunpack.c.l.b16 %v1777
      %v1895 = vunpack.c.l.b16 %v1778
      %v1896 = vunpack.c.l.b16 %v1779
      %v1897 = vunpack.c.l.b16 %v1780
      %v1898 = vunpack.c.l.b16 %v1781
      %v1899 = vunpack.c.l.b16 %v1782
      %v1900 = vunpack.c.l.b16 %v1783
      %v1901 = vunpack.c.l.b16 %v1784
      %v1902 = vunpack.c.l.b16 %v1785
      %v1903 = vunpack.c.l.b16 %v1786
      %v1904 = vunpack.c.l.b16 %v1787
      %v1905 = vpack.c.b16 %v1890, %v1889
      %v1906 = vpack.c.b16 %v1892, %v1891
      %v1907 = vpack.c.b16 %v1894, %v1893
      %v1908 = vpack.c.b16 %v1896, %v1895
      %v1909 = vpack.c.b16 %v1898, %v1897
      %v1910 = vpack.c.b16 %v1900, %v1899
      %v1911 = vpack.c.b16 %v1902, %v1901
      %v1912 = vpack.c.b16 %v1904, %v1903
      %1921 = vmatprep.subr.bf16.mxu0 0
      %1922 = vmatpush1.bf16.msra.mxu0 %v1905
      %1923 = vmatprep.subr.bf16.mxu0 0
      %1924 = vmatpush1.bf16.msra.mxu0 %v1906
      %1925 = vmatprep.subr.bf16.mxu0 0
      %1926 = vmatpush1.bf16.msra.mxu0 %v1907
      %1927 = vmatprep.subr.bf16.mxu0 0
      %1928 = vmatpush1.bf16.msra.mxu0 %v1908
      %1929 = vmatprep.subr.bf16.mxu0 0
      %1930 = vmatpush1.bf16.msra.mxu0 %v1909
      %1931 = vmatprep.subr.bf16.mxu0 0
      %1932 = vmatpush1.bf16.msra.mxu0 %v1910
      %1933 = vmatprep.subr.bf16.mxu0 0
      %1934 = vmatpush1.bf16.msra.mxu0 %v1911
      %1935 = vmatprep.subr.bf16.mxu0 0
      %1936 = vmatpush1.bf16.msra.mxu0 %v1912
      %1937 = vmatprep.subr.bf16.mxu0 0
      %1938 = vmatpush1.bf16.msra.mxu0 0
      %1939 = vmatprep.subr.bf16.mxu0 0
      %1940 = vmatpush1.bf16.msra.mxu0 0
      %1941 = vmatprep.subr.bf16.mxu0 0
      %1942 = vmatpush1.bf16.msra.mxu0 0
      %1943 = vmatprep.subr.bf16.mxu0 0
      %1944 = vmatpush1.bf16.msra.mxu0 0
      %1945 = vmatprep.subr.bf16.mxu0 0
      %1946 = vmatpush1.bf16.msra.mxu0 0
      %1947 = vmatprep.subr.bf16.mxu0 0
      %1948 = vmatpush1.bf16.msra.mxu0 0
      %1949 = vmatprep.subr.bf16.mxu0 0
      %1950 = vmatpush1.bf16.msra.mxu0 0
      %1951 = vmatprep.subr.bf16.mxu0 0
      %1952 = vmatpush1.bf16.msra.mxu0 0
      %1953 = vmatprep.mubr.bf16.mxu0 0
      %1954 = vmatmul.mubr.bf16.gmra.mrb[0].mxu0 %v1847
      %v1955 = vpop.f32.mrb[0].mxu0
      %v1956 = vadd.f32 0.0, %v1955
      %v1957 = vpop.f32.mrb[0].mxu0
      %v1958 = vpop.f32.mrb[0].mxu0
      %v1959 = vadd.f32 0.0, %v1958
      %v1960 = vpop.f32.mrb[0].mxu0
      %1961 = vmatprep.mubr.bf16.mxu0 0
      %1962 = vmatmul.mubr.bf16.gmra.mrb[0].mxu0 %v1870
      %v1963 = vpop.f32.mrb[0].mxu0
      %v1964 = vadd.f32 0.0, %v1963
      %v1965 = vpop.f32.mrb[0].mxu0
      %v1966 = vpop.f32.mrb[0].mxu0
      %v1967 = vpop.f32.mrb[0].mxu0
      %1968 = vdwg.mxu0
      %v1969 = vpack.i.b16 %v1732, %v1731
      %v1970 = vpack.i.b16 %v1734, %v1733
      %v1971 = vpack.i.b16 %v1736, %v1735
      %v1972 = vpack.i.b16 %v1738, %v1737
      %v1973 = vpack.i.b16 %v1740, %v1739
      %v1974 = vpack.i.b16 %v1742, %v1741
      %v1975 = vpack.i.b16 %v1744, %v1743
      %v1976 = vpack.i.b16 %v1746, %v1745
      %v1977 = vpack.i.b16 %v1748, %v1747
      %v1978 = vpack.i.b16 %v1750, %v1749
      %v1980 = vcombine.low %v1969, %v1970
      %v1981 = vcombine.low %v1971, %v1972
      %v1982 = vcombine.low %v1973, %v1974
      %v1983 = vcombine.low %v1975, %v1976
      %v1985 = vunpack.c.l.s4 1966171168
      %v1986 = vunpack.c.0.s8 %v1985
      %v1987 = vlaneseq
      %v1988 = vshrl.u32 %v1987, 7
      %v1989 = vsub.s32 %v1986, %v1988
      %v1990 = vrot.slane %v1980, %v1989
      %v1992 = vunpack.c.l.s4 1966171168
      %v1993 = vunpack.c.0.s8 %v1992
      %v1994 = vlaneseq
      %v1995 = vshrl.u32 %v1994, 7
      %v1996 = vsub.s32 %v1993, %v1995
      %v1997 = vrot.slane %v1981, %v1996
      %v1999 = vunpack.c.l.s4 1966171168
      %v2000 = vunpack.c.0.s8 %v1999
      %v2001 = vlaneseq
      %v2002 = vshrl.u32 %v2001, 7
      %v2003 = vsub.s32 %v2000, %v2002
      %v2004 = vrot.slane %v1982, %v2003
      %v2006 = vunpack.c.l.s4 1966171168
      %v2007 = vunpack.c.0.s8 %v2006
      %v2008 = vlaneseq
      %v2009 = vshrl.u32 %v2008, 7
      %v2010 = vsub.s32 %v2007, %v2009
      %v2011 = vrot.slane %v1983, %v2010
      %v2012 = vcombine.low %v1990, %v1997
      %v2013 = vcombine.low %v2004, %v2011
      %v2015 = vunpack.c.l.s4 1966171168
      %v2016 = vunpack.c.0.s8 %v2015
      %v2017 = vlaneseq
      %v2018 = vshrl.u32 %v2017, 7
      %v2019 = vsub.s32 %v2016, %v2018
      %v2020 = vrot.slane %v2012, %v2019
      %v2022 = vunpack.c.l.s4 1966171168
      %v2023 = vunpack.c.0.s8 %v2022
      %v2024 = vlaneseq
      %v2025 = vshrl.u32 %v2024, 7
      %v2026 = vsub.s32 %v2023, %v2025
      %v2027 = vrot.slane %v2013, %v2026
      %v2028 = vcombine.low %v2020, %v2027
      %v2029 = vcombine.low %v1977, %v1978
      %v2031 = vunpack.c.l.s4 1966171168
      %v2032 = vunpack.c.0.s8 %v2031
      %v2033 = vlaneseq
      %v2034 = vshrl.u32 %v2033, 7
      %v2035 = vsub.s32 %v2032, %v2034
      %v2036 = vrot.slane %v2029, %v2035
      %v2038 = vunpack.c.l.s4 1966171168
      %v2039 = vunpack.c.0.s8 %v2038
      %v2040 = vlaneseq
      %v2041 = vshrl.u32 %v2040, 7
      %v2042 = vsub.s32 %v2039, %v2041
      %v2043 = vrot.slane %v1751, %v2042
      %v2044 = vcombine.low %v2036, %v2043
      %v2046 = vunpack.c.l.s4 1966171168
      %v2047 = vunpack.c.0.s8 %v2046
      %v2048 = vlaneseq
      %v2049 = vshrl.u32 %v2048, 7
      %v2050 = vsub.s32 %v2047, %v2049
      %v2051 = vrot.slane %v2044, %v2050
      %v2070 = vunpack.c.l.b16 %v1752
      %v2071 = vunpack.c.l.b16 %v1753
      %v2072 = vunpack.c.l.b16 %v1754
      %v2073 = vunpack.c.l.b16 %v1755
      %v2074 = vunpack.c.l.b16 %v1756
      %v2075 = vunpack.c.l.b16 %v1757
      %v2076 = vunpack.c.l.b16 %v1758
      %v2077 = vunpack.c.l.b16 %v1759
      %v2078 = vunpack.c.l.b16 %v1760
      %v2079 = vunpack.c.l.b16 %v1761
      %v2080 = vunpack.c.l.b16 %v1762
      %v2081 = vunpack.c.l.b16 %v1763
      %v2082 = vunpack.c.l.b16 %v1764
      %v2083 = vunpack.c.l.b16 %v1765
      %v2084 = vunpack.c.l.b16 %v1766
      %v2085 = vunpack.c.l.b16 %v1767
      %v2086 = vpack.c.b16 %v2071, %v2070
      %v2087 = vpack.c.b16 %v2073, %v2072
      %v2088 = vpack.c.b16 %v2075, %v2074
      %v2089 = vpack.c.b16 %v2077, %v2076
      %v2090 = vpack.c.b16 %v2079, %v2078
      %v2091 = vpack.c.b16 %v2081, %v2080
      %v2092 = vpack.c.b16 %v2083, %v2082
      %v2093 = vpack.c.b16 %v2085, %v2084
      %2102 = vmatprep.subr.bf16.mxu0 0
      %2103 = vmatpush1.bf16.msra.mxu0 %v2086
      %2104 = vmatprep.subr.bf16.mxu0 0
      %2105 = vmatpush1.bf16.msra.mxu0 %v2087
      %2106 = vmatprep.subr.bf16.mxu0 0
      %2107 = vmatpush1.bf16.msra.mxu0 %v2088
      %2108 = vmatprep.subr.bf16.mxu0 0
      %2109 = vmatpush1.bf16.msra.mxu0 %v2089
      %2110 = vmatprep.subr.bf16.mxu0 0
      %2111 = vmatpush1.bf16.msra.mxu0 %v2090
      %2112 = vmatprep.subr.bf16.mxu0 0
      %2113 = vmatpush1.bf16.msra.mxu0 %v2091
      %2114 = vmatprep.subr.bf16.mxu0 0
      %2115 = vmatpush1.bf16.msra.mxu0 %v2092
      %2116 = vmatprep.subr.bf16.mxu0 0
      %2117 = vmatpush1.bf16.msra.mxu0 %v2093
      %2118 = vmatprep.subr.bf16.mxu0 0
      %2119 = vmatpush1.bf16.msra.mxu0 0
      %2120 = vmatprep.subr.bf16.mxu0 0
      %2121 = vmatpush1.bf16.msra.mxu0 0
      %2122 = vmatprep.subr.bf16.mxu0 0
      %2123 = vmatpush1.bf16.msra.mxu0 0
      %2124 = vmatprep.subr.bf16.mxu0 0
      %2125 = vmatpush1.bf16.msra.mxu0 0
      %2126 = vmatprep.subr.bf16.mxu0 0
      %2127 = vmatpush1.bf16.msra.mxu0 0
      %2128 = vmatprep.subr.bf16.mxu0 0
      %2129 = vmatpush1.bf16.msra.mxu0 0
      %2130 = vmatprep.subr.bf16.mxu0 0
      %2131 = vmatpush1.bf16.msra.mxu0 0
      %2132 = vmatprep.subr.bf16.mxu0 0
      %2133 = vmatpush1.bf16.msra.mxu0 0
      %2134 = vmatprep.mubr.bf16.mxu0 0
      %2135 = vmatmul.mubr.bf16.gmra.mrb[0].mxu0 %v2028
      %v2136 = vpop.f32.mrb[0].mxu0
      %v2137 = vadd.f32 %v1956, %v2136
      %v2138 = vpop.f32.mrb[0].mxu0
      %v2139 = vpop.f32.mrb[0].mxu0
      %v2140 = vadd.f32 %v1959, %v2139
      %v2141 = vpop.f32.mrb[0].mxu0
      %2142 = vmatprep.mubr.bf16.mxu0 0
      %2143 = vmatmul.mubr.bf16.gmra.mrb[0].mxu0 %v2051
      %v2144 = vpop.f32.mrb[0].mxu0
      %v2145 = vadd.f32 %v1964, %v2144
      %v2146 = vpop.f32.mrb[0].mxu0
      %v2147 = vpop.f32.mrb[0].mxu0
      %v2148 = vpop.f32.mrb[0].mxu0
      %2149 = vdwg.mxu0
      %v2150 = vcombine.high %v1651, %v1651
      %v2152 = vunpack.c.l.s4 1966171168
      %v2153 = vunpack.c.0.s8 %v2152
      %v2154 = vlaneseq
      %v2155 = vshrl.u32 %v2154, 7
      %v2156 = vsub.s32 %v2153, %v2155
      %v2157 = vrot.slane %v2150, %v2156
      %v2159 = vunpack.c.l.s4 1966171168
      %v2160 = vunpack.c.0.s8 %v2159
      %v2161 = vlaneseq
      %v2162 = vshrl.u32 %v2161, 7
      %v2163 = vsub.s32 %v2160, %v2162
      %v2164 = vrot.slane %v2157, %v2163
      %v2165 = vcombine.high %v1652, %v1652
      %v2167 = vunpack.c.l.s4 1966171168
      %v2168 = vunpack.c.0.s8 %v2167
      %v2169 = vlaneseq
      %v2170 = vshrl.u32 %v2169, 7
      %v2171 = vsub.s32 %v2168, %v2170
      %v2172 = vrot.slane %v2165, %v2171
      %v2174 = vunpack.c.l.s4 1966171168
      %v2175 = vunpack.c.0.s8 %v2174
      %v2176 = vlaneseq
      %v2177 = vshrl.u32 %v2176, 7
      %v2178 = vsub.s32 %v2175, %v2177
      %v2179 = vrot.slane %v2172, %v2178
      %v2180 = vcombine.high %v1653, %v1653
      %v2182 = vunpack.c.l.s4 1966171168
      %v2183 = vunpack.c.0.s8 %v2182
      %v2184 = vlaneseq
      %v2185 = vshrl.u32 %v2184, 7
      %v2186 = vsub.s32 %v2183, %v2185
      %v2187 = vrot.slane %v2180, %v2186
      %v2189 = vunpack.c.l.s4 1966171168
      %v2190 = vunpack.c.0.s8 %v2189
      %v2191 = vlaneseq
      %v2192 = vshrl.u32 %v2191, 7
      %v2193 = vsub.s32 %v2190, %v2192
      %v2194 = vrot.slane %v2187, %v2193
      %v2195 = vunpack.i.l.s16 %v2164
      %v2196 = vunpack.i.l.s16 %v2179
      %v2197 = vunpack.i.l.s16 %v2194
      %s2198 = scalar_lea.vmem %s4, 128
      %v2199 = vld [vmem:[%s2198] sm:$0xf]
      %v2200 = vld [vmem:[%s2198 + $0x4] sm:$0xf]
      %v2201 = vld [vmem:[%s2198 + $0x8] sm:$0xf]
      %v2202 = vld [vmem:[%s2198 + $0xc] sm:$0xf]
      %v2203 = vld [vmem:[%s2198 + $0x10] sm:$0xf]
      %v2204 = vld [vmem:[%s2198 + $0x14] sm:$0xf]
      %v2205 = vld [vmem:[%s2198 + $0x18] sm:$0xf]
      %v2206 = vld [vmem:[%s2198 + $0x1c] sm:$0xf]
      %v2207 = vld [vmem:[%s2198 + $0x20] sm:$0xf]
      %v2208 = vld [vmem:[%s2198 + $0x24] sm:$0xf]
      %v2209 = vld [vmem:[%s2198 + $0x28] sm:$0xf]
      %v2210 = vld [vmem:[%s2198 + $0x2c] sm:$0xf]
      %v2211 = vld [vmem:[%s2198 + $0x30] sm:$0xf]
      %v2212 = vld [vmem:[%s2198 + $0x34] sm:$0xf]
      %v2213 = vld [vmem:[%s2198 + $0x38] sm:$0xf]
      %v2214 = vld [vmem:[%s2198 + $0x3c] sm:$0xf]
      %v2215 = vpack.i.b16 %v1768, %v1737
      %v2216 = vpack.i.b16 %v1740, %v2195
      %v2217 = vpack.i.b16 %v2196, %v1769
      %v2218 = vpack.i.b16 %v1770, %v1751
      %v2220 = vcombine.low %v1970, %v1971
      %v2221 = vcombine.low %v2215, %v2216
      %v2222 = vcombine.low %v1974, %v1975
      %v2223 = vcombine.low %v2217, %v1977
      %v2225 = vunpack.c.l.s4 1966171168
      %v2226 = vunpack.c.0.s8 %v2225
      %v2227 = vlaneseq
      %v2228 = vshrl.u32 %v2227, 7
      %v2229 = vsub.s32 %v2226, %v2228
      %v2230 = vrot.slane %v2220, %v2229
      %v2232 = vunpack.c.l.s4 1966171168
      %v2233 = vunpack.c.0.s8 %v2232
      %v2234 = vlaneseq
      %v2235 = vshrl.u32 %v2234, 7
      %v2236 = vsub.s32 %v2233, %v2235
      %v2237 = vrot.slane %v2221, %v2236
      %v2239 = vunpack.c.l.s4 1966171168
      %v2240 = vunpack.c.0.s8 %v2239
      %v2241 = vlaneseq
      %v2242 = vshrl.u32 %v2241, 7
      %v2243 = vsub.s32 %v2240, %v2242
      %v2244 = vrot.slane %v2222, %v2243
      %v2246 = vunpack.c.l.s4 1966171168
      %v2247 = vunpack.c.0.s8 %v2246
      %v2248 = vlaneseq
      %v2249 = vshrl.u32 %v2248, 7
      %v2250 = vsub.s32 %v2247, %v2249
      %v2251 = vrot.slane %v2223, %v2250
      %v2252 = vcombine.low %v2230, %v2237
      %v2253 = vcombine.low %v2244, %v2251
      %v2255 = vunpack.c.l.s4 1966171168
      %v2256 = vunpack.c.0.s8 %v2255
      %v2257 = vlaneseq
      %v2258 = vshrl.u32 %v2257, 7
      %v2259 = vsub.s32 %v2256, %v2258
      %v2260 = vrot.slane %v2252, %v2259
      %v2262 = vunpack.c.l.s4 1966171168
      %v2263 = vunpack.c.0.s8 %v2262
      %v2264 = vlaneseq
      %v2265 = vshrl.u32 %v2264, 7
      %v2266 = vsub.s32 %v2263, %v2265
      %v2267 = vrot.slane %v2253, %v2266
      %v2268 = vcombine.low %v2260, %v2267
      %v2269 = vcombine.low %v1978, %v2218
      %v2271 = vunpack.c.l.s4 1966171168
      %v2272 = vunpack.c.0.s8 %v2271
      %v2273 = vlaneseq
      %v2274 = vshrl.u32 %v2273, 7
      %v2275 = vsub.s32 %v2272, %v2274
      %v2276 = vrot.slane %v2269, %v2275
      %v2278 = vunpack.c.l.s4 1966171168
      %v2279 = vunpack.c.0.s8 %v2278
      %v2280 = vlaneseq
      %v2281 = vshrl.u32 %v2280, 7
      %v2282 = vsub.s32 %v2279, %v2281
      %v2283 = vrot.slane %v2197, %v2282
      %v2284 = vcombine.low %v2276, %v2283
      %v2286 = vunpack.c.l.s4 1966171168
      %v2287 = vunpack.c.0.s8 %v2286
      %v2288 = vlaneseq
      %v2289 = vshrl.u32 %v2288, 7
      %v2290 = vsub.s32 %v2287, %v2289
      %v2291 = vrot.slane %v2284, %v2290
      %v2310 = vunpack.c.l.b16 %v2199
      %v2311 = vunpack.c.l.b16 %v2200
      %v2312 = vunpack.c.l.b16 %v2201
      %v2313 = vunpack.c.l.b16 %v2202
      %v2314 = vunpack.c.l.b16 %v2203
      %v2315 = vunpack.c.l.b16 %v2204
      %v2316 = vunpack.c.l.b16 %v2205
      %v2317 = vunpack.c.l.b16 %v2206
      %v2318 = vunpack.c.l.b16 %v2207
      %v2319 = vunpack.c.l.b16 %v2208
      %v2320 = vunpack.c.l.b16 %v2209
      %v2321 = vunpack.c.l.b16 %v2210
      %v2322 = vunpack.c.l.b16 %v2211
      %v2323 = vunpack.c.l.b16 %v2212
      %v2324 = vunpack.c.l.b16 %v2213
      %v2325 = vunpack.c.l.b16 %v2214
      %v2326 = vpack.c.b16 %v2311, %v2310
      %v2327 = vpack.c.b16 %v2313, %v2312
      %v2328 = vpack.c.b16 %v2315, %v2314
      %v2329 = vpack.c.b16 %v2317, %v2316
      %v2330 = vpack.c.b16 %v2319, %v2318
      %v2331 = vpack.c.b16 %v2321, %v2320
      %v2332 = vpack.c.b16 %v2323, %v2322
      %v2333 = vpack.c.b16 %v2325, %v2324
      %2342 = vmatprep.subr.bf16.mxu0 0
      %2343 = vmatpush1.bf16.msra.mxu0 %v2326
      %2344 = vmatprep.subr.bf16.mxu0 0
      %2345 = vmatpush1.bf16.msra.mxu0 %v2327
      %2346 = vmatprep.subr.bf16.mxu0 0
      %2347 = vmatpush1.bf16.msra.mxu0 %v2328
      %2348 = vmatprep.subr.bf16.mxu0 0
      %2349 = vmatpush1.bf16.msra.mxu0 %v2329
      %2350 = vmatprep.subr.bf16.mxu0 0
      %2351 = vmatpush1.bf16.msra.mxu0 %v2330
      %2352 = vmatprep.subr.bf16.mxu0 0
      %2353 = vmatpush1.bf16.msra.mxu0 %v2331
      %2354 = vmatprep.subr.bf16.mxu0 0
      %2355 = vmatpush1.bf16.msra.mxu0 %v2332
      %2356 = vmatprep.subr.bf16.mxu0 0
      %2357 = vmatpush1.bf16.msra.mxu0 %v2333
      %2358 = vmatprep.subr.bf16.mxu0 0
      %2359 = vmatpush1.bf16.msra.mxu0 0
      %2360 = vmatprep.subr.bf16.mxu0 0
      %2361 = vmatpush1.bf16.msra.mxu0 0
      %2362 = vmatprep.subr.bf16.mxu0 0
      %2363 = vmatpush1.bf16.msra.mxu0 0
      %2364 = vmatprep.subr.bf16.mxu0 0
      %2365 = vmatpush1.bf16.msra.mxu0 0
      %2366 = vmatprep.subr.bf16.mxu0 0
      %2367 = vmatpush1.bf16.msra.mxu0 0
      %2368 = vmatprep.subr.bf16.mxu0 0
      %2369 = vmatpush1.bf16.msra.mxu0 0
      %2370 = vmatprep.subr.bf16.mxu0 0
      %2371 = vmatpush1.bf16.msra.mxu0 0
      %2372 = vmatprep.subr.bf16.mxu0 0
      %2373 = vmatpush1.bf16.msra.mxu0 0
      %2374 = vmatprep.mubr.bf16.mxu0 0
      %2375 = vmatmul.mubr.bf16.gmra.mrb[0].mxu0 %v2268
      %v2376 = vpop.f32.mrb[0].mxu0
      %v2377 = vadd.f32 0.0, %v2376
      %v2378 = vpop.f32.mrb[0].mxu0
      %v2379 = vpop.f32.mrb[0].mxu0
      %v2380 = vadd.f32 0.0, %v2379
      %v2381 = vpop.f32.mrb[0].mxu0
      %2382 = vmatprep.mubr.bf16.mxu0 0
      %2383 = vmatmul.mubr.bf16.gmra.mrb[0].mxu0 %v2291
      %v2384 = vpop.f32.mrb[0].mxu0
      %v2385 = vadd.f32 0.0, %v2384
      %v2386 = vpop.f32.mrb[0].mxu0
      %v2387 = vpop.f32.mrb[0].mxu0
      %v2388 = vpop.f32.mrb[0].mxu0
      %2389 = vdwg.mxu0
      %v2390 = vadd.f32 %v2137, %v2377
      %v2391 = vadd.f32 %v2140, %v2380
      %v2392 = vadd.f32 %v2145, %v2385
      %v2395 = vunpack.c.l.s4 1966171168
      %v2396 = vunpack.c.0.s8 %v2395
      %v2397 = vlaneseq
      %v2398 = vshrl.u32 %v2397, 7
      %v2399 = vsub.s32 %v2396, %v2398
      %v2400 = vrot.slane %v1654, %v2399
      %v2401 = vcombine.high %v2400, %v2400
      %v2403 = vunpack.c.l.s4 1966171168
      %v2404 = vunpack.c.0.s8 %v2403
      %v2405 = vlaneseq
      %v2406 = vshrl.u32 %v2405, 7
      %v2407 = vsub.s32 %v2404, %v2406
      %v2408 = vrot.slane %v2400, %v2407
      %v2410 = vunpack.c.l.s4 1966171168
      %v2411 = vunpack.c.0.s8 %v2410
      %v2412 = vlaneseq
      %v2413 = vshrl.u32 %v2412, 7
      %v2414 = vsub.s32 %v2411, %v2413
      %v2415 = vrot.slane %v2401, %v2414
      %v2416 = vcombine.high %v2408, %v2408
      %v2417 = vcombine.high %v2415, %v2415
      %v2418 = vunpack.i.l.s16 %v2408
      %v2419 = vunpack.i.h.s16 %v2408
      %v2420 = vunpack.i.l.s16 %v2415
      %v2421 = vunpack.i.h.s16 %v2415
      %v2422 = vunpack.i.l.s16 %v2416
      %v2423 = vunpack.i.h.s16 %v2416
      %v2424 = vunpack.i.l.s16 %v2417
      %s2425 = scalar_lea.vmem %s4, 192
      %v2426 = vld [vmem:[%s2425] sm:$0xf]
      %v2427 = vld [vmem:[%s2425 + $0x4] sm:$0xf]
      %v2428 = vld [vmem:[%s2425 + $0x8] sm:$0xf]
      %v2429 = vld [vmem:[%s2425 + $0xc] sm:$0xf]
      %v2430 = vld [vmem:[%s2425 + $0x10] sm:$0xf]
      %v2431 = vld [vmem:[%s2425 + $0x14] sm:$0xf]
      %v2432 = vld [vmem:[%s2425 + $0x18] sm:$0xf]
      %v2433 = vld [vmem:[%s2425 + $0x1c] sm:$0xf]
      %v2434 = vld [vmem:[%s2425 + $0x20] sm:$0xf]
      %v2435 = vld [vmem:[%s2425 + $0x24] sm:$0xf]
      %v2436 = vld [vmem:[%s2425 + $0x28] sm:$0xf]
      %v2437 = vld [vmem:[%s2425 + $0x2c] sm:$0xf]
      %v2438 = vld [vmem:[%s2425 + $0x30] sm:$0xf]
      %v2439 = vld [vmem:[%s2425 + $0x34] sm:$0xf]
      %v2440 = vld [vmem:[%s2425 + $0x38] sm:$0xf]
      %v2441 = vld [vmem:[%s2425 + $0x3c] sm:$0xf]
      %v2442 = vpack.i.b16 %v1739, %v1738
      %v2443 = vpack.i.b16 %v1745, %v1744
      %v2444 = vpack.i.b16 %v2419, %v2418
      %v2445 = vpack.i.b16 %v2421, %v2420
      %v2446 = vpack.i.b16 %v2423, %v2422
      %v2448 = vcombine.low %v2442, %v1792
      %v2449 = vcombine.low %v1793, %v2443
      %v2450 = vcombine.low %v1795, %v1796
      %v2451 = vcombine.low %v1797, %v2444
      %v2453 = vunpack.c.l.s4 1966171168
      %v2454 = vunpack.c.0.s8 %v2453
      %v2455 = vlaneseq
      %v2456 = vshrl.u32 %v2455, 7
      %v2457 = vsub.s32 %v2454, %v2456
      %v2458 = vrot.slane %v2448, %v2457
      %v2460 = vunpack.c.l.s4 1966171168
      %v2461 = vunpack.c.0.s8 %v2460
      %v2462 = vlaneseq
      %v2463 = vshrl.u32 %v2462, 7
      %v2464 = vsub.s32 %v2461, %v2463
      %v2465 = vrot.slane %v2449, %v2464
      %v2467 = vunpack.c.l.s4 1966171168
      %v2468 = vunpack.c.0.s8 %v2467
      %v2469 = vlaneseq
      %v2470 = vshrl.u32 %v2469, 7
      %v2471 = vsub.s32 %v2468, %v2470
      %v2472 = vrot.slane %v2450, %v2471
      %v2474 = vunpack.c.l.s4 1966171168
      %v2475 = vunpack.c.0.s8 %v2474
      %v2476 = vlaneseq
      %v2477 = vshrl.u32 %v2476, 7
      %v2478 = vsub.s32 %v2475, %v2477
      %v2479 = vrot.slane %v2451, %v2478
      %v2480 = vcombine.low %v2458, %v2465
      %v2481 = vcombine.low %v2472, %v2479
      %v2483 = vunpack.c.l.s4 1966171168
      %v2484 = vunpack.c.0.s8 %v2483
      %v2485 = vlaneseq
      %v2486 = vshrl.u32 %v2485, 7
      %v2487 = vsub.s32 %v2484, %v2486
      %v2488 = vrot.slane %v2480, %v2487
      %v2490 = vunpack.c.l.s4 1966171168
      %v2491 = vunpack.c.0.s8 %v2490
      %v2492 = vlaneseq
      %v2493 = vshrl.u32 %v2492, 7
      %v2494 = vsub.s32 %v2491, %v2493
      %v2495 = vrot.slane %v2481, %v2494
      %v2496 = vcombine.low %v2488, %v2495
      %v2497 = vcombine.low %v2445, %v2446
      %v2499 = vunpack.c.l.s4 1966171168
      %v2500 = vunpack.c.0.s8 %v2499
      %v2501 = vlaneseq
      %v2502 = vshrl.u32 %v2501, 7
      %v2503 = vsub.s32 %v2500, %v2502
      %v2504 = vrot.slane %v2497, %v2503
      %v2506 = vunpack.c.l.s4 1966171168
      %v2507 = vunpack.c.0.s8 %v2506
      %v2508 = vlaneseq
      %v2509 = vshrl.u32 %v2508, 7
      %v2510 = vsub.s32 %v2507, %v2509
      %v2511 = vrot.slane %v2424, %v2510
      %v2512 = vcombine.low %v2504, %v2511
      %v2514 = vunpack.c.l.s4 1966171168
      %v2515 = vunpack.c.0.s8 %v2514
      %v2516 = vlaneseq
      %v2517 = vshrl.u32 %v2516, 7
      %v2518 = vsub.s32 %v2515, %v2517
      %v2519 = vrot.slane %v2512, %v2518
      %v2538 = vunpack.c.l.b16 %v2426
      %v2539 = vunpack.c.l.b16 %v2427
      %v2540 = vunpack.c.l.b16 %v2428
      %v2541 = vunpack.c.l.b16 %v2429
      %v2542 = vunpack.c.l.b16 %v2430
      %v2543 = vunpack.c.l.b16 %v2431
      %v2544 = vunpack.c.l.b16 %v2432
      %v2545 = vunpack.c.l.b16 %v2433
      %v2546 = vunpack.c.l.b16 %v2434
      %v2547 = vunpack.c.l.b16 %v2435
      %v2548 = vunpack.c.l.b16 %v2436
      %v2549 = vunpack.c.l.b16 %v2437
      %v2550 = vunpack.c.l.b16 %v2438
      %v2551 = vunpack.c.l.b16 %v2439
      %v2552 = vunpack.c.l.b16 %v2440
      %v2553 = vunpack.c.l.b16 %v2441
      %v2554 = vpack.c.b16 %v2539, %v2538
      %v2555 = vpack.c.b16 %v2541, %v2540
      %v2556 = vpack.c.b16 %v2543, %v2542
      %v2557 = vpack.c.b16 %v2545, %v2544
      %v2558 = vpack.c.b16 %v2547, %v2546
      %v2559 = vpack.c.b16 %v2549, %v2548
      %v2560 = vpack.c.b16 %v2551, %v2550
      %v2561 = vpack.c.b16 %v2553, %v2552
      %2570 = vmatprep.subr.bf16.mxu0 0
      %2571 = vmatpush1.bf16.msra.mxu0 %v2554
      %2572 = vmatprep.subr.bf16.mxu0 0
      %2573 = vmatpush1.bf16.msra.mxu0 %v2555
      %2574 = vmatprep.subr.bf16.mxu0 0
      %2575 = vmatpush1.bf16.msra.mxu0 %v2556
      %2576 = vmatprep.subr.bf16.mxu0 0
      %2577 = vmatpush1.bf16.msra.mxu0 %v2557
      %2578 = vmatprep.subr.bf16.mxu0 0
      %2579 = vmatpush1.bf16.msra.mxu0 %v2558
      %2580 = vmatprep.subr.bf16.mxu0 0
      %2581 = vmatpush1.bf16.msra.mxu0 %v2559
      %2582 = vmatprep.subr.bf16.mxu0 0
      %2583 = vmatpush1.bf16.msra.mxu0 %v2560
      %2584 = vmatprep.subr.bf16.mxu0 0
      %2585 = vmatpush1.bf16.msra.mxu0 %v2561
      %2586 = vmatprep.subr.bf16.mxu0 0
      %2587 = vmatpush1.bf16.msra.mxu0 0
      %2588 = vmatprep.subr.bf16.mxu0 0
      %2589 = vmatpush1.bf16.msra.mxu0 0
      %2590 = vmatprep.subr.bf16.mxu0 0
      %2591 = vmatpush1.bf16.msra.mxu0 0
      %2592 = vmatprep.subr.bf16.mxu0 0
      %2593 = vmatpush1.bf16.msra.mxu0 0
      %2594 = vmatprep.subr.bf16.mxu0 0
      %2595 = vmatpush1.bf16.msra.mxu0 0
      %2596 = vmatprep.subr.bf16.mxu0 0
      %2597 = vmatpush1.bf16.msra.mxu0 0
      %2598 = vmatprep.subr.bf16.mxu0 0
      %2599 = vmatpush1.bf16.msra.mxu0 0
      %2600 = vmatprep.subr.bf16.mxu0 0
      %2601 = vmatpush1.bf16.msra.mxu0 0
      %2602 = vmatprep.mubr.bf16.mxu0 0
      %2603 = vmatmul.mubr.bf16.gmra.mrb[0].mxu0 %v2496
      %v2604 = vpop.f32.mrb[0].mxu0
      %v2605 = vadd.f32 0.0, %v2604
      %v2606 = vpop.f32.mrb[0].mxu0
      %v2607 = vpop.f32.mrb[0].mxu0
      %v2608 = vadd.f32 0.0, %v2607
      %v2609 = vpop.f32.mrb[0].mxu0
      %2610 = vmatprep.mubr.bf16.mxu0 0
      %2611 = vmatmul.mubr.bf16.gmra.mrb[0].mxu0 %v2519
      %v2612 = vpop.f32.mrb[0].mxu0
      %v2613 = vadd.f32 0.0, %v2612
      %v2614 = vpop.f32.mrb[0].mxu0
      %v2615 = vpop.f32.mrb[0].mxu0
      %v2616 = vpop.f32.mrb[0].mxu0
      %2617 = vdwg.mxu0
      %v2618 = vadd.f32 %v2390, %v2605
      %v2619 = vadd.f32 %v2391, %v2608
      %v2620 = vadd.f32 %v2392, %v2613
      %v2621 = vunpack.i.h.s16 %v2417
      %s2622 = scalar_lea.vmem %s4, 256
      %v2623 = vld [vmem:[%s2622] sm:$0xf]
      %v2624 = vld [vmem:[%s2622 + $0x4] sm:$0xf]
      %v2625 = vld [vmem:[%s2622 + $0x8] sm:$0xf]
      %v2626 = vld [vmem:[%s2622 + $0xc] sm:$0xf]
      %v2627 = vld [vmem:[%s2622 + $0x10] sm:$0xf]
      %v2628 = vld [vmem:[%s2622 + $0x14] sm:$0xf]
      %v2629 = vld [vmem:[%s2622 + $0x18] sm:$0xf]
      %v2630 = vld [vmem:[%s2622 + $0x1c] sm:$0xf]
      %v2631 = vld [vmem:[%s2622 + $0x20] sm:$0xf]
      %v2632 = vld [vmem:[%s2622 + $0x24] sm:$0xf]
      %v2633 = vld [vmem:[%s2622 + $0x28] sm:$0xf]
      %v2634 = vld [vmem:[%s2622 + $0x2c] sm:$0xf]
      %v2635 = vld [vmem:[%s2622 + $0x30] sm:$0xf]
      %v2636 = vld [vmem:[%s2622 + $0x34] sm:$0xf]
      %v2637 = vld [vmem:[%s2622 + $0x38] sm:$0xf]
      %v2638 = vld [vmem:[%s2622 + $0x3c] sm:$0xf]
      %v2639 = vpack.i.b16 %v1746, %v1769
      %v2640 = vpack.i.b16 %v2420, %v2419
      %v2641 = vpack.i.b16 %v2422, %v2421
      %v2642 = vpack.i.b16 %v2424, %v2423
      %v2644 = vcombine.low %v1975, %v2639
      %v2645 = vcombine.low %v2218, %v2640
      %v2647 = vunpack.c.l.s4 1966171168
      %v2648 = vunpack.c.0.s8 %v2647
      %v2649 = vlaneseq
      %v2650 = vshrl.u32 %v2649, 7
      %v2651 = vsub.s32 %v2648, %v2650
      %v2652 = vrot.slane %v2644, %v2651
      %v2654 = vunpack.c.l.s4 1966171168
      %v2655 = vunpack.c.0.s8 %v2654
      %v2656 = vlaneseq
      %v2657 = vshrl.u32 %v2656, 7
      %v2658 = vsub.s32 %v2655, %v2657
      %v2659 = vrot.slane %v2645, %v2658
      %v2660 = vcombine.low %v2004, %v2652
      %v2661 = vcombine.low %v2036, %v2659
      %v2663 = vunpack.c.l.s4 1966171168
      %v2664 = vunpack.c.0.s8 %v2663
      %v2665 = vlaneseq
      %v2666 = vshrl.u32 %v2665, 7
      %v2667 = vsub.s32 %v2664, %v2666
      %v2668 = vrot.slane %v2660, %v2667
      %v2670 = vunpack.c.l.s4 1966171168
      %v2671 = vunpack.c.0.s8 %v2670
      %v2672 = vlaneseq
      %v2673 = vshrl.u32 %v2672, 7
      %v2674 = vsub.s32 %v2671, %v2673
      %v2675 = vrot.slane %v2661, %v2674
      %v2676 = vcombine.low %v2668, %v2675
      %v2677 = vcombine.low %v2641, %v2642
      %v2679 = vunpack.c.l.s4 1966171168
      %v2680 = vunpack.c.0.s8 %v2679
      %v2681 = vlaneseq
      %v2682 = vshrl.u32 %v2681, 7
      %v2683 = vsub.s32 %v2680, %v2682
      %v2684 = vrot.slane %v2677, %v2683
      %v2686 = vunpack.c.l.s4 1966171168
      %v2687 = vunpack.c.0.s8 %v2686
      %v2688 = vlaneseq
      %v2689 = vshrl.u32 %v2688, 7
      %v2690 = vsub.s32 %v2687, %v2689
      %v2691 = vrot.slane %v2621, %v2690
      %v2692 = vcombine.low %v2684, %v2691
      %v2694 = vunpack.c.l.s4 1966171168
      %v2695 = vunpack.c.0.s8 %v2694
      %v2696 = vlaneseq
      %v2697 = vshrl.u32 %v2696, 7
      %v2698 = vsub.s32 %v2695, %v2697
      %v2699 = vrot.slane %v2692, %v2698
      %v2718 = vunpack.c.l.b16 %v2623
      %v2719 = vunpack.c.l.b16 %v2624
      %v2720 = vunpack.c.l.b16 %v2625
      %v2721 = vunpack.c.l.b16 %v2626
      %v2722 = vunpack.c.l.b16 %v2627
      %v2723 = vunpack.c.l.b16 %v2628
      %v2724 = vunpack.c.l.b16 %v2629
      %v2725 = vunpack.c.l.b16 %v2630
      %v2726 = vunpack.c.l.b16 %v2631
      %v2727 = vunpack.c.l.b16 %v2632
      %v2728 = vunpack.c.l.b16 %v2633
      %v2729 = vunpack.c.l.b16 %v2634
      %v2730 = vunpack.c.l.b16 %v2635
      %v2731 = vunpack.c.l.b16 %v2636
      %v2732 = vunpack.c.l.b16 %v2637
      %v2733 = vunpack.c.l.b16 %v2638
      %v2734 = vpack.c.b16 %v2719, %v2718
      %v2735 = vpack.c.b16 %v2721, %v2720
      %v2736 = vpack.c.b16 %v2723, %v2722
      %v2737 = vpack.c.b16 %v2725, %v2724
      %v2738 = vpack.c.b16 %v2727, %v2726
      %v2739 = vpack.c.b16 %v2729, %v2728
      %v2740 = vpack.c.b16 %v2731, %v2730
      %v2741 = vpack.c.b16 %v2733, %v2732
      %2750 = vmatprep.subr.bf16.mxu0 0
      %2751 = vmatpush1.bf16.msra.mxu0 %v2734
      %2752 = vmatprep.subr.bf16.mxu0 0
      %2753 = vmatpush1.bf16.msra.mxu0 %v2735
      %2754 = vmatprep.subr.bf16.mxu0 0
      %2755 = vmatpush1.bf16.msra.mxu0 %v2736
      %2756 = vmatprep.subr.bf16.mxu0 0
      %2757 = vmatpush1.bf16.msra.mxu0 %v2737
      %2758 = vmatprep.subr.bf16.mxu0 0
      %2759 = vmatpush1.bf16.msra.mxu0 %v2738
      %2760 = vmatprep.subr.bf16.mxu0 0
      %2761 = vmatpush1.bf16.msra.mxu0 %v2739
      %2762 = vmatprep.subr.bf16.mxu0 0
      %2763 = vmatpush1.bf16.msra.mxu0 %v2740
      %2764 = vmatprep.subr.bf16.mxu0 0
      %2765 = vmatpush1.bf16.msra.mxu0 %v2741
      %2766 = vmatprep.subr.bf16.mxu0 0
      %2767 = vmatpush1.bf16.msra.mxu0 0
      %2768 = vmatprep.subr.bf16.mxu0 0
      %2769 = vmatpush1.bf16.msra.mxu0 0
      %2770 = vmatprep.subr.bf16.mxu0 0
      %2771 = vmatpush1.bf16.msra.mxu0 0
      %2772 = vmatprep.subr.bf16.mxu0 0
      %2773 = vmatpush1.bf16.msra.mxu0 0
      %2774 = vmatprep.subr.bf16.mxu0 0
      %2775 = vmatpush1.bf16.msra.mxu0 0
      %2776 = vmatprep.subr.bf16.mxu0 0
      %2777 = vmatpush1.bf16.msra.mxu0 0
      %2778 = vmatprep.subr.bf16.mxu0 0
      %2779 = vmatpush1.bf16.msra.mxu0 0
      %2780 = vmatprep.subr.bf16.mxu0 0
      %2781 = vmatpush1.bf16.msra.mxu0 0
      %2782 = vmatprep.mubr.bf16.mxu0 0
      %2783 = vmatmul.mubr.bf16.gmra.mrb[0].mxu0 %v2676
      %v2784 = vpop.f32.mrb[0].mxu0
      %v2785 = vadd.f32 0.0, %v2784
      %v2786 = vpop.f32.mrb[0].mxu0
      %v2787 = vpop.f32.mrb[0].mxu0
      %v2788 = vadd.f32 0.0, %v2787
      %v2789 = vpop.f32.mrb[0].mxu0
      %2790 = vmatprep.mubr.bf16.mxu0 0
      %2791 = vmatmul.mubr.bf16.gmra.mrb[0].mxu0 %v2699
      %v2792 = vpop.f32.mrb[0].mxu0
      %v2793 = vadd.f32 0.0, %v2792
      %v2794 = vpop.f32.mrb[0].mxu0
      %v2795 = vpop.f32.mrb[0].mxu0
      %v2796 = vpop.f32.mrb[0].mxu0
      %2797 = vdwg.mxu0
      %v2798 = vadd.f32 %v2618, %v2785
      %v2799 = vadd.f32 %v2619, %v2788
      %v2800 = vadd.f32 %v2620, %v2793
      %v2801 = vcombine.high %v1654, %v1654
      %v2803 = vunpack.c.l.s4 1966171168
      %v2804 = vunpack.c.0.s8 %v2803
      %v2805 = vlaneseq
      %v2806 = vshrl.u32 %v2805, 7
      %v2807 = vsub.s32 %v2804, %v2806
      %v2808 = vrot.slane %v2801, %v2807
      %v2810 = vunpack.c.l.s4 1966171168
      %v2811 = vunpack.c.0.s8 %v2810
      %v2812 = vlaneseq
      %v2813 = vshrl.u32 %v2812, 7
      %v2814 = vsub.s32 %v2811, %v2813
      %v2815 = vrot.slane %v2808, %v2814
      %v2816 = vunpack.i.l.s16 %v2815
      %s2817 = scalar_lea.vmem %s4, 320
      %v2818 = vld [vmem:[%s2817] sm:$0xf]
      %v2819 = vld [vmem:[%s2817 + $0x4] sm:$0xf]
      %v2820 = vld [vmem:[%s2817 + $0x8] sm:$0xf]
      %v2821 = vld [vmem:[%s2817 + $0xc] sm:$0xf]
      %v2822 = vld [vmem:[%s2817 + $0x10] sm:$0xf]
      %v2823 = vld [vmem:[%s2817 + $0x14] sm:$0xf]
      %v2824 = vld [vmem:[%s2817 + $0x18] sm:$0xf]
      %v2825 = vld [vmem:[%s2817 + $0x1c] sm:$0xf]
      %v2826 = vld [vmem:[%s2817 + $0x20] sm:$0xf]
      %v2827 = vld [vmem:[%s2817 + $0x24] sm:$0xf]
      %v2828 = vld [vmem:[%s2817 + $0x28] sm:$0xf]
      %v2829 = vld [vmem:[%s2817 + $0x2c] sm:$0xf]
      %v2830 = vld [vmem:[%s2817 + $0x30] sm:$0xf]
      %v2831 = vld [vmem:[%s2817 + $0x34] sm:$0xf]
      %v2832 = vld [vmem:[%s2817 + $0x38] sm:$0xf]
      %v2833 = vld [vmem:[%s2817 + $0x3c] sm:$0xf]
      %v2834 = vpack.i.b16 %v1747, %v2196
      %v2835 = vpack.i.b16 %v2197, %v1770
      %v2836 = vpack.i.b16 %v2621, %v2424
      %v2838 = vcombine.low %v1794, %v2834
      %v2839 = vcombine.low %v2835, %v2445
      %v2841 = vunpack.c.l.s4 1966171168
      %v2842 = vunpack.c.0.s8 %v2841
      %v2843 = vlaneseq
      %v2844 = vshrl.u32 %v2843, 7
      %v2845 = vsub.s32 %v2842, %v2844
      %v2846 = vrot.slane %v2838, %v2845
      %v2848 = vunpack.c.l.s4 1966171168
      %v2849 = vunpack.c.0.s8 %v2848
      %v2850 = vlaneseq
      %v2851 = vshrl.u32 %v2850, 7
      %v2852 = vsub.s32 %v2849, %v2851
      %v2853 = vrot.slane %v2839, %v2852
      %v2854 = vcombine.low %v1823, %v2846
      %v2855 = vcombine.low %v1855, %v2853
      %v2857 = vunpack.c.l.s4 1966171168
      %v2858 = vunpack.c.0.s8 %v2857
      %v2859 = vlaneseq
      %v2860 = vshrl.u32 %v2859, 7
      %v2861 = vsub.s32 %v2858, %v2860
      %v2862 = vrot.slane %v2854, %v2861
      %v2864 = vunpack.c.l.s4 1966171168
      %v2865 = vunpack.c.0.s8 %v2864
      %v2866 = vlaneseq
      %v2867 = vshrl.u32 %v2866, 7
      %v2868 = vsub.s32 %v2865, %v2867
      %v2869 = vrot.slane %v2855, %v2868
      %v2870 = vcombine.low %v2862, %v2869
      %v2871 = vcombine.low %v2446, %v2836
      %v2873 = vunpack.c.l.s4 1966171168
      %v2874 = vunpack.c.0.s8 %v2873
      %v2875 = vlaneseq
      %v2876 = vshrl.u32 %v2875, 7
      %v2877 = vsub.s32 %v2874, %v2876
      %v2878 = vrot.slane %v2871, %v2877
      %v2880 = vunpack.c.l.s4 1966171168
      %v2881 = vunpack.c.0.s8 %v2880
      %v2882 = vlaneseq
      %v2883 = vshrl.u32 %v2882, 7
      %v2884 = vsub.s32 %v2881, %v2883
      %v2885 = vrot.slane %v2816, %v2884
      %v2886 = vcombine.low %v2878, %v2885
      %v2888 = vunpack.c.l.s4 1966171168
      %v2889 = vunpack.c.0.s8 %v2888
      %v2890 = vlaneseq
      %v2891 = vshrl.u32 %v2890, 7
      %v2892 = vsub.s32 %v2889, %v2891
      %v2893 = vrot.slane %v2886, %v2892
      %v2912 = vunpack.c.l.b16 %v2818
      %v2913 = vunpack.c.l.b16 %v2819
      %v2914 = vunpack.c.l.b16 %v2820
      %v2915 = vunpack.c.l.b16 %v2821
      %v2916 = vunpack.c.l.b16 %v2822
      %v2917 = vunpack.c.l.b16 %v2823
      %v2918 = vunpack.c.l.b16 %v2824
      %v2919 = vunpack.c.l.b16 %v2825
      %v2920 = vunpack.c.l.b16 %v2826
      %v2921 = vunpack.c.l.b16 %v2827
      %v2922 = vunpack.c.l.b16 %v2828
      %v2923 = vunpack.c.l.b16 %v2829
      %v2924 = vunpack.c.l.b16 %v2830
      %v2925 = vunpack.c.l.b16 %v2831
      %v2926 = vunpack.c.l.b16 %v2832
      %v2927 = vunpack.c.l.b16 %v2833
      %v2928 = vpack.c.b16 %v2913, %v2912
      %v2929 = vpack.c.b16 %v2915, %v2914
      %v2930 = vpack.c.b16 %v2917, %v2916
      %v2931 = vpack.c.b16 %v2919, %v2918
      %v2932 = vpack.c.b16 %v2921, %v2920
      %v2933 = vpack.c.b16 %v2923, %v2922
      %v2934 = vpack.c.b16 %v2925, %v2924
      %v2935 = vpack.c.b16 %v2927, %v2926
      %2944 = vmatprep.subr.bf16.mxu0 0
      %2945 = vmatpush1.bf16.msra.mxu0 %v2928
      %2946 = vmatprep.subr.bf16.mxu0 0
      %2947 = vmatpush1.bf16.msra.mxu0 %v2929
      %2948 = vmatprep.subr.bf16.mxu0 0
      %2949 = vmatpush1.bf16.msra.mxu0 %v2930
      %2950 = vmatprep.subr.bf16.mxu0 0
      %2951 = vmatpush1.bf16.msra.mxu0 %v2931
      %2952 = vmatprep.subr.bf16.mxu0 0
      %2953 = vmatpush1.bf16.msra.mxu0 %v2932
      %2954 = vmatprep.subr.bf16.mxu0 0
      %2955 = vmatpush1.bf16.msra.mxu0 %v2933
      %2956 = vmatprep.subr.bf16.mxu0 0
      %2957 = vmatpush1.bf16.msra.mxu0 %v2934
      %2958 = vmatprep.subr.bf16.mxu0 0
      %2959 = vmatpush1.bf16.msra.mxu0 %v2935
      %2960 = vmatprep.subr.bf16.mxu0 0
      %2961 = vmatpush1.bf16.msra.mxu0 0
      %2962 = vmatprep.subr.bf16.mxu0 0
      %2963 = vmatpush1.bf16.msra.mxu0 0
      %2964 = vmatprep.subr.bf16.mxu0 0
      %2965 = vmatpush1.bf16.msra.mxu0 0
      %2966 = vmatprep.subr.bf16.mxu0 0
      %2967 = vmatpush1.bf16.msra.mxu0 0
      %2968 = vmatprep.subr.bf16.mxu0 0
      %2969 = vmatpush1.bf16.msra.mxu0 0
      %2970 = vmatprep.subr.bf16.mxu0 0
      %2971 = vmatpush1.bf16.msra.mxu0 0
      %2972 = vmatprep.subr.bf16.mxu0 0
      %2973 = vmatpush1.bf16.msra.mxu0 0
      %2974 = vmatprep.subr.bf16.mxu0 0
      %2975 = vmatpush1.bf16.msra.mxu0 0
      %2976 = vmatprep.mubr.bf16.mxu0 0
      %2977 = vmatmul.mubr.bf16.gmra.mrb[0].mxu0 %v2870
      %v2978 = vpop.f32.mrb[0].mxu0
      %v2979 = vadd.f32 0.0, %v2978
      %v2980 = vpop.f32.mrb[0].mxu0
      %v2981 = vpop.f32.mrb[0].mxu0
      %v2982 = vadd.f32 0.0, %v2981
      %v2983 = vpop.f32.mrb[0].mxu0
      %2984 = vmatprep.mubr.bf16.mxu0 0
      %2985 = vmatmul.mubr.bf16.gmra.mrb[0].mxu0 %v2893
      %v2986 = vpop.f32.mrb[0].mxu0
      %v2987 = vadd.f32 0.0, %v2986
      %v2988 = vpop.f32.mrb[0].mxu0
      %v2989 = vpop.f32.mrb[0].mxu0
      %v2990 = vpop.f32.mrb[0].mxu0
      %2991 = vdwg.mxu0
      %v2992 = vadd.f32 %v2798, %v2979
      %v2993 = vadd.f32 %v2799, %v2982
      %v2994 = vadd.f32 %v2800, %v2987
      %v2997 = vunpack.c.l.s4 1966171168
      %v2998 = vunpack.c.0.s8 %v2997
      %v2999 = vlaneseq
      %v3000 = vshrl.u32 %v2999, 7
      %v3001 = vsub.s32 %v2998, %v3000
      %v3002 = vrot.slane %v1655, %v3001
      %v3003 = vcombine.high %v3002, %v3002
      %v3005 = vunpack.c.l.s4 1966171168
      %v3006 = vunpack.c.0.s8 %v3005
      %v3007 = vlaneseq
      %v3008 = vshrl.u32 %v3007, 7
      %v3009 = vsub.s32 %v3006, %v3008
      %v3010 = vrot.slane %v3002, %v3009
      %v3012 = vunpack.c.l.s4 1966171168
      %v3013 = vunpack.c.0.s8 %v3012
      %v3014 = vlaneseq
      %v3015 = vshrl.u32 %v3014, 7
      %v3016 = vsub.s32 %v3013, %v3015
      %v3017 = vrot.slane %v3003, %v3016
      %v3018 = vcombine.high %v3010, %v3010
      %v3019 = vcombine.high %v3017, %v3017
      %v3020 = vunpack.i.l.s16 %v3010
      %v3021 = vunpack.i.h.s16 %v3010
      %v3022 = vunpack.i.l.s16 %v3017
      %v3023 = vunpack.i.h.s16 %v3017
      %v3024 = vunpack.i.l.s16 %v3018
      %v3025 = vunpack.i.h.s16 %v3018
      %v3026 = vunpack.i.l.s16 %v3019
      %s3027 = scalar_lea.vmem %s4, 384
      %v3028 = vld [vmem:[%s3027] sm:$0xf]
      %v3029 = vld [vmem:[%s3027 + $0x4] sm:$0xf]
      %v3030 = vld [vmem:[%s3027 + $0x8] sm:$0xf]
      %v3031 = vld [vmem:[%s3027 + $0xc] sm:$0xf]
      %v3032 = vld [vmem:[%s3027 + $0x10] sm:$0xf]
      %v3033 = vld [vmem:[%s3027 + $0x14] sm:$0xf]
      %v3034 = vld [vmem:[%s3027 + $0x18] sm:$0xf]
      %v3035 = vld [vmem:[%s3027 + $0x1c] sm:$0xf]
      %v3036 = vld [vmem:[%s3027 + $0x20] sm:$0xf]
      %v3037 = vld [vmem:[%s3027 + $0x24] sm:$0xf]
      %v3038 = vld [vmem:[%s3027 + $0x28] sm:$0xf]
      %v3039 = vld [vmem:[%s3027 + $0x2c] sm:$0xf]
      %v3040 = vld [vmem:[%s3027 + $0x30] sm:$0xf]
      %v3041 = vld [vmem:[%s3027 + $0x34] sm:$0xf]
      %v3042 = vld [vmem:[%s3027 + $0x38] sm:$0xf]
      %v3043 = vld [vmem:[%s3027 + $0x3c] sm:$0xf]
      %v3044 = vpack.i.b16 %v2418, %v1751
      %v3045 = vpack.i.b16 %v3021, %v3020
      %v3046 = vpack.i.b16 %v3023, %v3022
      %v3047 = vpack.i.b16 %v3025, %v3024
      %v3049 = vcombine.low %v1976, %v1977
      %v3050 = vcombine.low %v1978, %v3044
      %v3051 = vcombine.low %v2640, %v2641
      %v3052 = vcombine.low %v2642, %v3045
      %v3054 = vunpack.c.l.s4 1966171168
      %v3055 = vunpack.c.0.s8 %v3054
      %v3056 = vlaneseq
      %v3057 = vshrl.u32 %v3056, 7
      %v3058 = vsub.s32 %v3055, %v3057
      %v3059 = vrot.slane %v3049, %v3058
      %v3061 = vunpack.c.l.s4 1966171168
      %v3062 = vunpack.c.0.s8 %v3061
      %v3063 = vlaneseq
      %v3064 = vshrl.u32 %v3063, 7
      %v3065 = vsub.s32 %v3062, %v3064
      %v3066 = vrot.slane %v3050, %v3065
      %v3068 = vunpack.c.l.s4 1966171168
      %v3069 = vunpack.c.0.s8 %v3068
      %v3070 = vlaneseq
      %v3071 = vshrl.u32 %v3070, 7
      %v3072 = vsub.s32 %v3069, %v3071
      %v3073 = vrot.slane %v3051, %v3072
      %v3075 = vunpack.c.l.s4 1966171168
      %v3076 = vunpack.c.0.s8 %v3075
      %v3077 = vlaneseq
      %v3078 = vshrl.u32 %v3077, 7
      %v3079 = vsub.s32 %v3076, %v3078
      %v3080 = vrot.slane %v3052, %v3079
      %v3081 = vcombine.low %v3059, %v3066
      %v3082 = vcombine.low %v3073, %v3080
      %v3084 = vunpack.c.l.s4 1966171168
      %v3085 = vunpack.c.0.s8 %v3084
      %v3086 = vlaneseq
      %v3087 = vshrl.u32 %v3086, 7
      %v3088 = vsub.s32 %v3085, %v3087
      %v3089 = vrot.slane %v3081, %v3088
      %v3091 = vunpack.c.l.s4 1966171168
      %v3092 = vunpack.c.0.s8 %v3091
      %v3093 = vlaneseq
      %v3094 = vshrl.u32 %v3093, 7
      %v3095 = vsub.s32 %v3092, %v3094
      %v3096 = vrot.slane %v3082, %v3095
      %v3097 = vcombine.low %v3089, %v3096
      %v3098 = vcombine.low %v3046, %v3047
      %v3100 = vunpack.c.l.s4 1966171168
      %v3101 = vunpack.c.0.s8 %v3100
      %v3102 = vlaneseq
      %v3103 = vshrl.u32 %v3102, 7
      %v3104 = vsub.s32 %v3101, %v3103
      %v3105 = vrot.slane %v3098, %v3104
      %v3107 = vunpack.c.l.s4 1966171168
      %v3108 = vunpack.c.0.s8 %v3107
      %v3109 = vlaneseq
      %v3110 = vshrl.u32 %v3109, 7
      %v3111 = vsub.s32 %v3108, %v3110
      %v3112 = vrot.slane %v3026, %v3111
      %v3113 = vcombine.low %v3105, %v3112
      %v3115 = vunpack.c.l.s4 1966171168
      %v3116 = vunpack.c.0.s8 %v3115
      %v3117 = vlaneseq
      %v3118 = vshrl.u32 %v3117, 7
      %v3119 = vsub.s32 %v3116, %v3118
      %v3120 = vrot.slane %v3113, %v3119
      %v3139 = vunpack.c.l.b16 %v3028
      %v3140 = vunpack.c.l.b16 %v3029
      %v3141 = vunpack.c.l.b16 %v3030
      %v3142 = vunpack.c.l.b16 %v3031
      %v3143 = vunpack.c.l.b16 %v3032
      %v3144 = vunpack.c.l.b16 %v3033
      %v3145 = vunpack.c.l.b16 %v3034
      %v3146 = vunpack.c.l.b16 %v3035
      %v3147 = vunpack.c.l.b16 %v3036
      %v3148 = vunpack.c.l.b16 %v3037
      %v3149 = vunpack.c.l.b16 %v3038
      %v3150 = vunpack.c.l.b16 %v3039
      %v3151 = vunpack.c.l.b16 %v3040
      %v3152 = vunpack.c.l.b16 %v3041
      %v3153 = vunpack.c.l.b16 %v3042
      %v3154 = vunpack.c.l.b16 %v3043
      %v3155 = vpack.c.b16 %v3140, %v3139
      %v3156 = vpack.c.b16 %v3142, %v3141
      %v3157 = vpack.c.b16 %v3144, %v3143
      %v3158 = vpack.c.b16 %v3146, %v3145
      %v3159 = vpack.c.b16 %v3148, %v3147
      %v3160 = vpack.c.b16 %v3150, %v3149
      %v3161 = vpack.c.b16 %v3152, %v3151
      %v3162 = vpack.c.b16 %v3154, %v3153
      %3171 = vmatprep.subr.bf16.mxu0 0
      %3172 = vmatpush1.bf16.msra.mxu0 %v3155
      %3173 = vmatprep.subr.bf16.mxu0 0
      %3174 = vmatpush1.bf16.msra.mxu0 %v3156
      %3175 = vmatprep.subr.bf16.mxu0 0
      %3176 = vmatpush1.bf16.msra.mxu0 %v3157
      %3177 = vmatprep.subr.bf16.mxu0 0
      %3178 = vmatpush1.bf16.msra.mxu0 %v3158
      %3179 = vmatprep.subr.bf16.mxu0 0
      %3180 = vmatpush1.bf16.msra.mxu0 %v3159
      %3181 = vmatprep.subr.bf16.mxu0 0
      %3182 = vmatpush1.bf16.msra.mxu0 %v3160
      %3183 = vmatprep.subr.bf16.mxu0 0
      %3184 = vmatpush1.bf16.msra.mxu0 %v3161
      %3185 = vmatprep.subr.bf16.mxu0 0
      %3186 = vmatpush1.bf16.msra.mxu0 %v3162
      %3187 = vmatprep.subr.bf16.mxu0 0
      %3188 = vmatpush1.bf16.msra.mxu0 0
      %3189 = vmatprep.subr.bf16.mxu0 0
      %3190 = vmatpush1.bf16.msra.mxu0 0
      %3191 = vmatprep.subr.bf16.mxu0 0
      %3192 = vmatpush1.bf16.msra.mxu0 0
      %3193 = vmatprep.subr.bf16.mxu0 0
      %3194 = vmatpush1.bf16.msra.mxu0 0
      %3195 = vmatprep.subr.bf16.mxu0 0
      %3196 = vmatpush1.bf16.msra.mxu0 0
      %3197 = vmatprep.subr.bf16.mxu0 0
      %3198 = vmatpush1.bf16.msra.mxu0 0
      %3199 = vmatprep.subr.bf16.mxu0 0
      %3200 = vmatpush1.bf16.msra.mxu0 0
      %3201 = vmatprep.subr.bf16.mxu0 0
      %3202 = vmatpush1.bf16.msra.mxu0 0
      %3203 = vmatprep.mubr.bf16.mxu0 0
      %3204 = vmatmul.mubr.bf16.gmra.mrb[0].mxu0 %v3097
      %v3205 = vpop.f32.mrb[0].mxu0
      %v3206 = vadd.f32 0.0, %v3205
      %v3207 = vpop.f32.mrb[0].mxu0
      %v3208 = vpop.f32.mrb[0].mxu0
      %v3209 = vadd.f32 0.0, %v3208
      %v3210 = vpop.f32.mrb[0].mxu0
      %3211 = vmatprep.mubr.bf16.mxu0 0
      %3212 = vmatmul.mubr.bf16.gmra.mrb[0].mxu0 %v3120
      %v3213 = vpop.f32.mrb[0].mxu0
      %v3214 = vadd.f32 0.0, %v3213
      %v3215 = vpop.f32.mrb[0].mxu0
      %v3216 = vpop.f32.mrb[0].mxu0
      %v3217 = vpop.f32.mrb[0].mxu0
      %3218 = vdwg.mxu0
      %v3219 = vadd.f32 %v2992, %v3206
      %v3220 = vadd.f32 %v2993, %v3209
      %v3221 = vadd.f32 %v2994, %v3214
      %v3222 = vunpack.i.h.s16 %v3019
      %s3223 = scalar_lea.vmem %s4, 448
      %v3224 = vld [vmem:[%s3223] sm:$0xf]
      %v3225 = vld [vmem:[%s3223 + $0x4] sm:$0xf]
      %v3226 = vld [vmem:[%s3223 + $0x8] sm:$0xf]
      %v3227 = vld [vmem:[%s3223 + $0xc] sm:$0xf]
      %v3228 = vld [vmem:[%s3223 + $0x10] sm:$0xf]
      %v3229 = vld [vmem:[%s3223 + $0x14] sm:$0xf]
      %v3230 = vld [vmem:[%s3223 + $0x18] sm:$0xf]
      %v3231 = vld [vmem:[%s3223 + $0x1c] sm:$0xf]
      %v3232 = vld [vmem:[%s3223 + $0x20] sm:$0xf]
      %v3233 = vld [vmem:[%s3223 + $0x24] sm:$0xf]
      %v3234 = vld [vmem:[%s3223 + $0x28] sm:$0xf]
      %v3235 = vld [vmem:[%s3223 + $0x2c] sm:$0xf]
      %v3236 = vld [vmem:[%s3223 + $0x30] sm:$0xf]
      %v3237 = vld [vmem:[%s3223 + $0x34] sm:$0xf]
      %v3238 = vld [vmem:[%s3223 + $0x38] sm:$0xf]
      %v3239 = vld [vmem:[%s3223 + $0x3c] sm:$0xf]
      %v3240 = vpack.i.b16 %v2419, %v1770
      %v3241 = vpack.i.b16 %v3022, %v3021
      %v3242 = vpack.i.b16 %v3024, %v3023
      %v3243 = vpack.i.b16 %v3026, %v3025
      %v3245 = vcombine.low %v1797, %v3240
      %v3246 = vcombine.low %v2836, %v3241
      %v3248 = vunpack.c.l.s4 1966171168
      %v3249 = vunpack.c.0.s8 %v3248
      %v3250 = vlaneseq
      %v3251 = vshrl.u32 %v3250, 7
      %v3252 = vsub.s32 %v3249, %v3251
      %v3253 = vrot.slane %v3245, %v3252
      %v3255 = vunpack.c.l.s4 1966171168
      %v3256 = vunpack.c.0.s8 %v3255
      %v3257 = vlaneseq
      %v3258 = vshrl.u32 %v3257, 7
      %v3259 = vsub.s32 %v3256, %v3258
      %v3260 = vrot.slane %v3246, %v3259
      %v3261 = vcombine.low %v2472, %v3253
      %v3262 = vcombine.low %v2504, %v3260
      %v3264 = vunpack.c.l.s4 1966171168
      %v3265 = vunpack.c.0.s8 %v3264
      %v3266 = vlaneseq
      %v3267 = vshrl.u32 %v3266, 7
      %v3268 = vsub.s32 %v3265, %v3267
      %v3269 = vrot.slane %v3261, %v3268
      %v3271 = vunpack.c.l.s4 1966171168
      %v3272 = vunpack.c.0.s8 %v3271
      %v3273 = vlaneseq
      %v3274 = vshrl.u32 %v3273, 7
      %v3275 = vsub.s32 %v3272, %v3274
      %v3276 = vrot.slane %v3262, %v3275
      %v3277 = vcombine.low %v3269, %v3276
      %v3278 = vcombine.low %v3242, %v3243
      %v3280 = vunpack.c.l.s4 1966171168
      %v3281 = vunpack.c.0.s8 %v3280
      %v3282 = vlaneseq
      %v3283 = vshrl.u32 %v3282, 7
      %v3284 = vsub.s32 %v3281, %v3283
      %v3285 = vrot.slane %v3278, %v3284
      %v3287 = vunpack.c.l.s4 1966171168
      %v3288 = vunpack.c.0.s8 %v3287
      %v3289 = vlaneseq
      %v3290 = vshrl.u32 %v3289, 7
      %v3291 = vsub.s32 %v3288, %v3290
      %v3292 = vrot.slane %v3222, %v3291
      %v3293 = vcombine.low %v3285, %v3292
      %v3295 = vunpack.c.l.s4 1966171168
      %v3296 = vunpack.c.0.s8 %v3295
      %v3297 = vlaneseq
      %v3298 = vshrl.u32 %v3297, 7
      %v3299 = vsub.s32 %v3296, %v3298
      %v3300 = vrot.slane %v3293, %v3299
      %v3319 = vunpack.c.l.b16 %v3224
      %v3320 = vunpack.c.l.b16 %v3225
      %v3321 = vunpack.c.l.b16 %v3226
      %v3322 = vunpack.c.l.b16 %v3227
      %v3323 = vunpack.c.l.b16 %v3228
      %v3324 = vunpack.c.l.b16 %v3229
      %v3325 = vunpack.c.l.b16 %v3230
      %v3326 = vunpack.c.l.b16 %v3231
      %v3327 = vunpack.c.l.b16 %v3232
      %v3328 = vunpack.c.l.b16 %v3233
      %v3329 = vunpack.c.l.b16 %v3234
      %v3330 = vunpack.c.l.b16 %v3235
      %v3331 = vunpack.c.l.b16 %v3236
      %v3332 = vunpack.c.l.b16 %v3237
      %v3333 = vunpack.c.l.b16 %v3238
      %v3334 = vunpack.c.l.b16 %v3239
      %v3335 = vpack.c.b16 %v3320, %v3319
      %v3336 = vpack.c.b16 %v3322, %v3321
      %v3337 = vpack.c.b16 %v3324, %v3323
      %v3338 = vpack.c.b16 %v3326, %v3325
      %v3339 = vpack.c.b16 %v3328, %v3327
      %v3340 = vpack.c.b16 %v3330, %v3329
      %v3341 = vpack.c.b16 %v3332, %v3331
      %v3342 = vpack.c.b16 %v3334, %v3333
      %3351 = vmatprep.subr.bf16.mxu0 0
      %3352 = vmatpush1.bf16.msra.mxu0 %v3335
      %3353 = vmatprep.subr.bf16.mxu0 0
      %3354 = vmatpush1.bf16.msra.mxu0 %v3336
      %3355 = vmatprep.subr.bf16.mxu0 0
      %3356 = vmatpush1.bf16.msra.mxu0 %v3337
      %3357 = vmatprep.subr.bf16.mxu0 0
      %3358 = vmatpush1.bf16.msra.mxu0 %v3338
      %3359 = vmatprep.subr.bf16.mxu0 0
      %3360 = vmatpush1.bf16.msra.mxu0 %v3339
      %3361 = vmatprep.subr.bf16.mxu0 0
      %3362 = vmatpush1.bf16.msra.mxu0 %v3340
      %3363 = vmatprep.subr.bf16.mxu0 0
      %3364 = vmatpush1.bf16.msra.mxu0 %v3341
      %3365 = vmatprep.subr.bf16.mxu0 0
      %3366 = vmatpush1.bf16.msra.mxu0 %v3342
      %3367 = vmatprep.subr.bf16.mxu0 0
      %3368 = vmatpush1.bf16.msra.mxu0 0
      %3369 = vmatprep.subr.bf16.mxu0 0
      %3370 = vmatpush1.bf16.msra.mxu0 0
      %3371 = vmatprep.subr.bf16.mxu0 0
      %3372 = vmatpush1.bf16.msra.mxu0 0
      %3373 = vmatprep.subr.bf16.mxu0 0
      %3374 = vmatpush1.bf16.msra.mxu0 0
      %3375 = vmatprep.subr.bf16.mxu0 0
      %3376 = vmatpush1.bf16.msra.mxu0 0
      %3377 = vmatprep.subr.bf16.mxu0 0
      %3378 = vmatpush1.bf16.msra.mxu0 0
      %3379 = vmatprep.subr.bf16.mxu0 0
      %3380 = vmatpush1.bf16.msra.mxu0 0
      %3381 = vmatprep.subr.bf16.mxu0 0
      %3382 = vmatpush1.bf16.msra.mxu0 0
      %3383 = vmatprep.mubr.bf16.mxu0 0
      %3384 = vmatmul.mubr.bf16.gmra.mrb[0].mxu0 %v3277
      %v3385 = vpop.f32.mrb[0].mxu0
      %v3386 = vadd.f32 0.0, %v3385
      %v3387 = vpop.f32.mrb[0].mxu0
      %v3388 = vpop.f32.mrb[0].mxu0
      %v3389 = vadd.f32 0.0, %v3388
      %v3390 = vpop.f32.mrb[0].mxu0
      %3391 = vmatprep.mubr.bf16.mxu0 0
      %3392 = vmatmul.mubr.bf16.gmra.mrb[0].mxu0 %v3300
      %v3393 = vpop.f32.mrb[0].mxu0
      %v3394 = vadd.f32 0.0, %v3393
      %v3395 = vpop.f32.mrb[0].mxu0
      %v3396 = vpop.f32.mrb[0].mxu0
      %v3397 = vpop.f32.mrb[0].mxu0
      %3398 = vdwg.mxu0
      %v3399 = vadd.f32 %v3219, %v3386
      %v3400 = vadd.f32 %v3220, %v3389
      %v3401 = vadd.f32 %v3221, %v3394
      %v3402 = vcombine.high %v1655, %v1655
      %v3404 = vunpack.c.l.s4 1966171168
      %v3405 = vunpack.c.0.s8 %v3404
      %v3406 = vlaneseq
      %v3407 = vshrl.u32 %v3406, 7
      %v3408 = vsub.s32 %v3405, %v3407
      %v3409 = vrot.slane %v3402, %v3408
      %v3411 = vunpack.c.l.s4 1966171168
      %v3412 = vunpack.c.0.s8 %v3411
      %v3413 = vlaneseq
      %v3414 = vshrl.u32 %v3413, 7
      %v3415 = vsub.s32 %v3412, %v3414
      %v3416 = vrot.slane %v3409, %v3415
      %v3417 = vunpack.i.l.s16 %v3416
      %s3418 = scalar_lea.vmem %s4, 512
      %v3419 = vld [vmem:[%s3418] sm:$0xf]
      %v3420 = vld [vmem:[%s3418 + $0x4] sm:$0xf]
      %v3421 = vld [vmem:[%s3418 + $0x8] sm:$0xf]
      %v3422 = vld [vmem:[%s3418 + $0xc] sm:$0xf]
      %v3423 = vld [vmem:[%s3418 + $0x10] sm:$0xf]
      %v3424 = vld [vmem:[%s3418 + $0x14] sm:$0xf]
      %v3425 = vld [vmem:[%s3418 + $0x18] sm:$0xf]
      %v3426 = vld [vmem:[%s3418 + $0x1c] sm:$0xf]
      %v3427 = vld [vmem:[%s3418 + $0x20] sm:$0xf]
      %v3428 = vld [vmem:[%s3418 + $0x24] sm:$0xf]
      %v3429 = vld [vmem:[%s3418 + $0x28] sm:$0xf]
      %v3430 = vld [vmem:[%s3418 + $0x2c] sm:$0xf]
      %v3431 = vld [vmem:[%s3418 + $0x30] sm:$0xf]
      %v3432 = vld [vmem:[%s3418 + $0x34] sm:$0xf]
      %v3433 = vld [vmem:[%s3418 + $0x38] sm:$0xf]
      %v3434 = vld [vmem:[%s3418 + $0x3c] sm:$0xf]
      %v3435 = vpack.i.b16 %v2420, %v2197
      %v3436 = vpack.i.b16 %v2816, %v2621
      %v3437 = vpack.i.b16 %v3222, %v3026
      %v3439 = vcombine.low %v2218, %v3435
      %v3440 = vcombine.low %v3436, %v3046
      %v3442 = vunpack.c.l.s4 1966171168
      %v3443 = vunpack.c.0.s8 %v3442
      %v3444 = vlaneseq
      %v3445 = vshrl.u32 %v3444, 7
      %v3446 = vsub.s32 %v3443, %v3445
      %v3447 = vrot.slane %v3439, %v3446
      %v3449 = vunpack.c.l.s4 1966171168
      %v3450 = vunpack.c.0.s8 %v3449
      %v3451 = vlaneseq
      %v3452 = vshrl.u32 %v3451, 7
      %v3453 = vsub.s32 %v3450, %v3452
      %v3454 = vrot.slane %v3440, %v3453
      %v3455 = vcombine.low %v2036, %v3447
      %v3456 = vcombine.low %v2684, %v3454
      %v3458 = vunpack.c.l.s4 1966171168
      %v3459 = vunpack.c.0.s8 %v3458
      %v3460 = vlaneseq
      %v3461 = vshrl.u32 %v3460, 7
      %v3462 = vsub.s32 %v3459, %v3461
      %v3463 = vrot.slane %v3455, %v3462
      %v3465 = vunpack.c.l.s4 1966171168
      %v3466 = vunpack.c.0.s8 %v3465
      %v3467 = vlaneseq
      %v3468 = vshrl.u32 %v3467, 7
      %v3469 = vsub.s32 %v3466, %v3468
      %v3470 = vrot.slane %v3456, %v3469
      %v3471 = vcombine.low %v3463, %v3470
      %v3472 = vcombine.low %v3047, %v3437
      %v3474 = vunpack.c.l.s4 1966171168
      %v3475 = vunpack.c.0.s8 %v3474
      %v3476 = vlaneseq
      %v3477 = vshrl.u32 %v3476, 7
      %v3478 = vsub.s32 %v3475, %v3477
      %v3479 = vrot.slane %v3472, %v3478
      %v3481 = vunpack.c.l.s4 1966171168
      %v3482 = vunpack.c.0.s8 %v3481
      %v3483 = vlaneseq
      %v3484 = vshrl.u32 %v3483, 7
      %v3485 = vsub.s32 %v3482, %v3484
      %v3486 = vrot.slane %v3417, %v3485
      %v3487 = vcombine.low %v3479, %v3486
      %v3489 = vunpack.c.l.s4 1966171168
      %v3490 = vunpack.c.0.s8 %v3489
      %v3491 = vlaneseq
      %v3492 = vshrl.u32 %v3491, 7
      %v3493 = vsub.s32 %v3490, %v3492
      %v3494 = vrot.slane %v3487, %v3493
      %v3513 = vunpack.c.l.b16 %v3419
      %v3514 = vunpack.c.l.b16 %v3420
      %v3515 = vunpack.c.l.b16 %v3421
      %v3516 = vunpack.c.l.b16 %v3422
      %v3517 = vunpack.c.l.b16 %v3423
      %v3518 = vunpack.c.l.b16 %v3424
      %v3519 = vunpack.c.l.b16 %v3425
      %v3520 = vunpack.c.l.b16 %v3426
      %v3521 = vunpack.c.l.b16 %v3427
      %v3522 = vunpack.c.l.b16 %v3428
      %v3523 = vunpack.c.l.b16 %v3429
      %v3524 = vunpack.c.l.b16 %v3430
      %v3525 = vunpack.c.l.b16 %v3431
      %v3526 = vunpack.c.l.b16 %v3432
      %v3527 = vunpack.c.l.b16 %v3433
      %v3528 = vunpack.c.l.b16 %v3434
      %v3529 = vpack.c.b16 %v3514, %v3513
      %v3530 = vpack.c.b16 %v3516, %v3515
      %v3531 = vpack.c.b16 %v3518, %v3517
      %v3532 = vpack.c.b16 %v3520, %v3519
      %v3533 = vpack.c.b16 %v3522, %v3521
      %v3534 = vpack.c.b16 %v3524, %v3523
      %v3535 = vpack.c.b16 %v3526, %v3525
      %v3536 = vpack.c.b16 %v3528, %v3527
      %3545 = vmatprep.subr.bf16.mxu0 0
      %3546 = vmatpush1.bf16.msra.mxu0 %v3529
      %3547 = vmatprep.subr.bf16.mxu0 0
      %3548 = vmatpush1.bf16.msra.mxu0 %v3530
      %3549 = vmatprep.subr.bf16.mxu0 0
      %3550 = vmatpush1.bf16.msra.mxu0 %v3531
      %3551 = vmatprep.subr.bf16.mxu0 0
      %3552 = vmatpush1.bf16.msra.mxu0 %v3532
      %3553 = vmatprep.subr.bf16.mxu0 0
      %3554 = vmatpush1.bf16.msra.mxu0 %v3533
      %3555 = vmatprep.subr.bf16.mxu0 0
      %3556 = vmatpush1.bf16.msra.mxu0 %v3534
      %3557 = vmatprep.subr.bf16.mxu0 0
      %3558 = vmatpush1.bf16.msra.mxu0 %v3535
      %3559 = vmatprep.subr.bf16.mxu0 0
      %3560 = vmatpush1.bf16.msra.mxu0 %v3536
      %3561 = vmatprep.subr.bf16.mxu0 0
      %3562 = vmatpush1.bf16.msra.mxu0 0
      %3563 = vmatprep.subr.bf16.mxu0 0
      %3564 = vmatpush1.bf16.msra.mxu0 0
      %3565 = vmatprep.subr.bf16.mxu0 0
      %3566 = vmatpush1.bf16.msra.mxu0 0
      %3567 = vmatprep.subr.bf16.mxu0 0
      %3568 = vmatpush1.bf16.msra.mxu0 0
      %3569 = vmatprep.subr.bf16.mxu0 0
      %3570 = vmatpush1.bf16.msra.mxu0 0
      %3571 = vmatprep.subr.bf16.mxu0 0
      %3572 = vmatpush1.bf16.msra.mxu0 0
      %3573 = vmatprep.subr.bf16.mxu0 0
      %3574 = vmatpush1.bf16.msra.mxu0 0
      %3575 = vmatprep.subr.bf16.mxu0 0
      %3576 = vmatpush1.bf16.msra.mxu0 0
      %3577 = vmatprep.mubr.bf16.mxu0 0
      %3578 = vmatmul.mubr.bf16.gmra.mrb[0].mxu0 %v3471
      %v3579 = vpop.f32.mrb[0].mxu0
      %v3580 = vadd.f32 0.0, %v3579
      %v3581 = vpop.f32.mrb[0].mxu0
      %v3582 = vpop.f32.mrb[0].mxu0
      %v3583 = vadd.f32 0.0, %v3582
      %v3584 = vpop.f32.mrb[0].mxu0
      %3585 = vmatprep.mubr.bf16.mxu0 0
      %3586 = vmatmul.mubr.bf16.gmra.mrb[0].mxu0 %v3494
      %v3587 = vpop.f32.mrb[0].mxu0
      %v3588 = vadd.f32 0.0, %v3587
      %v3589 = vpop.f32.mrb[0].mxu0
      %v3590 = vpop.f32.mrb[0].mxu0
      %v3591 = vpop.f32.mrb[0].mxu0
      %3592 = vdwg.mxu0
      %v3593 = vadd.f32 %v3399, %v3580
      %v3594 = vadd.f32 %v3400, %v3583
      %v3595 = vadd.f32 %v3401, %v3588
      %v3596 = vld [vmem:[%s5] sm:$0x1]
      %v3598 = vlaneseq
      %v3599 = vshrl.u32 %v3598, 7
      %v3600 = vsub.s32 0, %v3599
      %v3601 = vrot.slane %v3596, %v3600
      %v3603 = vmul.f32 %v3593, %v3601
      %v3604 = vmul.f32 %v3594, %v3601
      %v3605 = vmul.f32 %v3595, %v3601
      %v3606 = vld [vmem:[%s6] sm:$0x1]
      %v3608 = vlaneseq
      %v3609 = vshrl.u32 %v3608, 7
      %v3610 = vsub.s32 0, %v3609
      %v3611 = vrot.slane %v3606, %v3610
      %v3613 = vadd.f32 %v3603, %v3611
      %v3614 = vadd.f32 %v3604, %v3611
      %v3615 = vadd.f32 %v3605, %v3611
      %v3616 = vmin.f32 %v3613, 20.0
      %v3617 = vmin.f32 %v3614, 20.0
      %v3618 = vmin.f32 %v3615, 20.0
      %v3619 = vmul.f32 %v3616, 1.442695
      %v3620 = vpow.pop %v3619
      %v3621 = vmul.f32 %v3617, 1.442695
      %v3622 = vpow.pop %v3621
      %v3623 = vmul.f32 %v3618, 1.442695
      %v3624 = vpow.pop %v3623
      %v3625 = vadd.f32 %v3620, 1.0
      %v3626 = vadd.f32 %v3622, 1.0
      %v3627 = vadd.f32 %v3624, 1.0
      %v3628 = vmul.f32 %v3625, %v3625
      %v3629 = vmul.f32 %v3626, %v3626
      %v3630 = vmul.f32 %v3627, %v3627
      %v3631 = vadd.f32 %v3628, 1.0
      %v3632 = vadd.f32 %v3629, 1.0
      %v3633 = vadd.f32 %v3630, 1.0
      %v3634 = vrcp.pop %v3631
      %v3635 = vrcp.pop %v3632
      %v3636 = vrcp.pop %v3633
      %v3637 = vmul.f32 %v3631, %v3634
      %v3638 = vmul.f32 %v3632, %v3635
      %v3639 = vmul.f32 %v3633, %v3636
      %v3640 = vsub.f32 2.0, %v3637
      %v3641 = vsub.f32 2.0, %v3638
      %v3642 = vsub.f32 2.0, %v3639
      %v3643 = vmul.f32 %v3634, %v3640
      %v3644 = vmul.f32 %v3635, %v3641
      %v3645 = vmul.f32 %v3636, %v3642
      %v3646 = vsub.f32 %v3628, 1.0
      %v3647 = vsub.f32 %v3629, 1.0
      %v3648 = vsub.f32 %v3630, 1.0
      %v3649 = vmul.f32 %v3613, %v3646
      %v3650 = vmul.f32 %v3614, %v3647
      %v3651 = vmul.f32 %v3615, %v3648
      %v3652 = vmul.f32 %v3649, %v3643
      %v3653 = vmul.f32 %v3650, %v3644
      %v3654 = vmul.f32 %v3651, %v3645
      %v3655 = vpack.i.b16 %v536, %v533
      %v3657 = vcombine.low %v583, %v585
      %v3658 = vcombine.low %v584, %v3655
      %v3660 = vunpack.c.l.s4 1935823168
      %v3661 = vunpack.c.0.s8 %v3660
      %v3662 = vlaneseq
      %v3663 = vshrl.u32 %v3662, 7
      %v3664 = vsub.s32 %v3661, %v3663
      %v3665 = vrot.slane %v3657, %v3664
      %v3667 = vunpack.c.l.s4 1935823168
      %v3668 = vunpack.c.0.s8 %v3667
      %v3669 = vlaneseq
      %v3670 = vshrl.u32 %v3669, 7
      %v3671 = vsub.s32 %v3668, %v3670
      %v3672 = vrot.slane %v3658, %v3671
      %v3673 = vcombine.low %v3665, %v3672
      %v3675 = vunpack.c.l.s4 1935823168
      %v3676 = vunpack.c.0.s8 %v3675
      %v3677 = vlaneseq
      %v3678 = vshrl.u32 %v3677, 7
      %v3679 = vsub.s32 %v3676, %v3678
      %v3680 = vrot.slane %v3673, %v3679
      %v3681 = vcombine.low %v588, %v590
      %v3682 = vcombine.low %v589, %v592
      %v3684 = vunpack.c.l.s4 1935823168
      %v3685 = vunpack.c.0.s8 %v3684
      %v3686 = vlaneseq
      %v3687 = vshrl.u32 %v3686, 7
      %v3688 = vsub.s32 %v3685, %v3687
      %v3689 = vrot.slane %v3681, %v3688
      %v3691 = vunpack.c.l.s4 1935823168
      %v3692 = vunpack.c.0.s8 %v3691
      %v3693 = vlaneseq
      %v3694 = vshrl.u32 %v3693, 7
      %v3695 = vsub.s32 %v3692, %v3694
      %v3696 = vrot.slane %v3682, %v3695
      %v3697 = vcombine.low %v3689, %v3696
      %v3699 = vunpack.c.l.s4 1935823168
      %v3700 = vunpack.c.0.s8 %v3699
      %v3701 = vlaneseq
      %v3702 = vshrl.u32 %v3701, 7
      %v3703 = vsub.s32 %v3700, %v3702
      %v3704 = vrot.slane %v3697, %v3703
      %v3705 = vcombine.low %v593, %v551
      %v3707 = vunpack.c.l.s4 1935823168
      %v3708 = vunpack.c.0.s8 %v3707
      %v3709 = vlaneseq
      %v3710 = vshrl.u32 %v3709, 7
      %v3711 = vsub.s32 %v3708, %v3710
      %v3712 = vrot.slane %v3705, %v3711
      %v3714 = vunpack.c.l.s4 1935823168
      %v3715 = vunpack.c.0.s8 %v3714
      %v3716 = vlaneseq
      %v3717 = vshrl.u32 %v3716, 7
      %v3718 = vsub.s32 %v3715, %v3717
      %v3719 = vrot.slane %v594, %v3718
      %v3720 = vcombine.low %v3712, %v3719
      %v3722 = vunpack.c.l.s4 1935823168
      %v3723 = vunpack.c.0.s8 %v3722
      %v3724 = vlaneseq
      %v3725 = vshrl.u32 %v3724, 7
      %v3726 = vsub.s32 %v3723, %v3725
      %v3727 = vrot.slane %v3720, %v3726
      %v3731 = vunpack.c.l.bf16 %v3680
      %v3732 = vunpack.c.l.bf16 %v3704
      %v3733 = vunpack.c.l.bf16 %v3727
      %v3734 = vadd.f32 %v3731, %v3652
      %v3735 = vadd.f32 %v3732, %v3653
      %v3736 = vadd.f32 %v3733, %v3654
      %v3737 = vpack.c.bf16 %v3735, %v3734
      %v3738 = vpack.c.bf16 %v3736, %v3736
      %v3741 = vcombine.high %v3737, %v3737
      %v3743 = vunpack.c.l.s4 1966171168
      %v3744 = vunpack.c.0.s8 %v3743
      %v3745 = vlaneseq
      %v3746 = vshrl.u32 %v3745, 7
      %v3747 = vsub.s32 %v3744, %v3746
      %v3748 = vrot.slane %v3737, %v3747
      %v3750 = vunpack.c.l.s4 1966171168
      %v3751 = vunpack.c.0.s8 %v3750
      %v3752 = vlaneseq
      %v3753 = vshrl.u32 %v3752, 7
      %v3754 = vsub.s32 %v3751, %v3753
      %v3755 = vrot.slane %v3741, %v3754
      %v3756 = vcombine.high %v3748, %v3748
      %v3757 = vcombine.high %v3755, %v3755
      %v3759 = vunpack.c.l.s4 1966171168
      %v3760 = vunpack.c.0.s8 %v3759
      %v3761 = vlaneseq
      %v3762 = vshrl.u32 %v3761, 7
      %v3763 = vsub.s32 %v3760, %v3762
      %v3764 = vrot.slane %v3748, %v3763
      %v3766 = vunpack.c.l.s4 1966171168
      %v3767 = vunpack.c.0.s8 %v3766
      %v3768 = vlaneseq
      %v3769 = vshrl.u32 %v3768, 7
      %v3770 = vsub.s32 %v3767, %v3769
      %v3771 = vrot.slane %v3755, %v3770
      %v3773 = vunpack.c.l.s4 1966171168
      %v3774 = vunpack.c.0.s8 %v3773
      %v3775 = vlaneseq
      %v3776 = vshrl.u32 %v3775, 7
      %v3777 = vsub.s32 %v3774, %v3776
      %v3778 = vrot.slane %v3756, %v3777
      %v3780 = vunpack.c.l.s4 1966171168
      %v3781 = vunpack.c.0.s8 %v3780
      %v3782 = vlaneseq
      %v3783 = vshrl.u32 %v3782, 7
      %v3784 = vsub.s32 %v3781, %v3783
      %v3785 = vrot.slane %v3757, %v3784
      %v3786 = vcombine.high %v3764, %v3764
      %v3787 = vcombine.high %v3771, %v3771
      %v3788 = vcombine.high %v3778, %v3778
      %v3789 = vcombine.high %v3785, %v3785
      %v3791 = vunpack.c.l.s4 1966171168
      %v3792 = vunpack.c.0.s8 %v3791
      %v3793 = vlaneseq
      %v3794 = vshrl.u32 %v3793, 7
      %v3795 = vsub.s32 %v3792, %v3794
      %v3796 = vrot.slane %v3738, %v3795
      %v3797 = vcombine.high %v3796, %v3796
      %v3799 = vunpack.c.l.s4 1966171168
      %v3800 = vunpack.c.0.s8 %v3799
      %v3801 = vlaneseq
      %v3802 = vshrl.u32 %v3801, 7
      %v3803 = vsub.s32 %v3800, %v3802
      %v3804 = vrot.slane %v3796, %v3803
      %v3806 = vunpack.c.l.s4 1966171168
      %v3807 = vunpack.c.0.s8 %v3806
      %v3808 = vlaneseq
      %v3809 = vshrl.u32 %v3808, 7
      %v3810 = vsub.s32 %v3807, %v3809
      %v3811 = vrot.slane %v3797, %v3810
      %v3812 = vcombine.high %v3804, %v3804
      %v3813 = vunpack.i.l.s16 %v3764
      %v3814 = vunpack.i.h.s16 %v3764
      %v3815 = vunpack.i.l.s16 %v3778
      %v3816 = vunpack.i.h.s16 %v3778
      %v3817 = vunpack.i.l.s16 %v3786
      %v3818 = vunpack.i.h.s16 %v3786
      %v3819 = vunpack.i.l.s16 %v3788
      %v3820 = vunpack.i.h.s16 %v3788
      %v3821 = vunpack.i.l.s16 %v3771
      %v3822 = vunpack.i.h.s16 %v3771
      %v3823 = vunpack.i.l.s16 %v3785
      %v3824 = vunpack.i.h.s16 %v3785
      %v3825 = vunpack.i.l.s16 %v3787
      %v3826 = vunpack.i.h.s16 %v3787
      %v3827 = vunpack.i.l.s16 %v3789
      %v3828 = vunpack.i.h.s16 %v3789
      %v3829 = vunpack.i.l.s16 %v3804
      %v3830 = vunpack.i.h.s16 %v3804
      %v3831 = vunpack.i.l.s16 %v3811
      %v3832 = vunpack.i.h.s16 %v3811
      %v3833 = vunpack.i.l.s16 %v3812
      %v3834 = vpack.i.b16 %v3814, %v3813
      %v3835 = vpack.i.b16 %v3816, %v3815
      %v3836 = vpack.i.b16 %v3818, %v3817
      %v3838 = vpack.i.b16 %v3821, %v3820
      %v3839 = vpack.i.b16 %v3823, %v3822
      %v3840 = vpack.i.b16 %v3825, %v3824
      %v3842 = vpack.i.b16 %v3828, %v3827
      %v3843 = vpack.i.b16 %v3830, %v3829
      %v3844 = vpack.i.b16 %v3832, %v3831
      %v3846 = vcombine.low %v3834, %v3836
      %v3847 = vcombine.low %v3835, %v3819
      %v3849 = vunpack.c.l.s4 1935823168
      %v3850 = vunpack.c.0.s8 %v3849
      %v3851 = vlaneseq
      %v3852 = vshrl.u32 %v3851, 7
      %v3853 = vsub.s32 %v3850, %v3852
      %v3854 = vrot.slane %v3846, %v3853
      %v3856 = vunpack.c.l.s4 1935823168
      %v3857 = vunpack.c.0.s8 %v3856
      %v3858 = vlaneseq
      %v3859 = vshrl.u32 %v3858, 7
      %v3860 = vsub.s32 %v3857, %v3859
      %v3861 = vrot.slane %v3847, %v3860
      %v3862 = vcombine.low %v3854, %v3861
      %v3864 = vunpack.c.l.s4 1935823168
      %v3865 = vunpack.c.0.s8 %v3864
      %v3866 = vlaneseq
      %v3867 = vshrl.u32 %v3866, 7
      %v3868 = vsub.s32 %v3865, %v3867
      %v3869 = vrot.slane %v3862, %v3868
      %v3870 = vcombine.low %v3838, %v3840
      %v3871 = vcombine.low %v3839, %v3826
      %v3873 = vunpack.c.l.s4 1935823168
      %v3874 = vunpack.c.0.s8 %v3873
      %v3875 = vlaneseq
      %v3876 = vshrl.u32 %v3875, 7
      %v3877 = vsub.s32 %v3874, %v3876
      %v3878 = vrot.slane %v3870, %v3877
      %v3880 = vunpack.c.l.s4 1935823168
      %v3881 = vunpack.c.0.s8 %v3880
      %v3882 = vlaneseq
      %v3883 = vshrl.u32 %v3882, 7
      %v3884 = vsub.s32 %v3881, %v3883
      %v3885 = vrot.slane %v3871, %v3884
      %v3886 = vcombine.low %v3878, %v3885
      %v3888 = vunpack.c.l.s4 1935823168
      %v3889 = vunpack.c.0.s8 %v3888
      %v3890 = vlaneseq
      %v3891 = vshrl.u32 %v3890, 7
      %v3892 = vsub.s32 %v3889, %v3891
      %v3893 = vrot.slane %v3886, %v3892
      %v3894 = vcombine.low %v3842, %v3844
      %v3895 = vcombine.low %v3843, %v3833
      %v3897 = vunpack.c.l.s4 1935823168
      %v3898 = vunpack.c.0.s8 %v3897
      %v3899 = vlaneseq
      %v3900 = vshrl.u32 %v3899, 7
      %v3901 = vsub.s32 %v3898, %v3900
      %v3902 = vrot.slane %v3894, %v3901
      %v3904 = vunpack.c.l.s4 1935823168
      %v3905 = vunpack.c.0.s8 %v3904
      %v3906 = vlaneseq
      %v3907 = vshrl.u32 %v3906, 7
      %v3908 = vsub.s32 %v3905, %v3907
      %v3909 = vrot.slane %v3895, %v3908
      %v3910 = vcombine.low %v3902, %v3909
      %v3912 = vunpack.c.l.s4 1935823168
      %v3913 = vunpack.c.0.s8 %v3912
      %v3914 = vlaneseq
      %v3915 = vshrl.u32 %v3914, 7
      %v3916 = vsub.s32 %v3913, %v3915
      %v3917 = vrot.slane %v3910, %v3916
      %vm3921 = vcmask 1043456
      %vm3922 = vsmask.f32 3328
      %vm3923 = vmand %vm3921, %vm3922
      %v3924 = vld [vmem:[%s300] sm:$0xf]
      %v3925 = vsel %vm3923, %v3869, %v3924
      %3926 = vst [vmem:[%s300] sm:$0xf] %v3925
      %v3927 = vld [vmem:[%s300 + $0x4] sm:$0xf]
      %v3928 = vsel %vm3923, %v3893, %v3927
      %3929 = vst [vmem:[%s300 + $0x4] sm:$0xf] %v3928
      %v3930 = vld [vmem:[%s300 + $0x8] sm:$0xf]
      %v3931 = vsel %vm3923, %v3917, %v3930
      %3932 = vst [vmem:[%s300 + $0x8] sm:$0xf] %v3931
      %s3933 = smul.u32 3, %s23
      %p3934 = scmp.lt.s32.totalorder %s22, 1
      %s3935 = scalar_select %p3934, %s22, 1
      %p3936 = scmp.lt.s32.totalorder %s3933, 8
      %s3937 = scalar_select %p3936, %s3933, 8
      %s3938 = smul.addr %s3935, 9
      %s3939 = sadd.s32 %s3937, %s3938
      %s3940 = smul.addr %s3939, 4
      %s3941 = scalar_lea.vmem %s7, %s3940
      // Predicated region
      $region49: #{cspstage_forward.5} parent=47 // pred_check
        %p3942 = pneg %p202
      $region50: #{cspstage_forward.5} parent=47 // pred_check_branch
        %3944 = sbr.rel (%p3942) target = $region52
      $region51: #{cspstage_forward.5} parent=47 // pred_region
        %s3945 = smul.u32 3, %s23
      $region52: #{cspstage_forward.5} parent=47 // pred_fallthru
        _
    $region48: #{cspstage_forward.5} parent=5 // pred_fallthru
      _
    %p3946 = scmp.le.s32.totalorder 2, %s13
    // Predicated region
    $region53: #{cspstage_forward.5} parent=5 // pred_check
      %p3947 = pneg %p3946
    $region54: #{cspstage_forward.5} parent=5 // pred_check_branch
      %3949 = sbr.rel (%p3947) target = $region56
    $region55: #{cspstage_forward.5} parent=5 // pred_region
      %s3950 = ssub.s32 %s13, 2
      // Predicated region
      $region57: #{cspstage_forward.5} parent=55 // pred_check
        %p3951 = pneg %p208
      $region58: #{cspstage_forward.5} parent=55 // pred_check_branch
        %3953 = sbr.rel (%p3951) target = $region60
      $region59: #{cspstage_forward.5} parent=55 // pred_region
        %s3954 = smul.u32 3, %s25
        %p3955 = scmp.lt.s32.totalorder %s24, 1
        %s3956 = scalar_select %p3955, %s24, 1
        %p3957 = scmp.lt.s32.totalorder %s3954, 8
        %s3958 = scalar_select %p3957, %s3954, 8
        %s3959 = smul.addr %s3956, 9
        %s3960 = sadd.s32 %s3958, %s3959
        %s3961 = smul.addr %s3960, 4
        %s3962 = scalar_lea.vmem %s7, %s3961
      $region60: #{cspstage_forward.5} parent=55 // pred_fallthru
        _
    $region56: #{cspstage_forward.5} parent=5 // pred_fallthru
      _
  $region6: #{cspstage_forward.5} parent=0 // loop_footer
    %s17 = sadd.s32 1, %s13
  $region7: #{cspstage_forward.5} parent=0 // loop_footer_branch
    %12 = sbr.rel target = $region3
  $region8: #{cspstage_forward.5} parent=0 // loop_exit
    _

</llo_original>
